<compile_context>
chip_gen: v7x
topology: tpu7x:2x2x1
jax: 0.10.0
libtpu: 0.0.40
codegen_flags: <defaults>
</compile_context>

<pallas_src>
import jax
import jax.numpy as jnp
from jax import lax
from jax.experimental import pallas as pl
from jax.experimental.pallas import tpu as pltpu


def _round_up(x, m):
    return (x + m - 1) // m * m


def _log_sigmoid(x):
    # numerically stable log(sigmoid(x)) = min(x, 0) - log(1 + exp(-|x|))
    return jnp.minimum(x, 0.0) - jnp.log(1.0 + jnp.exp(-jnp.abs(x)))


def _make_skipgram_kernel(tile_bs, kn, v_pad):
    rows_u = (1 + 2 * kn) * tile_bs          # pair_u | pos (k-major) | neg (k-major)

    def kernel(u_tab_ref, v_tab_ref, uidx_ref, vidx_ref, side_ref, o_ref):
        i = pl.program_id(0)

        @pl.when(i == 0)
        def _init():
            o_ref[...] = jnp.zeros_like(o_ref)

        u_tab = u_tab_ref[...]               # (V_pad, D_pad) f32, VMEM resident
        v_tab = v_tab_ref[...]

        # ---- Vectorized fused embedding gather (one-hot matmul on the MXU).
        # Exact: every multiplier is exactly 0.0 or 1.0.
        def gather(tab, idx_col, nrows):
            lanes = lax.broadcasted_iota(jnp.int32, (nrows, v_pad), 1)
            onehot = jnp.where(idx_col == lanes, 1.0, 0.0)          # (nrows, V_pad)
            return jnp.dot(onehot, tab, preferred_element_type=jnp.float32)

        u_rows = gather(u_tab, uidx_ref[...], rows_u)               # (rows_u, D)
        emb_v = gather(v_tab, vidx_ref[...], tile_bs)               # (T, D)

        emb_u = u_rows[0:tile_bs]                                   # (T, D)
        pos2d = u_rows[tile_bs:(1 + kn) * tile_bs]                  # (kn*T, D) k-major
        neg2d = u_rows[(1 + kn) * tile_bs:]                         # (kn*T, D) k-major

        side = side_ref[...]                                        # (kn*T, 3)
        mask_pos = side[:, 0:1]                                     # (kn*T, 1)
        mask_neg = side[:, 1:2]
        valid_rep = side[:, 2:3]                                    # valid[b] repeated per k
        valid_b = side[0:tile_bs, 2:3]                              # (T, 1)

        # emb_v repeated per negative/positive sample (k-major layout ->
        # a plain sublane concatenation, no relayout).
        emb_v_rep = jnp.concatenate([emb_v] * kn, axis=0)           # (kn*T, D)

        # ---- Loss math (masks distribute over the sum -> applied after it).
        score = _log_sigmoid(jnp.sum(emb_u * emb_v, axis=1, keepdims=True))   # (T,1)
        pos_dot = jnp.sum(pos2d * emb_v_rep, axis=1, keepdims=True)           # (kn*T,1)
        neg_dot = jnp.sum(neg2d * emb_v_rep, axis=1, keepdims=True)
        neg_ls = _log_sigmoid(-(mask_neg * neg_dot))
        pos_ls = _log_sigmoid(mask_pos * pos_dot)

        # sum(score) + sum(neg_score) + sum(score[:,None] - pos_ls)
        #   = (1+kn)*sum(score) + sum(neg_ls) - sum(pos_ls)   (valid-masked)
        partial = ((1.0 + kn) * jnp.sum(score * valid_b)
                   + jnp.sum(neg_ls * valid_rep)
                   - jnp.sum(pos_ls * valid_rep))

        # Output block is resident across the (reduction) grid axis.
        o_ref[...] += partial

        @pl.when(i == pl.num_programs(0) - 1)
        def _finalize():
            o_ref[...] = -o_ref[...]

    return kernel


def skipgram_loss_pallas(u_tab, v_tab, pair_u, pair_v, pos_u, neg_u,
                         mask_pos, mask_neg, *, tile_bs=None):
    """u_tab / v_tab must already be padded to (V_pad, D_pad) (multiples of 128)."""
    bs, kn = pos_u.shape
    v_pad, d_pad = u_tab.shape
    if tile_bs is None:
        # Large batch tile to amortize per-grid-step pipeline overhead; clamp
        # for tiny batches so the demo does not gather 100+ padded rows.
        tile_bs = max(8, min(128, _round_up(bs, 8)))
    assert tile_bs % 8 == 0, "tile_bs must be a multiple of 8 sublanes"
    bs_pad = _round_up(bs, tile_bs)
    nt = bs_pad // tile_bs
    pad_b = bs_pad - bs
    rows_u = (1 + 2 * kn) * tile_bs

    # ---- Wrapper-side packing (plain XLA, outside the kernel). -------------
    pair_u_p = jnp.pad(pair_u.astype(jnp.int32), (0, pad_b))                 # (bs_pad,)
    pair_v_p = jnp.pad(pair_v.astype(jnp.int32), (0, pad_b))
    pos_p = jnp.pad(pos_u.astype(jnp.int32), ((0, pad_b), (0, 0)))           # (bs_pad, kn)
    neg_p = jnp.pad(neg_u.astype(jnp.int32), ((0, pad_b), (0, 0)))
    mp_p = jnp.pad(mask_pos.astype(jnp.float32), ((0, pad_b), (0, 0)))
    mn_p = jnp.pad(mask_neg.astype(jnp.float32), ((0, pad_b), (0, 0)))
    valid = (jnp.arange(bs_pad) < bs).astype(jnp.float32)                    # (bs_pad,)

    def kmajor(x):  # (bs_pad, kn) -> (nt, kn*tile_bs); row-within-tile = k*tile_bs + b
        return x.reshape(nt, tile_bs, kn).transpose(0, 2, 1).reshape(nt, kn * tile_bs)

    # Per-tile contiguous u-table indices: [pair_u | pos (k-major) | neg (k-major)].
    u_idx = jnp.concatenate(
        [pair_u_p.reshape(nt, tile_bs), kmajor(pos_p), kmajor(neg_p)], axis=1
    ).reshape(nt * rows_u, 1)
    v_idx = pair_v_p.reshape(bs_pad, 1)

    # Single folded side input: [mask_pos, mask_neg, valid] per (b, k), k-major.
    valid_rep = jnp.broadcast_to(
        valid.reshape(nt, 1, tile_bs), (nt, kn, tile_bs)).reshape(nt, kn * tile_bs)
    side = jnp.stack([kmajor(mp_p), kmajor(mn_p), valid_rep],
                     axis=-1).reshape(nt * kn * tile_bs, 3)

    # ---- VMEM budget (tables are double-buffered by the default pipeline). --
    table_bytes = 2 * 2 * v_pad * d_pad * 4
    block_bytes = 2 * 4 * (rows_u + tile_bs + 3 * kn * tile_bs)
    interm_bytes = 4 * ((rows_u + tile_bs) * v_pad                 # one-hot temporaries
                        + (rows_u + (3 + kn) * tile_bs) * d_pad)   # gathered rows / repeats
    vmem_limit = int(min(max(table_bytes + block_bytes + interm_bytes + (16 << 20),
                             32 << 20),
                         96 << 20))   # NOTE: drop the cap to <=56 MiB on v7x (64 MiB VMEM)

    kernel = _make_skipgram_kernel(tile_bs, kn, v_pad)
    # Full-table block, constant index map -> fetched once, stays resident in
    # VMEM across all grid steps.
    tab_spec = pl.BlockSpec((v_pad, d_pad), lambda i: (0, 0))

    out = pl.pallas_call(
        kernel,
        out_shape=jax.ShapeDtypeStruct((1, 1), jnp.float32),
        grid_spec=pltpu.PrefetchScalarGridSpec(
            num_scalar_prefetch=0,
            grid=(nt,),
            in_specs=[
                tab_spec,                                                # u table
                tab_spec,                                                # v table
                pl.BlockSpec((rows_u, 1), lambda i: (i, 0)),             # u-table indices
                pl.BlockSpec((tile_bs, 1), lambda i: (i, 0)),            # v-table indices
                pl.BlockSpec((kn * tile_bs, 3), lambda i: (i, 0)),       # masks + valid
            ],
            out_specs=pl.BlockSpec((1, 1), lambda i: (0, 0)),
        ),
        # Batch axis is a reduction into the single resident output block.
        compiler_params=pltpu.CompilerParams(
            dimension_semantics=("arbitrary",),
            vmem_limit_bytes=vmem_limit),
    )(u_tab, v_tab, u_idx, v_idx, side)
    return out[0, 0]


class SkipGramModel:
    """JAX/Pallas port of the PyTorch SkipGramModel forward pass."""

    def __init__(self, emb_size, emb_dimension, wvectors, cvectors):
        self.emb_size = emb_size
        self.emb_dimension = emb_dimension
        self.u_embeddings = jnp.asarray(wvectors, dtype=jnp.float32)  # [V, D]
        self.v_embeddings = jnp.asarray(cvectors, dtype=jnp.float32)  # [V, D]
        # Lane/sublane padded copies used by the kernel.  Vocab is padded to a
        # multiple of 128 so the one-hot gather's contraction dim is lane
        # aligned; D is padded to 128 lanes.  Zero padding changes no dot
        # product and padded rows are never indexed.
        # TODO(synk): store the tables in bfloat16 (upcast in-kernel) for
        # large vocabularies; kept f32 here to match the PyTorch numerics.
        v_pad = _round_up(emb_size, 128)
        d_pad = _round_up(emb_dimension, 128)
        pad = ((0, v_pad - emb_size), (0, d_pad - emb_dimension))
        self._u_tab = jnp.pad(self.u_embeddings, pad)
        self._v_tab = jnp.pad(self.v_embeddings, pad)

    def forward(self, pair_u, pair_v, pos_u, mask_pos_u, neg_u, mask_neg_u):
        return skipgram_loss_pallas(
            self._u_tab, self._v_tab, pair_u, pair_v, pos_u, neg_u,
            mask_pos_u, mask_neg_u)


def _reference_loss(model, pair_u, pair_v, pos_u, mask_pos_u, neg_u, mask_neg_u):
    """Pure-JAX reference mirroring the PyTorch forward, for validation."""
    emb_u = model.u_embeddings[pair_u]
    emb_v = model.v_embeddings[pair_v]
    score = jax.nn.log_sigmoid(jnp.sum(emb_u * emb_v, axis=1))
    neg_emb_u = model.u_embeddings[neg_u] * mask_neg_u[:, :, None]
    neg_score = jax.nn.log_sigmoid(-jnp.sum(neg_emb_u * emb_v[:, None, :], axis=2))
    pos_emb_u = model.u_embeddings[pos_u] * mask_pos_u[:, :, None]
    pos_score_t = jax.nn.log_sigmoid(jnp.sum(pos_emb_u * emb_v[:, None, :], axis=2))
    pos_score = score[:, None] - pos_score_t
    return -(jnp.sum(score) + jnp.sum(neg_score) + jnp.sum(pos_score))


if __name__ == "__main__":
    key = jax.random.PRNGKey(0)
    emb_size = 500       # vocabulary size (padded to 512 inside the model)
    emb_dim = 100        # embedding dimension (padded to 128 lanes)
    bs = 200             # batch -> padded to 2 tiles of 128 (exercises accumulation)
    kn = 4               # number of pos/neg samples per pair

    k_w, k_c, k_pu, k_pv, k_pos, k_neg, k_mp, k_mn = jax.random.split(key, 8)
    wvectors = jax.random.normal(k_w, (emb_size, emb_dim), dtype=jnp.float32) * 0.3
    cvectors = jax.random.normal(k_c, (emb_size, emb_dim), dtype=jnp.float32) * 0.3

    pair_u = jax.random.randint(k_pu, (bs,), 0, emb_size, dtype=jnp.int32)
    pair_v = jax.random.randint(k_pv, (bs,), 0, emb_size, dtype=jnp.int32)
    pos_u = jax.random.randint(k_pos, (bs, kn), 0, emb_size, dtype=jnp.int32)
    neg_u = jax.random.randint(k_neg, (bs, kn), 0, emb_size, dtype=jnp.int32)
    mask_pos_u = (jax.random.uniform(k_mp, (bs, kn)) > 0.3).astype(jnp.float32)
    mask_neg_u = (jax.random.uniform(k_mn, (bs, kn)) > 0.3).astype(jnp.float32)

    model = SkipGramModel(emb_size, emb_dim, wvectors, cvectors)

    loss = model.forward(pair_u, pair_v, pos_u, mask_pos_u, neg_u, mask_neg_u)
    loss = jax.block_until_ready(loss)

    ref = _reference_loss(model, pair_u, pair_v, pos_u, mask_pos_u, neg_u, mask_neg_u)
    # Tolerance allows for the MXU's multi-pass f32 matmul emulation in the
    # one-hot gather and for summation-order differences.
    assert jnp.allclose(loss, ref, rtol=2e-3, atol=1e-2), (loss, ref)

    print("KERNEL_OK")
</pallas_src>

<mosaic_0001>
module attributes {stable_mosaic.version = 11 : i64} {
  func.func @kernel(%arg0: i32, %arg1: memref<512x128xf32, #tpu.memory_space<vmem>>, %arg2: memref<512x128xf32, #tpu.memory_space<vmem>>, %arg3: memref<1152x1xi32, #tpu.memory_space<vmem>>, %arg4: memref<128x1xi32, #tpu.memory_space<vmem>>, %arg5: memref<512x3xf32, #tpu.memory_space<vmem>>, %arg6: memref<1x1xf32, #tpu.memory_space<vmem>>) attributes {dimension_semantics = [#tpu.dimension_semantics<arbitrary>], iteration_bounds = array<i64: 2>, scalar_prefetch = 0 : i64, scratch_operands = 0 : i64, tpu.core_type = #tpu.core_type<tc>, window_params = [{pipeline_mode = #tpu.pipeline_mode<synchronous>, transform_indices = @transform_0, window_bounds = array<i64: 512, 128>}, {pipeline_mode = #tpu.pipeline_mode<synchronous>, transform_indices = @transform_1, window_bounds = array<i64: 512, 128>}, {transform_indices = @transform_2, window_bounds = array<i64: 1152, 1>}, {transform_indices = @transform_3, window_bounds = array<i64: 128, 1>}, {transform_indices = @transform_4, window_bounds = array<i64: 512, 3>}, {pipeline_mode = #tpu.pipeline_mode<synchronous>, transform_indices = @transform_5, window_bounds = array<i64: 1, 1>}]} {
    %c0_i32 = arith.constant 0 : i32
    %0 = arith.cmpi eq, %arg0, %c0_i32 : i32
    %1 = arith.extui %0 : i1 to i32
    %c0_i32_0 = arith.constant 0 : i32
    %2 = arith.cmpi ne, %1, %c0_i32_0 : i32
    scf.if %2 {
      %cst_37 = arith.constant 0.000000e+00 : f32
      %98 = vector.broadcast %cst_37 : f32 to vector<1x1xf32>
      %c0_38 = arith.constant 0 : index
      %c0_39 = arith.constant 0 : index
      %99 = vector.load %arg6[%c0_38, %c0_39] : memref<1x1xf32, #tpu.memory_space<vmem>>, vector<1x1xf32>
      tpu.vector_store %arg6[%c0_38, %c0_39], %98 {strides = array<i32>} : memref<1x1xf32, #tpu.memory_space<vmem>>, vector<1x1xf32>,
    } else {
    }
    %c0 = arith.constant 0 : index
    %c0_1 = arith.constant 0 : index
    %3 = vector.load %arg1[%c0, %c0_1] : memref<512x128xf32, #tpu.memory_space<vmem>>, vector<512x128xf32>
    %c0_2 = arith.constant 0 : index
    %c0_3 = arith.constant 0 : index
    %4 = vector.load %arg2[%c0_2, %c0_3] : memref<512x128xf32, #tpu.memory_space<vmem>>, vector<512x128xf32>
    %c0_4 = arith.constant 0 : index
    %c0_5 = arith.constant 0 : index
    %5 = vector.load %arg3[%c0_4, %c0_5] : memref<1152x1xi32, #tpu.memory_space<vmem>>, vector<1152x1xi32>
    %6 = tpu.iota {dimensions = array<i32: 1>} : vector<1152x512xi32>
    %7 = vector.broadcast %5 : vector<1152x1xi32> to vector<1152x512xi32>
    %8 = arith.cmpi eq, %7, %6 : vector<1152x512xi32>
    %cst = arith.constant 1.000000e+00 : f32
    %cst_6 = arith.constant 0.000000e+00 : f32
    %9 = vector.broadcast %cst : f32 to vector<1152x512xf32>
    %10 = vector.broadcast %cst_6 : f32 to vector<1152x512xf32>
    %11 = arith.select %8, %9, %10 : vector<1152x512xi1>, vector<1152x512xf32>
    %cst_7 = arith.constant dense<0.000000e+00> : vector<1152x128xf32>
    %12 = tpu.matmul %11, %3, %cst_7 {dimension_numbers = #tpu.dot_dimension_numbers<[1], [0], [0], [1], [0, 0, 1, 1], [], []>} : vector<1152x512xf32>, vector<512x128xf32>, vector<1152x128xf32> -> vector<1152x128xf32>
    %c0_8 = arith.constant 0 : index
    %c0_9 = arith.constant 0 : index
    %13 = vector.load %arg4[%c0_8, %c0_9] : memref<128x1xi32, #tpu.memory_space<vmem>>, vector<128x1xi32>
    %14 = tpu.iota {dimensions = array<i32: 1>} : vector<128x512xi32>
    %15 = vector.broadcast %13 : vector<128x1xi32> to vector<128x512xi32>
    %16 = arith.cmpi eq, %15, %14 : vector<128x512xi32>
    %cst_10 = arith.constant 1.000000e+00 : f32
    %cst_11 = arith.constant 0.000000e+00 : f32
    %17 = vector.broadcast %cst_10 : f32 to vector<128x512xf32>
    %18 = vector.broadcast %cst_11 : f32 to vector<128x512xf32>
    %19 = arith.select %16, %17, %18 : vector<128x512xi1>, vector<128x512xf32>
    %cst_12 = arith.constant dense<0.000000e+00> : vector<128x128xf32>
    %20 = tpu.matmul %19, %4, %cst_12 {dimension_numbers = #tpu.dot_dimension_numbers<[1], [0], [0], [1], [0, 0, 1, 1], [], []>} : vector<128x512xf32>, vector<512x128xf32>, vector<128x128xf32> -> vector<128x128xf32>
    %21 = vector.extract_strided_slice %12 {offsets = [0, 0], sizes = [128, 128], strides = [1, 1]} : vector<1152x128xf32> to vector<128x128xf32>
    %22 = vector.extract_strided_slice %12 {offsets = [128, 0], sizes = [512, 128], strides = [1, 1]} : vector<1152x128xf32> to vector<512x128xf32>
    %23 = vector.extract_strided_slice %12 {offsets = [640, 0], sizes = [512, 128], strides = [1, 1]} : vector<1152x128xf32> to vector<512x128xf32>
    %c0_13 = arith.constant 0 : index
    %c0_14 = arith.constant 0 : index
    %24 = vector.load %arg5[%c0_13, %c0_14] : memref<512x3xf32, #tpu.memory_space<vmem>>, vector<512x3xf32>
    %25 = vector.extract_strided_slice %24 {offsets = [0, 0], sizes = [512, 1], strides = [1, 1]} : vector<512x3xf32> to vector<512x1xf32>
    %26 = vector.extract_strided_slice %24 {offsets = [0, 1], sizes = [512, 1], strides = [1, 1]} : vector<512x3xf32> to vector<512x1xf32>
    %27 = vector.extract_strided_slice %24 {offsets = [0, 2], sizes = [512, 1], strides = [1, 1]} : vector<512x3xf32> to vector<512x1xf32>
    %28 = vector.extract_strided_slice %24 {offsets = [0, 2], sizes = [128, 1], strides = [1, 1]} : vector<512x3xf32> to vector<128x1xf32>
    %29 = tpu.concatenate %20, %20, %20, %20 in 0 : vector<128x128xf32>, vector<128x128xf32>, vector<128x128xf32>, vector<128x128xf32> -> vector<512x128xf32>
    %30 = arith.mulf %21, %20 : vector<128x128xf32>
    %cst_15 = arith.constant dense<0.000000e+00> : vector<128xf32>
    %31 = vector.multi_reduction <add>, %30, %cst_15 [1] : vector<128x128xf32> to vector<128xf32>
    %32 = vector.shape_cast %31 : vector<128xf32> to vector<128x1xf32>
    %cst_16 = arith.constant 0.000000e+00 : f32
    %33 = vector.broadcast %cst_16 : f32 to vector<128x1xf32>
    %34 = arith.minimumf %32, %33 : vector<128x1xf32>
    %35 = math.absf %32 : vector<128x1xf32>
    %cst_17 = arith.constant 0.000000e+00 : f32
    %36 = vector.broadcast %cst_17 : f32 to vector<128x1xf32>
    %37 = arith.subf %36, %35 : vector<128x1xf32>
    %38 = math.exp %37 : vector<128x1xf32>
    %cst_18 = arith.constant 1.000000e+00 : f32
    %39 = vector.broadcast %cst_18 : f32 to vector<128x1xf32>
    %40 = arith.addf %39, %38 : vector<128x1xf32>
    %41 = math.log %40 : vector<128x1xf32>
    %42 = arith.subf %34, %41 : vector<128x1xf32>
    %43 = arith.mulf %22, %29 : vector<512x128xf32>
    %cst_19 = arith.constant dense<0.000000e+00> : vector<512xf32>
    %44 = vector.multi_reduction <add>, %43, %cst_19 [1] : vector<512x128xf32> to vector<512xf32>
    %45 = vector.shape_cast %44 : vector<512xf32> to vector<512x1xf32>
    %46 = arith.mulf %23, %29 : vector<512x128xf32>
    %cst_20 = arith.constant dense<0.000000e+00> : vector<512xf32>
    %47 = vector.multi_reduction <add>, %46, %cst_20 [1] : vector<512x128xf32> to vector<512xf32>
    %48 = vector.shape_cast %47 : vector<512xf32> to vector<512x1xf32>
    %49 = arith.mulf %26, %48 : vector<512x1xf32>
    %cst_21 = arith.constant 0.000000e+00 : f32
    %50 = vector.broadcast %cst_21 : f32 to vector<512x1xf32>
    %51 = arith.subf %50, %49 : vector<512x1xf32>
    %cst_22 = arith.constant 0.000000e+00 : f32
    %52 = vector.broadcast %cst_22 : f32 to vector<512x1xf32>
    %53 = arith.minimumf %51, %52 : vector<512x1xf32>
    %54 = math.absf %51 : vector<512x1xf32>
    %cst_23 = arith.constant 0.000000e+00 : f32
    %55 = vector.broadcast %cst_23 : f32 to vector<512x1xf32>
    %56 = arith.subf %55, %54 : vector<512x1xf32>
    %57 = math.exp %56 : vector<512x1xf32>
    %cst_24 = arith.constant 1.000000e+00 : f32
    %58 = vector.broadcast %cst_24 : f32 to vector<512x1xf32>
    %59 = arith.addf %58, %57 : vector<512x1xf32>
    %60 = math.log %59 : vector<512x1xf32>
    %61 = arith.subf %53, %60 : vector<512x1xf32>
    %62 = arith.mulf %25, %45 : vector<512x1xf32>
    %cst_25 = arith.constant 0.000000e+00 : f32
    %63 = vector.broadcast %cst_25 : f32 to vector<512x1xf32>
    %64 = arith.minimumf %62, %63 : vector<512x1xf32>
    %65 = math.absf %62 : vector<512x1xf32>
    %cst_26 = arith.constant 0.000000e+00 : f32
    %66 = vector.broadcast %cst_26 : f32 to vector<512x1xf32>
    %67 = arith.subf %66, %65 : vector<512x1xf32>
    %68 = math.exp %67 : vector<512x1xf32>
    %cst_27 = arith.constant 1.000000e+00 : f32
    %69 = vector.broadcast %cst_27 : f32 to vector<512x1xf32>
    %70 = arith.addf %69, %68 : vector<512x1xf32>
    %71 = math.log %70 : vector<512x1xf32>
    %72 = arith.subf %64, %71 : vector<512x1xf32>
    %73 = arith.mulf %42, %28 : vector<128x1xf32>
    %74 = vector.shape_cast %73 : vector<128x1xf32> to vector<1x128x1xf32>
    %cst_28 = arith.constant dense<0.000000e+00> : vector<1xf32>
    %75 = vector.multi_reduction <add>, %74, %cst_28 [1, 2] : vector<1x128x1xf32> to vector<1xf32>
    %76 = vector.shape_cast %75 : vector<1xf32> to vector<1x1x1xf32>
    %77 = vector.extract %76[0, 0, 0] : f32 from vector<1x1x1xf32>
    %cst_29 = arith.constant 5.000000e+00 : f32
    %78 = arith.mulf %cst_29, %77 : f32
    %79 = arith.mulf %61, %27 : vector<512x1xf32>
    %80 = vector.shape_cast %79 : vector<512x1xf32> to vector<1x512x1xf32>
    %cst_30 = arith.constant dense<0.000000e+00> : vector<1xf32>
    %81 = vector.multi_reduction <add>, %80, %cst_30 [1, 2] : vector<1x512x1xf32> to vector<1xf32>
    %82 = vector.shape_cast %81 : vector<1xf32> to vector<1x1x1xf32>
    %83 = vector.extract %82[0, 0, 0] : f32 from vector<1x1x1xf32>
    %84 = arith.addf %78, %83 : f32
    %85 = arith.mulf %72, %27 : vector<512x1xf32>
    %86 = vector.shape_cast %85 : vector<512x1xf32> to vector<1x512x1xf32>
    %cst_31 = arith.constant dense<0.000000e+00> : vector<1xf32>
    %87 = vector.multi_reduction <add>, %86, %cst_31 [1, 2] : vector<1x512x1xf32> to vector<1xf32>
    %88 = vector.shape_cast %87 : vector<1xf32> to vector<1x1x1xf32>
    %89 = vector.extract %88[0, 0, 0] : f32 from vector<1x1x1xf32>
    %90 = arith.subf %84, %89 : f32
    %c0_32 = arith.constant 0 : index
    %c0_33 = arith.constant 0 : index
    %91 = vector.load %arg6[%c0_32, %c0_33] : memref<1x1xf32, #tpu.memory_space<vmem>>, vector<1x1xf32>
    %92 = vector.broadcast %90 : f32 to vector<1x1xf32>
    %93 = arith.addf %91, %92 : vector<1x1xf32>
    %c0_34 = arith.constant 0 : index
    %c0_35 = arith.constant 0 : index
    %94 = vector.load %arg6[%c0_34, %c0_35] : memref<1x1xf32, #tpu.memory_space<vmem>>, vector<1x1xf32>
    tpu.vector_store %arg6[%c0_34, %c0_35], %93 {strides = array<i32>} : memref<1x1xf32, #tpu.memory_space<vmem>>, vector<1x1xf32>,
    %c1_i32 = arith.constant 1 : i32
    %95 = arith.cmpi eq, %arg0, %c1_i32 : i32
    %96 = arith.extui %95 : i1 to i32
    %c0_i32_36 = arith.constant 0 : i32
    %97 = arith.cmpi ne, %96, %c0_i32_36 : i32
    scf.if %97 {
      %c0_37 = arith.constant 0 : index
      %c0_38 = arith.constant 0 : index
      %98 = vector.load %arg6[%c0_37, %c0_38] : memref<1x1xf32, #tpu.memory_space<vmem>>, vector<1x1xf32>
      %cst_39 = arith.constant 0.000000e+00 : f32
      %99 = vector.broadcast %cst_39 : f32 to vector<1x1xf32>
      %100 = arith.subf %99, %98 : vector<1x1xf32>
      %c0_40 = arith.constant 0 : index
      %c0_41 = arith.constant 0 : index
      %101 = vector.load %arg6[%c0_40, %c0_41] : memref<1x1xf32, #tpu.memory_space<vmem>>, vector<1x1xf32>
      tpu.vector_store %arg6[%c0_40, %c0_41], %100 {strides = array<i32>} : memref<1x1xf32, #tpu.memory_space<vmem>>, vector<1x1xf32>,
    } else {
    }
    return
  }
  func.func @transform_0(%arg0: i32) -> (i32, i32) {
    %c0_i32 = arith.constant 0 : i32
    %c0_i32_0 = arith.constant 0 : i32
    %c0_i32_1 = arith.constant 0 : i32
    return %c0_i32, %c0_i32_0 : i32, i32
  }
  func.func @transform_1(%arg0: i32) -> (i32, i32) {
    %c0_i32 = arith.constant 0 : i32
    %c0_i32_0 = arith.constant 0 : i32
    %c0_i32_1 = arith.constant 0 : i32
    return %c0_i32, %c0_i32_0 : i32, i32
  }
  func.func @transform_2(%arg0: i32) -> (i32, i32) {
    %c0_i32 = arith.constant 0 : i32
    %c0_i32_0 = arith.constant 0 : i32
    return %arg0, %c0_i32 : i32, i32
  }
  func.func @transform_3(%arg0: i32) -> (i32, i32) {
    %c0_i32 = arith.constant 0 : i32
    %c0_i32_0 = arith.constant 0 : i32
    return %arg0, %c0_i32 : i32, i32
  }
  func.func @transform_4(%arg0: i32) -> (i32, i32) {
    %c0_i32 = arith.constant 0 : i32
    %c0_i32_0 = arith.constant 0 : i32
    return %arg0, %c0_i32 : i32, i32
  }
  func.func @transform_5(%arg0: i32) -> (i32, i32) {
    %c0_i32 = arith.constant 0 : i32
    %c0_i32_0 = arith.constant 0 : i32
    %c0_i32_1 = arith.constant 0 : i32
    return %c0_i32, %c0_i32_0 : i32, i32
  }
}

</mosaic_0001>

<llo_original>
// kernel: tpu_custom_call.1
$region0: #{tpu_custom_call.1}
  #allocation0 [shape = 'u32[]', space=smem, size = 0x4, offset = 0x4, fixed_abs, tag = 'smem constant byte address 0x4 - core index']
  #allocation1 [shape = 'u32[144,128]{1,0:T(1,128)}', space=vmem, size = 0x12000, scoped, tag = 'internal scratch']
  %s0 = inlined_call_operand.vmem [shape: f32[512,128], index: 0, kind: input, shape index: {}]
  %s1 = inlined_call_operand.vmem [shape: f32[512,128], index: 1, kind: input, shape index: {}]
  %s2 = inlined_call_operand.vmem [shape: s32[2304,1], index: 2, kind: input, shape index: {}]
  %s3 = inlined_call_operand.vmem [shape: s32[256,1], index: 3, kind: input, shape index: {}]
  %s4 = inlined_call_operand.vmem [shape: f32[1024,3], index: 4, kind: input, shape index: {}]
  %s5 = inlined_call_operand.hbm [shape: f32[1,1], index: 5, kind: output, shape index: {}]
  %s6 = sld [smem:[#allocation0]]
  $region61: #{tpu_custom_call.1} parent=0
    _
  %s8 = ssub.s32 1, %s6
  %s9 = scalar_select 0, %s8, %s6
  $region1: #{tpu_custom_call.1} parent=0
    #allocation2 [shape = 'u8[512]{0}', space=vmem, size = 0x400, scoped, tag = 'output window, operand 0, single buffered']
    #allocation3 [shape = 's32[2]{0}', space=sflag, size = 0x8, scoped, tag = 'scoped memory for tpu_custom_call.1']
    %10 = vsyncpa [#allocation3], 0
    loop: start=0, step=1, limit=4
    $region2: #{tpu_custom_call.1} parent=1 // loop_pre_header
      _
    $region3: #{tpu_custom_call.1} parent=1 // loop_header
      %s12 = sphi 0, %s16
      %p13 = scmp.ge.s32.totalorder %s12, 4
      %s20 = sphi 0, %s20
      %s22 = sphi 0, %s20
      %s23 = sphi 0, %s22
      %s37 = sphi 0, %s23
      %s41 = sphi 0, %s41
      %s43 = sphi 0, %s41
      %s44 = sphi 0, %s43
      %s58 = sphi 0, %s44
      %s64 = sphi 0, %s66
      %s67 = sphi 0, %s64
      %s68 = sphi 0, %s67
      %s84 = sphi 0, %s68
      %s90 = sphi 0, %s92
      %s93 = sphi 0, %s90
      %s94 = sphi 0, %s93
      %s110 = sphi 0, %s94
      %s116 = sphi 0, %s118
      %s119 = sphi 0, %s116
      %s120 = sphi 0, %s119
      %s136 = sphi 0, %s120
      %s140 = sphi 0, %s140
      %s142 = sphi 0, %s140
      %s143 = sphi 0, %s142
      %s157 = sphi 0, %s143
    $region4: #{tpu_custom_call.1} parent=1 // loop_header_branch
      %15 = sbr.rel (%p13) target = $region8
    $region5: #{tpu_custom_call.1} parent=1 // loop_body
      %s17 = ssub.s32 %s12, 1
      %s18 = ssub.s32 %s12, 2
      %s19 = sadd.s32 %s12, 1
      %s21 = sadd.s32 %s20, 1
      %p24 = scmp.eq.s32.totalorder %s12, 1
      %p25 = scmp.ne.s32.totalorder %s20, %s22
      %p26 = scmp.eq.s32.totalorder %s12, 0
      %p27 = por %p25, %p26
      %p28 = scmp.ne.s32.totalorder %s20, %s22
      %p29 = scmp.eq.s32.totalorder %s17, 1
      %p30 = por %p28, %p29
      %p31 = scmp.ne.s32.totalorder %s22, %s23
      %p32 = scmp.eq.s32.totalorder %s17, 0
      %p33 = por %p31, %p32
      %p34 = scmp.ne.s32.totalorder %s22, %s23
      %p35 = scmp.eq.s32.totalorder %s18, 1
      %p36 = por %p34, %p35
      %p38 = scmp.ne.s32.totalorder %s23, %s37
      %p39 = scmp.eq.s32.totalorder %s18, 0
      %p40 = por %p38, %p39
      %s42 = sadd.s32 %s41, 1
      %p45 = scmp.eq.s32.totalorder %s12, 1
      %p46 = scmp.ne.s32.totalorder %s41, %s43
      %p47 = scmp.eq.s32.totalorder %s12, 0
      %p48 = por %p46, %p47
      %p49 = scmp.ne.s32.totalorder %s41, %s43
      %p50 = scmp.eq.s32.totalorder %s17, 1
      %p51 = por %p49, %p50
      %p52 = scmp.ne.s32.totalorder %s43, %s44
      %p53 = scmp.eq.s32.totalorder %s17, 0
      %p54 = por %p52, %p53
      %p55 = scmp.ne.s32.totalorder %s43, %s44
      %p56 = scmp.eq.s32.totalorder %s18, 1
      %p57 = por %p55, %p56
      %p59 = scmp.ne.s32.totalorder %s44, %s58
      %p60 = scmp.eq.s32.totalorder %s18, 0
      %p61 = por %p59, %p60
      %s62 = ssub.s32 %s12, %s19
      %p63 = scmp.eq.s32.totalorder %s62, 0
      %s65 = sadd.s32 %s64, 1
      %s66 = scalar_select %p63, %s64, %s65
      %p69 = pneg %p63
      %p70 = scmp.eq.s32.totalorder %s12, 1
      %p71 = por %p69, %p70
      %p72 = scmp.ne.s32.totalorder %s64, %s67
      %p73 = scmp.eq.s32.totalorder %s12, 0
      %p74 = por %p72, %p73
      %p75 = scmp.ne.s32.totalorder %s64, %s67
      %p76 = scmp.eq.s32.totalorder %s17, 1
      %p77 = por %p75, %p76
      %p78 = scmp.ne.s32.totalorder %s67, %s68
      %p79 = scmp.eq.s32.totalorder %s17, 0
      %p80 = por %p78, %p79
      %p81 = scmp.ne.s32.totalorder %s67, %s68
      %p82 = scmp.eq.s32.totalorder %s18, 1
      %p83 = por %p81, %p82
      %p85 = scmp.ne.s32.totalorder %s68, %s84
      %p86 = scmp.eq.s32.totalorder %s18, 0
      %p87 = por %p85, %p86
      %s88 = ssub.s32 %s12, %s19
      %p89 = scmp.eq.s32.totalorder %s88, 0
      %s91 = sadd.s32 %s90, 1
      %s92 = scalar_select %p89, %s90, %s91
      %p95 = pneg %p89
      %p96 = scmp.eq.s32.totalorder %s12, 1
      %p97 = por %p95, %p96
      %p98 = scmp.ne.s32.totalorder %s90, %s93
      %p99 = scmp.eq.s32.totalorder %s12, 0
      %p100 = por %p98, %p99
      %p101 = scmp.ne.s32.totalorder %s90, %s93
      %p102 = scmp.eq.s32.totalorder %s17, 1
      %p103 = por %p101, %p102
      %p104 = scmp.ne.s32.totalorder %s93, %s94
      %p105 = scmp.eq.s32.totalorder %s17, 0
      %p106 = por %p104, %p105
      %p107 = scmp.ne.s32.totalorder %s93, %s94
      %p108 = scmp.eq.s32.totalorder %s18, 1
      %p109 = por %p107, %p108
      %p111 = scmp.ne.s32.totalorder %s94, %s110
      %p112 = scmp.eq.s32.totalorder %s18, 0
      %p113 = por %p111, %p112
      %s114 = ssub.s32 %s12, %s19
      %p115 = scmp.eq.s32.totalorder %s114, 0
      %s117 = sadd.s32 %s116, 1
      %s118 = scalar_select %p115, %s116, %s117
      %p121 = pneg %p115
      %p122 = scmp.eq.s32.totalorder %s12, 1
      %p123 = por %p121, %p122
      %p124 = scmp.ne.s32.totalorder %s116, %s119
      %p125 = scmp.eq.s32.totalorder %s12, 0
      %p126 = por %p124, %p125
      %p127 = scmp.ne.s32.totalorder %s116, %s119
      %p128 = scmp.eq.s32.totalorder %s17, 1
      %p129 = por %p127, %p128
      %p130 = scmp.ne.s32.totalorder %s119, %s120
      %p131 = scmp.eq.s32.totalorder %s17, 0
      %p132 = por %p130, %p131
      %p133 = scmp.ne.s32.totalorder %s119, %s120
      %p134 = scmp.eq.s32.totalorder %s18, 1
      %p135 = por %p133, %p134
      %p137 = scmp.ne.s32.totalorder %s120, %s136
      %p138 = scmp.eq.s32.totalorder %s18, 0
      %p139 = por %p137, %p138
      %s141 = sadd.s32 %s140, 1
      %p144 = scmp.eq.s32.totalorder %s12, 1
      %p145 = scmp.ne.s32.totalorder %s140, %s142
      %p146 = scmp.eq.s32.totalorder %s12, 0
      %p147 = por %p145, %p146
      %p148 = scmp.ne.s32.totalorder %s140, %s142
      %p149 = scmp.eq.s32.totalorder %s17, 1
      %p150 = por %p148, %p149
      %p151 = scmp.ne.s32.totalorder %s142, %s143
      %p152 = scmp.eq.s32.totalorder %s17, 0
      %p153 = por %p151, %p152
      %p154 = scmp.ne.s32.totalorder %s142, %s143
      %p155 = scmp.eq.s32.totalorder %s18, 1
      %p156 = por %p154, %p155
      %p158 = scmp.ne.s32.totalorder %s143, %s157
      %p159 = scmp.eq.s32.totalorder %s18, 0
      %p160 = por %p158, %p159
      %p161 = scmp.le.s32.totalorder 1, %s12
      %p162 = scmp.lt.s32.totalorder %s12, 3
      %p163 = pnand %p161, %p162
      %p164 = pneg %p163
      // Predicated region
      $region9: #{tpu_custom_call.1} parent=5 // pred_check
        _
      $region10: #{tpu_custom_call.1} parent=5 // pred_check_branch
        %166 = sbr.rel (%p163) target = $region12
      $region11: #{tpu_custom_call.1} parent=5 // pred_region
        %s167 = ssub.s32 %s12, 1
        // Predicated region
        $region13: #{tpu_custom_call.1} parent=11 // pred_check
          %p168 = pneg %p33
        $region14: #{tpu_custom_call.1} parent=11 // pred_check_branch
          %170 = sbr.rel (%p168) target = $region16
        $region15: #{tpu_custom_call.1} parent=11 // pred_region
          _
        $region16: #{tpu_custom_call.1} parent=11 // pred_fallthru
          _
        // Predicated region
        $region17: #{tpu_custom_call.1} parent=11 // pred_check
          %p171 = pneg %p54
        $region18: #{tpu_custom_call.1} parent=11 // pred_check_branch
          %173 = sbr.rel (%p171) target = $region20
        $region19: #{tpu_custom_call.1} parent=11 // pred_region
          _
        $region20: #{tpu_custom_call.1} parent=11 // pred_fallthru
          _
      $region12: #{tpu_custom_call.1} parent=5 // pred_fallthru
        _
      %p174 = scmp.lt.s32.totalorder %s12, 2
      // Predicated region
      $region21: #{tpu_custom_call.1} parent=5 // pred_check
        %p175 = pneg %p174
      $region22: #{tpu_custom_call.1} parent=5 // pred_check_branch
        %177 = sbr.rel (%p175) target = $region24
      $region23: #{tpu_custom_call.1} parent=5 // pred_region
        // Predicated region
        $region25: #{tpu_custom_call.1} parent=23 // pred_check
          %p178 = pneg %p74
        $region26: #{tpu_custom_call.1} parent=23 // pred_check_branch
          %180 = sbr.rel (%p178) target = $region28
        $region27: #{tpu_custom_call.1} parent=23 // pred_region
          %s181 = smul.u32 144, %s12
          %p182 = scmp.lt.s32.totalorder %s181, 287
          %s183 = scalar_select %p182, %s181, 287
          %s184 = smul.addr %s183, 8
          %s185 = scalar_lea.vmem %s2, %s184
          %s186 = smul.u32 144, %s12
        $region28: #{tpu_custom_call.1} parent=23 // pred_fallthru
          _
        // Predicated region
        $region29: #{tpu_custom_call.1} parent=23 // pred_check
          %p187 = pneg %p100
        $region30: #{tpu_custom_call.1} parent=23 // pred_check_branch
          %189 = sbr.rel (%p187) target = $region32
        $region31: #{tpu_custom_call.1} parent=23 // pred_region
          %s190 = smul.u32 16, %s12
          %p191 = scmp.lt.s32.totalorder %s190, 31
          %s192 = scalar_select %p191, %s190, 31
          %s193 = smul.addr %s192, 8
          %s194 = scalar_lea.vmem %s3, %s193
          %s195 = smul.u32 16, %s12
        $region32: #{tpu_custom_call.1} parent=23 // pred_fallthru
          _
        // Predicated region
        $region33: #{tpu_custom_call.1} parent=23 // pred_check
          %p196 = pneg %p126
        $region34: #{tpu_custom_call.1} parent=23 // pred_check_branch
          %198 = sbr.rel (%p196) target = $region36
        $region35: #{tpu_custom_call.1} parent=23 // pred_region
          %s199 = smul.u32 64, %s12
          %p200 = scmp.lt.s32.totalorder %s199, 127
          %s201 = scalar_select %p200, %s199, 127
          %s202 = smul.addr %s201, 8
          %s203 = scalar_lea.vmem %s4, %s202
          %s204 = smul.u32 64, %s12
        $region36: #{tpu_custom_call.1} parent=23 // pred_fallthru
          _
      $region24: #{tpu_custom_call.1} parent=5 // pred_fallthru
        _
      %p205 = scmp.le.s32.totalorder 1, %s12
      %p206 = scmp.lt.s32.totalorder %s12, 3
      %p207 = pnand %p205, %p206
      %p208 = pneg %p207
      // Predicated region
      $region37: #{tpu_custom_call.1} parent=5 // pred_check
        _
      $region38: #{tpu_custom_call.1} parent=5 // pred_check_branch
        %210 = sbr.rel (%p207) target = $region40
      $region39: #{tpu_custom_call.1} parent=5 // pred_region
        %s211 = ssub.s32 %s12, 1
        %p212 = pneg %p33
        %p213 = pneg %p30
        %p214 = pneg %p54
        %p215 = pneg %p51
        %s216 = smul.u32 144, %s17
        %p217 = scmp.lt.s32.totalorder %s216, 287
        %s218 = scalar_select %p217, %s216, 287
        %s219 = smul.addr %s218, 8
        %s220 = scalar_lea.vmem %s2, %s219
        %p221 = pneg %p80
        %p222 = pneg %p77
        %s223 = smul.u32 16, %s17
        %p224 = scmp.lt.s32.totalorder %s223, 31
        %s225 = scalar_select %p224, %s223, 31
        %s226 = smul.addr %s225, 8
        %s227 = scalar_lea.vmem %s3, %s226
        %p228 = pneg %p106
        %p229 = pneg %p103
        %s230 = smul.u32 64, %s17
        %p231 = scmp.lt.s32.totalorder %s230, 127
        %s232 = scalar_select %p231, %s230, 127
        %s233 = smul.addr %s232, 8
        %s234 = scalar_lea.vmem %s4, %s233
        %p235 = pneg %p132
        %p236 = pneg %p129
        %p237 = pneg %p153
        %p238 = pneg %p150
        %s239 = smul.u32 144, %s17
        %p240 = scmp.lt.s32.totalorder %s239, 287
        %s241 = scalar_select %p240, %s239, 287
        %s242 = smul.addr %s241, 8
        %s243 = scalar_lea.vmem %s2, %s242
        %s244 = smul.u32 144, %s17
        %s245 = smul.u32 16, %s17
        %p246 = scmp.lt.s32.totalorder %s245, 31
        %s247 = scalar_select %p246, %s245, 31
        %s248 = smul.addr %s247, 8
        %s249 = scalar_lea.vmem %s3, %s248
        %s250 = smul.u32 16, %s17
        %s251 = smul.u32 64, %s17
        %p252 = scmp.lt.s32.totalorder %s251, 127
        %s253 = scalar_select %p252, %s251, 127
        %s254 = smul.addr %s253, 8
        %s255 = scalar_lea.vmem %s4, %s254
        %s256 = smul.u32 64, %s17
        %p257 = scmp.eq.s32.totalorder %s17, 0
        // Predicated region
        $region41: #{tpu_custom_call.1} parent=39 // pred_check
          %p258 = pneg %p257
        $region42: #{tpu_custom_call.1} parent=39 // pred_check_branch
          %260 = sbr.rel (%p258) target = $region44
        $region43: #{tpu_custom_call.1} parent=39 // pred_region
          %vm261 = vcmask 0
          %262 = vst.msk [vmem:[#allocation2] sm:$0x1] %vm261, 0.0
        $region44: #{tpu_custom_call.1} parent=39 // pred_fallthru
          _
        %v263 = vld [vmem:[%s0] sm:$0xff]
        %v264 = vld [vmem:[%s0 + $0x8] sm:$0xff]
        %v265 = vld [vmem:[%s0 + $0x10] sm:$0xff]
        %v266 = vld [vmem:[%s0 + $0x18] sm:$0xff]
        %v267 = vld [vmem:[%s0 + $0x20] sm:$0xff]
        %v268 = vld [vmem:[%s0 + $0x28] sm:$0xff]
        %v269 = vld [vmem:[%s0 + $0x30] sm:$0xff]
        %v270 = vld [vmem:[%s0 + $0x38] sm:$0xff]
        %v271 = vld [vmem:[%s0 + $0x40] sm:$0xff]
        %v272 = vld [vmem:[%s0 + $0x48] sm:$0xff]
        %v273 = vld [vmem:[%s0 + $0x50] sm:$0xff]
        %v274 = vld [vmem:[%s0 + $0x58] sm:$0xff]
        %v275 = vld [vmem:[%s0 + $0x60] sm:$0xff]
        %v276 = vld [vmem:[%s0 + $0x68] sm:$0xff]
        %v277 = vld [vmem:[%s0 + $0x70] sm:$0xff]
        %v278 = vld [vmem:[%s0 + $0x78] sm:$0xff]
        %v279 = vld [vmem:[%s0 + $0x80] sm:$0xff]
        %v280 = vld [vmem:[%s0 + $0x88] sm:$0xff]
        %v281 = vld [vmem:[%s0 + $0x90] sm:$0xff]
        %v282 = vld [vmem:[%s0 + $0x98] sm:$0xff]
        %v283 = vld [vmem:[%s0 + $0xa0] sm:$0xff]
        %v284 = vld [vmem:[%s0 + $0xa8] sm:$0xff]
        %v285 = vld [vmem:[%s0 + $0xb0] sm:$0xff]
        %v286 = vld [vmem:[%s0 + $0xb8] sm:$0xff]
        %v287 = vld [vmem:[%s0 + $0xc0] sm:$0xff]
        %v288 = vld [vmem:[%s0 + $0xc8] sm:$0xff]
        %v289 = vld [vmem:[%s0 + $0xd0] sm:$0xff]
        %v290 = vld [vmem:[%s0 + $0xd8] sm:$0xff]
        %v291 = vld [vmem:[%s0 + $0xe0] sm:$0xff]
        %v292 = vld [vmem:[%s0 + $0xe8] sm:$0xff]
        %v293 = vld [vmem:[%s0 + $0xf0] sm:$0xff]
        %v294 = vld [vmem:[%s0 + $0xf8] sm:$0xff]
        %v295 = vld [vmem:[%s0 + $0x100] sm:$0xff]
        %v296 = vld [vmem:[%s0 + $0x108] sm:$0xff]
        %v297 = vld [vmem:[%s0 + $0x110] sm:$0xff]
        %v298 = vld [vmem:[%s0 + $0x118] sm:$0xff]
        %v299 = vld [vmem:[%s0 + $0x120] sm:$0xff]
        %v300 = vld [vmem:[%s0 + $0x128] sm:$0xff]
        %v301 = vld [vmem:[%s0 + $0x130] sm:$0xff]
        %v302 = vld [vmem:[%s0 + $0x138] sm:$0xff]
        %v303 = vld [vmem:[%s0 + $0x140] sm:$0xff]
        %v304 = vld [vmem:[%s0 + $0x148] sm:$0xff]
        %v305 = vld [vmem:[%s0 + $0x150] sm:$0xff]
        %v306 = vld [vmem:[%s0 + $0x158] sm:$0xff]
        %v307 = vld [vmem:[%s0 + $0x160] sm:$0xff]
        %v308 = vld [vmem:[%s0 + $0x168] sm:$0xff]
        %v309 = vld [vmem:[%s0 + $0x170] sm:$0xff]
        %v310 = vld [vmem:[%s0 + $0x178] sm:$0xff]
        %v311 = vld [vmem:[%s0 + $0x180] sm:$0xff]
        %v312 = vld [vmem:[%s0 + $0x188] sm:$0xff]
        %v313 = vld [vmem:[%s0 + $0x190] sm:$0xff]
        %v314 = vld [vmem:[%s0 + $0x198] sm:$0xff]
        %v315 = vld [vmem:[%s0 + $0x1a0] sm:$0xff]
        %v316 = vld [vmem:[%s0 + $0x1a8] sm:$0xff]
        %v317 = vld [vmem:[%s0 + $0x1b0] sm:$0xff]
        %v318 = vld [vmem:[%s0 + $0x1b8] sm:$0xff]
        %v319 = vld [vmem:[%s0 + $0x1c0] sm:$0xff]
        %v320 = vld [vmem:[%s0 + $0x1c8] sm:$0xff]
        %v321 = vld [vmem:[%s0 + $0x1d0] sm:$0xff]
        %v322 = vld [vmem:[%s0 + $0x1d8] sm:$0xff]
        %v323 = vld [vmem:[%s0 + $0x1e0] sm:$0xff]
        %v324 = vld [vmem:[%s0 + $0x1e8] sm:$0xff]
        %v325 = vld [vmem:[%s0 + $0x1f0] sm:$0xff]
        %v326 = vld [vmem:[%s0 + $0x1f8] sm:$0xff]
        %v327 = vld [vmem:[%s1] sm:$0xff]
        %v328 = vld [vmem:[%s1 + $0x8] sm:$0xff]
        %v329 = vld [vmem:[%s1 + $0x10] sm:$0xff]
        %v330 = vld [vmem:[%s1 + $0x18] sm:$0xff]
        %v331 = vld [vmem:[%s1 + $0x20] sm:$0xff]
        %v332 = vld [vmem:[%s1 + $0x28] sm:$0xff]
        %v333 = vld [vmem:[%s1 + $0x30] sm:$0xff]
        %v334 = vld [vmem:[%s1 + $0x38] sm:$0xff]
        %v335 = vld [vmem:[%s1 + $0x40] sm:$0xff]
        %v336 = vld [vmem:[%s1 + $0x48] sm:$0xff]
        %v337 = vld [vmem:[%s1 + $0x50] sm:$0xff]
        %v338 = vld [vmem:[%s1 + $0x58] sm:$0xff]
        %v339 = vld [vmem:[%s1 + $0x60] sm:$0xff]
        %v340 = vld [vmem:[%s1 + $0x68] sm:$0xff]
        %v341 = vld [vmem:[%s1 + $0x70] sm:$0xff]
        %v342 = vld [vmem:[%s1 + $0x78] sm:$0xff]
        %v343 = vld [vmem:[%s1 + $0x80] sm:$0xff]
        %v344 = vld [vmem:[%s1 + $0x88] sm:$0xff]
        %v345 = vld [vmem:[%s1 + $0x90] sm:$0xff]
        %v346 = vld [vmem:[%s1 + $0x98] sm:$0xff]
        %v347 = vld [vmem:[%s1 + $0xa0] sm:$0xff]
        %v348 = vld [vmem:[%s1 + $0xa8] sm:$0xff]
        %v349 = vld [vmem:[%s1 + $0xb0] sm:$0xff]
        %v350 = vld [vmem:[%s1 + $0xb8] sm:$0xff]
        %v351 = vld [vmem:[%s1 + $0xc0] sm:$0xff]
        %v352 = vld [vmem:[%s1 + $0xc8] sm:$0xff]
        %v353 = vld [vmem:[%s1 + $0xd0] sm:$0xff]
        %v354 = vld [vmem:[%s1 + $0xd8] sm:$0xff]
        %v355 = vld [vmem:[%s1 + $0xe0] sm:$0xff]
        %v356 = vld [vmem:[%s1 + $0xe8] sm:$0xff]
        %v357 = vld [vmem:[%s1 + $0xf0] sm:$0xff]
        %v358 = vld [vmem:[%s1 + $0xf8] sm:$0xff]
        %v359 = vld [vmem:[%s1 + $0x100] sm:$0xff]
        %v360 = vld [vmem:[%s1 + $0x108] sm:$0xff]
        %v361 = vld [vmem:[%s1 + $0x110] sm:$0xff]
        %v362 = vld [vmem:[%s1 + $0x118] sm:$0xff]
        %v363 = vld [vmem:[%s1 + $0x120] sm:$0xff]
        %v364 = vld [vmem:[%s1 + $0x128] sm:$0xff]
        %v365 = vld [vmem:[%s1 + $0x130] sm:$0xff]
        %v366 = vld [vmem:[%s1 + $0x138] sm:$0xff]
        %v367 = vld [vmem:[%s1 + $0x140] sm:$0xff]
        %v368 = vld [vmem:[%s1 + $0x148] sm:$0xff]
        %v369 = vld [vmem:[%s1 + $0x150] sm:$0xff]
        %v370 = vld [vmem:[%s1 + $0x158] sm:$0xff]
        %v371 = vld [vmem:[%s1 + $0x160] sm:$0xff]
        %v372 = vld [vmem:[%s1 + $0x168] sm:$0xff]
        %v373 = vld [vmem:[%s1 + $0x170] sm:$0xff]
        %v374 = vld [vmem:[%s1 + $0x178] sm:$0xff]
        %v375 = vld [vmem:[%s1 + $0x180] sm:$0xff]
        %v376 = vld [vmem:[%s1 + $0x188] sm:$0xff]
        %v377 = vld [vmem:[%s1 + $0x190] sm:$0xff]
        %v378 = vld [vmem:[%s1 + $0x198] sm:$0xff]
        %v379 = vld [vmem:[%s1 + $0x1a0] sm:$0xff]
        %v380 = vld [vmem:[%s1 + $0x1a8] sm:$0xff]
        %v381 = vld [vmem:[%s1 + $0x1b0] sm:$0xff]
        %v382 = vld [vmem:[%s1 + $0x1b8] sm:$0xff]
        %v383 = vld [vmem:[%s1 + $0x1c0] sm:$0xff]
        %v384 = vld [vmem:[%s1 + $0x1c8] sm:$0xff]
        %v385 = vld [vmem:[%s1 + $0x1d0] sm:$0xff]
        %v386 = vld [vmem:[%s1 + $0x1d8] sm:$0xff]
        %v387 = vld [vmem:[%s1 + $0x1e0] sm:$0xff]
        %v388 = vld [vmem:[%s1 + $0x1e8] sm:$0xff]
        %v389 = vld [vmem:[%s1 + $0x1f0] sm:$0xff]
        %v390 = vld [vmem:[%s1 + $0x1f8] sm:$0xff]
        %v391 = vld [vmem:[%s243] sm:$0xff]
        %v392 = vld [vmem:[%s243 + $0x8] sm:$0xff]
        %v393 = vld [vmem:[%s243 + $0x10] sm:$0xff]
        %v394 = vld [vmem:[%s243 + $0x18] sm:$0xff]
        %v395 = vld [vmem:[%s243 + $0x20] sm:$0xff]
        %v396 = vld [vmem:[%s243 + $0x28] sm:$0xff]
        %v397 = vld [vmem:[%s243 + $0x30] sm:$0xff]
        %v398 = vld [vmem:[%s243 + $0x38] sm:$0xff]
        %v399 = vld [vmem:[%s243 + $0x40] sm:$0xff]
        %v400 = vld [vmem:[%s243 + $0x48] sm:$0xff]
        %v401 = vld [vmem:[%s243 + $0x50] sm:$0xff]
        %v402 = vld [vmem:[%s243 + $0x58] sm:$0xff]
        %v403 = vld [vmem:[%s243 + $0x60] sm:$0xff]
        %v404 = vld [vmem:[%s243 + $0x68] sm:$0xff]
        %v405 = vld [vmem:[%s243 + $0x70] sm:$0xff]
        %v406 = vld [vmem:[%s243 + $0x78] sm:$0xff]
        %v407 = vld [vmem:[%s243 + $0x80] sm:$0xff]
        %v408 = vld [vmem:[%s243 + $0x88] sm:$0xff]
        %v409 = vld [vmem:[%s243 + $0x90] sm:$0xff]
        %v410 = vld [vmem:[%s243 + $0x98] sm:$0xff]
        %v411 = vld [vmem:[%s243 + $0xa0] sm:$0xff]
        %v412 = vld [vmem:[%s243 + $0xa8] sm:$0xff]
        %v413 = vld [vmem:[%s243 + $0xb0] sm:$0xff]
        %v414 = vld [vmem:[%s243 + $0xb8] sm:$0xff]
        %v415 = vld [vmem:[%s243 + $0xc0] sm:$0xff]
        %v416 = vld [vmem:[%s243 + $0xc8] sm:$0xff]
        %v417 = vld [vmem:[%s243 + $0xd0] sm:$0xff]
        %v418 = vld [vmem:[%s243 + $0xd8] sm:$0xff]
        %v419 = vld [vmem:[%s243 + $0xe0] sm:$0xff]
        %v420 = vld [vmem:[%s243 + $0xe8] sm:$0xff]
        %v421 = vld [vmem:[%s243 + $0xf0] sm:$0xff]
        %v422 = vld [vmem:[%s243 + $0xf8] sm:$0xff]
        %v423 = vld [vmem:[%s243 + $0x100] sm:$0xff]
        %v424 = vld [vmem:[%s243 + $0x108] sm:$0xff]
        %v425 = vld [vmem:[%s243 + $0x110] sm:$0xff]
        %v426 = vld [vmem:[%s243 + $0x118] sm:$0xff]
        %v427 = vld [vmem:[%s243 + $0x120] sm:$0xff]
        %v428 = vld [vmem:[%s243 + $0x128] sm:$0xff]
        %v429 = vld [vmem:[%s243 + $0x130] sm:$0xff]
        %v430 = vld [vmem:[%s243 + $0x138] sm:$0xff]
        %v431 = vld [vmem:[%s243 + $0x140] sm:$0xff]
        %v432 = vld [vmem:[%s243 + $0x148] sm:$0xff]
        %v433 = vld [vmem:[%s243 + $0x150] sm:$0xff]
        %v434 = vld [vmem:[%s243 + $0x158] sm:$0xff]
        %v435 = vld [vmem:[%s243 + $0x160] sm:$0xff]
        %v436 = vld [vmem:[%s243 + $0x168] sm:$0xff]
        %v437 = vld [vmem:[%s243 + $0x170] sm:$0xff]
        %v438 = vld [vmem:[%s243 + $0x178] sm:$0xff]
        %v439 = vld [vmem:[%s243 + $0x180] sm:$0xff]
        %v440 = vld [vmem:[%s243 + $0x188] sm:$0xff]
        %v441 = vld [vmem:[%s243 + $0x190] sm:$0xff]
        %v442 = vld [vmem:[%s243 + $0x198] sm:$0xff]
        %v443 = vld [vmem:[%s243 + $0x1a0] sm:$0xff]
        %v444 = vld [vmem:[%s243 + $0x1a8] sm:$0xff]
        %v445 = vld [vmem:[%s243 + $0x1b0] sm:$0xff]
        %v446 = vld [vmem:[%s243 + $0x1b8] sm:$0xff]
        %v447 = vld [vmem:[%s243 + $0x1c0] sm:$0xff]
        %v448 = vld [vmem:[%s243 + $0x1c8] sm:$0xff]
        %v449 = vld [vmem:[%s243 + $0x1d0] sm:$0xff]
        %v450 = vld [vmem:[%s243 + $0x1d8] sm:$0xff]
        %v451 = vld [vmem:[%s243 + $0x1e0] sm:$0xff]
        %v452 = vld [vmem:[%s243 + $0x1e8] sm:$0xff]
        %v453 = vld [vmem:[%s243 + $0x1f0] sm:$0xff]
        %v454 = vld [vmem:[%s243 + $0x1f8] sm:$0xff]
        %v455 = vld [vmem:[%s243 + $0x200] sm:$0xff]
        %v456 = vld [vmem:[%s243 + $0x208] sm:$0xff]
        %v457 = vld [vmem:[%s243 + $0x210] sm:$0xff]
        %v458 = vld [vmem:[%s243 + $0x218] sm:$0xff]
        %v459 = vld [vmem:[%s243 + $0x220] sm:$0xff]
        %v460 = vld [vmem:[%s243 + $0x228] sm:$0xff]
        %v461 = vld [vmem:[%s243 + $0x230] sm:$0xff]
        %v462 = vld [vmem:[%s243 + $0x238] sm:$0xff]
        %v463 = vld [vmem:[%s243 + $0x240] sm:$0xff]
        %v464 = vld [vmem:[%s243 + $0x248] sm:$0xff]
        %v465 = vld [vmem:[%s243 + $0x250] sm:$0xff]
        %v466 = vld [vmem:[%s243 + $0x258] sm:$0xff]
        %v467 = vld [vmem:[%s243 + $0x260] sm:$0xff]
        %v468 = vld [vmem:[%s243 + $0x268] sm:$0xff]
        %v469 = vld [vmem:[%s243 + $0x270] sm:$0xff]
        %v470 = vld [vmem:[%s243 + $0x278] sm:$0xff]
        %v471 = vld [vmem:[%s243 + $0x280] sm:$0xff]
        %v472 = vld [vmem:[%s243 + $0x288] sm:$0xff]
        %v473 = vld [vmem:[%s243 + $0x290] sm:$0xff]
        %v474 = vld [vmem:[%s243 + $0x298] sm:$0xff]
        %v475 = vld [vmem:[%s243 + $0x2a0] sm:$0xff]
        %v476 = vld [vmem:[%s243 + $0x2a8] sm:$0xff]
        %v477 = vld [vmem:[%s243 + $0x2b0] sm:$0xff]
        %v478 = vld [vmem:[%s243 + $0x2b8] sm:$0xff]
        %v479 = vld [vmem:[%s243 + $0x2c0] sm:$0xff]
        %v480 = vld [vmem:[%s243 + $0x2c8] sm:$0xff]
        %v481 = vld [vmem:[%s243 + $0x2d0] sm:$0xff]
        %v482 = vld [vmem:[%s243 + $0x2d8] sm:$0xff]
        %v483 = vld [vmem:[%s243 + $0x2e0] sm:$0xff]
        %v484 = vld [vmem:[%s243 + $0x2e8] sm:$0xff]
        %v485 = vld [vmem:[%s243 + $0x2f0] sm:$0xff]
        %v486 = vld [vmem:[%s243 + $0x2f8] sm:$0xff]
        %v487 = vld [vmem:[%s243 + $0x300] sm:$0xff]
        %v488 = vld [vmem:[%s243 + $0x308] sm:$0xff]
        %v489 = vld [vmem:[%s243 + $0x310] sm:$0xff]
        %v490 = vld [vmem:[%s243 + $0x318] sm:$0xff]
        %v491 = vld [vmem:[%s243 + $0x320] sm:$0xff]
        %v492 = vld [vmem:[%s243 + $0x328] sm:$0xff]
        %v493 = vld [vmem:[%s243 + $0x330] sm:$0xff]
        %v494 = vld [vmem:[%s243 + $0x338] sm:$0xff]
        %v495 = vld [vmem:[%s243 + $0x340] sm:$0xff]
        %v496 = vld [vmem:[%s243 + $0x348] sm:$0xff]
        %v497 = vld [vmem:[%s243 + $0x350] sm:$0xff]
        %v498 = vld [vmem:[%s243 + $0x358] sm:$0xff]
        %v499 = vld [vmem:[%s243 + $0x360] sm:$0xff]
        %v500 = vld [vmem:[%s243 + $0x368] sm:$0xff]
        %v501 = vld [vmem:[%s243 + $0x370] sm:$0xff]
        %v502 = vld [vmem:[%s243 + $0x378] sm:$0xff]
        %v503 = vld [vmem:[%s243 + $0x380] sm:$0xff]
        %v504 = vld [vmem:[%s243 + $0x388] sm:$0xff]
        %v505 = vld [vmem:[%s243 + $0x390] sm:$0xff]
        %v506 = vld [vmem:[%s243 + $0x398] sm:$0xff]
        %v507 = vld [vmem:[%s243 + $0x3a0] sm:$0xff]
        %v508 = vld [vmem:[%s243 + $0x3a8] sm:$0xff]
        %v509 = vld [vmem:[%s243 + $0x3b0] sm:$0xff]
        %v510 = vld [vmem:[%s243 + $0x3b8] sm:$0xff]
        %v511 = vld [vmem:[%s243 + $0x3c0] sm:$0xff]
        %v512 = vld [vmem:[%s243 + $0x3c8] sm:$0xff]
        %v513 = vld [vmem:[%s243 + $0x3d0] sm:$0xff]
        %v514 = vld [vmem:[%s243 + $0x3d8] sm:$0xff]
        %v515 = vld [vmem:[%s243 + $0x3e0] sm:$0xff]
        %v516 = vld [vmem:[%s243 + $0x3e8] sm:$0xff]
        %v517 = vld [vmem:[%s243 + $0x3f0] sm:$0xff]
        %v518 = vld [vmem:[%s243 + $0x3f8] sm:$0xff]
        %v519 = vld [vmem:[%s243 + $0x400] sm:$0xff]
        %v520 = vld [vmem:[%s243 + $0x408] sm:$0xff]
        %v521 = vld [vmem:[%s243 + $0x410] sm:$0xff]
        %v522 = vld [vmem:[%s243 + $0x418] sm:$0xff]
        %v523 = vld [vmem:[%s243 + $0x420] sm:$0xff]
        %v524 = vld [vmem:[%s243 + $0x428] sm:$0xff]
        %v525 = vld [vmem:[%s243 + $0x430] sm:$0xff]
        %v526 = vld [vmem:[%s243 + $0x438] sm:$0xff]
        %v527 = vld [vmem:[%s243 + $0x440] sm:$0xff]
        %v528 = vld [vmem:[%s243 + $0x448] sm:$0xff]
        %v529 = vld [vmem:[%s243 + $0x450] sm:$0xff]
        %v530 = vld [vmem:[%s243 + $0x458] sm:$0xff]
        %v531 = vld [vmem:[%s243 + $0x460] sm:$0xff]
        %v532 = vld [vmem:[%s243 + $0x468] sm:$0xff]
        %v533 = vld [vmem:[%s243 + $0x470] sm:$0xff]
        %v534 = vld [vmem:[%s243 + $0x478] sm:$0xff]
        %v535 = vlaneseq
        %v536 = vand.u32 %v535, 127
        %v537 = vadd.s32 %v536, 128
        %v538 = vadd.s32 %v536, 256
        %v539 = vadd.s32 %v536, 384
        %540 = vset.pattern.permute.xlu0 0
        %541 = vperm.xlu0 %540, %v391
        %v542 = vpop.permute.xlu0 %541
        %543 = vset.pattern.permute.xlu0 0
        %544 = vperm.xlu0 %543, %v392
        %v545 = vpop.permute.xlu0 %544
        %546 = vset.pattern.permute.xlu0 0
        %547 = vperm.xlu0 %546, %v393
        %v548 = vpop.permute.xlu0 %547
        %549 = vset.pattern.permute.xlu0 0
        %550 = vperm.xlu0 %549, %v394
        %v551 = vpop.permute.xlu0 %550
        %552 = vset.pattern.permute.xlu0 0
        %553 = vperm.xlu0 %552, %v395
        %v554 = vpop.permute.xlu0 %553
        %555 = vset.pattern.permute.xlu0 0
        %556 = vperm.xlu0 %555, %v396
        %v557 = vpop.permute.xlu0 %556
        %558 = vset.pattern.permute.xlu0 0
        %559 = vperm.xlu0 %558, %v397
        %v560 = vpop.permute.xlu0 %559
        %561 = vset.pattern.permute.xlu0 0
        %562 = vperm.xlu0 %561, %v398
        %v563 = vpop.permute.xlu0 %562
        %564 = vset.pattern.permute.xlu0 0
        %565 = vperm.xlu0 %564, %v399
        %v566 = vpop.permute.xlu0 %565
        %567 = vset.pattern.permute.xlu0 0
        %568 = vperm.xlu0 %567, %v400
        %v569 = vpop.permute.xlu0 %568
        %570 = vset.pattern.permute.xlu0 0
        %571 = vperm.xlu0 %570, %v401
        %v572 = vpop.permute.xlu0 %571
        %573 = vset.pattern.permute.xlu0 0
        %574 = vperm.xlu0 %573, %v402
        %v575 = vpop.permute.xlu0 %574
        %576 = vset.pattern.permute.xlu0 0
        %577 = vperm.xlu0 %576, %v403
        %v578 = vpop.permute.xlu0 %577
        %579 = vset.pattern.permute.xlu0 0
        %580 = vperm.xlu0 %579, %v404
        %v581 = vpop.permute.xlu0 %580
        %582 = vset.pattern.permute.xlu0 0
        %583 = vperm.xlu0 %582, %v405
        %v584 = vpop.permute.xlu0 %583
        %585 = vset.pattern.permute.xlu0 0
        %586 = vperm.xlu0 %585, %v406
        %v587 = vpop.permute.xlu0 %586
        %588 = vset.pattern.permute.xlu0 0
        %589 = vperm.xlu0 %588, %v407
        %v590 = vpop.permute.xlu0 %589
        %591 = vset.pattern.permute.xlu0 0
        %592 = vperm.xlu0 %591, %v408
        %v593 = vpop.permute.xlu0 %592
        %594 = vset.pattern.permute.xlu0 0
        %595 = vperm.xlu0 %594, %v409
        %v596 = vpop.permute.xlu0 %595
        %597 = vset.pattern.permute.xlu0 0
        %598 = vperm.xlu0 %597, %v410
        %v599 = vpop.permute.xlu0 %598
        %600 = vset.pattern.permute.xlu0 0
        %601 = vperm.xlu0 %600, %v411
        %v602 = vpop.permute.xlu0 %601
        %603 = vset.pattern.permute.xlu0 0
        %604 = vperm.xlu0 %603, %v412
        %v605 = vpop.permute.xlu0 %604
        %606 = vset.pattern.permute.xlu0 0
        %607 = vperm.xlu0 %606, %v413
        %v608 = vpop.permute.xlu0 %607
        %609 = vset.pattern.permute.xlu0 0
        %610 = vperm.xlu0 %609, %v414
        %v611 = vpop.permute.xlu0 %610
        %612 = vset.pattern.permute.xlu0 0
        %613 = vperm.xlu0 %612, %v415
        %v614 = vpop.permute.xlu0 %613
        %615 = vset.pattern.permute.xlu0 0
        %616 = vperm.xlu0 %615, %v416
        %v617 = vpop.permute.xlu0 %616
        %618 = vset.pattern.permute.xlu0 0
        %619 = vperm.xlu0 %618, %v417
        %v620 = vpop.permute.xlu0 %619
        %621 = vset.pattern.permute.xlu0 0
        %622 = vperm.xlu0 %621, %v418
        %v623 = vpop.permute.xlu0 %622
        %624 = vset.pattern.permute.xlu0 0
        %625 = vperm.xlu0 %624, %v419
        %v626 = vpop.permute.xlu0 %625
        %627 = vset.pattern.permute.xlu0 0
        %628 = vperm.xlu0 %627, %v420
        %v629 = vpop.permute.xlu0 %628
        %630 = vset.pattern.permute.xlu0 0
        %631 = vperm.xlu0 %630, %v421
        %v632 = vpop.permute.xlu0 %631
        %633 = vset.pattern.permute.xlu0 0
        %634 = vperm.xlu0 %633, %v422
        %v635 = vpop.permute.xlu0 %634
        %636 = vset.pattern.permute.xlu0 0
        %637 = vperm.xlu0 %636, %v423
        %v638 = vpop.permute.xlu0 %637
        %639 = vset.pattern.permute.xlu0 0
        %640 = vperm.xlu0 %639, %v424
        %v641 = vpop.permute.xlu0 %640
        %642 = vset.pattern.permute.xlu0 0
        %643 = vperm.xlu0 %642, %v425
        %v644 = vpop.permute.xlu0 %643
        %645 = vset.pattern.permute.xlu0 0
        %646 = vperm.xlu0 %645, %v426
        %v647 = vpop.permute.xlu0 %646
        %648 = vset.pattern.permute.xlu0 0
        %649 = vperm.xlu0 %648, %v427
        %v650 = vpop.permute.xlu0 %649
        %651 = vset.pattern.permute.xlu0 0
        %652 = vperm.xlu0 %651, %v428
        %v653 = vpop.permute.xlu0 %652
        %654 = vset.pattern.permute.xlu0 0
        %655 = vperm.xlu0 %654, %v429
        %v656 = vpop.permute.xlu0 %655
        %657 = vset.pattern.permute.xlu0 0
        %658 = vperm.xlu0 %657, %v430
        %v659 = vpop.permute.xlu0 %658
        %660 = vset.pattern.permute.xlu0 0
        %661 = vperm.xlu0 %660, %v431
        %v662 = vpop.permute.xlu0 %661
        %663 = vset.pattern.permute.xlu0 0
        %664 = vperm.xlu0 %663, %v432
        %v665 = vpop.permute.xlu0 %664
        %666 = vset.pattern.permute.xlu0 0
        %667 = vperm.xlu0 %666, %v433
        %v668 = vpop.permute.xlu0 %667
        %669 = vset.pattern.permute.xlu0 0
        %670 = vperm.xlu0 %669, %v434
        %v671 = vpop.permute.xlu0 %670
        %672 = vset.pattern.permute.xlu0 0
        %673 = vperm.xlu0 %672, %v435
        %v674 = vpop.permute.xlu0 %673
        %675 = vset.pattern.permute.xlu0 0
        %676 = vperm.xlu0 %675, %v436
        %v677 = vpop.permute.xlu0 %676
        %678 = vset.pattern.permute.xlu0 0
        %679 = vperm.xlu0 %678, %v437
        %v680 = vpop.permute.xlu0 %679
        %681 = vset.pattern.permute.xlu0 0
        %682 = vperm.xlu0 %681, %v438
        %v683 = vpop.permute.xlu0 %682
        %684 = vset.pattern.permute.xlu0 0
        %685 = vperm.xlu0 %684, %v439
        %v686 = vpop.permute.xlu0 %685
        %687 = vset.pattern.permute.xlu0 0
        %688 = vperm.xlu0 %687, %v440
        %v689 = vpop.permute.xlu0 %688
        %690 = vset.pattern.permute.xlu0 0
        %691 = vperm.xlu0 %690, %v441
        %v692 = vpop.permute.xlu0 %691
        %693 = vset.pattern.permute.xlu0 0
        %694 = vperm.xlu0 %693, %v442
        %v695 = vpop.permute.xlu0 %694
        %696 = vset.pattern.permute.xlu0 0
        %697 = vperm.xlu0 %696, %v443
        %v698 = vpop.permute.xlu0 %697
        %699 = vset.pattern.permute.xlu0 0
        %700 = vperm.xlu0 %699, %v444
        %v701 = vpop.permute.xlu0 %700
        %702 = vset.pattern.permute.xlu0 0
        %703 = vperm.xlu0 %702, %v445
        %v704 = vpop.permute.xlu0 %703
        %705 = vset.pattern.permute.xlu0 0
        %706 = vperm.xlu0 %705, %v446
        %v707 = vpop.permute.xlu0 %706
        %708 = vset.pattern.permute.xlu0 0
        %709 = vperm.xlu0 %708, %v447
        %v710 = vpop.permute.xlu0 %709
        %711 = vset.pattern.permute.xlu0 0
        %712 = vperm.xlu0 %711, %v448
        %v713 = vpop.permute.xlu0 %712
        %714 = vset.pattern.permute.xlu0 0
        %715 = vperm.xlu0 %714, %v449
        %v716 = vpop.permute.xlu0 %715
        %717 = vset.pattern.permute.xlu0 0
        %718 = vperm.xlu0 %717, %v450
        %v719 = vpop.permute.xlu0 %718
        %720 = vset.pattern.permute.xlu0 0
        %721 = vperm.xlu0 %720, %v451
        %v722 = vpop.permute.xlu0 %721
        %723 = vset.pattern.permute.xlu0 0
        %724 = vperm.xlu0 %723, %v452
        %v725 = vpop.permute.xlu0 %724
        %726 = vset.pattern.permute.xlu0 0
        %727 = vperm.xlu0 %726, %v453
        %v728 = vpop.permute.xlu0 %727
        %729 = vset.pattern.permute.xlu0 0
        %730 = vperm.xlu0 %729, %v454
        %v731 = vpop.permute.xlu0 %730
        %732 = vset.pattern.permute.xlu0 0
        %733 = vperm.xlu0 %732, %v455
        %v734 = vpop.permute.xlu0 %733
        %735 = vset.pattern.permute.xlu0 0
        %736 = vperm.xlu0 %735, %v456
        %v737 = vpop.permute.xlu0 %736
        %738 = vset.pattern.permute.xlu0 0
        %739 = vperm.xlu0 %738, %v457
        %v740 = vpop.permute.xlu0 %739
        %741 = vset.pattern.permute.xlu0 0
        %742 = vperm.xlu0 %741, %v458
        %v743 = vpop.permute.xlu0 %742
        %744 = vset.pattern.permute.xlu0 0
        %745 = vperm.xlu0 %744, %v459
        %v746 = vpop.permute.xlu0 %745
        %747 = vset.pattern.permute.xlu0 0
        %748 = vperm.xlu0 %747, %v460
        %v749 = vpop.permute.xlu0 %748
        %750 = vset.pattern.permute.xlu0 0
        %751 = vperm.xlu0 %750, %v461
        %v752 = vpop.permute.xlu0 %751
        %753 = vset.pattern.permute.xlu0 0
        %754 = vperm.xlu0 %753, %v462
        %v755 = vpop.permute.xlu0 %754
        %756 = vset.pattern.permute.xlu0 0
        %757 = vperm.xlu0 %756, %v463
        %v758 = vpop.permute.xlu0 %757
        %759 = vset.pattern.permute.xlu0 0
        %760 = vperm.xlu0 %759, %v464
        %v761 = vpop.permute.xlu0 %760
        %762 = vset.pattern.permute.xlu0 0
        %763 = vperm.xlu0 %762, %v465
        %v764 = vpop.permute.xlu0 %763
        %765 = vset.pattern.permute.xlu0 0
        %766 = vperm.xlu0 %765, %v466
        %v767 = vpop.permute.xlu0 %766
        %768 = vset.pattern.permute.xlu0 0
        %769 = vperm.xlu0 %768, %v467
        %v770 = vpop.permute.xlu0 %769
        %771 = vset.pattern.permute.xlu0 0
        %772 = vperm.xlu0 %771, %v468
        %v773 = vpop.permute.xlu0 %772
        %774 = vset.pattern.permute.xlu0 0
        %775 = vperm.xlu0 %774, %v469
        %v776 = vpop.permute.xlu0 %775
        %777 = vset.pattern.permute.xlu0 0
        %778 = vperm.xlu0 %777, %v470
        %v779 = vpop.permute.xlu0 %778
        %780 = vset.pattern.permute.xlu0 0
        %781 = vperm.xlu0 %780, %v471
        %v782 = vpop.permute.xlu0 %781
        %783 = vset.pattern.permute.xlu0 0
        %784 = vperm.xlu0 %783, %v472
        %v785 = vpop.permute.xlu0 %784
        %786 = vset.pattern.permute.xlu0 0
        %787 = vperm.xlu0 %786, %v473
        %v788 = vpop.permute.xlu0 %787
        %789 = vset.pattern.permute.xlu0 0
        %790 = vperm.xlu0 %789, %v474
        %v791 = vpop.permute.xlu0 %790
        %792 = vset.pattern.permute.xlu0 0
        %793 = vperm.xlu0 %792, %v475
        %v794 = vpop.permute.xlu0 %793
        %795 = vset.pattern.permute.xlu0 0
        %796 = vperm.xlu0 %795, %v476
        %v797 = vpop.permute.xlu0 %796
        %798 = vset.pattern.permute.xlu0 0
        %799 = vperm.xlu0 %798, %v477
        %v800 = vpop.permute.xlu0 %799
        %801 = vset.pattern.permute.xlu0 0
        %802 = vperm.xlu0 %801, %v478
        %v803 = vpop.permute.xlu0 %802
        %804 = vset.pattern.permute.xlu0 0
        %805 = vperm.xlu0 %804, %v479
        %v806 = vpop.permute.xlu0 %805
        %807 = vset.pattern.permute.xlu0 0
        %808 = vperm.xlu0 %807, %v480
        %v809 = vpop.permute.xlu0 %808
        %810 = vset.pattern.permute.xlu0 0
        %811 = vperm.xlu0 %810, %v481
        %v812 = vpop.permute.xlu0 %811
        %813 = vset.pattern.permute.xlu0 0
        %814 = vperm.xlu0 %813, %v482
        %v815 = vpop.permute.xlu0 %814
        %816 = vset.pattern.permute.xlu0 0
        %817 = vperm.xlu0 %816, %v483
        %v818 = vpop.permute.xlu0 %817
        %819 = vset.pattern.permute.xlu0 0
        %820 = vperm.xlu0 %819, %v484
        %v821 = vpop.permute.xlu0 %820
        %822 = vset.pattern.permute.xlu0 0
        %823 = vperm.xlu0 %822, %v485
        %v824 = vpop.permute.xlu0 %823
        %825 = vset.pattern.permute.xlu0 0
        %826 = vperm.xlu0 %825, %v486
        %v827 = vpop.permute.xlu0 %826
        %828 = vset.pattern.permute.xlu0 0
        %829 = vperm.xlu0 %828, %v487
        %v830 = vpop.permute.xlu0 %829
        %831 = vset.pattern.permute.xlu0 0
        %832 = vperm.xlu0 %831, %v488
        %v833 = vpop.permute.xlu0 %832
        %834 = vset.pattern.permute.xlu0 0
        %835 = vperm.xlu0 %834, %v489
        %v836 = vpop.permute.xlu0 %835
        %837 = vset.pattern.permute.xlu0 0
        %838 = vperm.xlu0 %837, %v490
        %v839 = vpop.permute.xlu0 %838
        %840 = vset.pattern.permute.xlu0 0
        %841 = vperm.xlu0 %840, %v491
        %v842 = vpop.permute.xlu0 %841
        %843 = vset.pattern.permute.xlu0 0
        %844 = vperm.xlu0 %843, %v492
        %v845 = vpop.permute.xlu0 %844
        %846 = vset.pattern.permute.xlu0 0
        %847 = vperm.xlu0 %846, %v493
        %v848 = vpop.permute.xlu0 %847
        %849 = vset.pattern.permute.xlu0 0
        %850 = vperm.xlu0 %849, %v494
        %v851 = vpop.permute.xlu0 %850
        %852 = vset.pattern.permute.xlu0 0
        %853 = vperm.xlu0 %852, %v495
        %v854 = vpop.permute.xlu0 %853
        %855 = vset.pattern.permute.xlu0 0
        %856 = vperm.xlu0 %855, %v496
        %v857 = vpop.permute.xlu0 %856
        %858 = vset.pattern.permute.xlu0 0
        %859 = vperm.xlu0 %858, %v497
        %v860 = vpop.permute.xlu0 %859
        %861 = vset.pattern.permute.xlu0 0
        %862 = vperm.xlu0 %861, %v498
        %v863 = vpop.permute.xlu0 %862
        %864 = vset.pattern.permute.xlu0 0
        %865 = vperm.xlu0 %864, %v499
        %v866 = vpop.permute.xlu0 %865
        %867 = vset.pattern.permute.xlu0 0
        %868 = vperm.xlu0 %867, %v500
        %v869 = vpop.permute.xlu0 %868
        %870 = vset.pattern.permute.xlu0 0
        %871 = vperm.xlu0 %870, %v501
        %v872 = vpop.permute.xlu0 %871
        %873 = vset.pattern.permute.xlu0 0
        %874 = vperm.xlu0 %873, %v502
        %v875 = vpop.permute.xlu0 %874
        %876 = vset.pattern.permute.xlu0 0
        %877 = vperm.xlu0 %876, %v503
        %v878 = vpop.permute.xlu0 %877
        %879 = vset.pattern.permute.xlu0 0
        %880 = vperm.xlu0 %879, %v504
        %v881 = vpop.permute.xlu0 %880
        %882 = vset.pattern.permute.xlu0 0
        %883 = vperm.xlu0 %882, %v505
        %v884 = vpop.permute.xlu0 %883
        %885 = vset.pattern.permute.xlu0 0
        %886 = vperm.xlu0 %885, %v506
        %v887 = vpop.permute.xlu0 %886
        %888 = vset.pattern.permute.xlu0 0
        %889 = vperm.xlu0 %888, %v507
        %v890 = vpop.permute.xlu0 %889
        %891 = vset.pattern.permute.xlu0 0
        %892 = vperm.xlu0 %891, %v508
        %v893 = vpop.permute.xlu0 %892
        %894 = vset.pattern.permute.xlu0 0
        %895 = vperm.xlu0 %894, %v509
        %v896 = vpop.permute.xlu0 %895
        %897 = vset.pattern.permute.xlu0 0
        %898 = vperm.xlu0 %897, %v510
        %v899 = vpop.permute.xlu0 %898
        %900 = vset.pattern.permute.xlu0 0
        %901 = vperm.xlu0 %900, %v511
        %v902 = vpop.permute.xlu0 %901
        %903 = vset.pattern.permute.xlu0 0
        %904 = vperm.xlu0 %903, %v512
        %v905 = vpop.permute.xlu0 %904
        %906 = vset.pattern.permute.xlu0 0
        %907 = vperm.xlu0 %906, %v513
        %v908 = vpop.permute.xlu0 %907
        %909 = vset.pattern.permute.xlu0 0
        %910 = vperm.xlu0 %909, %v514
        %v911 = vpop.permute.xlu0 %910
        %912 = vset.pattern.permute.xlu0 0
        %913 = vperm.xlu0 %912, %v515
        %v914 = vpop.permute.xlu0 %913
        %915 = vset.pattern.permute.xlu0 0
        %916 = vperm.xlu0 %915, %v516
        %v917 = vpop.permute.xlu0 %916
        %918 = vset.pattern.permute.xlu0 0
        %919 = vperm.xlu0 %918, %v517
        %v920 = vpop.permute.xlu0 %919
        %921 = vset.pattern.permute.xlu0 0
        %922 = vperm.xlu0 %921, %v518
        %v923 = vpop.permute.xlu0 %922
        %924 = vset.pattern.permute.xlu0 0
        %925 = vperm.xlu0 %924, %v519
        %v926 = vpop.permute.xlu0 %925
        %927 = vset.pattern.permute.xlu0 0
        %928 = vperm.xlu0 %927, %v520
        %v929 = vpop.permute.xlu0 %928
        %930 = vset.pattern.permute.xlu0 0
        %931 = vperm.xlu0 %930, %v521
        %v932 = vpop.permute.xlu0 %931
        %933 = vset.pattern.permute.xlu0 0
        %934 = vperm.xlu0 %933, %v522
        %v935 = vpop.permute.xlu0 %934
        %936 = vset.pattern.permute.xlu0 0
        %937 = vperm.xlu0 %936, %v523
        %v938 = vpop.permute.xlu0 %937
        %939 = vset.pattern.permute.xlu0 0
        %940 = vperm.xlu0 %939, %v524
        %v941 = vpop.permute.xlu0 %940
        %942 = vset.pattern.permute.xlu0 0
        %943 = vperm.xlu0 %942, %v525
        %v944 = vpop.permute.xlu0 %943
        %945 = vset.pattern.permute.xlu0 0
        %946 = vperm.xlu0 %945, %v526
        %v947 = vpop.permute.xlu0 %946
        %948 = vset.pattern.permute.xlu0 0
        %949 = vperm.xlu0 %948, %v527
        %v950 = vpop.permute.xlu0 %949
        %951 = vset.pattern.permute.xlu0 0
        %952 = vperm.xlu0 %951, %v528
        %v953 = vpop.permute.xlu0 %952
        %954 = vset.pattern.permute.xlu0 0
        %955 = vperm.xlu0 %954, %v529
        %v956 = vpop.permute.xlu0 %955
        %957 = vset.pattern.permute.xlu0 0
        %958 = vperm.xlu0 %957, %v530
        %v959 = vpop.permute.xlu0 %958
        %960 = vset.pattern.permute.xlu0 0
        %961 = vperm.xlu0 %960, %v531
        %v962 = vpop.permute.xlu0 %961
        %963 = vset.pattern.permute.xlu0 0
        %964 = vperm.xlu0 %963, %v532
        %v965 = vpop.permute.xlu0 %964
        %966 = vset.pattern.permute.xlu0 0
        %967 = vperm.xlu0 %966, %v533
        %v968 = vpop.permute.xlu0 %967
        %969 = vset.pattern.permute.xlu0 0
        %970 = vperm.xlu0 %969, %v534
        %v971 = vpop.permute.xlu0 %970
        %vm972 = vcmp.eq.s32.totalorder %v542, %v536
        %vm973 = vcmp.eq.s32.totalorder %v542, %v537
        %vm974 = vcmp.eq.s32.totalorder %v542, %v538
        %vm975 = vcmp.eq.s32.totalorder %v542, %v539
        %vm976 = vcmp.eq.s32.totalorder %v545, %v536
        %vm977 = vcmp.eq.s32.totalorder %v545, %v537
        %vm978 = vcmp.eq.s32.totalorder %v545, %v538
        %vm979 = vcmp.eq.s32.totalorder %v545, %v539
        %vm980 = vcmp.eq.s32.totalorder %v548, %v536
        %vm981 = vcmp.eq.s32.totalorder %v548, %v537
        %vm982 = vcmp.eq.s32.totalorder %v548, %v538
        %vm983 = vcmp.eq.s32.totalorder %v548, %v539
        %vm984 = vcmp.eq.s32.totalorder %v551, %v536
        %vm985 = vcmp.eq.s32.totalorder %v551, %v537
        %vm986 = vcmp.eq.s32.totalorder %v551, %v538
        %vm987 = vcmp.eq.s32.totalorder %v551, %v539
        %vm988 = vcmp.eq.s32.totalorder %v554, %v536
        %vm989 = vcmp.eq.s32.totalorder %v554, %v537
        %vm990 = vcmp.eq.s32.totalorder %v554, %v538
        %vm991 = vcmp.eq.s32.totalorder %v554, %v539
        %vm992 = vcmp.eq.s32.totalorder %v557, %v536
        %vm993 = vcmp.eq.s32.totalorder %v557, %v537
        %vm994 = vcmp.eq.s32.totalorder %v557, %v538
        %vm995 = vcmp.eq.s32.totalorder %v557, %v539
        %vm996 = vcmp.eq.s32.totalorder %v560, %v536
        %vm997 = vcmp.eq.s32.totalorder %v560, %v537
        %vm998 = vcmp.eq.s32.totalorder %v560, %v538
        %vm999 = vcmp.eq.s32.totalorder %v560, %v539
        %vm1000 = vcmp.eq.s32.totalorder %v563, %v536
        %vm1001 = vcmp.eq.s32.totalorder %v563, %v537
        %vm1002 = vcmp.eq.s32.totalorder %v563, %v538
        %vm1003 = vcmp.eq.s32.totalorder %v563, %v539
        %vm1004 = vcmp.eq.s32.totalorder %v566, %v536
        %vm1005 = vcmp.eq.s32.totalorder %v566, %v537
        %vm1006 = vcmp.eq.s32.totalorder %v566, %v538
        %vm1007 = vcmp.eq.s32.totalorder %v566, %v539
        %vm1008 = vcmp.eq.s32.totalorder %v569, %v536
        %vm1009 = vcmp.eq.s32.totalorder %v569, %v537
        %vm1010 = vcmp.eq.s32.totalorder %v569, %v538
        %vm1011 = vcmp.eq.s32.totalorder %v569, %v539
        %vm1012 = vcmp.eq.s32.totalorder %v572, %v536
        %vm1013 = vcmp.eq.s32.totalorder %v572, %v537
        %vm1014 = vcmp.eq.s32.totalorder %v572, %v538
        %vm1015 = vcmp.eq.s32.totalorder %v572, %v539
        %vm1016 = vcmp.eq.s32.totalorder %v575, %v536
        %vm1017 = vcmp.eq.s32.totalorder %v575, %v537
        %vm1018 = vcmp.eq.s32.totalorder %v575, %v538
        %vm1019 = vcmp.eq.s32.totalorder %v575, %v539
        %vm1020 = vcmp.eq.s32.totalorder %v578, %v536
        %vm1021 = vcmp.eq.s32.totalorder %v578, %v537
        %vm1022 = vcmp.eq.s32.totalorder %v578, %v538
        %vm1023 = vcmp.eq.s32.totalorder %v578, %v539
        %vm1024 = vcmp.eq.s32.totalorder %v581, %v536
        %vm1025 = vcmp.eq.s32.totalorder %v581, %v537
        %vm1026 = vcmp.eq.s32.totalorder %v581, %v538
        %vm1027 = vcmp.eq.s32.totalorder %v581, %v539
        %vm1028 = vcmp.eq.s32.totalorder %v584, %v536
        %vm1029 = vcmp.eq.s32.totalorder %v584, %v537
        %vm1030 = vcmp.eq.s32.totalorder %v584, %v538
        %vm1031 = vcmp.eq.s32.totalorder %v584, %v539
        %vm1032 = vcmp.eq.s32.totalorder %v587, %v536
        %vm1033 = vcmp.eq.s32.totalorder %v587, %v537
        %vm1034 = vcmp.eq.s32.totalorder %v587, %v538
        %vm1035 = vcmp.eq.s32.totalorder %v587, %v539
        %vm1036 = vcmp.eq.s32.totalorder %v590, %v536
        %vm1037 = vcmp.eq.s32.totalorder %v590, %v537
        %vm1038 = vcmp.eq.s32.totalorder %v590, %v538
        %vm1039 = vcmp.eq.s32.totalorder %v590, %v539
        %vm1040 = vcmp.eq.s32.totalorder %v593, %v536
        %vm1041 = vcmp.eq.s32.totalorder %v593, %v537
        %vm1042 = vcmp.eq.s32.totalorder %v593, %v538
        %vm1043 = vcmp.eq.s32.totalorder %v593, %v539
        %vm1044 = vcmp.eq.s32.totalorder %v596, %v536
        %vm1045 = vcmp.eq.s32.totalorder %v596, %v537
        %vm1046 = vcmp.eq.s32.totalorder %v596, %v538
        %vm1047 = vcmp.eq.s32.totalorder %v596, %v539
        %vm1048 = vcmp.eq.s32.totalorder %v599, %v536
        %vm1049 = vcmp.eq.s32.totalorder %v599, %v537
        %vm1050 = vcmp.eq.s32.totalorder %v599, %v538
        %vm1051 = vcmp.eq.s32.totalorder %v599, %v539
        %vm1052 = vcmp.eq.s32.totalorder %v602, %v536
        %vm1053 = vcmp.eq.s32.totalorder %v602, %v537
        %vm1054 = vcmp.eq.s32.totalorder %v602, %v538
        %vm1055 = vcmp.eq.s32.totalorder %v602, %v539
        %vm1056 = vcmp.eq.s32.totalorder %v605, %v536
        %vm1057 = vcmp.eq.s32.totalorder %v605, %v537
        %vm1058 = vcmp.eq.s32.totalorder %v605, %v538
        %vm1059 = vcmp.eq.s32.totalorder %v605, %v539
        %vm1060 = vcmp.eq.s32.totalorder %v608, %v536
        %vm1061 = vcmp.eq.s32.totalorder %v608, %v537
        %vm1062 = vcmp.eq.s32.totalorder %v608, %v538
        %vm1063 = vcmp.eq.s32.totalorder %v608, %v539
        %vm1064 = vcmp.eq.s32.totalorder %v611, %v536
        %vm1065 = vcmp.eq.s32.totalorder %v611, %v537
        %vm1066 = vcmp.eq.s32.totalorder %v611, %v538
        %vm1067 = vcmp.eq.s32.totalorder %v611, %v539
        %vm1068 = vcmp.eq.s32.totalorder %v614, %v536
        %vm1069 = vcmp.eq.s32.totalorder %v614, %v537
        %vm1070 = vcmp.eq.s32.totalorder %v614, %v538
        %vm1071 = vcmp.eq.s32.totalorder %v614, %v539
        %vm1072 = vcmp.eq.s32.totalorder %v617, %v536
        %vm1073 = vcmp.eq.s32.totalorder %v617, %v537
        %vm1074 = vcmp.eq.s32.totalorder %v617, %v538
        %vm1075 = vcmp.eq.s32.totalorder %v617, %v539
        %vm1076 = vcmp.eq.s32.totalorder %v620, %v536
        %vm1077 = vcmp.eq.s32.totalorder %v620, %v537
        %vm1078 = vcmp.eq.s32.totalorder %v620, %v538
        %vm1079 = vcmp.eq.s32.totalorder %v620, %v539
        %vm1080 = vcmp.eq.s32.totalorder %v623, %v536
        %vm1081 = vcmp.eq.s32.totalorder %v623, %v537
        %vm1082 = vcmp.eq.s32.totalorder %v623, %v538
        %vm1083 = vcmp.eq.s32.totalorder %v623, %v539
        %vm1084 = vcmp.eq.s32.totalorder %v626, %v536
        %vm1085 = vcmp.eq.s32.totalorder %v626, %v537
        %vm1086 = vcmp.eq.s32.totalorder %v626, %v538
        %vm1087 = vcmp.eq.s32.totalorder %v626, %v539
        %vm1088 = vcmp.eq.s32.totalorder %v629, %v536
        %vm1089 = vcmp.eq.s32.totalorder %v629, %v537
        %vm1090 = vcmp.eq.s32.totalorder %v629, %v538
        %vm1091 = vcmp.eq.s32.totalorder %v629, %v539
        %vm1092 = vcmp.eq.s32.totalorder %v632, %v536
        %vm1093 = vcmp.eq.s32.totalorder %v632, %v537
        %vm1094 = vcmp.eq.s32.totalorder %v632, %v538
        %vm1095 = vcmp.eq.s32.totalorder %v632, %v539
        %vm1096 = vcmp.eq.s32.totalorder %v635, %v536
        %vm1097 = vcmp.eq.s32.totalorder %v635, %v537
        %vm1098 = vcmp.eq.s32.totalorder %v635, %v538
        %vm1099 = vcmp.eq.s32.totalorder %v635, %v539
        %vm1100 = vcmp.eq.s32.totalorder %v638, %v536
        %vm1101 = vcmp.eq.s32.totalorder %v638, %v537
        %vm1102 = vcmp.eq.s32.totalorder %v638, %v538
        %vm1103 = vcmp.eq.s32.totalorder %v638, %v539
        %vm1104 = vcmp.eq.s32.totalorder %v641, %v536
        %vm1105 = vcmp.eq.s32.totalorder %v641, %v537
        %vm1106 = vcmp.eq.s32.totalorder %v641, %v538
        %vm1107 = vcmp.eq.s32.totalorder %v641, %v539
        %vm1108 = vcmp.eq.s32.totalorder %v644, %v536
        %vm1109 = vcmp.eq.s32.totalorder %v644, %v537
        %vm1110 = vcmp.eq.s32.totalorder %v644, %v538
        %vm1111 = vcmp.eq.s32.totalorder %v644, %v539
        %vm1112 = vcmp.eq.s32.totalorder %v647, %v536
        %vm1113 = vcmp.eq.s32.totalorder %v647, %v537
        %vm1114 = vcmp.eq.s32.totalorder %v647, %v538
        %vm1115 = vcmp.eq.s32.totalorder %v647, %v539
        %vm1116 = vcmp.eq.s32.totalorder %v650, %v536
        %vm1117 = vcmp.eq.s32.totalorder %v650, %v537
        %vm1118 = vcmp.eq.s32.totalorder %v650, %v538
        %vm1119 = vcmp.eq.s32.totalorder %v650, %v539
        %vm1120 = vcmp.eq.s32.totalorder %v653, %v536
        %vm1121 = vcmp.eq.s32.totalorder %v653, %v537
        %vm1122 = vcmp.eq.s32.totalorder %v653, %v538
        %vm1123 = vcmp.eq.s32.totalorder %v653, %v539
        %vm1124 = vcmp.eq.s32.totalorder %v656, %v536
        %vm1125 = vcmp.eq.s32.totalorder %v656, %v537
        %vm1126 = vcmp.eq.s32.totalorder %v656, %v538
        %vm1127 = vcmp.eq.s32.totalorder %v656, %v539
        %vm1128 = vcmp.eq.s32.totalorder %v659, %v536
        %vm1129 = vcmp.eq.s32.totalorder %v659, %v537
        %vm1130 = vcmp.eq.s32.totalorder %v659, %v538
        %vm1131 = vcmp.eq.s32.totalorder %v659, %v539
        %vm1132 = vcmp.eq.s32.totalorder %v662, %v536
        %vm1133 = vcmp.eq.s32.totalorder %v662, %v537
        %vm1134 = vcmp.eq.s32.totalorder %v662, %v538
        %vm1135 = vcmp.eq.s32.totalorder %v662, %v539
        %vm1136 = vcmp.eq.s32.totalorder %v665, %v536
        %vm1137 = vcmp.eq.s32.totalorder %v665, %v537
        %vm1138 = vcmp.eq.s32.totalorder %v665, %v538
        %vm1139 = vcmp.eq.s32.totalorder %v665, %v539
        %vm1140 = vcmp.eq.s32.totalorder %v668, %v536
        %vm1141 = vcmp.eq.s32.totalorder %v668, %v537
        %vm1142 = vcmp.eq.s32.totalorder %v668, %v538
        %vm1143 = vcmp.eq.s32.totalorder %v668, %v539
        %vm1144 = vcmp.eq.s32.totalorder %v671, %v536
        %vm1145 = vcmp.eq.s32.totalorder %v671, %v537
        %vm1146 = vcmp.eq.s32.totalorder %v671, %v538
        %vm1147 = vcmp.eq.s32.totalorder %v671, %v539
        %vm1148 = vcmp.eq.s32.totalorder %v674, %v536
        %vm1149 = vcmp.eq.s32.totalorder %v674, %v537
        %vm1150 = vcmp.eq.s32.totalorder %v674, %v538
        %vm1151 = vcmp.eq.s32.totalorder %v674, %v539
        %vm1152 = vcmp.eq.s32.totalorder %v677, %v536
        %vm1153 = vcmp.eq.s32.totalorder %v677, %v537
        %vm1154 = vcmp.eq.s32.totalorder %v677, %v538
        %vm1155 = vcmp.eq.s32.totalorder %v677, %v539
        %vm1156 = vcmp.eq.s32.totalorder %v680, %v536
        %vm1157 = vcmp.eq.s32.totalorder %v680, %v537
        %vm1158 = vcmp.eq.s32.totalorder %v680, %v538
        %vm1159 = vcmp.eq.s32.totalorder %v680, %v539
        %vm1160 = vcmp.eq.s32.totalorder %v683, %v536
        %vm1161 = vcmp.eq.s32.totalorder %v683, %v537
        %vm1162 = vcmp.eq.s32.totalorder %v683, %v538
        %vm1163 = vcmp.eq.s32.totalorder %v683, %v539
        %vm1164 = vcmp.eq.s32.totalorder %v686, %v536
        %vm1165 = vcmp.eq.s32.totalorder %v686, %v537
        %vm1166 = vcmp.eq.s32.totalorder %v686, %v538
        %vm1167 = vcmp.eq.s32.totalorder %v686, %v539
        %vm1168 = vcmp.eq.s32.totalorder %v689, %v536
        %vm1169 = vcmp.eq.s32.totalorder %v689, %v537
        %vm1170 = vcmp.eq.s32.totalorder %v689, %v538
        %vm1171 = vcmp.eq.s32.totalorder %v689, %v539
        %vm1172 = vcmp.eq.s32.totalorder %v692, %v536
        %vm1173 = vcmp.eq.s32.totalorder %v692, %v537
        %vm1174 = vcmp.eq.s32.totalorder %v692, %v538
        %vm1175 = vcmp.eq.s32.totalorder %v692, %v539
        %vm1176 = vcmp.eq.s32.totalorder %v695, %v536
        %vm1177 = vcmp.eq.s32.totalorder %v695, %v537
        %vm1178 = vcmp.eq.s32.totalorder %v695, %v538
        %vm1179 = vcmp.eq.s32.totalorder %v695, %v539
        %vm1180 = vcmp.eq.s32.totalorder %v698, %v536
        %vm1181 = vcmp.eq.s32.totalorder %v698, %v537
        %vm1182 = vcmp.eq.s32.totalorder %v698, %v538
        %vm1183 = vcmp.eq.s32.totalorder %v698, %v539
        %vm1184 = vcmp.eq.s32.totalorder %v701, %v536
        %vm1185 = vcmp.eq.s32.totalorder %v701, %v537
        %vm1186 = vcmp.eq.s32.totalorder %v701, %v538
        %vm1187 = vcmp.eq.s32.totalorder %v701, %v539
        %vm1188 = vcmp.eq.s32.totalorder %v704, %v536
        %vm1189 = vcmp.eq.s32.totalorder %v704, %v537
        %vm1190 = vcmp.eq.s32.totalorder %v704, %v538
        %vm1191 = vcmp.eq.s32.totalorder %v704, %v539
        %vm1192 = vcmp.eq.s32.totalorder %v707, %v536
        %vm1193 = vcmp.eq.s32.totalorder %v707, %v537
        %vm1194 = vcmp.eq.s32.totalorder %v707, %v538
        %vm1195 = vcmp.eq.s32.totalorder %v707, %v539
        %vm1196 = vcmp.eq.s32.totalorder %v710, %v536
        %vm1197 = vcmp.eq.s32.totalorder %v710, %v537
        %vm1198 = vcmp.eq.s32.totalorder %v710, %v538
        %vm1199 = vcmp.eq.s32.totalorder %v710, %v539
        %vm1200 = vcmp.eq.s32.totalorder %v713, %v536
        %vm1201 = vcmp.eq.s32.totalorder %v713, %v537
        %vm1202 = vcmp.eq.s32.totalorder %v713, %v538
        %vm1203 = vcmp.eq.s32.totalorder %v713, %v539
        %vm1204 = vcmp.eq.s32.totalorder %v716, %v536
        %vm1205 = vcmp.eq.s32.totalorder %v716, %v537
        %vm1206 = vcmp.eq.s32.totalorder %v716, %v538
        %vm1207 = vcmp.eq.s32.totalorder %v716, %v539
        %vm1208 = vcmp.eq.s32.totalorder %v719, %v536
        %vm1209 = vcmp.eq.s32.totalorder %v719, %v537
        %vm1210 = vcmp.eq.s32.totalorder %v719, %v538
        %vm1211 = vcmp.eq.s32.totalorder %v719, %v539
        %vm1212 = vcmp.eq.s32.totalorder %v722, %v536
        %vm1213 = vcmp.eq.s32.totalorder %v722, %v537
        %vm1214 = vcmp.eq.s32.totalorder %v722, %v538
        %vm1215 = vcmp.eq.s32.totalorder %v722, %v539
        %vm1216 = vcmp.eq.s32.totalorder %v725, %v536
        %vm1217 = vcmp.eq.s32.totalorder %v725, %v537
        %vm1218 = vcmp.eq.s32.totalorder %v725, %v538
        %vm1219 = vcmp.eq.s32.totalorder %v725, %v539
        %vm1220 = vcmp.eq.s32.totalorder %v728, %v536
        %vm1221 = vcmp.eq.s32.totalorder %v728, %v537
        %vm1222 = vcmp.eq.s32.totalorder %v728, %v538
        %vm1223 = vcmp.eq.s32.totalorder %v728, %v539
        %vm1224 = vcmp.eq.s32.totalorder %v731, %v536
        %vm1225 = vcmp.eq.s32.totalorder %v731, %v537
        %vm1226 = vcmp.eq.s32.totalorder %v731, %v538
        %vm1227 = vcmp.eq.s32.totalorder %v731, %v539
        %vm1228 = vcmp.eq.s32.totalorder %v734, %v536
        %vm1229 = vcmp.eq.s32.totalorder %v734, %v537
        %vm1230 = vcmp.eq.s32.totalorder %v734, %v538
        %vm1231 = vcmp.eq.s32.totalorder %v734, %v539
        %vm1232 = vcmp.eq.s32.totalorder %v737, %v536
        %vm1233 = vcmp.eq.s32.totalorder %v737, %v537
        %vm1234 = vcmp.eq.s32.totalorder %v737, %v538
        %vm1235 = vcmp.eq.s32.totalorder %v737, %v539
        %vm1236 = vcmp.eq.s32.totalorder %v740, %v536
        %vm1237 = vcmp.eq.s32.totalorder %v740, %v537
        %vm1238 = vcmp.eq.s32.totalorder %v740, %v538
        %vm1239 = vcmp.eq.s32.totalorder %v740, %v539
        %vm1240 = vcmp.eq.s32.totalorder %v743, %v536
        %vm1241 = vcmp.eq.s32.totalorder %v743, %v537
        %vm1242 = vcmp.eq.s32.totalorder %v743, %v538
        %vm1243 = vcmp.eq.s32.totalorder %v743, %v539
        %vm1244 = vcmp.eq.s32.totalorder %v746, %v536
        %vm1245 = vcmp.eq.s32.totalorder %v746, %v537
        %vm1246 = vcmp.eq.s32.totalorder %v746, %v538
        %vm1247 = vcmp.eq.s32.totalorder %v746, %v539
        %vm1248 = vcmp.eq.s32.totalorder %v749, %v536
        %vm1249 = vcmp.eq.s32.totalorder %v749, %v537
        %vm1250 = vcmp.eq.s32.totalorder %v749, %v538
        %vm1251 = vcmp.eq.s32.totalorder %v749, %v539
        %vm1252 = vcmp.eq.s32.totalorder %v752, %v536
        %vm1253 = vcmp.eq.s32.totalorder %v752, %v537
        %vm1254 = vcmp.eq.s32.totalorder %v752, %v538
        %vm1255 = vcmp.eq.s32.totalorder %v752, %v539
        %vm1256 = vcmp.eq.s32.totalorder %v755, %v536
        %vm1257 = vcmp.eq.s32.totalorder %v755, %v537
        %vm1258 = vcmp.eq.s32.totalorder %v755, %v538
        %vm1259 = vcmp.eq.s32.totalorder %v755, %v539
        %vm1260 = vcmp.eq.s32.totalorder %v758, %v536
        %vm1261 = vcmp.eq.s32.totalorder %v758, %v537
        %vm1262 = vcmp.eq.s32.totalorder %v758, %v538
        %vm1263 = vcmp.eq.s32.totalorder %v758, %v539
        %vm1264 = vcmp.eq.s32.totalorder %v761, %v536
        %vm1265 = vcmp.eq.s32.totalorder %v761, %v537
        %vm1266 = vcmp.eq.s32.totalorder %v761, %v538
        %vm1267 = vcmp.eq.s32.totalorder %v761, %v539
        %vm1268 = vcmp.eq.s32.totalorder %v764, %v536
        %vm1269 = vcmp.eq.s32.totalorder %v764, %v537
        %vm1270 = vcmp.eq.s32.totalorder %v764, %v538
        %vm1271 = vcmp.eq.s32.totalorder %v764, %v539
        %vm1272 = vcmp.eq.s32.totalorder %v767, %v536
        %vm1273 = vcmp.eq.s32.totalorder %v767, %v537
        %vm1274 = vcmp.eq.s32.totalorder %v767, %v538
        %vm1275 = vcmp.eq.s32.totalorder %v767, %v539
        %vm1276 = vcmp.eq.s32.totalorder %v770, %v536
        %vm1277 = vcmp.eq.s32.totalorder %v770, %v537
        %vm1278 = vcmp.eq.s32.totalorder %v770, %v538
        %vm1279 = vcmp.eq.s32.totalorder %v770, %v539
        %vm1280 = vcmp.eq.s32.totalorder %v773, %v536
        %vm1281 = vcmp.eq.s32.totalorder %v773, %v537
        %vm1282 = vcmp.eq.s32.totalorder %v773, %v538
        %vm1283 = vcmp.eq.s32.totalorder %v773, %v539
        %vm1284 = vcmp.eq.s32.totalorder %v776, %v536
        %vm1285 = vcmp.eq.s32.totalorder %v776, %v537
        %vm1286 = vcmp.eq.s32.totalorder %v776, %v538
        %vm1287 = vcmp.eq.s32.totalorder %v776, %v539
        %vm1288 = vcmp.eq.s32.totalorder %v779, %v536
        %vm1289 = vcmp.eq.s32.totalorder %v779, %v537
        %vm1290 = vcmp.eq.s32.totalorder %v779, %v538
        %vm1291 = vcmp.eq.s32.totalorder %v779, %v539
        %vm1292 = vcmp.eq.s32.totalorder %v782, %v536
        %vm1293 = vcmp.eq.s32.totalorder %v782, %v537
        %vm1294 = vcmp.eq.s32.totalorder %v782, %v538
        %vm1295 = vcmp.eq.s32.totalorder %v782, %v539
        %vm1296 = vcmp.eq.s32.totalorder %v785, %v536
        %vm1297 = vcmp.eq.s32.totalorder %v785, %v537
        %vm1298 = vcmp.eq.s32.totalorder %v785, %v538
        %vm1299 = vcmp.eq.s32.totalorder %v785, %v539
        %vm1300 = vcmp.eq.s32.totalorder %v788, %v536
        %vm1301 = vcmp.eq.s32.totalorder %v788, %v537
        %vm1302 = vcmp.eq.s32.totalorder %v788, %v538
        %vm1303 = vcmp.eq.s32.totalorder %v788, %v539
        %vm1304 = vcmp.eq.s32.totalorder %v791, %v536
        %vm1305 = vcmp.eq.s32.totalorder %v791, %v537
        %vm1306 = vcmp.eq.s32.totalorder %v791, %v538
        %vm1307 = vcmp.eq.s32.totalorder %v791, %v539
        %vm1308 = vcmp.eq.s32.totalorder %v794, %v536
        %vm1309 = vcmp.eq.s32.totalorder %v794, %v537
        %vm1310 = vcmp.eq.s32.totalorder %v794, %v538
        %vm1311 = vcmp.eq.s32.totalorder %v794, %v539
        %vm1312 = vcmp.eq.s32.totalorder %v797, %v536
        %vm1313 = vcmp.eq.s32.totalorder %v797, %v537
        %vm1314 = vcmp.eq.s32.totalorder %v797, %v538
        %vm1315 = vcmp.eq.s32.totalorder %v797, %v539
        %vm1316 = vcmp.eq.s32.totalorder %v800, %v536
        %vm1317 = vcmp.eq.s32.totalorder %v800, %v537
        %vm1318 = vcmp.eq.s32.totalorder %v800, %v538
        %vm1319 = vcmp.eq.s32.totalorder %v800, %v539
        %vm1320 = vcmp.eq.s32.totalorder %v803, %v536
        %vm1321 = vcmp.eq.s32.totalorder %v803, %v537
        %vm1322 = vcmp.eq.s32.totalorder %v803, %v538
        %vm1323 = vcmp.eq.s32.totalorder %v803, %v539
        %vm1324 = vcmp.eq.s32.totalorder %v806, %v536
        %vm1325 = vcmp.eq.s32.totalorder %v806, %v537
        %vm1326 = vcmp.eq.s32.totalorder %v806, %v538
        %vm1327 = vcmp.eq.s32.totalorder %v806, %v539
        %vm1328 = vcmp.eq.s32.totalorder %v809, %v536
        %vm1329 = vcmp.eq.s32.totalorder %v809, %v537
        %vm1330 = vcmp.eq.s32.totalorder %v809, %v538
        %vm1331 = vcmp.eq.s32.totalorder %v809, %v539
        %vm1332 = vcmp.eq.s32.totalorder %v812, %v536
        %vm1333 = vcmp.eq.s32.totalorder %v812, %v537
        %vm1334 = vcmp.eq.s32.totalorder %v812, %v538
        %vm1335 = vcmp.eq.s32.totalorder %v812, %v539
        %vm1336 = vcmp.eq.s32.totalorder %v815, %v536
        %vm1337 = vcmp.eq.s32.totalorder %v815, %v537
        %vm1338 = vcmp.eq.s32.totalorder %v815, %v538
        %vm1339 = vcmp.eq.s32.totalorder %v815, %v539
        %vm1340 = vcmp.eq.s32.totalorder %v818, %v536
        %vm1341 = vcmp.eq.s32.totalorder %v818, %v537
        %vm1342 = vcmp.eq.s32.totalorder %v818, %v538
        %vm1343 = vcmp.eq.s32.totalorder %v818, %v539
        %vm1344 = vcmp.eq.s32.totalorder %v821, %v536
        %vm1345 = vcmp.eq.s32.totalorder %v821, %v537
        %vm1346 = vcmp.eq.s32.totalorder %v821, %v538
        %vm1347 = vcmp.eq.s32.totalorder %v821, %v539
        %vm1348 = vcmp.eq.s32.totalorder %v824, %v536
        %vm1349 = vcmp.eq.s32.totalorder %v824, %v537
        %vm1350 = vcmp.eq.s32.totalorder %v824, %v538
        %vm1351 = vcmp.eq.s32.totalorder %v824, %v539
        %vm1352 = vcmp.eq.s32.totalorder %v827, %v536
        %vm1353 = vcmp.eq.s32.totalorder %v827, %v537
        %vm1354 = vcmp.eq.s32.totalorder %v827, %v538
        %vm1355 = vcmp.eq.s32.totalorder %v827, %v539
        %vm1356 = vcmp.eq.s32.totalorder %v830, %v536
        %vm1357 = vcmp.eq.s32.totalorder %v830, %v537
        %vm1358 = vcmp.eq.s32.totalorder %v830, %v538
        %vm1359 = vcmp.eq.s32.totalorder %v830, %v539
        %vm1360 = vcmp.eq.s32.totalorder %v833, %v536
        %vm1361 = vcmp.eq.s32.totalorder %v833, %v537
        %vm1362 = vcmp.eq.s32.totalorder %v833, %v538
        %vm1363 = vcmp.eq.s32.totalorder %v833, %v539
        %vm1364 = vcmp.eq.s32.totalorder %v836, %v536
        %vm1365 = vcmp.eq.s32.totalorder %v836, %v537
        %vm1366 = vcmp.eq.s32.totalorder %v836, %v538
        %vm1367 = vcmp.eq.s32.totalorder %v836, %v539
        %vm1368 = vcmp.eq.s32.totalorder %v839, %v536
        %vm1369 = vcmp.eq.s32.totalorder %v839, %v537
        %vm1370 = vcmp.eq.s32.totalorder %v839, %v538
        %vm1371 = vcmp.eq.s32.totalorder %v839, %v539
        %vm1372 = vcmp.eq.s32.totalorder %v842, %v536
        %vm1373 = vcmp.eq.s32.totalorder %v842, %v537
        %vm1374 = vcmp.eq.s32.totalorder %v842, %v538
        %vm1375 = vcmp.eq.s32.totalorder %v842, %v539
        %vm1376 = vcmp.eq.s32.totalorder %v845, %v536
        %vm1377 = vcmp.eq.s32.totalorder %v845, %v537
        %vm1378 = vcmp.eq.s32.totalorder %v845, %v538
        %vm1379 = vcmp.eq.s32.totalorder %v845, %v539
        %vm1380 = vcmp.eq.s32.totalorder %v848, %v536
        %vm1381 = vcmp.eq.s32.totalorder %v848, %v537
        %vm1382 = vcmp.eq.s32.totalorder %v848, %v538
        %vm1383 = vcmp.eq.s32.totalorder %v848, %v539
        %vm1384 = vcmp.eq.s32.totalorder %v851, %v536
        %vm1385 = vcmp.eq.s32.totalorder %v851, %v537
        %vm1386 = vcmp.eq.s32.totalorder %v851, %v538
        %vm1387 = vcmp.eq.s32.totalorder %v851, %v539
        %vm1388 = vcmp.eq.s32.totalorder %v854, %v536
        %vm1389 = vcmp.eq.s32.totalorder %v854, %v537
        %vm1390 = vcmp.eq.s32.totalorder %v854, %v538
        %vm1391 = vcmp.eq.s32.totalorder %v854, %v539
        %vm1392 = vcmp.eq.s32.totalorder %v857, %v536
        %vm1393 = vcmp.eq.s32.totalorder %v857, %v537
        %vm1394 = vcmp.eq.s32.totalorder %v857, %v538
        %vm1395 = vcmp.eq.s32.totalorder %v857, %v539
        %vm1396 = vcmp.eq.s32.totalorder %v860, %v536
        %vm1397 = vcmp.eq.s32.totalorder %v860, %v537
        %vm1398 = vcmp.eq.s32.totalorder %v860, %v538
        %vm1399 = vcmp.eq.s32.totalorder %v860, %v539
        %vm1400 = vcmp.eq.s32.totalorder %v863, %v536
        %vm1401 = vcmp.eq.s32.totalorder %v863, %v537
        %vm1402 = vcmp.eq.s32.totalorder %v863, %v538
        %vm1403 = vcmp.eq.s32.totalorder %v863, %v539
        %vm1404 = vcmp.eq.s32.totalorder %v866, %v536
        %vm1405 = vcmp.eq.s32.totalorder %v866, %v537
        %vm1406 = vcmp.eq.s32.totalorder %v866, %v538
        %vm1407 = vcmp.eq.s32.totalorder %v866, %v539
        %vm1408 = vcmp.eq.s32.totalorder %v869, %v536
        %vm1409 = vcmp.eq.s32.totalorder %v869, %v537
        %vm1410 = vcmp.eq.s32.totalorder %v869, %v538
        %vm1411 = vcmp.eq.s32.totalorder %v869, %v539
        %vm1412 = vcmp.eq.s32.totalorder %v872, %v536
        %vm1413 = vcmp.eq.s32.totalorder %v872, %v537
        %vm1414 = vcmp.eq.s32.totalorder %v872, %v538
        %vm1415 = vcmp.eq.s32.totalorder %v872, %v539
        %vm1416 = vcmp.eq.s32.totalorder %v875, %v536
        %vm1417 = vcmp.eq.s32.totalorder %v875, %v537
        %vm1418 = vcmp.eq.s32.totalorder %v875, %v538
        %vm1419 = vcmp.eq.s32.totalorder %v875, %v539
        %vm1420 = vcmp.eq.s32.totalorder %v878, %v536
        %vm1421 = vcmp.eq.s32.totalorder %v878, %v537
        %vm1422 = vcmp.eq.s32.totalorder %v878, %v538
        %vm1423 = vcmp.eq.s32.totalorder %v878, %v539
        %vm1424 = vcmp.eq.s32.totalorder %v881, %v536
        %vm1425 = vcmp.eq.s32.totalorder %v881, %v537
        %vm1426 = vcmp.eq.s32.totalorder %v881, %v538
        %vm1427 = vcmp.eq.s32.totalorder %v881, %v539
        %vm1428 = vcmp.eq.s32.totalorder %v884, %v536
        %vm1429 = vcmp.eq.s32.totalorder %v884, %v537
        %vm1430 = vcmp.eq.s32.totalorder %v884, %v538
        %vm1431 = vcmp.eq.s32.totalorder %v884, %v539
        %vm1432 = vcmp.eq.s32.totalorder %v887, %v536
        %vm1433 = vcmp.eq.s32.totalorder %v887, %v537
        %vm1434 = vcmp.eq.s32.totalorder %v887, %v538
        %vm1435 = vcmp.eq.s32.totalorder %v887, %v539
        %vm1436 = vcmp.eq.s32.totalorder %v890, %v536
        %vm1437 = vcmp.eq.s32.totalorder %v890, %v537
        %vm1438 = vcmp.eq.s32.totalorder %v890, %v538
        %vm1439 = vcmp.eq.s32.totalorder %v890, %v539
        %vm1440 = vcmp.eq.s32.totalorder %v893, %v536
        %vm1441 = vcmp.eq.s32.totalorder %v893, %v537
        %vm1442 = vcmp.eq.s32.totalorder %v893, %v538
        %vm1443 = vcmp.eq.s32.totalorder %v893, %v539
        %vm1444 = vcmp.eq.s32.totalorder %v896, %v536
        %vm1445 = vcmp.eq.s32.totalorder %v896, %v537
        %vm1446 = vcmp.eq.s32.totalorder %v896, %v538
        %vm1447 = vcmp.eq.s32.totalorder %v896, %v539
        %vm1448 = vcmp.eq.s32.totalorder %v899, %v536
        %vm1449 = vcmp.eq.s32.totalorder %v899, %v537
        %vm1450 = vcmp.eq.s32.totalorder %v899, %v538
        %vm1451 = vcmp.eq.s32.totalorder %v899, %v539
        %vm1452 = vcmp.eq.s32.totalorder %v902, %v536
        %vm1453 = vcmp.eq.s32.totalorder %v902, %v537
        %vm1454 = vcmp.eq.s32.totalorder %v902, %v538
        %vm1455 = vcmp.eq.s32.totalorder %v902, %v539
        %vm1456 = vcmp.eq.s32.totalorder %v905, %v536
        %vm1457 = vcmp.eq.s32.totalorder %v905, %v537
        %vm1458 = vcmp.eq.s32.totalorder %v905, %v538
        %vm1459 = vcmp.eq.s32.totalorder %v905, %v539
        %vm1460 = vcmp.eq.s32.totalorder %v908, %v536
        %vm1461 = vcmp.eq.s32.totalorder %v908, %v537
        %vm1462 = vcmp.eq.s32.totalorder %v908, %v538
        %vm1463 = vcmp.eq.s32.totalorder %v908, %v539
        %vm1464 = vcmp.eq.s32.totalorder %v911, %v536
        %vm1465 = vcmp.eq.s32.totalorder %v911, %v537
        %vm1466 = vcmp.eq.s32.totalorder %v911, %v538
        %vm1467 = vcmp.eq.s32.totalorder %v911, %v539
        %vm1468 = vcmp.eq.s32.totalorder %v914, %v536
        %vm1469 = vcmp.eq.s32.totalorder %v914, %v537
        %vm1470 = vcmp.eq.s32.totalorder %v914, %v538
        %vm1471 = vcmp.eq.s32.totalorder %v914, %v539
        %vm1472 = vcmp.eq.s32.totalorder %v917, %v536
        %vm1473 = vcmp.eq.s32.totalorder %v917, %v537
        %vm1474 = vcmp.eq.s32.totalorder %v917, %v538
        %vm1475 = vcmp.eq.s32.totalorder %v917, %v539
        %vm1476 = vcmp.eq.s32.totalorder %v920, %v536
        %vm1477 = vcmp.eq.s32.totalorder %v920, %v537
        %vm1478 = vcmp.eq.s32.totalorder %v920, %v538
        %vm1479 = vcmp.eq.s32.totalorder %v920, %v539
        %vm1480 = vcmp.eq.s32.totalorder %v923, %v536
        %vm1481 = vcmp.eq.s32.totalorder %v923, %v537
        %vm1482 = vcmp.eq.s32.totalorder %v923, %v538
        %vm1483 = vcmp.eq.s32.totalorder %v923, %v539
        %vm1484 = vcmp.eq.s32.totalorder %v926, %v536
        %vm1485 = vcmp.eq.s32.totalorder %v926, %v537
        %vm1486 = vcmp.eq.s32.totalorder %v926, %v538
        %vm1487 = vcmp.eq.s32.totalorder %v926, %v539
        %vm1488 = vcmp.eq.s32.totalorder %v929, %v536
        %vm1489 = vcmp.eq.s32.totalorder %v929, %v537
        %vm1490 = vcmp.eq.s32.totalorder %v929, %v538
        %vm1491 = vcmp.eq.s32.totalorder %v929, %v539
        %vm1492 = vcmp.eq.s32.totalorder %v932, %v536
        %vm1493 = vcmp.eq.s32.totalorder %v932, %v537
        %vm1494 = vcmp.eq.s32.totalorder %v932, %v538
        %vm1495 = vcmp.eq.s32.totalorder %v932, %v539
        %vm1496 = vcmp.eq.s32.totalorder %v935, %v536
        %vm1497 = vcmp.eq.s32.totalorder %v935, %v537
        %vm1498 = vcmp.eq.s32.totalorder %v935, %v538
        %vm1499 = vcmp.eq.s32.totalorder %v935, %v539
        %vm1500 = vcmp.eq.s32.totalorder %v938, %v536
        %vm1501 = vcmp.eq.s32.totalorder %v938, %v537
        %vm1502 = vcmp.eq.s32.totalorder %v938, %v538
        %vm1503 = vcmp.eq.s32.totalorder %v938, %v539
        %vm1504 = vcmp.eq.s32.totalorder %v941, %v536
        %vm1505 = vcmp.eq.s32.totalorder %v941, %v537
        %vm1506 = vcmp.eq.s32.totalorder %v941, %v538
        %vm1507 = vcmp.eq.s32.totalorder %v941, %v539
        %vm1508 = vcmp.eq.s32.totalorder %v944, %v536
        %vm1509 = vcmp.eq.s32.totalorder %v944, %v537
        %vm1510 = vcmp.eq.s32.totalorder %v944, %v538
        %vm1511 = vcmp.eq.s32.totalorder %v944, %v539
        %vm1512 = vcmp.eq.s32.totalorder %v947, %v536
        %vm1513 = vcmp.eq.s32.totalorder %v947, %v537
        %vm1514 = vcmp.eq.s32.totalorder %v947, %v538
        %vm1515 = vcmp.eq.s32.totalorder %v947, %v539
        %vm1516 = vcmp.eq.s32.totalorder %v950, %v536
        %vm1517 = vcmp.eq.s32.totalorder %v950, %v537
        %vm1518 = vcmp.eq.s32.totalorder %v950, %v538
        %vm1519 = vcmp.eq.s32.totalorder %v950, %v539
        %vm1520 = vcmp.eq.s32.totalorder %v953, %v536
        %vm1521 = vcmp.eq.s32.totalorder %v953, %v537
        %vm1522 = vcmp.eq.s32.totalorder %v953, %v538
        %vm1523 = vcmp.eq.s32.totalorder %v953, %v539
        %vm1524 = vcmp.eq.s32.totalorder %v956, %v536
        %vm1525 = vcmp.eq.s32.totalorder %v956, %v537
        %vm1526 = vcmp.eq.s32.totalorder %v956, %v538
        %vm1527 = vcmp.eq.s32.totalorder %v956, %v539
        %vm1528 = vcmp.eq.s32.totalorder %v959, %v536
        %vm1529 = vcmp.eq.s32.totalorder %v959, %v537
        %vm1530 = vcmp.eq.s32.totalorder %v959, %v538
        %vm1531 = vcmp.eq.s32.totalorder %v959, %v539
        %vm1532 = vcmp.eq.s32.totalorder %v962, %v536
        %vm1533 = vcmp.eq.s32.totalorder %v962, %v537
        %vm1534 = vcmp.eq.s32.totalorder %v962, %v538
        %vm1535 = vcmp.eq.s32.totalorder %v962, %v539
        %vm1536 = vcmp.eq.s32.totalorder %v965, %v536
        %vm1537 = vcmp.eq.s32.totalorder %v965, %v537
        %vm1538 = vcmp.eq.s32.totalorder %v965, %v538
        %vm1539 = vcmp.eq.s32.totalorder %v965, %v539
        %vm1540 = vcmp.eq.s32.totalorder %v968, %v536
        %vm1541 = vcmp.eq.s32.totalorder %v968, %v537
        %vm1542 = vcmp.eq.s32.totalorder %v968, %v538
        %vm1543 = vcmp.eq.s32.totalorder %v968, %v539
        %vm1544 = vcmp.eq.s32.totalorder %v971, %v536
        %vm1545 = vcmp.eq.s32.totalorder %v971, %v537
        %vm1546 = vcmp.eq.s32.totalorder %v971, %v538
        %vm1547 = vcmp.eq.s32.totalorder %v971, %v539
        %v1548 = vsel %vm972, 1.0, 0.0
        %v1549 = vsel %vm973, 1.0, 0.0
        %v1550 = vsel %vm974, 1.0, 0.0
        %v1551 = vsel %vm975, 1.0, 0.0
        %v1552 = vsel %vm976, 1.0, 0.0
        %v1553 = vsel %vm977, 1.0, 0.0
        %v1554 = vsel %vm978, 1.0, 0.0
        %v1555 = vsel %vm979, 1.0, 0.0
        %v1556 = vsel %vm980, 1.0, 0.0
        %v1557 = vsel %vm981, 1.0, 0.0
        %v1558 = vsel %vm982, 1.0, 0.0
        %v1559 = vsel %vm983, 1.0, 0.0
        %v1560 = vsel %vm984, 1.0, 0.0
        %v1561 = vsel %vm985, 1.0, 0.0
        %v1562 = vsel %vm986, 1.0, 0.0
        %v1563 = vsel %vm987, 1.0, 0.0
        %v1564 = vsel %vm988, 1.0, 0.0
        %v1565 = vsel %vm989, 1.0, 0.0
        %v1566 = vsel %vm990, 1.0, 0.0
        %v1567 = vsel %vm991, 1.0, 0.0
        %v1568 = vsel %vm992, 1.0, 0.0
        %v1569 = vsel %vm993, 1.0, 0.0
        %v1570 = vsel %vm994, 1.0, 0.0
        %v1571 = vsel %vm995, 1.0, 0.0
        %v1572 = vsel %vm996, 1.0, 0.0
        %v1573 = vsel %vm997, 1.0, 0.0
        %v1574 = vsel %vm998, 1.0, 0.0
        %v1575 = vsel %vm999, 1.0, 0.0
        %v1576 = vsel %vm1000, 1.0, 0.0
        %v1577 = vsel %vm1001, 1.0, 0.0
        %v1578 = vsel %vm1002, 1.0, 0.0
        %v1579 = vsel %vm1003, 1.0, 0.0
        %v1580 = vsel %vm1004, 1.0, 0.0
        %v1581 = vsel %vm1005, 1.0, 0.0
        %v1582 = vsel %vm1006, 1.0, 0.0
        %v1583 = vsel %vm1007, 1.0, 0.0
        %v1584 = vsel %vm1008, 1.0, 0.0
        %v1585 = vsel %vm1009, 1.0, 0.0
        %v1586 = vsel %vm1010, 1.0, 0.0
        %v1587 = vsel %vm1011, 1.0, 0.0
        %v1588 = vsel %vm1012, 1.0, 0.0
        %v1589 = vsel %vm1013, 1.0, 0.0
        %v1590 = vsel %vm1014, 1.0, 0.0
        %v1591 = vsel %vm1015, 1.0, 0.0
        %v1592 = vsel %vm1016, 1.0, 0.0
        %v1593 = vsel %vm1017, 1.0, 0.0
        %v1594 = vsel %vm1018, 1.0, 0.0
        %v1595 = vsel %vm1019, 1.0, 0.0
        %v1596 = vsel %vm1020, 1.0, 0.0
        %v1597 = vsel %vm1021, 1.0, 0.0
        %v1598 = vsel %vm1022, 1.0, 0.0
        %v1599 = vsel %vm1023, 1.0, 0.0
        %v1600 = vsel %vm1024, 1.0, 0.0
        %v1601 = vsel %vm1025, 1.0, 0.0
        %v1602 = vsel %vm1026, 1.0, 0.0
        %v1603 = vsel %vm1027, 1.0, 0.0
        %v1604 = vsel %vm1028, 1.0, 0.0
        %v1605 = vsel %vm1029, 1.0, 0.0
        %v1606 = vsel %vm1030, 1.0, 0.0
        %v1607 = vsel %vm1031, 1.0, 0.0
        %v1608 = vsel %vm1032, 1.0, 0.0
        %v1609 = vsel %vm1033, 1.0, 0.0
        %v1610 = vsel %vm1034, 1.0, 0.0
        %v1611 = vsel %vm1035, 1.0, 0.0
        %v1612 = vsel %vm1036, 1.0, 0.0
        %v1613 = vsel %vm1037, 1.0, 0.0
        %v1614 = vsel %vm1038, 1.0, 0.0
        %v1615 = vsel %vm1039, 1.0, 0.0
        %v1616 = vsel %vm1040, 1.0, 0.0
        %v1617 = vsel %vm1041, 1.0, 0.0
        %v1618 = vsel %vm1042, 1.0, 0.0
        %v1619 = vsel %vm1043, 1.0, 0.0
        %v1620 = vsel %vm1044, 1.0, 0.0
        %v1621 = vsel %vm1045, 1.0, 0.0
        %v1622 = vsel %vm1046, 1.0, 0.0
        %v1623 = vsel %vm1047, 1.0, 0.0
        %v1624 = vsel %vm1048, 1.0, 0.0
        %v1625 = vsel %vm1049, 1.0, 0.0
        %v1626 = vsel %vm1050, 1.0, 0.0
        %v1627 = vsel %vm1051, 1.0, 0.0
        %v1628 = vsel %vm1052, 1.0, 0.0
        %v1629 = vsel %vm1053, 1.0, 0.0
        %v1630 = vsel %vm1054, 1.0, 0.0
        %v1631 = vsel %vm1055, 1.0, 0.0
        %v1632 = vsel %vm1056, 1.0, 0.0
        %v1633 = vsel %vm1057, 1.0, 0.0
        %v1634 = vsel %vm1058, 1.0, 0.0
        %v1635 = vsel %vm1059, 1.0, 0.0
        %v1636 = vsel %vm1060, 1.0, 0.0
        %v1637 = vsel %vm1061, 1.0, 0.0
        %v1638 = vsel %vm1062, 1.0, 0.0
        %v1639 = vsel %vm1063, 1.0, 0.0
        %v1640 = vsel %vm1064, 1.0, 0.0
        %v1641 = vsel %vm1065, 1.0, 0.0
        %v1642 = vsel %vm1066, 1.0, 0.0
        %v1643 = vsel %vm1067, 1.0, 0.0
        %v1644 = vsel %vm1068, 1.0, 0.0
        %v1645 = vsel %vm1069, 1.0, 0.0
        %v1646 = vsel %vm1070, 1.0, 0.0
        %v1647 = vsel %vm1071, 1.0, 0.0
        %v1648 = vsel %vm1072, 1.0, 0.0
        %v1649 = vsel %vm1073, 1.0, 0.0
        %v1650 = vsel %vm1074, 1.0, 0.0
        %v1651 = vsel %vm1075, 1.0, 0.0
        %v1652 = vsel %vm1076, 1.0, 0.0
        %v1653 = vsel %vm1077, 1.0, 0.0
        %v1654 = vsel %vm1078, 1.0, 0.0
        %v1655 = vsel %vm1079, 1.0, 0.0
        %v1656 = vsel %vm1080, 1.0, 0.0
        %v1657 = vsel %vm1081, 1.0, 0.0
        %v1658 = vsel %vm1082, 1.0, 0.0
        %v1659 = vsel %vm1083, 1.0, 0.0
        %v1660 = vsel %vm1084, 1.0, 0.0
        %v1661 = vsel %vm1085, 1.0, 0.0
        %v1662 = vsel %vm1086, 1.0, 0.0
        %v1663 = vsel %vm1087, 1.0, 0.0
        %v1664 = vsel %vm1088, 1.0, 0.0
        %v1665 = vsel %vm1089, 1.0, 0.0
        %v1666 = vsel %vm1090, 1.0, 0.0
        %v1667 = vsel %vm1091, 1.0, 0.0
        %v1668 = vsel %vm1092, 1.0, 0.0
        %v1669 = vsel %vm1093, 1.0, 0.0
        %v1670 = vsel %vm1094, 1.0, 0.0
        %v1671 = vsel %vm1095, 1.0, 0.0
        %v1672 = vsel %vm1096, 1.0, 0.0
        %v1673 = vsel %vm1097, 1.0, 0.0
        %v1674 = vsel %vm1098, 1.0, 0.0
        %v1675 = vsel %vm1099, 1.0, 0.0
        %v1676 = vsel %vm1100, 1.0, 0.0
        %v1677 = vsel %vm1101, 1.0, 0.0
        %v1678 = vsel %vm1102, 1.0, 0.0
        %v1679 = vsel %vm1103, 1.0, 0.0
        %v1680 = vsel %vm1104, 1.0, 0.0
        %v1681 = vsel %vm1105, 1.0, 0.0
        %v1682 = vsel %vm1106, 1.0, 0.0
        %v1683 = vsel %vm1107, 1.0, 0.0
        %v1684 = vsel %vm1108, 1.0, 0.0
        %v1685 = vsel %vm1109, 1.0, 0.0
        %v1686 = vsel %vm1110, 1.0, 0.0
        %v1687 = vsel %vm1111, 1.0, 0.0
        %v1688 = vsel %vm1112, 1.0, 0.0
        %v1689 = vsel %vm1113, 1.0, 0.0
        %v1690 = vsel %vm1114, 1.0, 0.0
        %v1691 = vsel %vm1115, 1.0, 0.0
        %v1692 = vsel %vm1116, 1.0, 0.0
        %v1693 = vsel %vm1117, 1.0, 0.0
        %v1694 = vsel %vm1118, 1.0, 0.0
        %v1695 = vsel %vm1119, 1.0, 0.0
        %v1696 = vsel %vm1120, 1.0, 0.0
        %v1697 = vsel %vm1121, 1.0, 0.0
        %v1698 = vsel %vm1122, 1.0, 0.0
        %v1699 = vsel %vm1123, 1.0, 0.0
        %v1700 = vsel %vm1124, 1.0, 0.0
        %v1701 = vsel %vm1125, 1.0, 0.0
        %v1702 = vsel %vm1126, 1.0, 0.0
        %v1703 = vsel %vm1127, 1.0, 0.0
        %v1704 = vsel %vm1128, 1.0, 0.0
        %v1705 = vsel %vm1129, 1.0, 0.0
        %v1706 = vsel %vm1130, 1.0, 0.0
        %v1707 = vsel %vm1131, 1.0, 0.0
        %v1708 = vsel %vm1132, 1.0, 0.0
        %v1709 = vsel %vm1133, 1.0, 0.0
        %v1710 = vsel %vm1134, 1.0, 0.0
        %v1711 = vsel %vm1135, 1.0, 0.0
        %v1712 = vsel %vm1136, 1.0, 0.0
        %v1713 = vsel %vm1137, 1.0, 0.0
        %v1714 = vsel %vm1138, 1.0, 0.0
        %v1715 = vsel %vm1139, 1.0, 0.0
        %v1716 = vsel %vm1140, 1.0, 0.0
        %v1717 = vsel %vm1141, 1.0, 0.0
        %v1718 = vsel %vm1142, 1.0, 0.0
        %v1719 = vsel %vm1143, 1.0, 0.0
        %v1720 = vsel %vm1144, 1.0, 0.0
        %v1721 = vsel %vm1145, 1.0, 0.0
        %v1722 = vsel %vm1146, 1.0, 0.0
        %v1723 = vsel %vm1147, 1.0, 0.0
        %v1724 = vsel %vm1148, 1.0, 0.0
        %v1725 = vsel %vm1149, 1.0, 0.0
        %v1726 = vsel %vm1150, 1.0, 0.0
        %v1727 = vsel %vm1151, 1.0, 0.0
        %v1728 = vsel %vm1152, 1.0, 0.0
        %v1729 = vsel %vm1153, 1.0, 0.0
        %v1730 = vsel %vm1154, 1.0, 0.0
        %v1731 = vsel %vm1155, 1.0, 0.0
        %v1732 = vsel %vm1156, 1.0, 0.0
        %v1733 = vsel %vm1157, 1.0, 0.0
        %v1734 = vsel %vm1158, 1.0, 0.0
        %v1735 = vsel %vm1159, 1.0, 0.0
        %v1736 = vsel %vm1160, 1.0, 0.0
        %v1737 = vsel %vm1161, 1.0, 0.0
        %v1738 = vsel %vm1162, 1.0, 0.0
        %v1739 = vsel %vm1163, 1.0, 0.0
        %v1740 = vsel %vm1164, 1.0, 0.0
        %v1741 = vsel %vm1165, 1.0, 0.0
        %v1742 = vsel %vm1166, 1.0, 0.0
        %v1743 = vsel %vm1167, 1.0, 0.0
        %v1744 = vsel %vm1168, 1.0, 0.0
        %v1745 = vsel %vm1169, 1.0, 0.0
        %v1746 = vsel %vm1170, 1.0, 0.0
        %v1747 = vsel %vm1171, 1.0, 0.0
        %v1748 = vsel %vm1172, 1.0, 0.0
        %v1749 = vsel %vm1173, 1.0, 0.0
        %v1750 = vsel %vm1174, 1.0, 0.0
        %v1751 = vsel %vm1175, 1.0, 0.0
        %v1752 = vsel %vm1176, 1.0, 0.0
        %v1753 = vsel %vm1177, 1.0, 0.0
        %v1754 = vsel %vm1178, 1.0, 0.0
        %v1755 = vsel %vm1179, 1.0, 0.0
        %v1756 = vsel %vm1180, 1.0, 0.0
        %v1757 = vsel %vm1181, 1.0, 0.0
        %v1758 = vsel %vm1182, 1.0, 0.0
        %v1759 = vsel %vm1183, 1.0, 0.0
        %v1760 = vsel %vm1184, 1.0, 0.0
        %v1761 = vsel %vm1185, 1.0, 0.0
        %v1762 = vsel %vm1186, 1.0, 0.0
        %v1763 = vsel %vm1187, 1.0, 0.0
        %v1764 = vsel %vm1188, 1.0, 0.0
        %v1765 = vsel %vm1189, 1.0, 0.0
        %v1766 = vsel %vm1190, 1.0, 0.0
        %v1767 = vsel %vm1191, 1.0, 0.0
        %v1768 = vsel %vm1192, 1.0, 0.0
        %v1769 = vsel %vm1193, 1.0, 0.0
        %v1770 = vsel %vm1194, 1.0, 0.0
        %v1771 = vsel %vm1195, 1.0, 0.0
        %v1772 = vsel %vm1196, 1.0, 0.0
        %v1773 = vsel %vm1197, 1.0, 0.0
        %v1774 = vsel %vm1198, 1.0, 0.0
        %v1775 = vsel %vm1199, 1.0, 0.0
        %v1776 = vsel %vm1200, 1.0, 0.0
        %v1777 = vsel %vm1201, 1.0, 0.0
        %v1778 = vsel %vm1202, 1.0, 0.0
        %v1779 = vsel %vm1203, 1.0, 0.0
        %v1780 = vsel %vm1204, 1.0, 0.0
        %v1781 = vsel %vm1205, 1.0, 0.0
        %v1782 = vsel %vm1206, 1.0, 0.0
        %v1783 = vsel %vm1207, 1.0, 0.0
        %v1784 = vsel %vm1208, 1.0, 0.0
        %v1785 = vsel %vm1209, 1.0, 0.0
        %v1786 = vsel %vm1210, 1.0, 0.0
        %v1787 = vsel %vm1211, 1.0, 0.0
        %v1788 = vsel %vm1212, 1.0, 0.0
        %v1789 = vsel %vm1213, 1.0, 0.0
        %v1790 = vsel %vm1214, 1.0, 0.0
        %v1791 = vsel %vm1215, 1.0, 0.0
        %v1792 = vsel %vm1216, 1.0, 0.0
        %v1793 = vsel %vm1217, 1.0, 0.0
        %v1794 = vsel %vm1218, 1.0, 0.0
        %v1795 = vsel %vm1219, 1.0, 0.0
        %v1796 = vsel %vm1220, 1.0, 0.0
        %v1797 = vsel %vm1221, 1.0, 0.0
        %v1798 = vsel %vm1222, 1.0, 0.0
        %v1799 = vsel %vm1223, 1.0, 0.0
        %v1800 = vsel %vm1224, 1.0, 0.0
        %v1801 = vsel %vm1225, 1.0, 0.0
        %v1802 = vsel %vm1226, 1.0, 0.0
        %v1803 = vsel %vm1227, 1.0, 0.0
        %v1804 = vsel %vm1228, 1.0, 0.0
        %v1805 = vsel %vm1229, 1.0, 0.0
        %v1806 = vsel %vm1230, 1.0, 0.0
        %v1807 = vsel %vm1231, 1.0, 0.0
        %v1808 = vsel %vm1232, 1.0, 0.0
        %v1809 = vsel %vm1233, 1.0, 0.0
        %v1810 = vsel %vm1234, 1.0, 0.0
        %v1811 = vsel %vm1235, 1.0, 0.0
        %v1812 = vsel %vm1236, 1.0, 0.0
        %v1813 = vsel %vm1237, 1.0, 0.0
        %v1814 = vsel %vm1238, 1.0, 0.0
        %v1815 = vsel %vm1239, 1.0, 0.0
        %v1816 = vsel %vm1240, 1.0, 0.0
        %v1817 = vsel %vm1241, 1.0, 0.0
        %v1818 = vsel %vm1242, 1.0, 0.0
        %v1819 = vsel %vm1243, 1.0, 0.0
        %v1820 = vsel %vm1244, 1.0, 0.0
        %v1821 = vsel %vm1245, 1.0, 0.0
        %v1822 = vsel %vm1246, 1.0, 0.0
        %v1823 = vsel %vm1247, 1.0, 0.0
        %v1824 = vsel %vm1248, 1.0, 0.0
        %v1825 = vsel %vm1249, 1.0, 0.0
        %v1826 = vsel %vm1250, 1.0, 0.0
        %v1827 = vsel %vm1251, 1.0, 0.0
        %v1828 = vsel %vm1252, 1.0, 0.0
        %v1829 = vsel %vm1253, 1.0, 0.0
        %v1830 = vsel %vm1254, 1.0, 0.0
        %v1831 = vsel %vm1255, 1.0, 0.0
        %v1832 = vsel %vm1256, 1.0, 0.0
        %v1833 = vsel %vm1257, 1.0, 0.0
        %v1834 = vsel %vm1258, 1.0, 0.0
        %v1835 = vsel %vm1259, 1.0, 0.0
        %v1836 = vsel %vm1260, 1.0, 0.0
        %v1837 = vsel %vm1261, 1.0, 0.0
        %v1838 = vsel %vm1262, 1.0, 0.0
        %v1839 = vsel %vm1263, 1.0, 0.0
        %v1840 = vsel %vm1264, 1.0, 0.0
        %v1841 = vsel %vm1265, 1.0, 0.0
        %v1842 = vsel %vm1266, 1.0, 0.0
        %v1843 = vsel %vm1267, 1.0, 0.0
        %v1844 = vsel %vm1268, 1.0, 0.0
        %v1845 = vsel %vm1269, 1.0, 0.0
        %v1846 = vsel %vm1270, 1.0, 0.0
        %v1847 = vsel %vm1271, 1.0, 0.0
        %v1848 = vsel %vm1272, 1.0, 0.0
        %v1849 = vsel %vm1273, 1.0, 0.0
        %v1850 = vsel %vm1274, 1.0, 0.0
        %v1851 = vsel %vm1275, 1.0, 0.0
        %v1852 = vsel %vm1276, 1.0, 0.0
        %v1853 = vsel %vm1277, 1.0, 0.0
        %v1854 = vsel %vm1278, 1.0, 0.0
        %v1855 = vsel %vm1279, 1.0, 0.0
        %v1856 = vsel %vm1280, 1.0, 0.0
        %v1857 = vsel %vm1281, 1.0, 0.0
        %v1858 = vsel %vm1282, 1.0, 0.0
        %v1859 = vsel %vm1283, 1.0, 0.0
        %v1860 = vsel %vm1284, 1.0, 0.0
        %v1861 = vsel %vm1285, 1.0, 0.0
        %v1862 = vsel %vm1286, 1.0, 0.0
        %v1863 = vsel %vm1287, 1.0, 0.0
        %v1864 = vsel %vm1288, 1.0, 0.0
        %v1865 = vsel %vm1289, 1.0, 0.0
        %v1866 = vsel %vm1290, 1.0, 0.0
        %v1867 = vsel %vm1291, 1.0, 0.0
        %v1868 = vsel %vm1292, 1.0, 0.0
        %v1869 = vsel %vm1293, 1.0, 0.0
        %v1870 = vsel %vm1294, 1.0, 0.0
        %v1871 = vsel %vm1295, 1.0, 0.0
        %v1872 = vsel %vm1296, 1.0, 0.0
        %v1873 = vsel %vm1297, 1.0, 0.0
        %v1874 = vsel %vm1298, 1.0, 0.0
        %v1875 = vsel %vm1299, 1.0, 0.0
        %v1876 = vsel %vm1300, 1.0, 0.0
        %v1877 = vsel %vm1301, 1.0, 0.0
        %v1878 = vsel %vm1302, 1.0, 0.0
        %v1879 = vsel %vm1303, 1.0, 0.0
        %v1880 = vsel %vm1304, 1.0, 0.0
        %v1881 = vsel %vm1305, 1.0, 0.0
        %v1882 = vsel %vm1306, 1.0, 0.0
        %v1883 = vsel %vm1307, 1.0, 0.0
        %v1884 = vsel %vm1308, 1.0, 0.0
        %v1885 = vsel %vm1309, 1.0, 0.0
        %v1886 = vsel %vm1310, 1.0, 0.0
        %v1887 = vsel %vm1311, 1.0, 0.0
        %v1888 = vsel %vm1312, 1.0, 0.0
        %v1889 = vsel %vm1313, 1.0, 0.0
        %v1890 = vsel %vm1314, 1.0, 0.0
        %v1891 = vsel %vm1315, 1.0, 0.0
        %v1892 = vsel %vm1316, 1.0, 0.0
        %v1893 = vsel %vm1317, 1.0, 0.0
        %v1894 = vsel %vm1318, 1.0, 0.0
        %v1895 = vsel %vm1319, 1.0, 0.0
        %v1896 = vsel %vm1320, 1.0, 0.0
        %v1897 = vsel %vm1321, 1.0, 0.0
        %v1898 = vsel %vm1322, 1.0, 0.0
        %v1899 = vsel %vm1323, 1.0, 0.0
        %v1900 = vsel %vm1324, 1.0, 0.0
        %v1901 = vsel %vm1325, 1.0, 0.0
        %v1902 = vsel %vm1326, 1.0, 0.0
        %v1903 = vsel %vm1327, 1.0, 0.0
        %v1904 = vsel %vm1328, 1.0, 0.0
        %v1905 = vsel %vm1329, 1.0, 0.0
        %v1906 = vsel %vm1330, 1.0, 0.0
        %v1907 = vsel %vm1331, 1.0, 0.0
        %v1908 = vsel %vm1332, 1.0, 0.0
        %v1909 = vsel %vm1333, 1.0, 0.0
        %v1910 = vsel %vm1334, 1.0, 0.0
        %v1911 = vsel %vm1335, 1.0, 0.0
        %v1912 = vsel %vm1336, 1.0, 0.0
        %v1913 = vsel %vm1337, 1.0, 0.0
        %v1914 = vsel %vm1338, 1.0, 0.0
        %v1915 = vsel %vm1339, 1.0, 0.0
        %v1916 = vsel %vm1340, 1.0, 0.0
        %v1917 = vsel %vm1341, 1.0, 0.0
        %v1918 = vsel %vm1342, 1.0, 0.0
        %v1919 = vsel %vm1343, 1.0, 0.0
        %v1920 = vsel %vm1344, 1.0, 0.0
        %v1921 = vsel %vm1345, 1.0, 0.0
        %v1922 = vsel %vm1346, 1.0, 0.0
        %v1923 = vsel %vm1347, 1.0, 0.0
        %v1924 = vsel %vm1348, 1.0, 0.0
        %v1925 = vsel %vm1349, 1.0, 0.0
        %v1926 = vsel %vm1350, 1.0, 0.0
        %v1927 = vsel %vm1351, 1.0, 0.0
        %v1928 = vsel %vm1352, 1.0, 0.0
        %v1929 = vsel %vm1353, 1.0, 0.0
        %v1930 = vsel %vm1354, 1.0, 0.0
        %v1931 = vsel %vm1355, 1.0, 0.0
        %v1932 = vsel %vm1356, 1.0, 0.0
        %v1933 = vsel %vm1357, 1.0, 0.0
        %v1934 = vsel %vm1358, 1.0, 0.0
        %v1935 = vsel %vm1359, 1.0, 0.0
        %v1936 = vsel %vm1360, 1.0, 0.0
        %v1937 = vsel %vm1361, 1.0, 0.0
        %v1938 = vsel %vm1362, 1.0, 0.0
        %v1939 = vsel %vm1363, 1.0, 0.0
        %v1940 = vsel %vm1364, 1.0, 0.0
        %v1941 = vsel %vm1365, 1.0, 0.0
        %v1942 = vsel %vm1366, 1.0, 0.0
        %v1943 = vsel %vm1367, 1.0, 0.0
        %v1944 = vsel %vm1368, 1.0, 0.0
        %v1945 = vsel %vm1369, 1.0, 0.0
        %v1946 = vsel %vm1370, 1.0, 0.0
        %v1947 = vsel %vm1371, 1.0, 0.0
        %v1948 = vsel %vm1372, 1.0, 0.0
        %v1949 = vsel %vm1373, 1.0, 0.0
        %v1950 = vsel %vm1374, 1.0, 0.0
        %v1951 = vsel %vm1375, 1.0, 0.0
        %v1952 = vsel %vm1376, 1.0, 0.0
        %v1953 = vsel %vm1377, 1.0, 0.0
        %v1954 = vsel %vm1378, 1.0, 0.0
        %v1955 = vsel %vm1379, 1.0, 0.0
        %v1956 = vsel %vm1380, 1.0, 0.0
        %v1957 = vsel %vm1381, 1.0, 0.0
        %v1958 = vsel %vm1382, 1.0, 0.0
        %v1959 = vsel %vm1383, 1.0, 0.0
        %v1960 = vsel %vm1384, 1.0, 0.0
        %v1961 = vsel %vm1385, 1.0, 0.0
        %v1962 = vsel %vm1386, 1.0, 0.0
        %v1963 = vsel %vm1387, 1.0, 0.0
        %v1964 = vsel %vm1388, 1.0, 0.0
        %v1965 = vsel %vm1389, 1.0, 0.0
        %v1966 = vsel %vm1390, 1.0, 0.0
        %v1967 = vsel %vm1391, 1.0, 0.0
        %v1968 = vsel %vm1392, 1.0, 0.0
        %v1969 = vsel %vm1393, 1.0, 0.0
        %v1970 = vsel %vm1394, 1.0, 0.0
        %v1971 = vsel %vm1395, 1.0, 0.0
        %v1972 = vsel %vm1396, 1.0, 0.0
        %v1973 = vsel %vm1397, 1.0, 0.0
        %v1974 = vsel %vm1398, 1.0, 0.0
        %v1975 = vsel %vm1399, 1.0, 0.0
        %v1976 = vsel %vm1400, 1.0, 0.0
        %v1977 = vsel %vm1401, 1.0, 0.0
        %v1978 = vsel %vm1402, 1.0, 0.0
        %v1979 = vsel %vm1403, 1.0, 0.0
        %v1980 = vsel %vm1404, 1.0, 0.0
        %v1981 = vsel %vm1405, 1.0, 0.0
        %v1982 = vsel %vm1406, 1.0, 0.0
        %v1983 = vsel %vm1407, 1.0, 0.0
        %v1984 = vsel %vm1408, 1.0, 0.0
        %v1985 = vsel %vm1409, 1.0, 0.0
        %v1986 = vsel %vm1410, 1.0, 0.0
        %v1987 = vsel %vm1411, 1.0, 0.0
        %v1988 = vsel %vm1412, 1.0, 0.0
        %v1989 = vsel %vm1413, 1.0, 0.0
        %v1990 = vsel %vm1414, 1.0, 0.0
        %v1991 = vsel %vm1415, 1.0, 0.0
        %v1992 = vsel %vm1416, 1.0, 0.0
        %v1993 = vsel %vm1417, 1.0, 0.0
        %v1994 = vsel %vm1418, 1.0, 0.0
        %v1995 = vsel %vm1419, 1.0, 0.0
        %v1996 = vsel %vm1420, 1.0, 0.0
        %v1997 = vsel %vm1421, 1.0, 0.0
        %v1998 = vsel %vm1422, 1.0, 0.0
        %v1999 = vsel %vm1423, 1.0, 0.0
        %v2000 = vsel %vm1424, 1.0, 0.0
        %v2001 = vsel %vm1425, 1.0, 0.0
        %v2002 = vsel %vm1426, 1.0, 0.0
        %v2003 = vsel %vm1427, 1.0, 0.0
        %v2004 = vsel %vm1428, 1.0, 0.0
        %v2005 = vsel %vm1429, 1.0, 0.0
        %v2006 = vsel %vm1430, 1.0, 0.0
        %v2007 = vsel %vm1431, 1.0, 0.0
        %v2008 = vsel %vm1432, 1.0, 0.0
        %v2009 = vsel %vm1433, 1.0, 0.0
        %v2010 = vsel %vm1434, 1.0, 0.0
        %v2011 = vsel %vm1435, 1.0, 0.0
        %v2012 = vsel %vm1436, 1.0, 0.0
        %v2013 = vsel %vm1437, 1.0, 0.0
        %v2014 = vsel %vm1438, 1.0, 0.0
        %v2015 = vsel %vm1439, 1.0, 0.0
        %v2016 = vsel %vm1440, 1.0, 0.0
        %v2017 = vsel %vm1441, 1.0, 0.0
        %v2018 = vsel %vm1442, 1.0, 0.0
        %v2019 = vsel %vm1443, 1.0, 0.0
        %v2020 = vsel %vm1444, 1.0, 0.0
        %v2021 = vsel %vm1445, 1.0, 0.0
        %v2022 = vsel %vm1446, 1.0, 0.0
        %v2023 = vsel %vm1447, 1.0, 0.0
        %v2024 = vsel %vm1448, 1.0, 0.0
        %v2025 = vsel %vm1449, 1.0, 0.0
        %v2026 = vsel %vm1450, 1.0, 0.0
        %v2027 = vsel %vm1451, 1.0, 0.0
        %v2028 = vsel %vm1452, 1.0, 0.0
        %v2029 = vsel %vm1453, 1.0, 0.0
        %v2030 = vsel %vm1454, 1.0, 0.0
        %v2031 = vsel %vm1455, 1.0, 0.0
        %v2032 = vsel %vm1456, 1.0, 0.0
        %v2033 = vsel %vm1457, 1.0, 0.0
        %v2034 = vsel %vm1458, 1.0, 0.0
        %v2035 = vsel %vm1459, 1.0, 0.0
        %v2036 = vsel %vm1460, 1.0, 0.0
        %v2037 = vsel %vm1461, 1.0, 0.0
        %v2038 = vsel %vm1462, 1.0, 0.0
        %v2039 = vsel %vm1463, 1.0, 0.0
        %v2040 = vsel %vm1464, 1.0, 0.0
        %v2041 = vsel %vm1465, 1.0, 0.0
        %v2042 = vsel %vm1466, 1.0, 0.0
        %v2043 = vsel %vm1467, 1.0, 0.0
        %v2044 = vsel %vm1468, 1.0, 0.0
        %v2045 = vsel %vm1469, 1.0, 0.0
        %v2046 = vsel %vm1470, 1.0, 0.0
        %v2047 = vsel %vm1471, 1.0, 0.0
        %v2048 = vsel %vm1472, 1.0, 0.0
        %v2049 = vsel %vm1473, 1.0, 0.0
        %v2050 = vsel %vm1474, 1.0, 0.0
        %v2051 = vsel %vm1475, 1.0, 0.0
        %v2052 = vsel %vm1476, 1.0, 0.0
        %v2053 = vsel %vm1477, 1.0, 0.0
        %v2054 = vsel %vm1478, 1.0, 0.0
        %v2055 = vsel %vm1479, 1.0, 0.0
        %v2056 = vsel %vm1480, 1.0, 0.0
        %v2057 = vsel %vm1481, 1.0, 0.0
        %v2058 = vsel %vm1482, 1.0, 0.0
        %v2059 = vsel %vm1483, 1.0, 0.0
        %v2060 = vsel %vm1484, 1.0, 0.0
        %v2061 = vsel %vm1485, 1.0, 0.0
        %v2062 = vsel %vm1486, 1.0, 0.0
        %v2063 = vsel %vm1487, 1.0, 0.0
        %v2064 = vsel %vm1488, 1.0, 0.0
        %v2065 = vsel %vm1489, 1.0, 0.0
        %v2066 = vsel %vm1490, 1.0, 0.0
        %v2067 = vsel %vm1491, 1.0, 0.0
        %v2068 = vsel %vm1492, 1.0, 0.0
        %v2069 = vsel %vm1493, 1.0, 0.0
        %v2070 = vsel %vm1494, 1.0, 0.0
        %v2071 = vsel %vm1495, 1.0, 0.0
        %v2072 = vsel %vm1496, 1.0, 0.0
        %v2073 = vsel %vm1497, 1.0, 0.0
        %v2074 = vsel %vm1498, 1.0, 0.0
        %v2075 = vsel %vm1499, 1.0, 0.0
        %v2076 = vsel %vm1500, 1.0, 0.0
        %v2077 = vsel %vm1501, 1.0, 0.0
        %v2078 = vsel %vm1502, 1.0, 0.0
        %v2079 = vsel %vm1503, 1.0, 0.0
        %v2080 = vsel %vm1504, 1.0, 0.0
        %v2081 = vsel %vm1505, 1.0, 0.0
        %v2082 = vsel %vm1506, 1.0, 0.0
        %v2083 = vsel %vm1507, 1.0, 0.0
        %v2084 = vsel %vm1508, 1.0, 0.0
        %v2085 = vsel %vm1509, 1.0, 0.0
        %v2086 = vsel %vm1510, 1.0, 0.0
        %v2087 = vsel %vm1511, 1.0, 0.0
        %v2088 = vsel %vm1512, 1.0, 0.0
        %v2089 = vsel %vm1513, 1.0, 0.0
        %v2090 = vsel %vm1514, 1.0, 0.0
        %v2091 = vsel %vm1515, 1.0, 0.0
        %v2092 = vsel %vm1516, 1.0, 0.0
        %v2093 = vsel %vm1517, 1.0, 0.0
        %v2094 = vsel %vm1518, 1.0, 0.0
        %v2095 = vsel %vm1519, 1.0, 0.0
        %v2096 = vsel %vm1520, 1.0, 0.0
        %v2097 = vsel %vm1521, 1.0, 0.0
        %v2098 = vsel %vm1522, 1.0, 0.0
        %v2099 = vsel %vm1523, 1.0, 0.0
        %v2100 = vsel %vm1524, 1.0, 0.0
        %v2101 = vsel %vm1525, 1.0, 0.0
        %v2102 = vsel %vm1526, 1.0, 0.0
        %v2103 = vsel %vm1527, 1.0, 0.0
        %v2104 = vsel %vm1528, 1.0, 0.0
        %v2105 = vsel %vm1529, 1.0, 0.0
        %v2106 = vsel %vm1530, 1.0, 0.0
        %v2107 = vsel %vm1531, 1.0, 0.0
        %v2108 = vsel %vm1532, 1.0, 0.0
        %v2109 = vsel %vm1533, 1.0, 0.0
        %v2110 = vsel %vm1534, 1.0, 0.0
        %v2111 = vsel %vm1535, 1.0, 0.0
        %v2112 = vsel %vm1536, 1.0, 0.0
        %v2113 = vsel %vm1537, 1.0, 0.0
        %v2114 = vsel %vm1538, 1.0, 0.0
        %v2115 = vsel %vm1539, 1.0, 0.0
        %v2116 = vsel %vm1540, 1.0, 0.0
        %v2117 = vsel %vm1541, 1.0, 0.0
        %v2118 = vsel %vm1542, 1.0, 0.0
        %v2119 = vsel %vm1543, 1.0, 0.0
        %v2120 = vsel %vm1544, 1.0, 0.0
        %v2121 = vsel %vm1545, 1.0, 0.0
        %v2122 = vsel %vm1546, 1.0, 0.0
        %v2123 = vsel %vm1547, 1.0, 0.0
        %2124 = vmatprep.subr.mxu0 0.0
        %2125 = vmatpush1.msra.mxu0 %v263
        %2126 = vmatprep.subr.mxu0 0.0
        %2127 = vmatpush1.msra.mxu0 %v264
        %2128 = vmatprep.subr.mxu0 0.0
        %2129 = vmatpush1.msra.mxu0 %v265
        %2130 = vmatprep.subr.mxu0 0.0
        %2131 = vmatpush1.msra.mxu0 %v266
        %2132 = vmatprep.subr.mxu0 0.0
        %2133 = vmatpush1.msra.mxu0 %v267
        %2134 = vmatprep.subr.mxu0 0.0
        %2135 = vmatpush1.msra.mxu0 %v268
        %2136 = vmatprep.subr.mxu0 0.0
        %2137 = vmatpush1.msra.mxu0 %v269
        %2138 = vmatprep.subr.mxu0 0.0
        %2139 = vmatpush1.msra.mxu0 %v270
        %2140 = vmatprep.subr.mxu0 0.0
        %2141 = vmatpush1.msra.mxu0 %v271
        %2142 = vmatprep.subr.mxu0 0.0
        %2143 = vmatpush1.msra.mxu0 %v272
        %2144 = vmatprep.subr.mxu0 0.0
        %2145 = vmatpush1.msra.mxu0 %v273
        %2146 = vmatprep.subr.mxu0 0.0
        %2147 = vmatpush1.msra.mxu0 %v274
        %2148 = vmatprep.subr.mxu0 0.0
        %2149 = vmatpush1.msra.mxu0 %v275
        %2150 = vmatprep.subr.mxu0 0.0
        %2151 = vmatpush1.msra.mxu0 %v276
        %2152 = vmatprep.subr.mxu0 0.0
        %2153 = vmatpush1.msra.mxu0 %v277
        %2154 = vmatprep.subr.mxu0 0.0
        %2155 = vmatpush1.msra.mxu0 %v278
        %2156 = vmatprep.subr.mxu0 0.0
        %2157 = vmatpush1.msra.mxu0 %v279
        %2158 = vmatprep.subr.mxu0 0.0
        %2159 = vmatpush1.msra.mxu0 %v280
        %2160 = vmatprep.subr.mxu0 0.0
        %2161 = vmatpush1.msra.mxu0 %v281
        %2162 = vmatprep.subr.mxu0 0.0
        %2163 = vmatpush1.msra.mxu0 %v282
        %2164 = vmatprep.subr.mxu0 0.0
        %2165 = vmatpush1.msra.mxu0 %v283
        %2166 = vmatprep.subr.mxu0 0.0
        %2167 = vmatpush1.msra.mxu0 %v284
        %2168 = vmatprep.subr.mxu0 0.0
        %2169 = vmatpush1.msra.mxu0 %v285
        %2170 = vmatprep.subr.mxu0 0.0
        %2171 = vmatpush1.msra.mxu0 %v286
        %2172 = vmatprep.subr.mxu0 0.0
        %2173 = vmatpush1.msra.mxu0 %v287
        %2174 = vmatprep.subr.mxu0 0.0
        %2175 = vmatpush1.msra.mxu0 %v288
        %2176 = vmatprep.subr.mxu0 0.0
        %2177 = vmatpush1.msra.mxu0 %v289
        %2178 = vmatprep.subr.mxu0 0.0
        %2179 = vmatpush1.msra.mxu0 %v290
        %2180 = vmatprep.subr.mxu0 0.0
        %2181 = vmatpush1.msra.mxu0 %v291
        %2182 = vmatprep.subr.mxu0 0.0
        %2183 = vmatpush1.msra.mxu0 %v292
        %2184 = vmatprep.subr.mxu0 0.0
        %2185 = vmatpush1.msra.mxu0 %v293
        %2186 = vmatprep.subr.mxu0 0.0
        %2187 = vmatpush1.msra.mxu0 %v294
        %2188 = vmatprep.mubr.f32.mxu0 %v1549
        %2189 = vmatmul.mubr.f32.gmra.mrb[0].mxu0 %v1548
        %v2190 = vpop.f32.mrb[0].mxu0
        %v2191 = vadd.f32 0.0, %v2190
        %v2192 = vpop.f32.mrb[0].mxu0
        %2193 = vmatprep.mubr.f32.mxu0 %v1553
        %2194 = vmatmul.mubr.f32.gmra.mrb[0].mxu0 %v1552
        %v2195 = vpop.f32.mrb[0].mxu0
        %v2196 = vadd.f32 0.0, %v2195
        %v2197 = vpop.f32.mrb[0].mxu0
        %2198 = vmatprep.mubr.f32.mxu0 %v1557
        %2199 = vmatmul.mubr.f32.gmra.mrb[0].mxu0 %v1556
        %v2200 = vpop.f32.mrb[0].mxu0
        %v2201 = vadd.f32 0.0, %v2200
        %v2202 = vpop.f32.mrb[0].mxu0
        %2203 = vmatprep.mubr.f32.mxu0 %v1561
        %2204 = vmatmul.mubr.f32.gmra.mrb[0].mxu0 %v1560
        %v2205 = vpop.f32.mrb[0].mxu0
        %v2206 = vadd.f32 0.0, %v2205
        %v2207 = vpop.f32.mrb[0].mxu0
        %2208 = vmatprep.mubr.f32.mxu0 %v1565
        %2209 = vmatmul.mubr.f32.gmra.mrb[0].mxu0 %v1564
        %v2210 = vpop.f32.mrb[0].mxu0
        %v2211 = vadd.f32 0.0, %v2210
        %v2212 = vpop.f32.mrb[0].mxu0
        %2213 = vmatprep.mubr.f32.mxu0 %v1569
        %2214 = vmatmul.mubr.f32.gmra.mrb[0].mxu0 %v1568
        %v2215 = vpop.f32.mrb[0].mxu0
        %v2216 = vadd.f32 0.0, %v2215
        %v2217 = vpop.f32.mrb[0].mxu0
        %2218 = vmatprep.mubr.f32.mxu0 %v1573
        %2219 = vmatmul.mubr.f32.gmra.mrb[0].mxu0 %v1572
        %v2220 = vpop.f32.mrb[0].mxu0
        %v2221 = vadd.f32 0.0, %v2220
        %v2222 = vpop.f32.mrb[0].mxu0
        %2223 = vmatprep.mubr.f32.mxu0 %v1577
        %2224 = vmatmul.mubr.f32.gmra.mrb[0].mxu0 %v1576
        %v2225 = vpop.f32.mrb[0].mxu0
        %v2226 = vadd.f32 0.0, %v2225
        %v2227 = vpop.f32.mrb[0].mxu0
        %2228 = vmatprep.mubr.f32.mxu0 %v1581
        %2229 = vmatmul.mubr.f32.gmra.mrb[0].mxu0 %v1580
        %v2230 = vpop.f32.mrb[0].mxu0
        %v2231 = vadd.f32 0.0, %v2230
        %v2232 = vpop.f32.mrb[0].mxu0
        %2233 = vmatprep.mubr.f32.mxu0 %v1585
        %2234 = vmatmul.mubr.f32.gmra.mrb[0].mxu0 %v1584
        %v2235 = vpop.f32.mrb[0].mxu0
        %v2236 = vadd.f32 0.0, %v2235
        %v2237 = vpop.f32.mrb[0].mxu0
        %2238 = vmatprep.mubr.f32.mxu0 %v1589
        %2239 = vmatmul.mubr.f32.gmra.mrb[0].mxu0 %v1588
        %v2240 = vpop.f32.mrb[0].mxu0
        %v2241 = vadd.f32 0.0, %v2240
        %v2242 = vpop.f32.mrb[0].mxu0
        %2243 = vmatprep.mubr.f32.mxu0 %v1593
        %2244 = vmatmul.mubr.f32.gmra.mrb[0].mxu0 %v1592
        %v2245 = vpop.f32.mrb[0].mxu0
        %v2246 = vadd.f32 0.0, %v2245
        %v2247 = vpop.f32.mrb[0].mxu0
        %2248 = vmatprep.mubr.f32.mxu0 %v1597
        %2249 = vmatmul.mubr.f32.gmra.mrb[0].mxu0 %v1596
        %v2250 = vpop.f32.mrb[0].mxu0
        %v2251 = vadd.f32 0.0, %v2250
        %v2252 = vpop.f32.mrb[0].mxu0
        %2253 = vmatprep.mubr.f32.mxu0 %v1601
        %2254 = vmatmul.mubr.f32.gmra.mrb[0].mxu0 %v1600
        %v2255 = vpop.f32.mrb[0].mxu0
        %v2256 = vadd.f32 0.0, %v2255
        %v2257 = vpop.f32.mrb[0].mxu0
        %2258 = vmatprep.mubr.f32.mxu0 %v1605
        %2259 = vmatmul.mubr.f32.gmra.mrb[0].mxu0 %v1604
        %v2260 = vpop.f32.mrb[0].mxu0
        %v2261 = vadd.f32 0.0, %v2260
        %v2262 = vpop.f32.mrb[0].mxu0
        %2263 = vmatprep.mubr.f32.mxu0 %v1609
        %2264 = vmatmul.mubr.f32.gmra.mrb[0].mxu0 %v1608
        %v2265 = vpop.f32.mrb[0].mxu0
        %v2266 = vadd.f32 0.0, %v2265
        %v2267 = vpop.f32.mrb[0].mxu0
        %2268 = vmatprep.mubr.f32.mxu0 %v1613
        %2269 = vmatmul.mubr.f32.gmra.mrb[0].mxu0 %v1612
        %v2270 = vpop.f32.mrb[0].mxu0
        %v2271 = vadd.f32 0.0, %v2270
        %v2272 = vpop.f32.mrb[0].mxu0
        %2273 = vmatprep.mubr.f32.mxu0 %v1617
        %2274 = vmatmul.mubr.f32.gmra.mrb[0].mxu0 %v1616
        %v2275 = vpop.f32.mrb[0].mxu0
        %v2276 = vadd.f32 0.0, %v2275
        %v2277 = vpop.f32.mrb[0].mxu0
        %2278 = vmatprep.mubr.f32.mxu0 %v1621
        %2279 = vmatmul.mubr.f32.gmra.mrb[0].mxu0 %v1620
        %v2280 = vpop.f32.mrb[0].mxu0
        %v2281 = vadd.f32 0.0, %v2280
        %v2282 = vpop.f32.mrb[0].mxu0
        %2283 = vmatprep.mubr.f32.mxu0 %v1625
        %2284 = vmatmul.mubr.f32.gmra.mrb[0].mxu0 %v1624
        %v2285 = vpop.f32.mrb[0].mxu0
        %v2286 = vadd.f32 0.0, %v2285
        %v2287 = vpop.f32.mrb[0].mxu0
        %2288 = vmatprep.mubr.f32.mxu0 %v1629
        %2289 = vmatmul.mubr.f32.gmra.mrb[0].mxu0 %v1628
        %v2290 = vpop.f32.mrb[0].mxu0
        %v2291 = vadd.f32 0.0, %v2290
        %v2292 = vpop.f32.mrb[0].mxu0
        %2293 = vmatprep.mubr.f32.mxu0 %v1633
        %2294 = vmatmul.mubr.f32.gmra.mrb[0].mxu0 %v1632
        %v2295 = vpop.f32.mrb[0].mxu0
        %v2296 = vadd.f32 0.0, %v2295
        %v2297 = vpop.f32.mrb[0].mxu0
        %2298 = vmatprep.mubr.f32.mxu0 %v1637
        %2299 = vmatmul.mubr.f32.gmra.mrb[0].mxu0 %v1636
        %v2300 = vpop.f32.mrb[0].mxu0
        %v2301 = vadd.f32 0.0, %v2300
        %v2302 = vpop.f32.mrb[0].mxu0
        %2303 = vmatprep.mubr.f32.mxu0 %v1641
        %2304 = vmatmul.mubr.f32.gmra.mrb[0].mxu0 %v1640
        %v2305 = vpop.f32.mrb[0].mxu0
        %v2306 = vadd.f32 0.0, %v2305
        %v2307 = vpop.f32.mrb[0].mxu0
        %2308 = vmatprep.mubr.f32.mxu0 %v1645
        %2309 = vmatmul.mubr.f32.gmra.mrb[0].mxu0 %v1644
        %v2310 = vpop.f32.mrb[0].mxu0
        %v2311 = vadd.f32 0.0, %v2310
        %v2312 = vpop.f32.mrb[0].mxu0
        %2313 = vmatprep.mubr.f32.mxu0 %v1649
        %2314 = vmatmul.mubr.f32.gmra.mrb[0].mxu0 %v1648
        %v2315 = vpop.f32.mrb[0].mxu0
        %v2316 = vadd.f32 0.0, %v2315
        %v2317 = vpop.f32.mrb[0].mxu0
        %2318 = vmatprep.mubr.f32.mxu0 %v1653
        %2319 = vmatmul.mubr.f32.gmra.mrb[0].mxu0 %v1652
        %v2320 = vpop.f32.mrb[0].mxu0
        %v2321 = vadd.f32 0.0, %v2320
        %v2322 = vpop.f32.mrb[0].mxu0
        %2323 = vmatprep.mubr.f32.mxu0 %v1657
        %2324 = vmatmul.mubr.f32.gmra.mrb[0].mxu0 %v1656
        %v2325 = vpop.f32.mrb[0].mxu0
        %v2326 = vadd.f32 0.0, %v2325
        %v2327 = vpop.f32.mrb[0].mxu0
        %2328 = vmatprep.mubr.f32.mxu0 %v1661
        %2329 = vmatmul.mubr.f32.gmra.mrb[0].mxu0 %v1660
        %v2330 = vpop.f32.mrb[0].mxu0
        %v2331 = vadd.f32 0.0, %v2330
        %v2332 = vpop.f32.mrb[0].mxu0
        %2333 = vmatprep.mubr.f32.mxu0 %v1665
        %2334 = vmatmul.mubr.f32.gmra.mrb[0].mxu0 %v1664
        %v2335 = vpop.f32.mrb[0].mxu0
        %v2336 = vadd.f32 0.0, %v2335
        %v2337 = vpop.f32.mrb[0].mxu0
        %2338 = vmatprep.mubr.f32.mxu0 %v1669
        %2339 = vmatmul.mubr.f32.gmra.mrb[0].mxu0 %v1668
        %v2340 = vpop.f32.mrb[0].mxu0
        %v2341 = vadd.f32 0.0, %v2340
        %v2342 = vpop.f32.mrb[0].mxu0
        %2343 = vmatprep.mubr.f32.mxu0 %v1673
        %2344 = vmatmul.mubr.f32.gmra.mrb[0].mxu0 %v1672
        %v2345 = vpop.f32.mrb[0].mxu0
        %v2346 = vadd.f32 0.0, %v2345
        %v2347 = vpop.f32.mrb[0].mxu0
        %2348 = vmatprep.mubr.f32.mxu0 %v1677
        %2349 = vmatmul.mubr.f32.gmra.mrb[0].mxu0 %v1676
        %v2350 = vpop.f32.mrb[0].mxu0
        %v2351 = vadd.f32 0.0, %v2350
        %v2352 = vpop.f32.mrb[0].mxu0
        %2353 = vmatprep.mubr.f32.mxu0 %v1681
        %2354 = vmatmul.mubr.f32.gmra.mrb[0].mxu0 %v1680
        %v2355 = vpop.f32.mrb[0].mxu0
        %v2356 = vadd.f32 0.0, %v2355
        %v2357 = vpop.f32.mrb[0].mxu0
        %2358 = vmatprep.mubr.f32.mxu0 %v1685
        %2359 = vmatmul.mubr.f32.gmra.mrb[0].mxu0 %v1684
        %v2360 = vpop.f32.mrb[0].mxu0
        %v2361 = vadd.f32 0.0, %v2360
        %v2362 = vpop.f32.mrb[0].mxu0
        %2363 = vmatprep.mubr.f32.mxu0 %v1689
        %2364 = vmatmul.mubr.f32.gmra.mrb[0].mxu0 %v1688
        %v2365 = vpop.f32.mrb[0].mxu0
        %v2366 = vadd.f32 0.0, %v2365
        %v2367 = vpop.f32.mrb[0].mxu0
        %2368 = vmatprep.mubr.f32.mxu0 %v1693
        %2369 = vmatmul.mubr.f32.gmra.mrb[0].mxu0 %v1692
        %v2370 = vpop.f32.mrb[0].mxu0
        %v2371 = vadd.f32 0.0, %v2370
        %v2372 = vpop.f32.mrb[0].mxu0
        %2373 = vmatprep.mubr.f32.mxu0 %v1697
        %2374 = vmatmul.mubr.f32.gmra.mrb[0].mxu0 %v1696
        %v2375 = vpop.f32.mrb[0].mxu0
        %v2376 = vadd.f32 0.0, %v2375
        %v2377 = vpop.f32.mrb[0].mxu0
        %2378 = vmatprep.mubr.f32.mxu0 %v1701
        %2379 = vmatmul.mubr.f32.gmra.mrb[0].mxu0 %v1700
        %v2380 = vpop.f32.mrb[0].mxu0
        %v2381 = vadd.f32 0.0, %v2380
        %v2382 = vpop.f32.mrb[0].mxu0
        %2383 = vmatprep.mubr.f32.mxu0 %v1705
        %2384 = vmatmul.mubr.f32.gmra.mrb[0].mxu0 %v1704
        %v2385 = vpop.f32.mrb[0].mxu0
        %v2386 = vadd.f32 0.0, %v2385
        %v2387 = vpop.f32.mrb[0].mxu0
        %2388 = vmatprep.mubr.f32.mxu0 %v1709
        %2389 = vmatmul.mubr.f32.gmra.mrb[0].mxu0 %v1708
        %v2390 = vpop.f32.mrb[0].mxu0
        %v2391 = vadd.f32 0.0, %v2390
        %v2392 = vpop.f32.mrb[0].mxu0
        %2393 = vmatprep.mubr.f32.mxu0 %v1713
        %2394 = vmatmul.mubr.f32.gmra.mrb[0].mxu0 %v1712
        %v2395 = vpop.f32.mrb[0].mxu0
        %v2396 = vadd.f32 0.0, %v2395
        %v2397 = vpop.f32.mrb[0].mxu0
        %2398 = vmatprep.mubr.f32.mxu0 %v1717
        %2399 = vmatmul.mubr.f32.gmra.mrb[0].mxu0 %v1716
        %v2400 = vpop.f32.mrb[0].mxu0
        %v2401 = vadd.f32 0.0, %v2400
        %v2402 = vpop.f32.mrb[0].mxu0
        %2403 = vmatprep.mubr.f32.mxu0 %v1721
        %2404 = vmatmul.mubr.f32.gmra.mrb[0].mxu0 %v1720
        %v2405 = vpop.f32.mrb[0].mxu0
        %v2406 = vadd.f32 0.0, %v2405
        %v2407 = vpop.f32.mrb[0].mxu0
        %2408 = vmatprep.mubr.f32.mxu0 %v1725
        %2409 = vmatmul.mubr.f32.gmra.mrb[0].mxu0 %v1724
        %v2410 = vpop.f32.mrb[0].mxu0
        %v2411 = vadd.f32 0.0, %v2410
        %v2412 = vpop.f32.mrb[0].mxu0
        %2413 = vmatprep.mubr.f32.mxu0 %v1729
        %2414 = vmatmul.mubr.f32.gmra.mrb[0].mxu0 %v1728
        %v2415 = vpop.f32.mrb[0].mxu0
        %v2416 = vadd.f32 0.0, %v2415
        %v2417 = vpop.f32.mrb[0].mxu0
        %2418 = vmatprep.mubr.f32.mxu0 %v1733
        %2419 = vmatmul.mubr.f32.gmra.mrb[0].mxu0 %v1732
        %v2420 = vpop.f32.mrb[0].mxu0
        %v2421 = vadd.f32 0.0, %v2420
        %v2422 = vpop.f32.mrb[0].mxu0
        %2423 = vmatprep.mubr.f32.mxu0 %v1737
        %2424 = vmatmul.mubr.f32.gmra.mrb[0].mxu0 %v1736
        %v2425 = vpop.f32.mrb[0].mxu0
        %v2426 = vadd.f32 0.0, %v2425
        %v2427 = vpop.f32.mrb[0].mxu0
        %2428 = vmatprep.mubr.f32.mxu0 %v1741
        %2429 = vmatmul.mubr.f32.gmra.mrb[0].mxu0 %v1740
        %v2430 = vpop.f32.mrb[0].mxu0
        %v2431 = vadd.f32 0.0, %v2430
        %v2432 = vpop.f32.mrb[0].mxu0
        %2433 = vmatprep.mubr.f32.mxu0 %v1745
        %2434 = vmatmul.mubr.f32.gmra.mrb[0].mxu0 %v1744
        %v2435 = vpop.f32.mrb[0].mxu0
        %v2436 = vadd.f32 0.0, %v2435
        %v2437 = vpop.f32.mrb[0].mxu0
        %2438 = vmatprep.mubr.f32.mxu0 %v1749
        %2439 = vmatmul.mubr.f32.gmra.mrb[0].mxu0 %v1748
        %v2440 = vpop.f32.mrb[0].mxu0
        %v2441 = vadd.f32 0.0, %v2440
        %v2442 = vpop.f32.mrb[0].mxu0
        %2443 = vmatprep.mubr.f32.mxu0 %v1753
        %2444 = vmatmul.mubr.f32.gmra.mrb[0].mxu0 %v1752
        %v2445 = vpop.f32.mrb[0].mxu0
        %v2446 = vadd.f32 0.0, %v2445
        %v2447 = vpop.f32.mrb[0].mxu0
        %2448 = vmatprep.mubr.f32.mxu0 %v1757
        %2449 = vmatmul.mubr.f32.gmra.mrb[0].mxu0 %v1756
        %v2450 = vpop.f32.mrb[0].mxu0
        %v2451 = vadd.f32 0.0, %v2450
        %v2452 = vpop.f32.mrb[0].mxu0
        %2453 = vmatprep.mubr.f32.mxu0 %v1761
        %2454 = vmatmul.mubr.f32.gmra.mrb[0].mxu0 %v1760
        %v2455 = vpop.f32.mrb[0].mxu0
        %v2456 = vadd.f32 0.0, %v2455
        %v2457 = vpop.f32.mrb[0].mxu0
        %2458 = vmatprep.mubr.f32.mxu0 %v1765
        %2459 = vmatmul.mubr.f32.gmra.mrb[0].mxu0 %v1764
        %v2460 = vpop.f32.mrb[0].mxu0
        %v2461 = vadd.f32 0.0, %v2460
        %v2462 = vpop.f32.mrb[0].mxu0
        %2463 = vmatprep.mubr.f32.mxu0 %v1769
        %2464 = vmatmul.mubr.f32.gmra.mrb[0].mxu0 %v1768
        %v2465 = vpop.f32.mrb[0].mxu0
        %v2466 = vadd.f32 0.0, %v2465
        %v2467 = vpop.f32.mrb[0].mxu0
        %2468 = vmatprep.mubr.f32.mxu0 %v1773
        %2469 = vmatmul.mubr.f32.gmra.mrb[0].mxu0 %v1772
        %v2470 = vpop.f32.mrb[0].mxu0
        %v2471 = vadd.f32 0.0, %v2470
        %v2472 = vpop.f32.mrb[0].mxu0
        %2473 = vmatprep.mubr.f32.mxu0 %v1777
        %2474 = vmatmul.mubr.f32.gmra.mrb[0].mxu0 %v1776
        %v2475 = vpop.f32.mrb[0].mxu0
        %v2476 = vadd.f32 0.0, %v2475
        %v2477 = vpop.f32.mrb[0].mxu0
        %2478 = vmatprep.mubr.f32.mxu0 %v1781
        %2479 = vmatmul.mubr.f32.gmra.mrb[0].mxu0 %v1780
        %v2480 = vpop.f32.mrb[0].mxu0
        %v2481 = vadd.f32 0.0, %v2480
        %v2482 = vpop.f32.mrb[0].mxu0
        %2483 = vmatprep.mubr.f32.mxu0 %v1785
        %2484 = vmatmul.mubr.f32.gmra.mrb[0].mxu0 %v1784
        %v2485 = vpop.f32.mrb[0].mxu0
        %v2486 = vadd.f32 0.0, %v2485
        %v2487 = vpop.f32.mrb[0].mxu0
        %2488 = vmatprep.mubr.f32.mxu0 %v1789
        %2489 = vmatmul.mubr.f32.gmra.mrb[0].mxu0 %v1788
        %v2490 = vpop.f32.mrb[0].mxu0
        %v2491 = vadd.f32 0.0, %v2490
        %v2492 = vpop.f32.mrb[0].mxu0
        %2493 = vmatprep.mubr.f32.mxu0 %v1793
        %2494 = vmatmul.mubr.f32.gmra.mrb[0].mxu0 %v1792
        %v2495 = vpop.f32.mrb[0].mxu0
        %v2496 = vadd.f32 0.0, %v2495
        %v2497 = vpop.f32.mrb[0].mxu0
        %2498 = vmatprep.mubr.f32.mxu0 %v1797
        %2499 = vmatmul.mubr.f32.gmra.mrb[0].mxu0 %v1796
        %v2500 = vpop.f32.mrb[0].mxu0
        %v2501 = vadd.f32 0.0, %v2500
        %v2502 = vpop.f32.mrb[0].mxu0
        %2503 = vmatprep.mubr.f32.mxu0 %v1801
        %2504 = vmatmul.mubr.f32.gmra.mrb[0].mxu0 %v1800
        %v2505 = vpop.f32.mrb[0].mxu0
        %v2506 = vadd.f32 0.0, %v2505
        %v2507 = vpop.f32.mrb[0].mxu0
        %2508 = vmatprep.mubr.f32.mxu0 %v1805
        %2509 = vmatmul.mubr.f32.gmra.mrb[0].mxu0 %v1804
        %v2510 = vpop.f32.mrb[0].mxu0
        %v2511 = vadd.f32 0.0, %v2510
        %v2512 = vpop.f32.mrb[0].mxu0
        %2513 = vmatprep.mubr.f32.mxu0 %v1809
        %2514 = vmatmul.mubr.f32.gmra.mrb[0].mxu0 %v1808
        %v2515 = vpop.f32.mrb[0].mxu0
        %v2516 = vadd.f32 0.0, %v2515
        %v2517 = vpop.f32.mrb[0].mxu0
        %2518 = vmatprep.mubr.f32.mxu0 %v1813
        %2519 = vmatmul.mubr.f32.gmra.mrb[0].mxu0 %v1812
        %v2520 = vpop.f32.mrb[0].mxu0
        %v2521 = vadd.f32 0.0, %v2520
        %v2522 = vpop.f32.mrb[0].mxu0
        %2523 = vmatprep.mubr.f32.mxu0 %v1817
        %2524 = vmatmul.mubr.f32.gmra.mrb[0].mxu0 %v1816
        %v2525 = vpop.f32.mrb[0].mxu0
        %v2526 = vadd.f32 0.0, %v2525
        %v2527 = vpop.f32.mrb[0].mxu0
        %2528 = vmatprep.mubr.f32.mxu0 %v1821
        %2529 = vmatmul.mubr.f32.gmra.mrb[0].mxu0 %v1820
        %v2530 = vpop.f32.mrb[0].mxu0
        %v2531 = vadd.f32 0.0, %v2530
        %v2532 = vpop.f32.mrb[0].mxu0
        %2533 = vmatprep.mubr.f32.mxu0 %v1825
        %2534 = vmatmul.mubr.f32.gmra.mrb[0].mxu0 %v1824
        %v2535 = vpop.f32.mrb[0].mxu0
        %v2536 = vadd.f32 0.0, %v2535
        %v2537 = vpop.f32.mrb[0].mxu0
        %2538 = vmatprep.mubr.f32.mxu0 %v1829
        %2539 = vmatmul.mubr.f32.gmra.mrb[0].mxu0 %v1828
        %v2540 = vpop.f32.mrb[0].mxu0
        %v2541 = vadd.f32 0.0, %v2540
        %v2542 = vpop.f32.mrb[0].mxu0
        %2543 = vmatprep.mubr.f32.mxu0 %v1833
        %2544 = vmatmul.mubr.f32.gmra.mrb[0].mxu0 %v1832
        %v2545 = vpop.f32.mrb[0].mxu0
        %v2546 = vadd.f32 0.0, %v2545
        %v2547 = vpop.f32.mrb[0].mxu0
        %2548 = vmatprep.mubr.f32.mxu0 %v1837
        %2549 = vmatmul.mubr.f32.gmra.mrb[0].mxu0 %v1836
        %v2550 = vpop.f32.mrb[0].mxu0
        %v2551 = vadd.f32 0.0, %v2550
        %v2552 = vpop.f32.mrb[0].mxu0
        %2553 = vmatprep.mubr.f32.mxu0 %v1841
        %2554 = vmatmul.mubr.f32.gmra.mrb[0].mxu0 %v1840
        %v2555 = vpop.f32.mrb[0].mxu0
        %v2556 = vadd.f32 0.0, %v2555
        %v2557 = vpop.f32.mrb[0].mxu0
        %2558 = vmatprep.mubr.f32.mxu0 %v1845
        %2559 = vmatmul.mubr.f32.gmra.mrb[0].mxu0 %v1844
        %v2560 = vpop.f32.mrb[0].mxu0
        %v2561 = vadd.f32 0.0, %v2560
        %v2562 = vpop.f32.mrb[0].mxu0
        %2563 = vmatprep.mubr.f32.mxu0 %v1849
        %2564 = vmatmul.mubr.f32.gmra.mrb[0].mxu0 %v1848
        %v2565 = vpop.f32.mrb[0].mxu0
        %v2566 = vadd.f32 0.0, %v2565
        %v2567 = vpop.f32.mrb[0].mxu0
        %2568 = vmatprep.mubr.f32.mxu0 %v1853
        %2569 = vmatmul.mubr.f32.gmra.mrb[0].mxu0 %v1852
        %v2570 = vpop.f32.mrb[0].mxu0
        %v2571 = vadd.f32 0.0, %v2570
        %v2572 = vpop.f32.mrb[0].mxu0
        %2573 = vmatprep.mubr.f32.mxu0 %v1857
        %2574 = vmatmul.mubr.f32.gmra.mrb[0].mxu0 %v1856
        %v2575 = vpop.f32.mrb[0].mxu0
        %v2576 = vadd.f32 0.0, %v2575
        %v2577 = vpop.f32.mrb[0].mxu0
        %2578 = vmatprep.mubr.f32.mxu0 %v1861
        %2579 = vmatmul.mubr.f32.gmra.mrb[0].mxu0 %v1860
        %v2580 = vpop.f32.mrb[0].mxu0
        %v2581 = vadd.f32 0.0, %v2580
        %v2582 = vpop.f32.mrb[0].mxu0
        %2583 = vmatprep.mubr.f32.mxu0 %v1865
        %2584 = vmatmul.mubr.f32.gmra.mrb[0].mxu0 %v1864
        %v2585 = vpop.f32.mrb[0].mxu0
        %v2586 = vadd.f32 0.0, %v2585
        %v2587 = vpop.f32.mrb[0].mxu0
        %2588 = vmatprep.mubr.f32.mxu0 %v1869
        %2589 = vmatmul.mubr.f32.gmra.mrb[0].mxu0 %v1868
        %v2590 = vpop.f32.mrb[0].mxu0
        %v2591 = vadd.f32 0.0, %v2590
        %v2592 = vpop.f32.mrb[0].mxu0
        %2593 = vmatprep.mubr.f32.mxu0 %v1873
        %2594 = vmatmul.mubr.f32.gmra.mrb[0].mxu0 %v1872
        %v2595 = vpop.f32.mrb[0].mxu0
        %v2596 = vadd.f32 0.0, %v2595
        %v2597 = vpop.f32.mrb[0].mxu0
        %2598 = vmatprep.mubr.f32.mxu0 %v1877
        %2599 = vmatmul.mubr.f32.gmra.mrb[0].mxu0 %v1876
        %v2600 = vpop.f32.mrb[0].mxu0
        %v2601 = vadd.f32 0.0, %v2600
        %v2602 = vpop.f32.mrb[0].mxu0
        %2603 = vmatprep.mubr.f32.mxu0 %v1881
        %2604 = vmatmul.mubr.f32.gmra.mrb[0].mxu0 %v1880
        %v2605 = vpop.f32.mrb[0].mxu0
        %v2606 = vadd.f32 0.0, %v2605
        %v2607 = vpop.f32.mrb[0].mxu0
        %2608 = vmatprep.mubr.f32.mxu0 %v1885
        %2609 = vmatmul.mubr.f32.gmra.mrb[0].mxu0 %v1884
        %v2610 = vpop.f32.mrb[0].mxu0
        %v2611 = vadd.f32 0.0, %v2610
        %v2612 = vpop.f32.mrb[0].mxu0
        %2613 = vmatprep.mubr.f32.mxu0 %v1889
        %2614 = vmatmul.mubr.f32.gmra.mrb[0].mxu0 %v1888
        %v2615 = vpop.f32.mrb[0].mxu0
        %v2616 = vadd.f32 0.0, %v2615
        %v2617 = vpop.f32.mrb[0].mxu0
        %2618 = vmatprep.mubr.f32.mxu0 %v1893
        %2619 = vmatmul.mubr.f32.gmra.mrb[0].mxu0 %v1892
        %v2620 = vpop.f32.mrb[0].mxu0
        %v2621 = vadd.f32 0.0, %v2620
        %v2622 = vpop.f32.mrb[0].mxu0
        %2623 = vmatprep.mubr.f32.mxu0 %v1897
        %2624 = vmatmul.mubr.f32.gmra.mrb[0].mxu0 %v1896
        %v2625 = vpop.f32.mrb[0].mxu0
        %v2626 = vadd.f32 0.0, %v2625
        %v2627 = vpop.f32.mrb[0].mxu0
        %2628 = vmatprep.mubr.f32.mxu0 %v1901
        %2629 = vmatmul.mubr.f32.gmra.mrb[0].mxu0 %v1900
        %v2630 = vpop.f32.mrb[0].mxu0
        %v2631 = vadd.f32 0.0, %v2630
        %v2632 = vpop.f32.mrb[0].mxu0
        %2633 = vmatprep.mubr.f32.mxu0 %v1905
        %2634 = vmatmul.mubr.f32.gmra.mrb[0].mxu0 %v1904
        %v2635 = vpop.f32.mrb[0].mxu0
        %v2636 = vadd.f32 0.0, %v2635
        %v2637 = vpop.f32.mrb[0].mxu0
        %2638 = vmatprep.mubr.f32.mxu0 %v1909
        %2639 = vmatmul.mubr.f32.gmra.mrb[0].mxu0 %v1908
        %v2640 = vpop.f32.mrb[0].mxu0
        %v2641 = vadd.f32 0.0, %v2640
        %v2642 = vpop.f32.mrb[0].mxu0
        %2643 = vmatprep.mubr.f32.mxu0 %v1913
        %2644 = vmatmul.mubr.f32.gmra.mrb[0].mxu0 %v1912
        %v2645 = vpop.f32.mrb[0].mxu0
        %v2646 = vadd.f32 0.0, %v2645
        %v2647 = vpop.f32.mrb[0].mxu0
        %2648 = vmatprep.mubr.f32.mxu0 %v1917
        %2649 = vmatmul.mubr.f32.gmra.mrb[0].mxu0 %v1916
        %v2650 = vpop.f32.mrb[0].mxu0
        %v2651 = vadd.f32 0.0, %v2650
        %v2652 = vpop.f32.mrb[0].mxu0
        %2653 = vmatprep.mubr.f32.mxu0 %v1921
        %2654 = vmatmul.mubr.f32.gmra.mrb[0].mxu0 %v1920
        %v2655 = vpop.f32.mrb[0].mxu0
        %v2656 = vadd.f32 0.0, %v2655
        %v2657 = vpop.f32.mrb[0].mxu0
        %2658 = vmatprep.mubr.f32.mxu0 %v1925
        %2659 = vmatmul.mubr.f32.gmra.mrb[0].mxu0 %v1924
        %v2660 = vpop.f32.mrb[0].mxu0
        %v2661 = vadd.f32 0.0, %v2660
        %v2662 = vpop.f32.mrb[0].mxu0
        %2663 = vmatprep.mubr.f32.mxu0 %v1929
        %2664 = vmatmul.mubr.f32.gmra.mrb[0].mxu0 %v1928
        %v2665 = vpop.f32.mrb[0].mxu0
        %v2666 = vadd.f32 0.0, %v2665
        %v2667 = vpop.f32.mrb[0].mxu0
        %2668 = vmatprep.mubr.f32.mxu0 %v1933
        %2669 = vmatmul.mubr.f32.gmra.mrb[0].mxu0 %v1932
        %v2670 = vpop.f32.mrb[0].mxu0
        %v2671 = vadd.f32 0.0, %v2670
        %v2672 = vpop.f32.mrb[0].mxu0
        %2673 = vmatprep.mubr.f32.mxu0 %v1937
        %2674 = vmatmul.mubr.f32.gmra.mrb[0].mxu0 %v1936
        %v2675 = vpop.f32.mrb[0].mxu0
        %v2676 = vadd.f32 0.0, %v2675
        %v2677 = vpop.f32.mrb[0].mxu0
        %2678 = vmatprep.mubr.f32.mxu0 %v1941
        %2679 = vmatmul.mubr.f32.gmra.mrb[0].mxu0 %v1940
        %v2680 = vpop.f32.mrb[0].mxu0
        %v2681 = vadd.f32 0.0, %v2680
        %v2682 = vpop.f32.mrb[0].mxu0
        %2683 = vmatprep.mubr.f32.mxu0 %v1945
        %2684 = vmatmul.mubr.f32.gmra.mrb[0].mxu0 %v1944
        %v2685 = vpop.f32.mrb[0].mxu0
        %v2686 = vadd.f32 0.0, %v2685
        %v2687 = vpop.f32.mrb[0].mxu0
        %2688 = vmatprep.mubr.f32.mxu0 %v1949
        %2689 = vmatmul.mubr.f32.gmra.mrb[0].mxu0 %v1948
        %v2690 = vpop.f32.mrb[0].mxu0
        %v2691 = vadd.f32 0.0, %v2690
        %v2692 = vpop.f32.mrb[0].mxu0
        %2693 = vmatprep.mubr.f32.mxu0 %v1953
        %2694 = vmatmul.mubr.f32.gmra.mrb[0].mxu0 %v1952
        %v2695 = vpop.f32.mrb[0].mxu0
        %v2696 = vadd.f32 0.0, %v2695
        %v2697 = vpop.f32.mrb[0].mxu0
        %2698 = vmatprep.mubr.f32.mxu0 %v1957
        %2699 = vmatmul.mubr.f32.gmra.mrb[0].mxu0 %v1956
        %v2700 = vpop.f32.mrb[0].mxu0
        %v2701 = vadd.f32 0.0, %v2700
        %v2702 = vpop.f32.mrb[0].mxu0
        %2703 = vmatprep.mubr.f32.mxu0 %v1961
        %2704 = vmatmul.mubr.f32.gmra.mrb[0].mxu0 %v1960
        %v2705 = vpop.f32.mrb[0].mxu0
        %v2706 = vadd.f32 0.0, %v2705
        %v2707 = vpop.f32.mrb[0].mxu0
        %2708 = vmatprep.mubr.f32.mxu0 %v1965
        %2709 = vmatmul.mubr.f32.gmra.mrb[0].mxu0 %v1964
        %v2710 = vpop.f32.mrb[0].mxu0
        %v2711 = vadd.f32 0.0, %v2710
        %v2712 = vpop.f32.mrb[0].mxu0
        %2713 = vmatprep.mubr.f32.mxu0 %v1969
        %2714 = vmatmul.mubr.f32.gmra.mrb[0].mxu0 %v1968
        %v2715 = vpop.f32.mrb[0].mxu0
        %v2716 = vadd.f32 0.0, %v2715
        %v2717 = vpop.f32.mrb[0].mxu0
        %2718 = vmatprep.mubr.f32.mxu0 %v1973
        %2719 = vmatmul.mubr.f32.gmra.mrb[0].mxu0 %v1972
        %v2720 = vpop.f32.mrb[0].mxu0
        %v2721 = vadd.f32 0.0, %v2720
        %v2722 = vpop.f32.mrb[0].mxu0
        %2723 = vmatprep.mubr.f32.mxu0 %v1977
        %2724 = vmatmul.mubr.f32.gmra.mrb[0].mxu0 %v1976
        %v2725 = vpop.f32.mrb[0].mxu0
        %v2726 = vadd.f32 0.0, %v2725
        %v2727 = vpop.f32.mrb[0].mxu0
        %2728 = vmatprep.mubr.f32.mxu0 %v1981
        %2729 = vmatmul.mubr.f32.gmra.mrb[0].mxu0 %v1980
        %v2730 = vpop.f32.mrb[0].mxu0
        %v2731 = vadd.f32 0.0, %v2730
        %v2732 = vpop.f32.mrb[0].mxu0
        %2733 = vmatprep.mubr.f32.mxu0 %v1985
        %2734 = vmatmul.mubr.f32.gmra.mrb[0].mxu0 %v1984
        %v2735 = vpop.f32.mrb[0].mxu0
        %v2736 = vadd.f32 0.0, %v2735
        %v2737 = vpop.f32.mrb[0].mxu0
        %2738 = vmatprep.mubr.f32.mxu0 %v1989
        %2739 = vmatmul.mubr.f32.gmra.mrb[0].mxu0 %v1988
        %v2740 = vpop.f32.mrb[0].mxu0
        %v2741 = vadd.f32 0.0, %v2740
        %v2742 = vpop.f32.mrb[0].mxu0
        %2743 = vmatprep.mubr.f32.mxu0 %v1993
        %2744 = vmatmul.mubr.f32.gmra.mrb[0].mxu0 %v1992
        %v2745 = vpop.f32.mrb[0].mxu0
        %v2746 = vadd.f32 0.0, %v2745
        %v2747 = vpop.f32.mrb[0].mxu0
        %2748 = vmatprep.mubr.f32.mxu0 %v1997
        %2749 = vmatmul.mubr.f32.gmra.mrb[0].mxu0 %v1996
        %v2750 = vpop.f32.mrb[0].mxu0
        %v2751 = vadd.f32 0.0, %v2750
        %v2752 = vpop.f32.mrb[0].mxu0
        %2753 = vmatprep.mubr.f32.mxu0 %v2001
        %2754 = vmatmul.mubr.f32.gmra.mrb[0].mxu0 %v2000
        %v2755 = vpop.f32.mrb[0].mxu0
        %v2756 = vadd.f32 0.0, %v2755
        %v2757 = vpop.f32.mrb[0].mxu0
        %2758 = vmatprep.mubr.f32.mxu0 %v2005
        %2759 = vmatmul.mubr.f32.gmra.mrb[0].mxu0 %v2004
        %v2760 = vpop.f32.mrb[0].mxu0
        %v2761 = vadd.f32 0.0, %v2760
        %v2762 = vpop.f32.mrb[0].mxu0
        %2763 = vmatprep.mubr.f32.mxu0 %v2009
        %2764 = vmatmul.mubr.f32.gmra.mrb[0].mxu0 %v2008
        %v2765 = vpop.f32.mrb[0].mxu0
        %v2766 = vadd.f32 0.0, %v2765
        %v2767 = vpop.f32.mrb[0].mxu0
        %2768 = vmatprep.mubr.f32.mxu0 %v2013
        %2769 = vmatmul.mubr.f32.gmra.mrb[0].mxu0 %v2012
        %v2770 = vpop.f32.mrb[0].mxu0
        %v2771 = vadd.f32 0.0, %v2770
        %v2772 = vpop.f32.mrb[0].mxu0
        %2773 = vmatprep.mubr.f32.mxu0 %v2017
        %2774 = vmatmul.mubr.f32.gmra.mrb[0].mxu0 %v2016
        %v2775 = vpop.f32.mrb[0].mxu0
        %v2776 = vadd.f32 0.0, %v2775
        %v2777 = vpop.f32.mrb[0].mxu0
        %2778 = vmatprep.mubr.f32.mxu0 %v2021
        %2779 = vmatmul.mubr.f32.gmra.mrb[0].mxu0 %v2020
        %v2780 = vpop.f32.mrb[0].mxu0
        %v2781 = vadd.f32 0.0, %v2780
        %v2782 = vpop.f32.mrb[0].mxu0
        %2783 = vmatprep.mubr.f32.mxu0 %v2025
        %2784 = vmatmul.mubr.f32.gmra.mrb[0].mxu0 %v2024
        %v2785 = vpop.f32.mrb[0].mxu0
        %v2786 = vadd.f32 0.0, %v2785
        %v2787 = vpop.f32.mrb[0].mxu0
        %2788 = vmatprep.mubr.f32.mxu0 %v2029
        %2789 = vmatmul.mubr.f32.gmra.mrb[0].mxu0 %v2028
        %v2790 = vpop.f32.mrb[0].mxu0
        %v2791 = vadd.f32 0.0, %v2790
        %v2792 = vpop.f32.mrb[0].mxu0
        %2793 = vmatprep.mubr.f32.mxu0 %v2033
        %2794 = vmatmul.mubr.f32.gmra.mrb[0].mxu0 %v2032
        %v2795 = vpop.f32.mrb[0].mxu0
        %v2796 = vadd.f32 0.0, %v2795
        %v2797 = vpop.f32.mrb[0].mxu0
        %2798 = vmatprep.mubr.f32.mxu0 %v2037
        %2799 = vmatmul.mubr.f32.gmra.mrb[0].mxu0 %v2036
        %v2800 = vpop.f32.mrb[0].mxu0
        %v2801 = vadd.f32 0.0, %v2800
        %v2802 = vpop.f32.mrb[0].mxu0
        %2803 = vmatprep.mubr.f32.mxu0 %v2041
        %2804 = vmatmul.mubr.f32.gmra.mrb[0].mxu0 %v2040
        %v2805 = vpop.f32.mrb[0].mxu0
        %v2806 = vadd.f32 0.0, %v2805
        %v2807 = vpop.f32.mrb[0].mxu0
        %2808 = vmatprep.mubr.f32.mxu0 %v2045
        %2809 = vmatmul.mubr.f32.gmra.mrb[0].mxu0 %v2044
        %v2810 = vpop.f32.mrb[0].mxu0
        %v2811 = vadd.f32 0.0, %v2810
        %v2812 = vpop.f32.mrb[0].mxu0
        %2813 = vmatprep.mubr.f32.mxu0 %v2049
        %2814 = vmatmul.mubr.f32.gmra.mrb[0].mxu0 %v2048
        %v2815 = vpop.f32.mrb[0].mxu0
        %v2816 = vadd.f32 0.0, %v2815
        %v2817 = vpop.f32.mrb[0].mxu0
        %2818 = vmatprep.mubr.f32.mxu0 %v2053
        %2819 = vmatmul.mubr.f32.gmra.mrb[0].mxu0 %v2052
        %v2820 = vpop.f32.mrb[0].mxu0
        %v2821 = vadd.f32 0.0, %v2820
        %v2822 = vpop.f32.mrb[0].mxu0
        %2823 = vmatprep.mubr.f32.mxu0 %v2057
        %2824 = vmatmul.mubr.f32.gmra.mrb[0].mxu0 %v2056
        %v2825 = vpop.f32.mrb[0].mxu0
        %v2826 = vadd.f32 0.0, %v2825
        %v2827 = vpop.f32.mrb[0].mxu0
        %2828 = vmatprep.mubr.f32.mxu0 %v2061
        %2829 = vmatmul.mubr.f32.gmra.mrb[0].mxu0 %v2060
        %v2830 = vpop.f32.mrb[0].mxu0
        %v2831 = vadd.f32 0.0, %v2830
        %v2832 = vpop.f32.mrb[0].mxu0
        %2833 = vmatprep.mubr.f32.mxu0 %v2065
        %2834 = vmatmul.mubr.f32.gmra.mrb[0].mxu0 %v2064
        %v2835 = vpop.f32.mrb[0].mxu0
        %v2836 = vadd.f32 0.0, %v2835
        %v2837 = vpop.f32.mrb[0].mxu0
        %2838 = vmatprep.mubr.f32.mxu0 %v2069
        %2839 = vmatmul.mubr.f32.gmra.mrb[0].mxu0 %v2068
        %v2840 = vpop.f32.mrb[0].mxu0
        %v2841 = vadd.f32 0.0, %v2840
        %v2842 = vpop.f32.mrb[0].mxu0
        %2843 = vmatprep.mubr.f32.mxu0 %v2073
        %2844 = vmatmul.mubr.f32.gmra.mrb[0].mxu0 %v2072
        %v2845 = vpop.f32.mrb[0].mxu0
        %v2846 = vadd.f32 0.0, %v2845
        %v2847 = vpop.f32.mrb[0].mxu0
        %2848 = vmatprep.mubr.f32.mxu0 %v2077
        %2849 = vmatmul.mubr.f32.gmra.mrb[0].mxu0 %v2076
        %v2850 = vpop.f32.mrb[0].mxu0
        %v2851 = vadd.f32 0.0, %v2850
        %v2852 = vpop.f32.mrb[0].mxu0
        %2853 = vmatprep.mubr.f32.mxu0 %v2081
        %2854 = vmatmul.mubr.f32.gmra.mrb[0].mxu0 %v2080
        %v2855 = vpop.f32.mrb[0].mxu0
        %v2856 = vadd.f32 0.0, %v2855
        %v2857 = vpop.f32.mrb[0].mxu0
        %2858 = vmatprep.mubr.f32.mxu0 %v2085
        %2859 = vmatmul.mubr.f32.gmra.mrb[0].mxu0 %v2084
        %v2860 = vpop.f32.mrb[0].mxu0
        %v2861 = vadd.f32 0.0, %v2860
        %v2862 = vpop.f32.mrb[0].mxu0
        %2863 = vmatprep.mubr.f32.mxu0 %v2089
        %2864 = vmatmul.mubr.f32.gmra.mrb[0].mxu0 %v2088
        %v2865 = vpop.f32.mrb[0].mxu0
        %v2866 = vadd.f32 0.0, %v2865
        %v2867 = vpop.f32.mrb[0].mxu0
        %2868 = vmatprep.mubr.f32.mxu0 %v2093
        %2869 = vmatmul.mubr.f32.gmra.mrb[0].mxu0 %v2092
        %v2870 = vpop.f32.mrb[0].mxu0
        %v2871 = vadd.f32 0.0, %v2870
        %v2872 = vpop.f32.mrb[0].mxu0
        %2873 = vmatprep.mubr.f32.mxu0 %v2097
        %2874 = vmatmul.mubr.f32.gmra.mrb[0].mxu0 %v2096
        %v2875 = vpop.f32.mrb[0].mxu0
        %v2876 = vadd.f32 0.0, %v2875
        %v2877 = vpop.f32.mrb[0].mxu0
        %2878 = vmatprep.mubr.f32.mxu0 %v2101
        %2879 = vmatmul.mubr.f32.gmra.mrb[0].mxu0 %v2100
        %v2880 = vpop.f32.mrb[0].mxu0
        %v2881 = vadd.f32 0.0, %v2880
        %v2882 = vpop.f32.mrb[0].mxu0
        %2883 = vmatprep.mubr.f32.mxu0 %v2105
        %2884 = vmatmul.mubr.f32.gmra.mrb[0].mxu0 %v2104
        %v2885 = vpop.f32.mrb[0].mxu0
        %v2886 = vadd.f32 0.0, %v2885
        %v2887 = vpop.f32.mrb[0].mxu0
        %2888 = vmatprep.mubr.f32.mxu0 %v2109
        %2889 = vmatmul.mubr.f32.gmra.mrb[0].mxu0 %v2108
        %v2890 = vpop.f32.mrb[0].mxu0
        %v2891 = vadd.f32 0.0, %v2890
        %v2892 = vpop.f32.mrb[0].mxu0
        %2893 = vmatprep.mubr.f32.mxu0 %v2113
        %2894 = vmatmul.mubr.f32.gmra.mrb[0].mxu0 %v2112
        %v2895 = vpop.f32.mrb[0].mxu0
        %v2896 = vadd.f32 0.0, %v2895
        %v2897 = vpop.f32.mrb[0].mxu0
        %2898 = vmatprep.mubr.f32.mxu0 %v2117
        %2899 = vmatmul.mubr.f32.gmra.mrb[0].mxu0 %v2116
        %v2900 = vpop.f32.mrb[0].mxu0
        %v2901 = vadd.f32 0.0, %v2900
        %v2902 = vpop.f32.mrb[0].mxu0
        %2903 = vmatprep.mubr.f32.mxu0 %v2121
        %2904 = vmatmul.mubr.f32.gmra.mrb[0].mxu0 %v2120
        %v2905 = vpop.f32.mrb[0].mxu0
        %v2906 = vadd.f32 0.0, %v2905
        %v2907 = vpop.f32.mrb[0].mxu0
        %2908 = vdwg.mxu0
        %2909 = vmatprep.subr.mxu0 0.0
        %2910 = vmatpush1.msra.mxu0 %v295
        %2911 = vmatprep.subr.mxu0 0.0
        %2912 = vmatpush1.msra.mxu0 %v296
        %2913 = vmatprep.subr.mxu0 0.0
        %2914 = vmatpush1.msra.mxu0 %v297
        %2915 = vmatprep.subr.mxu0 0.0
        %2916 = vmatpush1.msra.mxu0 %v298
        %2917 = vmatprep.subr.mxu0 0.0
        %2918 = vmatpush1.msra.mxu0 %v299
        %2919 = vmatprep.subr.mxu0 0.0
        %2920 = vmatpush1.msra.mxu0 %v300
        %2921 = vmatprep.subr.mxu0 0.0
        %2922 = vmatpush1.msra.mxu0 %v301
        %2923 = vmatprep.subr.mxu0 0.0
        %2924 = vmatpush1.msra.mxu0 %v302
        %2925 = vmatprep.subr.mxu0 0.0
        %2926 = vmatpush1.msra.mxu0 %v303
        %2927 = vmatprep.subr.mxu0 0.0
        %2928 = vmatpush1.msra.mxu0 %v304
        %2929 = vmatprep.subr.mxu0 0.0
        %2930 = vmatpush1.msra.mxu0 %v305
        %2931 = vmatprep.subr.mxu0 0.0
        %2932 = vmatpush1.msra.mxu0 %v306
        %2933 = vmatprep.subr.mxu0 0.0
        %2934 = vmatpush1.msra.mxu0 %v307
        %2935 = vmatprep.subr.mxu0 0.0
        %2936 = vmatpush1.msra.mxu0 %v308
        %2937 = vmatprep.subr.mxu0 0.0
        %2938 = vmatpush1.msra.mxu0 %v309
        %2939 = vmatprep.subr.mxu0 0.0
        %2940 = vmatpush1.msra.mxu0 %v310
        %2941 = vmatprep.subr.mxu0 0.0
        %2942 = vmatpush1.msra.mxu0 %v311
        %2943 = vmatprep.subr.mxu0 0.0
        %2944 = vmatpush1.msra.mxu0 %v312
        %2945 = vmatprep.subr.mxu0 0.0
        %2946 = vmatpush1.msra.mxu0 %v313
        %2947 = vmatprep.subr.mxu0 0.0
        %2948 = vmatpush1.msra.mxu0 %v314
        %2949 = vmatprep.subr.mxu0 0.0
        %2950 = vmatpush1.msra.mxu0 %v315
        %2951 = vmatprep.subr.mxu0 0.0
        %2952 = vmatpush1.msra.mxu0 %v316
        %2953 = vmatprep.subr.mxu0 0.0
        %2954 = vmatpush1.msra.mxu0 %v317
        %2955 = vmatprep.subr.mxu0 0.0
        %2956 = vmatpush1.msra.mxu0 %v318
        %2957 = vmatprep.subr.mxu0 0.0
        %2958 = vmatpush1.msra.mxu0 %v319
        %2959 = vmatprep.subr.mxu0 0.0
        %2960 = vmatpush1.msra.mxu0 %v320
        %2961 = vmatprep.subr.mxu0 0.0
        %2962 = vmatpush1.msra.mxu0 %v321
        %2963 = vmatprep.subr.mxu0 0.0
        %2964 = vmatpush1.msra.mxu0 %v322
        %2965 = vmatprep.subr.mxu0 0.0
        %2966 = vmatpush1.msra.mxu0 %v323
        %2967 = vmatprep.subr.mxu0 0.0
        %2968 = vmatpush1.msra.mxu0 %v324
        %2969 = vmatprep.subr.mxu0 0.0
        %2970 = vmatpush1.msra.mxu0 %v325
        %2971 = vmatprep.subr.mxu0 0.0
        %2972 = vmatpush1.msra.mxu0 %v326
        %2973 = vmatprep.mubr.f32.mxu0 %v1551
        %2974 = vmatmul.mubr.f32.gmra.mrb[0].mxu0 %v1550
        %v2975 = vpop.f32.mrb[0].mxu0
        %v2976 = vadd.f32 %v2191, %v2975
        %v2977 = vpop.f32.mrb[0].mxu0
        %2978 = vmatprep.mubr.f32.mxu0 %v1555
        %2979 = vmatmul.mubr.f32.gmra.mrb[0].mxu0 %v1554
        %v2980 = vpop.f32.mrb[0].mxu0
        %v2981 = vadd.f32 %v2196, %v2980
        %v2982 = vpop.f32.mrb[0].mxu0
        %2983 = vmatprep.mubr.f32.mxu0 %v1559
        %2984 = vmatmul.mubr.f32.gmra.mrb[0].mxu0 %v1558
        %v2985 = vpop.f32.mrb[0].mxu0
        %v2986 = vadd.f32 %v2201, %v2985
        %v2987 = vpop.f32.mrb[0].mxu0
        %2988 = vmatprep.mubr.f32.mxu0 %v1563
        %2989 = vmatmul.mubr.f32.gmra.mrb[0].mxu0 %v1562
        %v2990 = vpop.f32.mrb[0].mxu0
        %v2991 = vadd.f32 %v2206, %v2990
        %v2992 = vpop.f32.mrb[0].mxu0
        %2993 = vmatprep.mubr.f32.mxu0 %v1567
        %2994 = vmatmul.mubr.f32.gmra.mrb[0].mxu0 %v1566
        %v2995 = vpop.f32.mrb[0].mxu0
        %v2996 = vadd.f32 %v2211, %v2995
        %v2997 = vpop.f32.mrb[0].mxu0
        %2998 = vmatprep.mubr.f32.mxu0 %v1571
        %2999 = vmatmul.mubr.f32.gmra.mrb[0].mxu0 %v1570
        %v3000 = vpop.f32.mrb[0].mxu0
        %v3001 = vadd.f32 %v2216, %v3000
        %v3002 = vpop.f32.mrb[0].mxu0
        %3003 = vmatprep.mubr.f32.mxu0 %v1575
        %3004 = vmatmul.mubr.f32.gmra.mrb[0].mxu0 %v1574
        %v3005 = vpop.f32.mrb[0].mxu0
        %v3006 = vadd.f32 %v2221, %v3005
        %v3007 = vpop.f32.mrb[0].mxu0
        %3008 = vmatprep.mubr.f32.mxu0 %v1579
        %3009 = vmatmul.mubr.f32.gmra.mrb[0].mxu0 %v1578
        %v3010 = vpop.f32.mrb[0].mxu0
        %v3011 = vadd.f32 %v2226, %v3010
        %v3012 = vpop.f32.mrb[0].mxu0
        %3013 = vmatprep.mubr.f32.mxu0 %v1583
        %3014 = vmatmul.mubr.f32.gmra.mrb[0].mxu0 %v1582
        %v3015 = vpop.f32.mrb[0].mxu0
        %v3016 = vadd.f32 %v2231, %v3015
        %v3017 = vpop.f32.mrb[0].mxu0
        %3018 = vmatprep.mubr.f32.mxu0 %v1587
        %3019 = vmatmul.mubr.f32.gmra.mrb[0].mxu0 %v1586
        %v3020 = vpop.f32.mrb[0].mxu0
        %v3021 = vadd.f32 %v2236, %v3020
        %v3022 = vpop.f32.mrb[0].mxu0
        %3023 = vmatprep.mubr.f32.mxu0 %v1591
        %3024 = vmatmul.mubr.f32.gmra.mrb[0].mxu0 %v1590
        %v3025 = vpop.f32.mrb[0].mxu0
        %v3026 = vadd.f32 %v2241, %v3025
        %v3027 = vpop.f32.mrb[0].mxu0
        %3028 = vmatprep.mubr.f32.mxu0 %v1595
        %3029 = vmatmul.mubr.f32.gmra.mrb[0].mxu0 %v1594
        %v3030 = vpop.f32.mrb[0].mxu0
        %v3031 = vadd.f32 %v2246, %v3030
        %v3032 = vpop.f32.mrb[0].mxu0
        %3033 = vmatprep.mubr.f32.mxu0 %v1599
        %3034 = vmatmul.mubr.f32.gmra.mrb[0].mxu0 %v1598
        %v3035 = vpop.f32.mrb[0].mxu0
        %v3036 = vadd.f32 %v2251, %v3035
        %v3037 = vpop.f32.mrb[0].mxu0
        %3038 = vmatprep.mubr.f32.mxu0 %v1603
        %3039 = vmatmul.mubr.f32.gmra.mrb[0].mxu0 %v1602
        %v3040 = vpop.f32.mrb[0].mxu0
        %v3041 = vadd.f32 %v2256, %v3040
        %v3042 = vpop.f32.mrb[0].mxu0
        %3043 = vmatprep.mubr.f32.mxu0 %v1607
        %3044 = vmatmul.mubr.f32.gmra.mrb[0].mxu0 %v1606
        %v3045 = vpop.f32.mrb[0].mxu0
        %v3046 = vadd.f32 %v2261, %v3045
        %v3047 = vpop.f32.mrb[0].mxu0
        %3048 = vmatprep.mubr.f32.mxu0 %v1611
        %3049 = vmatmul.mubr.f32.gmra.mrb[0].mxu0 %v1610
        %v3050 = vpop.f32.mrb[0].mxu0
        %v3051 = vadd.f32 %v2266, %v3050
        %v3052 = vpop.f32.mrb[0].mxu0
        %3053 = vmatprep.mubr.f32.mxu0 %v1615
        %3054 = vmatmul.mubr.f32.gmra.mrb[0].mxu0 %v1614
        %v3055 = vpop.f32.mrb[0].mxu0
        %v3056 = vadd.f32 %v2271, %v3055
        %v3057 = vpop.f32.mrb[0].mxu0
        %3058 = vmatprep.mubr.f32.mxu0 %v1619
        %3059 = vmatmul.mubr.f32.gmra.mrb[0].mxu0 %v1618
        %v3060 = vpop.f32.mrb[0].mxu0
        %v3061 = vadd.f32 %v2276, %v3060
        %v3062 = vpop.f32.mrb[0].mxu0
        %3063 = vmatprep.mubr.f32.mxu0 %v1623
        %3064 = vmatmul.mubr.f32.gmra.mrb[0].mxu0 %v1622
        %v3065 = vpop.f32.mrb[0].mxu0
        %v3066 = vadd.f32 %v2281, %v3065
        %v3067 = vpop.f32.mrb[0].mxu0
        %3068 = vmatprep.mubr.f32.mxu0 %v1627
        %3069 = vmatmul.mubr.f32.gmra.mrb[0].mxu0 %v1626
        %v3070 = vpop.f32.mrb[0].mxu0
        %v3071 = vadd.f32 %v2286, %v3070
        %v3072 = vpop.f32.mrb[0].mxu0
        %3073 = vmatprep.mubr.f32.mxu0 %v1631
        %3074 = vmatmul.mubr.f32.gmra.mrb[0].mxu0 %v1630
        %v3075 = vpop.f32.mrb[0].mxu0
        %v3076 = vadd.f32 %v2291, %v3075
        %v3077 = vpop.f32.mrb[0].mxu0
        %3078 = vmatprep.mubr.f32.mxu0 %v1635
        %3079 = vmatmul.mubr.f32.gmra.mrb[0].mxu0 %v1634
        %v3080 = vpop.f32.mrb[0].mxu0
        %v3081 = vadd.f32 %v2296, %v3080
        %v3082 = vpop.f32.mrb[0].mxu0
        %3083 = vmatprep.mubr.f32.mxu0 %v1639
        %3084 = vmatmul.mubr.f32.gmra.mrb[0].mxu0 %v1638
        %v3085 = vpop.f32.mrb[0].mxu0
        %v3086 = vadd.f32 %v2301, %v3085
        %v3087 = vpop.f32.mrb[0].mxu0
        %3088 = vmatprep.mubr.f32.mxu0 %v1643
        %3089 = vmatmul.mubr.f32.gmra.mrb[0].mxu0 %v1642
        %v3090 = vpop.f32.mrb[0].mxu0
        %v3091 = vadd.f32 %v2306, %v3090
        %v3092 = vpop.f32.mrb[0].mxu0
        %3093 = vmatprep.mubr.f32.mxu0 %v1647
        %3094 = vmatmul.mubr.f32.gmra.mrb[0].mxu0 %v1646
        %v3095 = vpop.f32.mrb[0].mxu0
        %v3096 = vadd.f32 %v2311, %v3095
        %v3097 = vpop.f32.mrb[0].mxu0
        %3098 = vmatprep.mubr.f32.mxu0 %v1651
        %3099 = vmatmul.mubr.f32.gmra.mrb[0].mxu0 %v1650
        %v3100 = vpop.f32.mrb[0].mxu0
        %v3101 = vadd.f32 %v2316, %v3100
        %v3102 = vpop.f32.mrb[0].mxu0
        %3103 = vmatprep.mubr.f32.mxu0 %v1655
        %3104 = vmatmul.mubr.f32.gmra.mrb[0].mxu0 %v1654
        %v3105 = vpop.f32.mrb[0].mxu0
        %v3106 = vadd.f32 %v2321, %v3105
        %v3107 = vpop.f32.mrb[0].mxu0
        %3108 = vmatprep.mubr.f32.mxu0 %v1659
        %3109 = vmatmul.mubr.f32.gmra.mrb[0].mxu0 %v1658
        %v3110 = vpop.f32.mrb[0].mxu0
        %v3111 = vadd.f32 %v2326, %v3110
        %v3112 = vpop.f32.mrb[0].mxu0
        %3113 = vmatprep.mubr.f32.mxu0 %v1663
        %3114 = vmatmul.mubr.f32.gmra.mrb[0].mxu0 %v1662
        %v3115 = vpop.f32.mrb[0].mxu0
        %v3116 = vadd.f32 %v2331, %v3115
        %v3117 = vpop.f32.mrb[0].mxu0
        %3118 = vmatprep.mubr.f32.mxu0 %v1667
        %3119 = vmatmul.mubr.f32.gmra.mrb[0].mxu0 %v1666
        %v3120 = vpop.f32.mrb[0].mxu0
        %v3121 = vadd.f32 %v2336, %v3120
        %v3122 = vpop.f32.mrb[0].mxu0
        %3123 = vmatprep.mubr.f32.mxu0 %v1671
        %3124 = vmatmul.mubr.f32.gmra.mrb[0].mxu0 %v1670
        %v3125 = vpop.f32.mrb[0].mxu0
        %v3126 = vadd.f32 %v2341, %v3125
        %v3127 = vpop.f32.mrb[0].mxu0
        %3128 = vmatprep.mubr.f32.mxu0 %v1675
        %3129 = vmatmul.mubr.f32.gmra.mrb[0].mxu0 %v1674
        %v3130 = vpop.f32.mrb[0].mxu0
        %v3131 = vadd.f32 %v2346, %v3130
        %v3132 = vpop.f32.mrb[0].mxu0
        %3133 = vmatprep.mubr.f32.mxu0 %v1679
        %3134 = vmatmul.mubr.f32.gmra.mrb[0].mxu0 %v1678
        %v3135 = vpop.f32.mrb[0].mxu0
        %v3136 = vadd.f32 %v2351, %v3135
        %v3137 = vpop.f32.mrb[0].mxu0
        %3138 = vmatprep.mubr.f32.mxu0 %v1683
        %3139 = vmatmul.mubr.f32.gmra.mrb[0].mxu0 %v1682
        %v3140 = vpop.f32.mrb[0].mxu0
        %v3141 = vadd.f32 %v2356, %v3140
        %v3142 = vpop.f32.mrb[0].mxu0
        %3143 = vmatprep.mubr.f32.mxu0 %v1687
        %3144 = vmatmul.mubr.f32.gmra.mrb[0].mxu0 %v1686
        %v3145 = vpop.f32.mrb[0].mxu0
        %v3146 = vadd.f32 %v2361, %v3145
        %v3147 = vpop.f32.mrb[0].mxu0
        %3148 = vmatprep.mubr.f32.mxu0 %v1691
        %3149 = vmatmul.mubr.f32.gmra.mrb[0].mxu0 %v1690
        %v3150 = vpop.f32.mrb[0].mxu0
        %v3151 = vadd.f32 %v2366, %v3150
        %v3152 = vpop.f32.mrb[0].mxu0
        %3153 = vmatprep.mubr.f32.mxu0 %v1695
        %3154 = vmatmul.mubr.f32.gmra.mrb[0].mxu0 %v1694
        %v3155 = vpop.f32.mrb[0].mxu0
        %v3156 = vadd.f32 %v2371, %v3155
        %v3157 = vpop.f32.mrb[0].mxu0
        %3158 = vmatprep.mubr.f32.mxu0 %v1699
        %3159 = vmatmul.mubr.f32.gmra.mrb[0].mxu0 %v1698
        %v3160 = vpop.f32.mrb[0].mxu0
        %v3161 = vadd.f32 %v2376, %v3160
        %v3162 = vpop.f32.mrb[0].mxu0
        %3163 = vmatprep.mubr.f32.mxu0 %v1703
        %3164 = vmatmul.mubr.f32.gmra.mrb[0].mxu0 %v1702
        %v3165 = vpop.f32.mrb[0].mxu0
        %v3166 = vadd.f32 %v2381, %v3165
        %v3167 = vpop.f32.mrb[0].mxu0
        %3168 = vmatprep.mubr.f32.mxu0 %v1707
        %3169 = vmatmul.mubr.f32.gmra.mrb[0].mxu0 %v1706
        %v3170 = vpop.f32.mrb[0].mxu0
        %v3171 = vadd.f32 %v2386, %v3170
        %v3172 = vpop.f32.mrb[0].mxu0
        %3173 = vmatprep.mubr.f32.mxu0 %v1711
        %3174 = vmatmul.mubr.f32.gmra.mrb[0].mxu0 %v1710
        %v3175 = vpop.f32.mrb[0].mxu0
        %v3176 = vadd.f32 %v2391, %v3175
        %v3177 = vpop.f32.mrb[0].mxu0
        %3178 = vmatprep.mubr.f32.mxu0 %v1715
        %3179 = vmatmul.mubr.f32.gmra.mrb[0].mxu0 %v1714
        %v3180 = vpop.f32.mrb[0].mxu0
        %v3181 = vadd.f32 %v2396, %v3180
        %v3182 = vpop.f32.mrb[0].mxu0
        %3183 = vmatprep.mubr.f32.mxu0 %v1719
        %3184 = vmatmul.mubr.f32.gmra.mrb[0].mxu0 %v1718
        %v3185 = vpop.f32.mrb[0].mxu0
        %v3186 = vadd.f32 %v2401, %v3185
        %v3187 = vpop.f32.mrb[0].mxu0
        %3188 = vmatprep.mubr.f32.mxu0 %v1723
        %3189 = vmatmul.mubr.f32.gmra.mrb[0].mxu0 %v1722
        %v3190 = vpop.f32.mrb[0].mxu0
        %v3191 = vadd.f32 %v2406, %v3190
        %v3192 = vpop.f32.mrb[0].mxu0
        %3193 = vmatprep.mubr.f32.mxu0 %v1727
        %3194 = vmatmul.mubr.f32.gmra.mrb[0].mxu0 %v1726
        %v3195 = vpop.f32.mrb[0].mxu0
        %v3196 = vadd.f32 %v2411, %v3195
        %v3197 = vpop.f32.mrb[0].mxu0
        %3198 = vmatprep.mubr.f32.mxu0 %v1731
        %3199 = vmatmul.mubr.f32.gmra.mrb[0].mxu0 %v1730
        %v3200 = vpop.f32.mrb[0].mxu0
        %v3201 = vadd.f32 %v2416, %v3200
        %v3202 = vpop.f32.mrb[0].mxu0
        %3203 = vmatprep.mubr.f32.mxu0 %v1735
        %3204 = vmatmul.mubr.f32.gmra.mrb[0].mxu0 %v1734
        %v3205 = vpop.f32.mrb[0].mxu0
        %v3206 = vadd.f32 %v2421, %v3205
        %v3207 = vpop.f32.mrb[0].mxu0
        %3208 = vmatprep.mubr.f32.mxu0 %v1739
        %3209 = vmatmul.mubr.f32.gmra.mrb[0].mxu0 %v1738
        %v3210 = vpop.f32.mrb[0].mxu0
        %v3211 = vadd.f32 %v2426, %v3210
        %v3212 = vpop.f32.mrb[0].mxu0
        %3213 = vmatprep.mubr.f32.mxu0 %v1743
        %3214 = vmatmul.mubr.f32.gmra.mrb[0].mxu0 %v1742
        %v3215 = vpop.f32.mrb[0].mxu0
        %v3216 = vadd.f32 %v2431, %v3215
        %v3217 = vpop.f32.mrb[0].mxu0
        %3218 = vmatprep.mubr.f32.mxu0 %v1747
        %3219 = vmatmul.mubr.f32.gmra.mrb[0].mxu0 %v1746
        %v3220 = vpop.f32.mrb[0].mxu0
        %v3221 = vadd.f32 %v2436, %v3220
        %v3222 = vpop.f32.mrb[0].mxu0
        %3223 = vmatprep.mubr.f32.mxu0 %v1751
        %3224 = vmatmul.mubr.f32.gmra.mrb[0].mxu0 %v1750
        %v3225 = vpop.f32.mrb[0].mxu0
        %v3226 = vadd.f32 %v2441, %v3225
        %v3227 = vpop.f32.mrb[0].mxu0
        %3228 = vmatprep.mubr.f32.mxu0 %v1755
        %3229 = vmatmul.mubr.f32.gmra.mrb[0].mxu0 %v1754
        %v3230 = vpop.f32.mrb[0].mxu0
        %v3231 = vadd.f32 %v2446, %v3230
        %v3232 = vpop.f32.mrb[0].mxu0
        %3233 = vmatprep.mubr.f32.mxu0 %v1759
        %3234 = vmatmul.mubr.f32.gmra.mrb[0].mxu0 %v1758
        %v3235 = vpop.f32.mrb[0].mxu0
        %v3236 = vadd.f32 %v2451, %v3235
        %v3237 = vpop.f32.mrb[0].mxu0
        %3238 = vmatprep.mubr.f32.mxu0 %v1763
        %3239 = vmatmul.mubr.f32.gmra.mrb[0].mxu0 %v1762
        %v3240 = vpop.f32.mrb[0].mxu0
        %v3241 = vadd.f32 %v2456, %v3240
        %v3242 = vpop.f32.mrb[0].mxu0
        %3243 = vmatprep.mubr.f32.mxu0 %v1767
        %3244 = vmatmul.mubr.f32.gmra.mrb[0].mxu0 %v1766
        %v3245 = vpop.f32.mrb[0].mxu0
        %v3246 = vadd.f32 %v2461, %v3245
        %v3247 = vpop.f32.mrb[0].mxu0
        %3248 = vmatprep.mubr.f32.mxu0 %v1771
        %3249 = vmatmul.mubr.f32.gmra.mrb[0].mxu0 %v1770
        %v3250 = vpop.f32.mrb[0].mxu0
        %v3251 = vadd.f32 %v2466, %v3250
        %v3252 = vpop.f32.mrb[0].mxu0
        %3253 = vmatprep.mubr.f32.mxu0 %v1775
        %3254 = vmatmul.mubr.f32.gmra.mrb[0].mxu0 %v1774
        %v3255 = vpop.f32.mrb[0].mxu0
        %v3256 = vadd.f32 %v2471, %v3255
        %v3257 = vpop.f32.mrb[0].mxu0
        %3258 = vmatprep.mubr.f32.mxu0 %v1779
        %3259 = vmatmul.mubr.f32.gmra.mrb[0].mxu0 %v1778
        %v3260 = vpop.f32.mrb[0].mxu0
        %v3261 = vadd.f32 %v2476, %v3260
        %v3262 = vpop.f32.mrb[0].mxu0
        %3263 = vmatprep.mubr.f32.mxu0 %v1783
        %3264 = vmatmul.mubr.f32.gmra.mrb[0].mxu0 %v1782
        %v3265 = vpop.f32.mrb[0].mxu0
        %v3266 = vadd.f32 %v2481, %v3265
        %v3267 = vpop.f32.mrb[0].mxu0
        %3268 = vmatprep.mubr.f32.mxu0 %v1787
        %3269 = vmatmul.mubr.f32.gmra.mrb[0].mxu0 %v1786
        %v3270 = vpop.f32.mrb[0].mxu0
        %v3271 = vadd.f32 %v2486, %v3270
        %v3272 = vpop.f32.mrb[0].mxu0
        %3273 = vmatprep.mubr.f32.mxu0 %v1791
        %3274 = vmatmul.mubr.f32.gmra.mrb[0].mxu0 %v1790
        %v3275 = vpop.f32.mrb[0].mxu0
        %v3276 = vadd.f32 %v2491, %v3275
        %v3277 = vpop.f32.mrb[0].mxu0
        %3278 = vmatprep.mubr.f32.mxu0 %v1795
        %3279 = vmatmul.mubr.f32.gmra.mrb[0].mxu0 %v1794
        %v3280 = vpop.f32.mrb[0].mxu0
        %v3281 = vadd.f32 %v2496, %v3280
        %v3282 = vpop.f32.mrb[0].mxu0
        %3283 = vmatprep.mubr.f32.mxu0 %v1799
        %3284 = vmatmul.mubr.f32.gmra.mrb[0].mxu0 %v1798
        %v3285 = vpop.f32.mrb[0].mxu0
        %v3286 = vadd.f32 %v2501, %v3285
        %v3287 = vpop.f32.mrb[0].mxu0
        %3288 = vmatprep.mubr.f32.mxu0 %v1803
        %3289 = vmatmul.mubr.f32.gmra.mrb[0].mxu0 %v1802
        %v3290 = vpop.f32.mrb[0].mxu0
        %v3291 = vadd.f32 %v2506, %v3290
        %v3292 = vpop.f32.mrb[0].mxu0
        %3293 = vmatprep.mubr.f32.mxu0 %v1807
        %3294 = vmatmul.mubr.f32.gmra.mrb[0].mxu0 %v1806
        %v3295 = vpop.f32.mrb[0].mxu0
        %v3296 = vadd.f32 %v2511, %v3295
        %v3297 = vpop.f32.mrb[0].mxu0
        %3298 = vmatprep.mubr.f32.mxu0 %v1811
        %3299 = vmatmul.mubr.f32.gmra.mrb[0].mxu0 %v1810
        %v3300 = vpop.f32.mrb[0].mxu0
        %v3301 = vadd.f32 %v2516, %v3300
        %v3302 = vpop.f32.mrb[0].mxu0
        %3303 = vmatprep.mubr.f32.mxu0 %v1815
        %3304 = vmatmul.mubr.f32.gmra.mrb[0].mxu0 %v1814
        %v3305 = vpop.f32.mrb[0].mxu0
        %v3306 = vadd.f32 %v2521, %v3305
        %v3307 = vpop.f32.mrb[0].mxu0
        %3308 = vmatprep.mubr.f32.mxu0 %v1819
        %3309 = vmatmul.mubr.f32.gmra.mrb[0].mxu0 %v1818
        %v3310 = vpop.f32.mrb[0].mxu0
        %v3311 = vadd.f32 %v2526, %v3310
        %v3312 = vpop.f32.mrb[0].mxu0
        %3313 = vmatprep.mubr.f32.mxu0 %v1823
        %3314 = vmatmul.mubr.f32.gmra.mrb[0].mxu0 %v1822
        %v3315 = vpop.f32.mrb[0].mxu0
        %v3316 = vadd.f32 %v2531, %v3315
        %v3317 = vpop.f32.mrb[0].mxu0
        %3318 = vmatprep.mubr.f32.mxu0 %v1827
        %3319 = vmatmul.mubr.f32.gmra.mrb[0].mxu0 %v1826
        %v3320 = vpop.f32.mrb[0].mxu0
        %v3321 = vadd.f32 %v2536, %v3320
        %v3322 = vpop.f32.mrb[0].mxu0
        %3323 = vmatprep.mubr.f32.mxu0 %v1831
        %3324 = vmatmul.mubr.f32.gmra.mrb[0].mxu0 %v1830
        %v3325 = vpop.f32.mrb[0].mxu0
        %v3326 = vadd.f32 %v2541, %v3325
        %v3327 = vpop.f32.mrb[0].mxu0
        %3328 = vmatprep.mubr.f32.mxu0 %v1835
        %3329 = vmatmul.mubr.f32.gmra.mrb[0].mxu0 %v1834
        %v3330 = vpop.f32.mrb[0].mxu0
        %v3331 = vadd.f32 %v2546, %v3330
        %v3332 = vpop.f32.mrb[0].mxu0
        %3333 = vmatprep.mubr.f32.mxu0 %v1839
        %3334 = vmatmul.mubr.f32.gmra.mrb[0].mxu0 %v1838
        %v3335 = vpop.f32.mrb[0].mxu0
        %v3336 = vadd.f32 %v2551, %v3335
        %v3337 = vpop.f32.mrb[0].mxu0
        %3338 = vmatprep.mubr.f32.mxu0 %v1843
        %3339 = vmatmul.mubr.f32.gmra.mrb[0].mxu0 %v1842
        %v3340 = vpop.f32.mrb[0].mxu0
        %v3341 = vadd.f32 %v2556, %v3340
        %v3342 = vpop.f32.mrb[0].mxu0
        %3343 = vmatprep.mubr.f32.mxu0 %v1847
        %3344 = vmatmul.mubr.f32.gmra.mrb[0].mxu0 %v1846
        %v3345 = vpop.f32.mrb[0].mxu0
        %v3346 = vadd.f32 %v2561, %v3345
        %v3347 = vpop.f32.mrb[0].mxu0
        %3348 = vmatprep.mubr.f32.mxu0 %v1851
        %3349 = vmatmul.mubr.f32.gmra.mrb[0].mxu0 %v1850
        %v3350 = vpop.f32.mrb[0].mxu0
        %v3351 = vadd.f32 %v2566, %v3350
        %v3352 = vpop.f32.mrb[0].mxu0
        %3353 = vmatprep.mubr.f32.mxu0 %v1855
        %3354 = vmatmul.mubr.f32.gmra.mrb[0].mxu0 %v1854
        %v3355 = vpop.f32.mrb[0].mxu0
        %v3356 = vadd.f32 %v2571, %v3355
        %v3357 = vpop.f32.mrb[0].mxu0
        %3358 = vmatprep.mubr.f32.mxu0 %v1859
        %3359 = vmatmul.mubr.f32.gmra.mrb[0].mxu0 %v1858
        %v3360 = vpop.f32.mrb[0].mxu0
        %v3361 = vadd.f32 %v2576, %v3360
        %v3362 = vpop.f32.mrb[0].mxu0
        %3363 = vmatprep.mubr.f32.mxu0 %v1863
        %3364 = vmatmul.mubr.f32.gmra.mrb[0].mxu0 %v1862
        %v3365 = vpop.f32.mrb[0].mxu0
        %v3366 = vadd.f32 %v2581, %v3365
        %v3367 = vpop.f32.mrb[0].mxu0
        %3368 = vmatprep.mubr.f32.mxu0 %v1867
        %3369 = vmatmul.mubr.f32.gmra.mrb[0].mxu0 %v1866
        %v3370 = vpop.f32.mrb[0].mxu0
        %v3371 = vadd.f32 %v2586, %v3370
        %v3372 = vpop.f32.mrb[0].mxu0
        %3373 = vmatprep.mubr.f32.mxu0 %v1871
        %3374 = vmatmul.mubr.f32.gmra.mrb[0].mxu0 %v1870
        %v3375 = vpop.f32.mrb[0].mxu0
        %v3376 = vadd.f32 %v2591, %v3375
        %v3377 = vpop.f32.mrb[0].mxu0
        %3378 = vmatprep.mubr.f32.mxu0 %v1875
        %3379 = vmatmul.mubr.f32.gmra.mrb[0].mxu0 %v1874
        %v3380 = vpop.f32.mrb[0].mxu0
        %v3381 = vadd.f32 %v2596, %v3380
        %v3382 = vpop.f32.mrb[0].mxu0
        %3383 = vmatprep.mubr.f32.mxu0 %v1879
        %3384 = vmatmul.mubr.f32.gmra.mrb[0].mxu0 %v1878
        %v3385 = vpop.f32.mrb[0].mxu0
        %v3386 = vadd.f32 %v2601, %v3385
        %v3387 = vpop.f32.mrb[0].mxu0
        %3388 = vmatprep.mubr.f32.mxu0 %v1883
        %3389 = vmatmul.mubr.f32.gmra.mrb[0].mxu0 %v1882
        %v3390 = vpop.f32.mrb[0].mxu0
        %v3391 = vadd.f32 %v2606, %v3390
        %v3392 = vpop.f32.mrb[0].mxu0
        %3393 = vmatprep.mubr.f32.mxu0 %v1887
        %3394 = vmatmul.mubr.f32.gmra.mrb[0].mxu0 %v1886
        %v3395 = vpop.f32.mrb[0].mxu0
        %v3396 = vadd.f32 %v2611, %v3395
        %v3397 = vpop.f32.mrb[0].mxu0
        %3398 = vmatprep.mubr.f32.mxu0 %v1891
        %3399 = vmatmul.mubr.f32.gmra.mrb[0].mxu0 %v1890
        %v3400 = vpop.f32.mrb[0].mxu0
        %v3401 = vadd.f32 %v2616, %v3400
        %v3402 = vpop.f32.mrb[0].mxu0
        %3403 = vmatprep.mubr.f32.mxu0 %v1895
        %3404 = vmatmul.mubr.f32.gmra.mrb[0].mxu0 %v1894
        %v3405 = vpop.f32.mrb[0].mxu0
        %v3406 = vadd.f32 %v2621, %v3405
        %v3407 = vpop.f32.mrb[0].mxu0
        %3408 = vmatprep.mubr.f32.mxu0 %v1899
        %3409 = vmatmul.mubr.f32.gmra.mrb[0].mxu0 %v1898
        %v3410 = vpop.f32.mrb[0].mxu0
        %v3411 = vadd.f32 %v2626, %v3410
        %v3412 = vpop.f32.mrb[0].mxu0
        %3413 = vmatprep.mubr.f32.mxu0 %v1903
        %3414 = vmatmul.mubr.f32.gmra.mrb[0].mxu0 %v1902
        %v3415 = vpop.f32.mrb[0].mxu0
        %v3416 = vadd.f32 %v2631, %v3415
        %v3417 = vpop.f32.mrb[0].mxu0
        %3418 = vmatprep.mubr.f32.mxu0 %v1907
        %3419 = vmatmul.mubr.f32.gmra.mrb[0].mxu0 %v1906
        %v3420 = vpop.f32.mrb[0].mxu0
        %v3421 = vadd.f32 %v2636, %v3420
        %v3422 = vpop.f32.mrb[0].mxu0
        %3423 = vmatprep.mubr.f32.mxu0 %v1911
        %3424 = vmatmul.mubr.f32.gmra.mrb[0].mxu0 %v1910
        %v3425 = vpop.f32.mrb[0].mxu0
        %v3426 = vadd.f32 %v2641, %v3425
        %v3427 = vpop.f32.mrb[0].mxu0
        %3428 = vmatprep.mubr.f32.mxu0 %v1915
        %3429 = vmatmul.mubr.f32.gmra.mrb[0].mxu0 %v1914
        %v3430 = vpop.f32.mrb[0].mxu0
        %v3431 = vadd.f32 %v2646, %v3430
        %v3432 = vpop.f32.mrb[0].mxu0
        %3433 = vmatprep.mubr.f32.mxu0 %v1919
        %3434 = vmatmul.mubr.f32.gmra.mrb[0].mxu0 %v1918
        %v3435 = vpop.f32.mrb[0].mxu0
        %v3436 = vadd.f32 %v2651, %v3435
        %v3437 = vpop.f32.mrb[0].mxu0
        %3438 = vmatprep.mubr.f32.mxu0 %v1923
        %3439 = vmatmul.mubr.f32.gmra.mrb[0].mxu0 %v1922
        %v3440 = vpop.f32.mrb[0].mxu0
        %v3441 = vadd.f32 %v2656, %v3440
        %v3442 = vpop.f32.mrb[0].mxu0
        %3443 = vmatprep.mubr.f32.mxu0 %v1927
        %3444 = vmatmul.mubr.f32.gmra.mrb[0].mxu0 %v1926
        %v3445 = vpop.f32.mrb[0].mxu0
        %v3446 = vadd.f32 %v2661, %v3445
        %v3447 = vpop.f32.mrb[0].mxu0
        %3448 = vmatprep.mubr.f32.mxu0 %v1931
        %3449 = vmatmul.mubr.f32.gmra.mrb[0].mxu0 %v1930
        %v3450 = vpop.f32.mrb[0].mxu0
        %v3451 = vadd.f32 %v2666, %v3450
        %v3452 = vpop.f32.mrb[0].mxu0
        %3453 = vmatprep.mubr.f32.mxu0 %v1935
        %3454 = vmatmul.mubr.f32.gmra.mrb[0].mxu0 %v1934
        %v3455 = vpop.f32.mrb[0].mxu0
        %v3456 = vadd.f32 %v2671, %v3455
        %v3457 = vpop.f32.mrb[0].mxu0
        %3458 = vmatprep.mubr.f32.mxu0 %v1939
        %3459 = vmatmul.mubr.f32.gmra.mrb[0].mxu0 %v1938
        %v3460 = vpop.f32.mrb[0].mxu0
        %v3461 = vadd.f32 %v2676, %v3460
        %v3462 = vpop.f32.mrb[0].mxu0
        %3463 = vmatprep.mubr.f32.mxu0 %v1943
        %3464 = vmatmul.mubr.f32.gmra.mrb[0].mxu0 %v1942
        %v3465 = vpop.f32.mrb[0].mxu0
        %v3466 = vadd.f32 %v2681, %v3465
        %v3467 = vpop.f32.mrb[0].mxu0
        %3468 = vmatprep.mubr.f32.mxu0 %v1947
        %3469 = vmatmul.mubr.f32.gmra.mrb[0].mxu0 %v1946
        %v3470 = vpop.f32.mrb[0].mxu0
        %v3471 = vadd.f32 %v2686, %v3470
        %v3472 = vpop.f32.mrb[0].mxu0
        %3473 = vmatprep.mubr.f32.mxu0 %v1951
        %3474 = vmatmul.mubr.f32.gmra.mrb[0].mxu0 %v1950
        %v3475 = vpop.f32.mrb[0].mxu0
        %v3476 = vadd.f32 %v2691, %v3475
        %v3477 = vpop.f32.mrb[0].mxu0
        %3478 = vmatprep.mubr.f32.mxu0 %v1955
        %3479 = vmatmul.mubr.f32.gmra.mrb[0].mxu0 %v1954
        %v3480 = vpop.f32.mrb[0].mxu0
        %v3481 = vadd.f32 %v2696, %v3480
        %v3482 = vpop.f32.mrb[0].mxu0
        %3483 = vmatprep.mubr.f32.mxu0 %v1959
        %3484 = vmatmul.mubr.f32.gmra.mrb[0].mxu0 %v1958
        %v3485 = vpop.f32.mrb[0].mxu0
        %v3486 = vadd.f32 %v2701, %v3485
        %v3487 = vpop.f32.mrb[0].mxu0
        %3488 = vmatprep.mubr.f32.mxu0 %v1963
        %3489 = vmatmul.mubr.f32.gmra.mrb[0].mxu0 %v1962
        %v3490 = vpop.f32.mrb[0].mxu0
        %v3491 = vadd.f32 %v2706, %v3490
        %v3492 = vpop.f32.mrb[0].mxu0
        %3493 = vmatprep.mubr.f32.mxu0 %v1967
        %3494 = vmatmul.mubr.f32.gmra.mrb[0].mxu0 %v1966
        %v3495 = vpop.f32.mrb[0].mxu0
        %v3496 = vadd.f32 %v2711, %v3495
        %v3497 = vpop.f32.mrb[0].mxu0
        %3498 = vmatprep.mubr.f32.mxu0 %v1971
        %3499 = vmatmul.mubr.f32.gmra.mrb[0].mxu0 %v1970
        %v3500 = vpop.f32.mrb[0].mxu0
        %v3501 = vadd.f32 %v2716, %v3500
        %v3502 = vpop.f32.mrb[0].mxu0
        %3503 = vmatprep.mubr.f32.mxu0 %v1975
        %3504 = vmatmul.mubr.f32.gmra.mrb[0].mxu0 %v1974
        %v3505 = vpop.f32.mrb[0].mxu0
        %v3506 = vadd.f32 %v2721, %v3505
        %v3507 = vpop.f32.mrb[0].mxu0
        %3508 = vmatprep.mubr.f32.mxu0 %v1979
        %3509 = vmatmul.mubr.f32.gmra.mrb[0].mxu0 %v1978
        %v3510 = vpop.f32.mrb[0].mxu0
        %v3511 = vadd.f32 %v2726, %v3510
        %v3512 = vpop.f32.mrb[0].mxu0
        %3513 = vmatprep.mubr.f32.mxu0 %v1983
        %3514 = vmatmul.mubr.f32.gmra.mrb[0].mxu0 %v1982
        %v3515 = vpop.f32.mrb[0].mxu0
        %v3516 = vadd.f32 %v2731, %v3515
        %v3517 = vpop.f32.mrb[0].mxu0
        %3518 = vmatprep.mubr.f32.mxu0 %v1987
        %3519 = vmatmul.mubr.f32.gmra.mrb[0].mxu0 %v1986
        %v3520 = vpop.f32.mrb[0].mxu0
        %v3521 = vadd.f32 %v2736, %v3520
        %v3522 = vpop.f32.mrb[0].mxu0
        %3523 = vmatprep.mubr.f32.mxu0 %v1991
        %3524 = vmatmul.mubr.f32.gmra.mrb[0].mxu0 %v1990
        %v3525 = vpop.f32.mrb[0].mxu0
        %v3526 = vadd.f32 %v2741, %v3525
        %v3527 = vpop.f32.mrb[0].mxu0
        %3528 = vmatprep.mubr.f32.mxu0 %v1995
        %3529 = vmatmul.mubr.f32.gmra.mrb[0].mxu0 %v1994
        %v3530 = vpop.f32.mrb[0].mxu0
        %v3531 = vadd.f32 %v2746, %v3530
        %v3532 = vpop.f32.mrb[0].mxu0
        %3533 = vmatprep.mubr.f32.mxu0 %v1999
        %3534 = vmatmul.mubr.f32.gmra.mrb[0].mxu0 %v1998
        %v3535 = vpop.f32.mrb[0].mxu0
        %v3536 = vadd.f32 %v2751, %v3535
        %v3537 = vpop.f32.mrb[0].mxu0
        %3538 = vmatprep.mubr.f32.mxu0 %v2003
        %3539 = vmatmul.mubr.f32.gmra.mrb[0].mxu0 %v2002
        %v3540 = vpop.f32.mrb[0].mxu0
        %v3541 = vadd.f32 %v2756, %v3540
        %v3542 = vpop.f32.mrb[0].mxu0
        %3543 = vmatprep.mubr.f32.mxu0 %v2007
        %3544 = vmatmul.mubr.f32.gmra.mrb[0].mxu0 %v2006
        %v3545 = vpop.f32.mrb[0].mxu0
        %v3546 = vadd.f32 %v2761, %v3545
        %v3547 = vpop.f32.mrb[0].mxu0
        %3548 = vmatprep.mubr.f32.mxu0 %v2011
        %3549 = vmatmul.mubr.f32.gmra.mrb[0].mxu0 %v2010
        %v3550 = vpop.f32.mrb[0].mxu0
        %v3551 = vadd.f32 %v2766, %v3550
        %v3552 = vpop.f32.mrb[0].mxu0
        %3553 = vmatprep.mubr.f32.mxu0 %v2015
        %3554 = vmatmul.mubr.f32.gmra.mrb[0].mxu0 %v2014
        %v3555 = vpop.f32.mrb[0].mxu0
        %v3556 = vadd.f32 %v2771, %v3555
        %v3557 = vpop.f32.mrb[0].mxu0
        %3558 = vmatprep.mubr.f32.mxu0 %v2019
        %3559 = vmatmul.mubr.f32.gmra.mrb[0].mxu0 %v2018
        %v3560 = vpop.f32.mrb[0].mxu0
        %v3561 = vadd.f32 %v2776, %v3560
        %v3562 = vpop.f32.mrb[0].mxu0
        %3563 = vmatprep.mubr.f32.mxu0 %v2023
        %3564 = vmatmul.mubr.f32.gmra.mrb[0].mxu0 %v2022
        %v3565 = vpop.f32.mrb[0].mxu0
        %v3566 = vadd.f32 %v2781, %v3565
        %v3567 = vpop.f32.mrb[0].mxu0
        %3568 = vmatprep.mubr.f32.mxu0 %v2027
        %3569 = vmatmul.mubr.f32.gmra.mrb[0].mxu0 %v2026
        %v3570 = vpop.f32.mrb[0].mxu0
        %v3571 = vadd.f32 %v2786, %v3570
        %v3572 = vpop.f32.mrb[0].mxu0
        %3573 = vmatprep.mubr.f32.mxu0 %v2031
        %3574 = vmatmul.mubr.f32.gmra.mrb[0].mxu0 %v2030
        %v3575 = vpop.f32.mrb[0].mxu0
        %v3576 = vadd.f32 %v2791, %v3575
        %v3577 = vpop.f32.mrb[0].mxu0
        %3578 = vmatprep.mubr.f32.mxu0 %v2035
        %3579 = vmatmul.mubr.f32.gmra.mrb[0].mxu0 %v2034
        %v3580 = vpop.f32.mrb[0].mxu0
        %v3581 = vadd.f32 %v2796, %v3580
        %v3582 = vpop.f32.mrb[0].mxu0
        %3583 = vmatprep.mubr.f32.mxu0 %v2039
        %3584 = vmatmul.mubr.f32.gmra.mrb[0].mxu0 %v2038
        %v3585 = vpop.f32.mrb[0].mxu0
        %v3586 = vadd.f32 %v2801, %v3585
        %v3587 = vpop.f32.mrb[0].mxu0
        %3588 = vmatprep.mubr.f32.mxu0 %v2043
        %3589 = vmatmul.mubr.f32.gmra.mrb[0].mxu0 %v2042
        %v3590 = vpop.f32.mrb[0].mxu0
        %v3591 = vadd.f32 %v2806, %v3590
        %v3592 = vpop.f32.mrb[0].mxu0
        %3593 = vmatprep.mubr.f32.mxu0 %v2047
        %3594 = vmatmul.mubr.f32.gmra.mrb[0].mxu0 %v2046
        %v3595 = vpop.f32.mrb[0].mxu0
        %v3596 = vadd.f32 %v2811, %v3595
        %v3597 = vpop.f32.mrb[0].mxu0
        %3598 = vmatprep.mubr.f32.mxu0 %v2051
        %3599 = vmatmul.mubr.f32.gmra.mrb[0].mxu0 %v2050
        %v3600 = vpop.f32.mrb[0].mxu0
        %v3601 = vadd.f32 %v2816, %v3600
        %v3602 = vpop.f32.mrb[0].mxu0
        %3603 = vmatprep.mubr.f32.mxu0 %v2055
        %3604 = vmatmul.mubr.f32.gmra.mrb[0].mxu0 %v2054
        %v3605 = vpop.f32.mrb[0].mxu0
        %v3606 = vadd.f32 %v2821, %v3605
        %v3607 = vpop.f32.mrb[0].mxu0
        %3608 = vmatprep.mubr.f32.mxu0 %v2059
        %3609 = vmatmul.mubr.f32.gmra.mrb[0].mxu0 %v2058
        %v3610 = vpop.f32.mrb[0].mxu0
        %v3611 = vadd.f32 %v2826, %v3610
        %v3612 = vpop.f32.mrb[0].mxu0
        %3613 = vmatprep.mubr.f32.mxu0 %v2063
        %3614 = vmatmul.mubr.f32.gmra.mrb[0].mxu0 %v2062
        %v3615 = vpop.f32.mrb[0].mxu0
        %v3616 = vadd.f32 %v2831, %v3615
        %v3617 = vpop.f32.mrb[0].mxu0
        %3618 = vmatprep.mubr.f32.mxu0 %v2067
        %3619 = vmatmul.mubr.f32.gmra.mrb[0].mxu0 %v2066
        %v3620 = vpop.f32.mrb[0].mxu0
        %v3621 = vadd.f32 %v2836, %v3620
        %v3622 = vpop.f32.mrb[0].mxu0
        %3623 = vmatprep.mubr.f32.mxu0 %v2071
        %3624 = vmatmul.mubr.f32.gmra.mrb[0].mxu0 %v2070
        %v3625 = vpop.f32.mrb[0].mxu0
        %v3626 = vadd.f32 %v2841, %v3625
        %v3627 = vpop.f32.mrb[0].mxu0
        %3628 = vmatprep.mubr.f32.mxu0 %v2075
        %3629 = vmatmul.mubr.f32.gmra.mrb[0].mxu0 %v2074
        %v3630 = vpop.f32.mrb[0].mxu0
        %v3631 = vadd.f32 %v2846, %v3630
        %v3632 = vpop.f32.mrb[0].mxu0
        %3633 = vmatprep.mubr.f32.mxu0 %v2079
        %3634 = vmatmul.mubr.f32.gmra.mrb[0].mxu0 %v2078
        %v3635 = vpop.f32.mrb[0].mxu0
        %v3636 = vadd.f32 %v2851, %v3635
        %v3637 = vpop.f32.mrb[0].mxu0
        %3638 = vmatprep.mubr.f32.mxu0 %v2083
        %3639 = vmatmul.mubr.f32.gmra.mrb[0].mxu0 %v2082
        %v3640 = vpop.f32.mrb[0].mxu0
        %v3641 = vadd.f32 %v2856, %v3640
        %v3642 = vpop.f32.mrb[0].mxu0
        %3643 = vmatprep.mubr.f32.mxu0 %v2087
        %3644 = vmatmul.mubr.f32.gmra.mrb[0].mxu0 %v2086
        %v3645 = vpop.f32.mrb[0].mxu0
        %v3646 = vadd.f32 %v2861, %v3645
        %v3647 = vpop.f32.mrb[0].mxu0
        %3648 = vmatprep.mubr.f32.mxu0 %v2091
        %3649 = vmatmul.mubr.f32.gmra.mrb[0].mxu0 %v2090
        %v3650 = vpop.f32.mrb[0].mxu0
        %v3651 = vadd.f32 %v2866, %v3650
        %v3652 = vpop.f32.mrb[0].mxu0
        %3653 = vmatprep.mubr.f32.mxu0 %v2095
        %3654 = vmatmul.mubr.f32.gmra.mrb[0].mxu0 %v2094
        %v3655 = vpop.f32.mrb[0].mxu0
        %v3656 = vadd.f32 %v2871, %v3655
        %v3657 = vpop.f32.mrb[0].mxu0
        %3658 = vmatprep.mubr.f32.mxu0 %v2099
        %3659 = vmatmul.mubr.f32.gmra.mrb[0].mxu0 %v2098
        %v3660 = vpop.f32.mrb[0].mxu0
        %v3661 = vadd.f32 %v2876, %v3660
        %v3662 = vpop.f32.mrb[0].mxu0
        %3663 = vmatprep.mubr.f32.mxu0 %v2103
        %3664 = vmatmul.mubr.f32.gmra.mrb[0].mxu0 %v2102
        %v3665 = vpop.f32.mrb[0].mxu0
        %v3666 = vadd.f32 %v2881, %v3665
        %v3667 = vpop.f32.mrb[0].mxu0
        %3668 = vmatprep.mubr.f32.mxu0 %v2107
        %3669 = vmatmul.mubr.f32.gmra.mrb[0].mxu0 %v2106
        %v3670 = vpop.f32.mrb[0].mxu0
        %v3671 = vadd.f32 %v2886, %v3670
        %v3672 = vpop.f32.mrb[0].mxu0
        %3673 = vmatprep.mubr.f32.mxu0 %v2111
        %3674 = vmatmul.mubr.f32.gmra.mrb[0].mxu0 %v2110
        %v3675 = vpop.f32.mrb[0].mxu0
        %v3676 = vadd.f32 %v2891, %v3675
        %v3677 = vpop.f32.mrb[0].mxu0
        %3678 = vmatprep.mubr.f32.mxu0 %v2115
        %3679 = vmatmul.mubr.f32.gmra.mrb[0].mxu0 %v2114
        %v3680 = vpop.f32.mrb[0].mxu0
        %v3681 = vadd.f32 %v2896, %v3680
        %v3682 = vpop.f32.mrb[0].mxu0
        %3683 = vmatprep.mubr.f32.mxu0 %v2119
        %3684 = vmatmul.mubr.f32.gmra.mrb[0].mxu0 %v2118
        %v3685 = vpop.f32.mrb[0].mxu0
        %v3686 = vadd.f32 %v2901, %v3685
        %v3687 = vpop.f32.mrb[0].mxu0
        %3688 = vmatprep.mubr.f32.mxu0 %v2123
        %3689 = vmatmul.mubr.f32.gmra.mrb[0].mxu0 %v2122
        %v3690 = vpop.f32.mrb[0].mxu0
        %v3691 = vadd.f32 %v2906, %v3690
        %v3692 = vpop.f32.mrb[0].mxu0
        %3693 = vdwg.mxu0
        %v3694 = vld [vmem:[%s249] sm:$0xff]
        %v3695 = vld [vmem:[%s249 + $0x8] sm:$0xff]
        %v3696 = vld [vmem:[%s249 + $0x10] sm:$0xff]
        %v3697 = vld [vmem:[%s249 + $0x18] sm:$0xff]
        %v3698 = vld [vmem:[%s249 + $0x20] sm:$0xff]
        %v3699 = vld [vmem:[%s249 + $0x28] sm:$0xff]
        %v3700 = vld [vmem:[%s249 + $0x30] sm:$0xff]
        %v3701 = vld [vmem:[%s249 + $0x38] sm:$0xff]
        %v3702 = vld [vmem:[%s249 + $0x40] sm:$0xff]
        %v3703 = vld [vmem:[%s249 + $0x48] sm:$0xff]
        %v3704 = vld [vmem:[%s249 + $0x50] sm:$0xff]
        %v3705 = vld [vmem:[%s249 + $0x58] sm:$0xff]
        %v3706 = vld [vmem:[%s249 + $0x60] sm:$0xff]
        %v3707 = vld [vmem:[%s249 + $0x68] sm:$0xff]
        %v3708 = vld [vmem:[%s249 + $0x70] sm:$0xff]
        %v3709 = vld [vmem:[%s249 + $0x78] sm:$0xff]
        %3710 = vset.pattern.permute.xlu0 0
        %3711 = vperm.xlu0 %3710, %v3694
        %v3712 = vpop.permute.xlu0 %3711
        %3713 = vset.pattern.permute.xlu0 0
        %3714 = vperm.xlu0 %3713, %v3695
        %v3715 = vpop.permute.xlu0 %3714
        %3716 = vset.pattern.permute.xlu0 0
        %3717 = vperm.xlu0 %3716, %v3696
        %v3718 = vpop.permute.xlu0 %3717
        %3719 = vset.pattern.permute.xlu0 0
        %3720 = vperm.xlu0 %3719, %v3697
        %v3721 = vpop.permute.xlu0 %3720
        %3722 = vset.pattern.permute.xlu0 0
        %3723 = vperm.xlu0 %3722, %v3698
        %v3724 = vpop.permute.xlu0 %3723
        %3725 = vset.pattern.permute.xlu0 0
        %3726 = vperm.xlu0 %3725, %v3699
        %v3727 = vpop.permute.xlu0 %3726
        %3728 = vset.pattern.permute.xlu0 0
        %3729 = vperm.xlu0 %3728, %v3700
        %v3730 = vpop.permute.xlu0 %3729
        %3731 = vset.pattern.permute.xlu0 0
        %3732 = vperm.xlu0 %3731, %v3701
        %v3733 = vpop.permute.xlu0 %3732
        %3734 = vset.pattern.permute.xlu0 0
        %3735 = vperm.xlu0 %3734, %v3702
        %v3736 = vpop.permute.xlu0 %3735
        %3737 = vset.pattern.permute.xlu0 0
        %3738 = vperm.xlu0 %3737, %v3703
        %v3739 = vpop.permute.xlu0 %3738
        %3740 = vset.pattern.permute.xlu0 0
        %3741 = vperm.xlu0 %3740, %v3704
        %v3742 = vpop.permute.xlu0 %3741
        %3743 = vset.pattern.permute.xlu0 0
        %3744 = vperm.xlu0 %3743, %v3705
        %v3745 = vpop.permute.xlu0 %3744
        %3746 = vset.pattern.permute.xlu0 0
        %3747 = vperm.xlu0 %3746, %v3706
        %v3748 = vpop.permute.xlu0 %3747
        %3749 = vset.pattern.permute.xlu0 0
        %3750 = vperm.xlu0 %3749, %v3707
        %v3751 = vpop.permute.xlu0 %3750
        %3752 = vset.pattern.permute.xlu0 0
        %3753 = vperm.xlu0 %3752, %v3708
        %v3754 = vpop.permute.xlu0 %3753
        %3755 = vset.pattern.permute.xlu0 0
        %3756 = vperm.xlu0 %3755, %v3709
        %v3757 = vpop.permute.xlu0 %3756
        %vm3758 = vcmp.eq.s32.totalorder %v3712, %v536
        %vm3759 = vcmp.eq.s32.totalorder %v3712, %v537
        %vm3760 = vcmp.eq.s32.totalorder %v3712, %v538
        %vm3761 = vcmp.eq.s32.totalorder %v3712, %v539
        %vm3762 = vcmp.eq.s32.totalorder %v3715, %v536
        %vm3763 = vcmp.eq.s32.totalorder %v3715, %v537
        %vm3764 = vcmp.eq.s32.totalorder %v3715, %v538
        %vm3765 = vcmp.eq.s32.totalorder %v3715, %v539
        %vm3766 = vcmp.eq.s32.totalorder %v3718, %v536
        %vm3767 = vcmp.eq.s32.totalorder %v3718, %v537
        %vm3768 = vcmp.eq.s32.totalorder %v3718, %v538
        %vm3769 = vcmp.eq.s32.totalorder %v3718, %v539
        %vm3770 = vcmp.eq.s32.totalorder %v3721, %v536
        %vm3771 = vcmp.eq.s32.totalorder %v3721, %v537
        %vm3772 = vcmp.eq.s32.totalorder %v3721, %v538
        %vm3773 = vcmp.eq.s32.totalorder %v3721, %v539
        %vm3774 = vcmp.eq.s32.totalorder %v3724, %v536
        %vm3775 = vcmp.eq.s32.totalorder %v3724, %v537
        %vm3776 = vcmp.eq.s32.totalorder %v3724, %v538
        %vm3777 = vcmp.eq.s32.totalorder %v3724, %v539
        %vm3778 = vcmp.eq.s32.totalorder %v3727, %v536
        %vm3779 = vcmp.eq.s32.totalorder %v3727, %v537
        %vm3780 = vcmp.eq.s32.totalorder %v3727, %v538
        %vm3781 = vcmp.eq.s32.totalorder %v3727, %v539
        %vm3782 = vcmp.eq.s32.totalorder %v3730, %v536
        %vm3783 = vcmp.eq.s32.totalorder %v3730, %v537
        %vm3784 = vcmp.eq.s32.totalorder %v3730, %v538
        %vm3785 = vcmp.eq.s32.totalorder %v3730, %v539
        %vm3786 = vcmp.eq.s32.totalorder %v3733, %v536
        %vm3787 = vcmp.eq.s32.totalorder %v3733, %v537
        %vm3788 = vcmp.eq.s32.totalorder %v3733, %v538
        %vm3789 = vcmp.eq.s32.totalorder %v3733, %v539
        %vm3790 = vcmp.eq.s32.totalorder %v3736, %v536
        %vm3791 = vcmp.eq.s32.totalorder %v3736, %v537
        %vm3792 = vcmp.eq.s32.totalorder %v3736, %v538
        %vm3793 = vcmp.eq.s32.totalorder %v3736, %v539
        %vm3794 = vcmp.eq.s32.totalorder %v3739, %v536
        %vm3795 = vcmp.eq.s32.totalorder %v3739, %v537
        %vm3796 = vcmp.eq.s32.totalorder %v3739, %v538
        %vm3797 = vcmp.eq.s32.totalorder %v3739, %v539
        %vm3798 = vcmp.eq.s32.totalorder %v3742, %v536
        %vm3799 = vcmp.eq.s32.totalorder %v3742, %v537
        %vm3800 = vcmp.eq.s32.totalorder %v3742, %v538
        %vm3801 = vcmp.eq.s32.totalorder %v3742, %v539
        %vm3802 = vcmp.eq.s32.totalorder %v3745, %v536
        %vm3803 = vcmp.eq.s32.totalorder %v3745, %v537
        %vm3804 = vcmp.eq.s32.totalorder %v3745, %v538
        %vm3805 = vcmp.eq.s32.totalorder %v3745, %v539
        %vm3806 = vcmp.eq.s32.totalorder %v3748, %v536
        %vm3807 = vcmp.eq.s32.totalorder %v3748, %v537
        %vm3808 = vcmp.eq.s32.totalorder %v3748, %v538
        %vm3809 = vcmp.eq.s32.totalorder %v3748, %v539
        %vm3810 = vcmp.eq.s32.totalorder %v3751, %v536
        %vm3811 = vcmp.eq.s32.totalorder %v3751, %v537
        %vm3812 = vcmp.eq.s32.totalorder %v3751, %v538
        %vm3813 = vcmp.eq.s32.totalorder %v3751, %v539
        %vm3814 = vcmp.eq.s32.totalorder %v3754, %v536
        %vm3815 = vcmp.eq.s32.totalorder %v3754, %v537
        %vm3816 = vcmp.eq.s32.totalorder %v3754, %v538
        %vm3817 = vcmp.eq.s32.totalorder %v3754, %v539
        %vm3818 = vcmp.eq.s32.totalorder %v3757, %v536
        %vm3819 = vcmp.eq.s32.totalorder %v3757, %v537
        %vm3820 = vcmp.eq.s32.totalorder %v3757, %v538
        %vm3821 = vcmp.eq.s32.totalorder %v3757, %v539
        %v3822 = vsel %vm3758, 1.0, 0.0
        %v3823 = vsel %vm3759, 1.0, 0.0
        %v3824 = vsel %vm3760, 1.0, 0.0
        %v3825 = vsel %vm3761, 1.0, 0.0
        %v3826 = vsel %vm3762, 1.0, 0.0
        %v3827 = vsel %vm3763, 1.0, 0.0
        %v3828 = vsel %vm3764, 1.0, 0.0
        %v3829 = vsel %vm3765, 1.0, 0.0
        %v3830 = vsel %vm3766, 1.0, 0.0
        %v3831 = vsel %vm3767, 1.0, 0.0
        %v3832 = vsel %vm3768, 1.0, 0.0
        %v3833 = vsel %vm3769, 1.0, 0.0
        %v3834 = vsel %vm3770, 1.0, 0.0
        %v3835 = vsel %vm3771, 1.0, 0.0
        %v3836 = vsel %vm3772, 1.0, 0.0
        %v3837 = vsel %vm3773, 1.0, 0.0
        %v3838 = vsel %vm3774, 1.0, 0.0
        %v3839 = vsel %vm3775, 1.0, 0.0
        %v3840 = vsel %vm3776, 1.0, 0.0
        %v3841 = vsel %vm3777, 1.0, 0.0
        %v3842 = vsel %vm3778, 1.0, 0.0
        %v3843 = vsel %vm3779, 1.0, 0.0
        %v3844 = vsel %vm3780, 1.0, 0.0
        %v3845 = vsel %vm3781, 1.0, 0.0
        %v3846 = vsel %vm3782, 1.0, 0.0
        %v3847 = vsel %vm3783, 1.0, 0.0
        %v3848 = vsel %vm3784, 1.0, 0.0
        %v3849 = vsel %vm3785, 1.0, 0.0
        %v3850 = vsel %vm3786, 1.0, 0.0
        %v3851 = vsel %vm3787, 1.0, 0.0
        %v3852 = vsel %vm3788, 1.0, 0.0
        %v3853 = vsel %vm3789, 1.0, 0.0
        %v3854 = vsel %vm3790, 1.0, 0.0
        %v3855 = vsel %vm3791, 1.0, 0.0
        %v3856 = vsel %vm3792, 1.0, 0.0
        %v3857 = vsel %vm3793, 1.0, 0.0
        %v3858 = vsel %vm3794, 1.0, 0.0
        %v3859 = vsel %vm3795, 1.0, 0.0
        %v3860 = vsel %vm3796, 1.0, 0.0
        %v3861 = vsel %vm3797, 1.0, 0.0
        %v3862 = vsel %vm3798, 1.0, 0.0
        %v3863 = vsel %vm3799, 1.0, 0.0
        %v3864 = vsel %vm3800, 1.0, 0.0
        %v3865 = vsel %vm3801, 1.0, 0.0
        %v3866 = vsel %vm3802, 1.0, 0.0
        %v3867 = vsel %vm3803, 1.0, 0.0
        %v3868 = vsel %vm3804, 1.0, 0.0
        %v3869 = vsel %vm3805, 1.0, 0.0
        %v3870 = vsel %vm3806, 1.0, 0.0
        %v3871 = vsel %vm3807, 1.0, 0.0
        %v3872 = vsel %vm3808, 1.0, 0.0
        %v3873 = vsel %vm3809, 1.0, 0.0
        %v3874 = vsel %vm3810, 1.0, 0.0
        %v3875 = vsel %vm3811, 1.0, 0.0
        %v3876 = vsel %vm3812, 1.0, 0.0
        %v3877 = vsel %vm3813, 1.0, 0.0
        %v3878 = vsel %vm3814, 1.0, 0.0
        %v3879 = vsel %vm3815, 1.0, 0.0
        %v3880 = vsel %vm3816, 1.0, 0.0
        %v3881 = vsel %vm3817, 1.0, 0.0
        %v3882 = vsel %vm3818, 1.0, 0.0
        %v3883 = vsel %vm3819, 1.0, 0.0
        %v3884 = vsel %vm3820, 1.0, 0.0
        %v3885 = vsel %vm3821, 1.0, 0.0
        %3886 = vmatprep.subr.mxu0 0.0
        %3887 = vmatpush1.msra.mxu0 %v327
        %3888 = vmatprep.subr.mxu0 0.0
        %3889 = vmatpush1.msra.mxu0 %v328
        %3890 = vmatprep.subr.mxu0 0.0
        %3891 = vmatpush1.msra.mxu0 %v329
        %3892 = vmatprep.subr.mxu0 0.0
        %3893 = vmatpush1.msra.mxu0 %v330
        %3894 = vmatprep.subr.mxu0 0.0
        %3895 = vmatpush1.msra.mxu0 %v331
        %3896 = vmatprep.subr.mxu0 0.0
        %3897 = vmatpush1.msra.mxu0 %v332
        %3898 = vmatprep.subr.mxu0 0.0
        %3899 = vmatpush1.msra.mxu0 %v333
        %3900 = vmatprep.subr.mxu0 0.0
        %3901 = vmatpush1.msra.mxu0 %v334
        %3902 = vmatprep.subr.mxu0 0.0
        %3903 = vmatpush1.msra.mxu0 %v335
        %3904 = vmatprep.subr.mxu0 0.0
        %3905 = vmatpush1.msra.mxu0 %v336
        %3906 = vmatprep.subr.mxu0 0.0
        %3907 = vmatpush1.msra.mxu0 %v337
        %3908 = vmatprep.subr.mxu0 0.0
        %3909 = vmatpush1.msra.mxu0 %v338
        %3910 = vmatprep.subr.mxu0 0.0
        %3911 = vmatpush1.msra.mxu0 %v339
        %3912 = vmatprep.subr.mxu0 0.0
        %3913 = vmatpush1.msra.mxu0 %v340
        %3914 = vmatprep.subr.mxu0 0.0
        %3915 = vmatpush1.msra.mxu0 %v341
        %3916 = vmatprep.subr.mxu0 0.0
        %3917 = vmatpush1.msra.mxu0 %v342
        %3918 = vmatprep.subr.mxu0 0.0
        %3919 = vmatpush1.msra.mxu0 %v343
        %3920 = vmatprep.subr.mxu0 0.0
        %3921 = vmatpush1.msra.mxu0 %v344
        %3922 = vmatprep.subr.mxu0 0.0
        %3923 = vmatpush1.msra.mxu0 %v345
        %3924 = vmatprep.subr.mxu0 0.0
        %3925 = vmatpush1.msra.mxu0 %v346
        %3926 = vmatprep.subr.mxu0 0.0
        %3927 = vmatpush1.msra.mxu0 %v347
        %3928 = vmatprep.subr.mxu0 0.0
        %3929 = vmatpush1.msra.mxu0 %v348
        %3930 = vmatprep.subr.mxu0 0.0
        %3931 = vmatpush1.msra.mxu0 %v349
        %3932 = vmatprep.subr.mxu0 0.0
        %3933 = vmatpush1.msra.mxu0 %v350
        %3934 = vmatprep.subr.mxu0 0.0
        %3935 = vmatpush1.msra.mxu0 %v351
        %3936 = vmatprep.subr.mxu0 0.0
        %3937 = vmatpush1.msra.mxu0 %v352
        %3938 = vmatprep.subr.mxu0 0.0
        %3939 = vmatpush1.msra.mxu0 %v353
        %3940 = vmatprep.subr.mxu0 0.0
        %3941 = vmatpush1.msra.mxu0 %v354
        %3942 = vmatprep.subr.mxu0 0.0
        %3943 = vmatpush1.msra.mxu0 %v355
        %3944 = vmatprep.subr.mxu0 0.0
        %3945 = vmatpush1.msra.mxu0 %v356
        %3946 = vmatprep.subr.mxu0 0.0
        %3947 = vmatpush1.msra.mxu0 %v357
        %3948 = vmatprep.subr.mxu0 0.0
        %3949 = vmatpush1.msra.mxu0 %v358
        %3950 = vmatprep.mubr.f32.mxu0 %v3823
        %3951 = vmatmul.mubr.f32.gmra.mrb[0].mxu0 %v3822
        %v3952 = vpop.f32.mrb[0].mxu0
        %v3953 = vadd.f32 0.0, %v3952
        %v3954 = vpop.f32.mrb[0].mxu0
        %3955 = vmatprep.mubr.f32.mxu0 %v3827
        %3956 = vmatmul.mubr.f32.gmra.mrb[0].mxu0 %v3826
        %v3957 = vpop.f32.mrb[0].mxu0
        %v3958 = vadd.f32 0.0, %v3957
        %v3959 = vpop.f32.mrb[0].mxu0
        %3960 = vmatprep.mubr.f32.mxu0 %v3831
        %3961 = vmatmul.mubr.f32.gmra.mrb[0].mxu0 %v3830
        %v3962 = vpop.f32.mrb[0].mxu0
        %v3963 = vadd.f32 0.0, %v3962
        %v3964 = vpop.f32.mrb[0].mxu0
        %3965 = vmatprep.mubr.f32.mxu0 %v3835
        %3966 = vmatmul.mubr.f32.gmra.mrb[0].mxu0 %v3834
        %v3967 = vpop.f32.mrb[0].mxu0
        %v3968 = vadd.f32 0.0, %v3967
        %v3969 = vpop.f32.mrb[0].mxu0
        %3970 = vmatprep.mubr.f32.mxu0 %v3839
        %3971 = vmatmul.mubr.f32.gmra.mrb[0].mxu0 %v3838
        %v3972 = vpop.f32.mrb[0].mxu0
        %v3973 = vadd.f32 0.0, %v3972
        %v3974 = vpop.f32.mrb[0].mxu0
        %3975 = vmatprep.mubr.f32.mxu0 %v3843
        %3976 = vmatmul.mubr.f32.gmra.mrb[0].mxu0 %v3842
        %v3977 = vpop.f32.mrb[0].mxu0
        %v3978 = vadd.f32 0.0, %v3977
        %v3979 = vpop.f32.mrb[0].mxu0
        %3980 = vmatprep.mubr.f32.mxu0 %v3847
        %3981 = vmatmul.mubr.f32.gmra.mrb[0].mxu0 %v3846
        %v3982 = vpop.f32.mrb[0].mxu0
        %v3983 = vadd.f32 0.0, %v3982
        %v3984 = vpop.f32.mrb[0].mxu0
        %3985 = vmatprep.mubr.f32.mxu0 %v3851
        %3986 = vmatmul.mubr.f32.gmra.mrb[0].mxu0 %v3850
        %v3987 = vpop.f32.mrb[0].mxu0
        %v3988 = vadd.f32 0.0, %v3987
        %v3989 = vpop.f32.mrb[0].mxu0
        %3990 = vmatprep.mubr.f32.mxu0 %v3855
        %3991 = vmatmul.mubr.f32.gmra.mrb[0].mxu0 %v3854
        %v3992 = vpop.f32.mrb[0].mxu0
        %v3993 = vadd.f32 0.0, %v3992
        %v3994 = vpop.f32.mrb[0].mxu0
        %3995 = vmatprep.mubr.f32.mxu0 %v3859
        %3996 = vmatmul.mubr.f32.gmra.mrb[0].mxu0 %v3858
        %v3997 = vpop.f32.mrb[0].mxu0
        %v3998 = vadd.f32 0.0, %v3997
        %v3999 = vpop.f32.mrb[0].mxu0
        %4000 = vmatprep.mubr.f32.mxu0 %v3863
        %4001 = vmatmul.mubr.f32.gmra.mrb[0].mxu0 %v3862
        %v4002 = vpop.f32.mrb[0].mxu0
        %v4003 = vadd.f32 0.0, %v4002
        %v4004 = vpop.f32.mrb[0].mxu0
        %4005 = vmatprep.mubr.f32.mxu0 %v3867
        %4006 = vmatmul.mubr.f32.gmra.mrb[0].mxu0 %v3866
        %v4007 = vpop.f32.mrb[0].mxu0
        %v4008 = vadd.f32 0.0, %v4007
        %v4009 = vpop.f32.mrb[0].mxu0
        %4010 = vmatprep.mubr.f32.mxu0 %v3871
        %4011 = vmatmul.mubr.f32.gmra.mrb[0].mxu0 %v3870
        %v4012 = vpop.f32.mrb[0].mxu0
        %v4013 = vadd.f32 0.0, %v4012
        %v4014 = vpop.f32.mrb[0].mxu0
        %4015 = vmatprep.mubr.f32.mxu0 %v3875
        %4016 = vmatmul.mubr.f32.gmra.mrb[0].mxu0 %v3874
        %v4017 = vpop.f32.mrb[0].mxu0
        %v4018 = vadd.f32 0.0, %v4017
        %v4019 = vpop.f32.mrb[0].mxu0
        %4020 = vmatprep.mubr.f32.mxu0 %v3879
        %4021 = vmatmul.mubr.f32.gmra.mrb[0].mxu0 %v3878
        %v4022 = vpop.f32.mrb[0].mxu0
        %v4023 = vadd.f32 0.0, %v4022
        %v4024 = vpop.f32.mrb[0].mxu0
        %4025 = vmatprep.mubr.f32.mxu0 %v3883
        %4026 = vmatmul.mubr.f32.gmra.mrb[0].mxu0 %v3882
        %v4027 = vpop.f32.mrb[0].mxu0
        %v4028 = vadd.f32 0.0, %v4027
        %v4029 = vpop.f32.mrb[0].mxu0
        %4030 = vdwg.mxu0
        %4031 = vmatprep.subr.mxu0 0.0
        %4032 = vmatpush1.msra.mxu0 %v359
        %4033 = vmatprep.subr.mxu0 0.0
        %4034 = vmatpush1.msra.mxu0 %v360
        %4035 = vmatprep.subr.mxu0 0.0
        %4036 = vmatpush1.msra.mxu0 %v361
        %4037 = vmatprep.subr.mxu0 0.0
        %4038 = vmatpush1.msra.mxu0 %v362
        %4039 = vmatprep.subr.mxu0 0.0
        %4040 = vmatpush1.msra.mxu0 %v363
        %4041 = vmatprep.subr.mxu0 0.0
        %4042 = vmatpush1.msra.mxu0 %v364
        %4043 = vmatprep.subr.mxu0 0.0
        %4044 = vmatpush1.msra.mxu0 %v365
        %4045 = vmatprep.subr.mxu0 0.0
        %4046 = vmatpush1.msra.mxu0 %v366
        %4047 = vmatprep.subr.mxu0 0.0
        %4048 = vmatpush1.msra.mxu0 %v367
        %4049 = vmatprep.subr.mxu0 0.0
        %4050 = vmatpush1.msra.mxu0 %v368
        %4051 = vmatprep.subr.mxu0 0.0
        %4052 = vmatpush1.msra.mxu0 %v369
        %4053 = vmatprep.subr.mxu0 0.0
        %4054 = vmatpush1.msra.mxu0 %v370
        %4055 = vmatprep.subr.mxu0 0.0
        %4056 = vmatpush1.msra.mxu0 %v371
        %4057 = vmatprep.subr.mxu0 0.0
        %4058 = vmatpush1.msra.mxu0 %v372
        %4059 = vmatprep.subr.mxu0 0.0
        %4060 = vmatpush1.msra.mxu0 %v373
        %4061 = vmatprep.subr.mxu0 0.0
        %4062 = vmatpush1.msra.mxu0 %v374
        %4063 = vmatprep.subr.mxu0 0.0
        %4064 = vmatpush1.msra.mxu0 %v375
        %4065 = vmatprep.subr.mxu0 0.0
        %4066 = vmatpush1.msra.mxu0 %v376
        %4067 = vmatprep.subr.mxu0 0.0
        %4068 = vmatpush1.msra.mxu0 %v377
        %4069 = vmatprep.subr.mxu0 0.0
        %4070 = vmatpush1.msra.mxu0 %v378
        %4071 = vmatprep.subr.mxu0 0.0
        %4072 = vmatpush1.msra.mxu0 %v379
        %4073 = vmatprep.subr.mxu0 0.0
        %4074 = vmatpush1.msra.mxu0 %v380
        %4075 = vmatprep.subr.mxu0 0.0
        %4076 = vmatpush1.msra.mxu0 %v381
        %4077 = vmatprep.subr.mxu0 0.0
        %4078 = vmatpush1.msra.mxu0 %v382
        %4079 = vmatprep.subr.mxu0 0.0
        %4080 = vmatpush1.msra.mxu0 %v383
        %4081 = vmatprep.subr.mxu0 0.0
        %4082 = vmatpush1.msra.mxu0 %v384
        %4083 = vmatprep.subr.mxu0 0.0
        %4084 = vmatpush1.msra.mxu0 %v385
        %4085 = vmatprep.subr.mxu0 0.0
        %4086 = vmatpush1.msra.mxu0 %v386
        %4087 = vmatprep.subr.mxu0 0.0
        %4088 = vmatpush1.msra.mxu0 %v387
        %4089 = vmatprep.subr.mxu0 0.0
        %4090 = vmatpush1.msra.mxu0 %v388
        %4091 = vmatprep.subr.mxu0 0.0
        %4092 = vmatpush1.msra.mxu0 %v389
        %4093 = vmatprep.subr.mxu0 0.0
        %4094 = vmatpush1.msra.mxu0 %v390
        %4095 = vmatprep.mubr.f32.mxu0 %v3825
        %4096 = vmatmul.mubr.f32.gmra.mrb[0].mxu0 %v3824
        %v4097 = vpop.f32.mrb[0].mxu0
        %v4098 = vadd.f32 %v3953, %v4097
        %v4099 = vpop.f32.mrb[0].mxu0
        %4100 = vmatprep.mubr.f32.mxu0 %v3829
        %4101 = vmatmul.mubr.f32.gmra.mrb[0].mxu0 %v3828
        %v4102 = vpop.f32.mrb[0].mxu0
        %v4103 = vadd.f32 %v3958, %v4102
        %v4104 = vpop.f32.mrb[0].mxu0
        %4105 = vmatprep.mubr.f32.mxu0 %v3833
        %4106 = vmatmul.mubr.f32.gmra.mrb[0].mxu0 %v3832
        %v4107 = vpop.f32.mrb[0].mxu0
        %v4108 = vadd.f32 %v3963, %v4107
        %v4109 = vpop.f32.mrb[0].mxu0
        %4110 = vmatprep.mubr.f32.mxu0 %v3837
        %4111 = vmatmul.mubr.f32.gmra.mrb[0].mxu0 %v3836
        %v4112 = vpop.f32.mrb[0].mxu0
        %v4113 = vadd.f32 %v3968, %v4112
        %v4114 = vpop.f32.mrb[0].mxu0
        %4115 = vmatprep.mubr.f32.mxu0 %v3841
        %4116 = vmatmul.mubr.f32.gmra.mrb[0].mxu0 %v3840
        %v4117 = vpop.f32.mrb[0].mxu0
        %v4118 = vadd.f32 %v3973, %v4117
        %v4119 = vpop.f32.mrb[0].mxu0
        %4120 = vmatprep.mubr.f32.mxu0 %v3845
        %4121 = vmatmul.mubr.f32.gmra.mrb[0].mxu0 %v3844
        %v4122 = vpop.f32.mrb[0].mxu0
        %v4123 = vadd.f32 %v3978, %v4122
        %v4124 = vpop.f32.mrb[0].mxu0
        %4125 = vmatprep.mubr.f32.mxu0 %v3849
        %4126 = vmatmul.mubr.f32.gmra.mrb[0].mxu0 %v3848
        %v4127 = vpop.f32.mrb[0].mxu0
        %v4128 = vadd.f32 %v3983, %v4127
        %v4129 = vpop.f32.mrb[0].mxu0
        %4130 = vmatprep.mubr.f32.mxu0 %v3853
        %4131 = vmatmul.mubr.f32.gmra.mrb[0].mxu0 %v3852
        %v4132 = vpop.f32.mrb[0].mxu0
        %v4133 = vadd.f32 %v3988, %v4132
        %v4134 = vpop.f32.mrb[0].mxu0
        %4135 = vmatprep.mubr.f32.mxu0 %v3857
        %4136 = vmatmul.mubr.f32.gmra.mrb[0].mxu0 %v3856
        %v4137 = vpop.f32.mrb[0].mxu0
        %v4138 = vadd.f32 %v3993, %v4137
        %v4139 = vpop.f32.mrb[0].mxu0
        %4140 = vmatprep.mubr.f32.mxu0 %v3861
        %4141 = vmatmul.mubr.f32.gmra.mrb[0].mxu0 %v3860
        %v4142 = vpop.f32.mrb[0].mxu0
        %v4143 = vadd.f32 %v3998, %v4142
        %v4144 = vpop.f32.mrb[0].mxu0
        %4145 = vmatprep.mubr.f32.mxu0 %v3865
        %4146 = vmatmul.mubr.f32.gmra.mrb[0].mxu0 %v3864
        %v4147 = vpop.f32.mrb[0].mxu0
        %v4148 = vadd.f32 %v4003, %v4147
        %v4149 = vpop.f32.mrb[0].mxu0
        %4150 = vmatprep.mubr.f32.mxu0 %v3869
        %4151 = vmatmul.mubr.f32.gmra.mrb[0].mxu0 %v3868
        %v4152 = vpop.f32.mrb[0].mxu0
        %v4153 = vadd.f32 %v4008, %v4152
        %v4154 = vpop.f32.mrb[0].mxu0
        %4155 = vmatprep.mubr.f32.mxu0 %v3873
        %4156 = vmatmul.mubr.f32.gmra.mrb[0].mxu0 %v3872
        %v4157 = vpop.f32.mrb[0].mxu0
        %v4158 = vadd.f32 %v4013, %v4157
        %v4159 = vpop.f32.mrb[0].mxu0
        %4160 = vmatprep.mubr.f32.mxu0 %v3877
        %4161 = vmatmul.mubr.f32.gmra.mrb[0].mxu0 %v3876
        %v4162 = vpop.f32.mrb[0].mxu0
        %v4163 = vadd.f32 %v4018, %v4162
        %v4164 = vpop.f32.mrb[0].mxu0
        %4165 = vmatprep.mubr.f32.mxu0 %v3881
        %4166 = vmatmul.mubr.f32.gmra.mrb[0].mxu0 %v3880
        %v4167 = vpop.f32.mrb[0].mxu0
        %v4168 = vadd.f32 %v4023, %v4167
        %v4169 = vpop.f32.mrb[0].mxu0
        %4170 = vmatprep.mubr.f32.mxu0 %v3885
        %4171 = vmatmul.mubr.f32.gmra.mrb[0].mxu0 %v3884
        %v4172 = vpop.f32.mrb[0].mxu0
        %v4173 = vadd.f32 %v4028, %v4172
        %v4174 = vpop.f32.mrb[0].mxu0
        %4175 = vdwg.mxu0
        %v4176 = vld [vmem:[%s255] sm:$0xff]
        %v4177 = vld [vmem:[%s255 + $0x8] sm:$0xff]
        %v4178 = vld [vmem:[%s255 + $0x10] sm:$0xff]
        %v4179 = vld [vmem:[%s255 + $0x18] sm:$0xff]
        %v4180 = vld [vmem:[%s255 + $0x20] sm:$0xff]
        %v4181 = vld [vmem:[%s255 + $0x28] sm:$0xff]
        %v4182 = vld [vmem:[%s255 + $0x30] sm:$0xff]
        %v4183 = vld [vmem:[%s255 + $0x38] sm:$0xff]
        %v4184 = vld [vmem:[%s255 + $0x40] sm:$0xff]
        %v4185 = vld [vmem:[%s255 + $0x48] sm:$0xff]
        %v4186 = vld [vmem:[%s255 + $0x50] sm:$0xff]
        %v4187 = vld [vmem:[%s255 + $0x58] sm:$0xff]
        %v4188 = vld [vmem:[%s255 + $0x60] sm:$0xff]
        %v4189 = vld [vmem:[%s255 + $0x68] sm:$0xff]
        %v4190 = vld [vmem:[%s255 + $0x70] sm:$0xff]
        %v4191 = vld [vmem:[%s255 + $0x78] sm:$0xff]
        %v4192 = vld [vmem:[%s255 + $0x80] sm:$0xff]
        %v4193 = vld [vmem:[%s255 + $0x88] sm:$0xff]
        %v4194 = vld [vmem:[%s255 + $0x90] sm:$0xff]
        %v4195 = vld [vmem:[%s255 + $0x98] sm:$0xff]
        %v4196 = vld [vmem:[%s255 + $0xa0] sm:$0xff]
        %v4197 = vld [vmem:[%s255 + $0xa8] sm:$0xff]
        %v4198 = vld [vmem:[%s255 + $0xb0] sm:$0xff]
        %v4199 = vld [vmem:[%s255 + $0xb8] sm:$0xff]
        %v4200 = vld [vmem:[%s255 + $0xc0] sm:$0xff]
        %v4201 = vld [vmem:[%s255 + $0xc8] sm:$0xff]
        %v4202 = vld [vmem:[%s255 + $0xd0] sm:$0xff]
        %v4203 = vld [vmem:[%s255 + $0xd8] sm:$0xff]
        %v4204 = vld [vmem:[%s255 + $0xe0] sm:$0xff]
        %v4205 = vld [vmem:[%s255 + $0xe8] sm:$0xff]
        %v4206 = vld [vmem:[%s255 + $0xf0] sm:$0xff]
        %v4207 = vld [vmem:[%s255 + $0xf8] sm:$0xff]
        %v4208 = vld [vmem:[%s255 + $0x100] sm:$0xff]
        %v4209 = vld [vmem:[%s255 + $0x108] sm:$0xff]
        %v4210 = vld [vmem:[%s255 + $0x110] sm:$0xff]
        %v4211 = vld [vmem:[%s255 + $0x118] sm:$0xff]
        %v4212 = vld [vmem:[%s255 + $0x120] sm:$0xff]
        %v4213 = vld [vmem:[%s255 + $0x128] sm:$0xff]
        %v4214 = vld [vmem:[%s255 + $0x130] sm:$0xff]
        %v4215 = vld [vmem:[%s255 + $0x138] sm:$0xff]
        %v4216 = vld [vmem:[%s255 + $0x140] sm:$0xff]
        %v4217 = vld [vmem:[%s255 + $0x148] sm:$0xff]
        %v4218 = vld [vmem:[%s255 + $0x150] sm:$0xff]
        %v4219 = vld [vmem:[%s255 + $0x158] sm:$0xff]
        %v4220 = vld [vmem:[%s255 + $0x160] sm:$0xff]
        %v4221 = vld [vmem:[%s255 + $0x168] sm:$0xff]
        %v4222 = vld [vmem:[%s255 + $0x170] sm:$0xff]
        %v4223 = vld [vmem:[%s255 + $0x178] sm:$0xff]
        %v4224 = vld [vmem:[%s255 + $0x180] sm:$0xff]
        %v4225 = vld [vmem:[%s255 + $0x188] sm:$0xff]
        %v4226 = vld [vmem:[%s255 + $0x190] sm:$0xff]
        %v4227 = vld [vmem:[%s255 + $0x198] sm:$0xff]
        %v4228 = vld [vmem:[%s255 + $0x1a0] sm:$0xff]
        %v4229 = vld [vmem:[%s255 + $0x1a8] sm:$0xff]
        %v4230 = vld [vmem:[%s255 + $0x1b0] sm:$0xff]
        %v4231 = vld [vmem:[%s255 + $0x1b8] sm:$0xff]
        %v4232 = vld [vmem:[%s255 + $0x1c0] sm:$0xff]
        %v4233 = vld [vmem:[%s255 + $0x1c8] sm:$0xff]
        %v4234 = vld [vmem:[%s255 + $0x1d0] sm:$0xff]
        %v4235 = vld [vmem:[%s255 + $0x1d8] sm:$0xff]
        %v4236 = vld [vmem:[%s255 + $0x1e0] sm:$0xff]
        %v4237 = vld [vmem:[%s255 + $0x1e8] sm:$0xff]
        %v4238 = vld [vmem:[%s255 + $0x1f0] sm:$0xff]
        %v4239 = vld [vmem:[%s255 + $0x1f8] sm:$0xff]
        %v4240 = vmul.f32 %v2976, %v4098
        %v4241 = vmul.f32 %v2981, %v4103
        %v4242 = vmul.f32 %v2986, %v4108
        %v4243 = vmul.f32 %v2991, %v4113
        %v4244 = vmul.f32 %v2996, %v4118
        %v4245 = vmul.f32 %v3001, %v4123
        %v4246 = vmul.f32 %v3006, %v4128
        %v4247 = vmul.f32 %v3011, %v4133
        %v4248 = vmul.f32 %v3016, %v4138
        %v4249 = vmul.f32 %v3021, %v4143
        %v4250 = vmul.f32 %v3026, %v4148
        %v4251 = vmul.f32 %v3031, %v4153
        %v4252 = vmul.f32 %v3036, %v4158
        %v4253 = vmul.f32 %v3041, %v4163
        %v4254 = vmul.f32 %v3046, %v4168
        %v4255 = vmul.f32 %v3051, %v4173
        %4256 = vadd.xlane.f32.xlu0 %v4240
        %v4257 = vpop.xlane.xlu0 %4256
        %4258 = vadd.xlane.f32.xlu0 %v4241
        %v4259 = vpop.xlane.xlu0 %4258
        %4260 = vadd.xlane.f32.xlu0 %v4242
        %v4261 = vpop.xlane.xlu0 %4260
        %4262 = vadd.xlane.f32.xlu0 %v4243
        %v4263 = vpop.xlane.xlu0 %4262
        %4264 = vadd.xlane.f32.xlu0 %v4244
        %v4265 = vpop.xlane.xlu0 %4264
        %4266 = vadd.xlane.f32.xlu0 %v4245
        %v4267 = vpop.xlane.xlu0 %4266
        %4268 = vadd.xlane.f32.xlu0 %v4246
        %v4269 = vpop.xlane.xlu0 %4268
        %4270 = vadd.xlane.f32.xlu0 %v4247
        %v4271 = vpop.xlane.xlu0 %4270
        %4272 = vadd.xlane.f32.xlu0 %v4248
        %v4273 = vpop.xlane.xlu0 %4272
        %4274 = vadd.xlane.f32.xlu0 %v4249
        %v4275 = vpop.xlane.xlu0 %4274
        %4276 = vadd.xlane.f32.xlu0 %v4250
        %v4277 = vpop.xlane.xlu0 %4276
        %4278 = vadd.xlane.f32.xlu0 %v4251
        %v4279 = vpop.xlane.xlu0 %4278
        %4280 = vadd.xlane.f32.xlu0 %v4252
        %v4281 = vpop.xlane.xlu0 %4280
        %4282 = vadd.xlane.f32.xlu0 %v4253
        %v4283 = vpop.xlane.xlu0 %4282
        %4284 = vadd.xlane.f32.xlu0 %v4254
        %v4285 = vpop.xlane.xlu0 %4284
        %4286 = vadd.xlane.f32.xlu0 %v4255
        %v4287 = vpop.xlane.xlu0 %4286
        %v4288 = vmin.f32 %v4257, 0.0
        %v4289 = vmin.f32 %v4259, 0.0
        %v4290 = vmin.f32 %v4261, 0.0
        %v4291 = vmin.f32 %v4263, 0.0
        %v4292 = vmin.f32 %v4265, 0.0
        %v4293 = vmin.f32 %v4267, 0.0
        %v4294 = vmin.f32 %v4269, 0.0
        %v4295 = vmin.f32 %v4271, 0.0
        %v4296 = vmin.f32 %v4273, 0.0
        %v4297 = vmin.f32 %v4275, 0.0
        %v4298 = vmin.f32 %v4277, 0.0
        %v4299 = vmin.f32 %v4279, 0.0
        %v4300 = vmin.f32 %v4281, 0.0
        %v4301 = vmin.f32 %v4283, 0.0
        %v4302 = vmin.f32 %v4285, 0.0
        %v4303 = vmin.f32 %v4287, 0.0
        %v4304 = vand.u32 2147483647, %v4257
        %v4305 = vand.u32 2147483647, %v4259
        %v4306 = vand.u32 2147483647, %v4261
        %v4307 = vand.u32 2147483647, %v4263
        %v4308 = vand.u32 2147483647, %v4265
        %v4309 = vand.u32 2147483647, %v4267
        %v4310 = vand.u32 2147483647, %v4269
        %v4311 = vand.u32 2147483647, %v4271
        %v4312 = vand.u32 2147483647, %v4273
        %v4313 = vand.u32 2147483647, %v4275
        %v4314 = vand.u32 2147483647, %v4277
        %v4315 = vand.u32 2147483647, %v4279
        %v4316 = vand.u32 2147483647, %v4281
        %v4317 = vand.u32 2147483647, %v4283
        %v4318 = vand.u32 2147483647, %v4285
        %v4319 = vand.u32 2147483647, %v4287
        %v4320 = vsub.f32 0.0, %v4304
        %v4321 = vsub.f32 0.0, %v4305
        %v4322 = vsub.f32 0.0, %v4306
        %v4323 = vsub.f32 0.0, %v4307
        %v4324 = vsub.f32 0.0, %v4308
        %v4325 = vsub.f32 0.0, %v4309
        %v4326 = vsub.f32 0.0, %v4310
        %v4327 = vsub.f32 0.0, %v4311
        %v4328 = vsub.f32 0.0, %v4312
        %v4329 = vsub.f32 0.0, %v4313
        %v4330 = vsub.f32 0.0, %v4314
        %v4331 = vsub.f32 0.0, %v4315
        %v4332 = vsub.f32 0.0, %v4316
        %v4333 = vsub.f32 0.0, %v4317
        %v4334 = vsub.f32 0.0, %v4318
        %v4335 = vsub.f32 0.0, %v4319
        %v4336 = vmul.f32 %v4320, 1.442695
        %v4337 = vpow.pop %v4336
        %v4338 = vmul.f32 %v4321, 1.442695
        %v4339 = vpow.pop %v4338
        %v4340 = vmul.f32 %v4322, 1.442695
        %v4341 = vpow.pop %v4340
        %v4342 = vmul.f32 %v4323, 1.442695
        %v4343 = vpow.pop %v4342
        %v4344 = vmul.f32 %v4324, 1.442695
        %v4345 = vpow.pop %v4344
        %v4346 = vmul.f32 %v4325, 1.442695
        %v4347 = vpow.pop %v4346
        %v4348 = vmul.f32 %v4326, 1.442695
        %v4349 = vpow.pop %v4348
        %v4350 = vmul.f32 %v4327, 1.442695
        %v4351 = vpow.pop %v4350
        %v4352 = vmul.f32 %v4328, 1.442695
        %v4353 = vpow.pop %v4352
        %v4354 = vmul.f32 %v4329, 1.442695
        %v4355 = vpow.pop %v4354
        %v4356 = vmul.f32 %v4330, 1.442695
        %v4357 = vpow.pop %v4356
        %v4358 = vmul.f32 %v4331, 1.442695
        %v4359 = vpow.pop %v4358
        %v4360 = vmul.f32 %v4332, 1.442695
        %v4361 = vpow.pop %v4360
        %v4362 = vmul.f32 %v4333, 1.442695
        %v4363 = vpow.pop %v4362
        %v4364 = vmul.f32 %v4334, 1.442695
        %v4365 = vpow.pop %v4364
        %v4366 = vmul.f32 %v4335, 1.442695
        %v4367 = vpow.pop %v4366
        %v4368 = vadd.f32 %v4337, 1.0
        %v4369 = vadd.f32 %v4339, 1.0
        %v4370 = vadd.f32 %v4341, 1.0
        %v4371 = vadd.f32 %v4343, 1.0
        %v4372 = vadd.f32 %v4345, 1.0
        %v4373 = vadd.f32 %v4347, 1.0
        %v4374 = vadd.f32 %v4349, 1.0
        %v4375 = vadd.f32 %v4351, 1.0
        %v4376 = vadd.f32 %v4353, 1.0
        %v4377 = vadd.f32 %v4355, 1.0
        %v4378 = vadd.f32 %v4357, 1.0
        %v4379 = vadd.f32 %v4359, 1.0
        %v4380 = vadd.f32 %v4361, 1.0
        %v4381 = vadd.f32 %v4363, 1.0
        %v4382 = vadd.f32 %v4365, 1.0
        %v4383 = vadd.f32 %v4367, 1.0
        %v4384 = vlog2.pop %v4368
        %v4385 = vmul.f32 %v4384, 0.6931472
        %v4386 = vlog2.pop %v4369
        %v4387 = vmul.f32 %v4386, 0.6931472
        %v4388 = vlog2.pop %v4370
        %v4389 = vmul.f32 %v4388, 0.6931472
        %v4390 = vlog2.pop %v4371
        %v4391 = vmul.f32 %v4390, 0.6931472
        %v4392 = vlog2.pop %v4372
        %v4393 = vmul.f32 %v4392, 0.6931472
        %v4394 = vlog2.pop %v4373
        %v4395 = vmul.f32 %v4394, 0.6931472
        %v4396 = vlog2.pop %v4374
        %v4397 = vmul.f32 %v4396, 0.6931472
        %v4398 = vlog2.pop %v4375
        %v4399 = vmul.f32 %v4398, 0.6931472
        %v4400 = vlog2.pop %v4376
        %v4401 = vmul.f32 %v4400, 0.6931472
        %v4402 = vlog2.pop %v4377
        %v4403 = vmul.f32 %v4402, 0.6931472
        %v4404 = vlog2.pop %v4378
        %v4405 = vmul.f32 %v4404, 0.6931472
        %v4406 = vlog2.pop %v4379
        %v4407 = vmul.f32 %v4406, 0.6931472
        %v4408 = vlog2.pop %v4380
        %v4409 = vmul.f32 %v4408, 0.6931472
        %v4410 = vlog2.pop %v4381
        %v4411 = vmul.f32 %v4410, 0.6931472
        %v4412 = vlog2.pop %v4382
        %v4413 = vmul.f32 %v4412, 0.6931472
        %v4414 = vlog2.pop %v4383
        %v4415 = vmul.f32 %v4414, 0.6931472
        %v4416 = vsub.f32 %v4288, %v4385
        %v4417 = vsub.f32 %v4289, %v4387
        %v4418 = vsub.f32 %v4290, %v4389
        %v4419 = vsub.f32 %v4291, %v4391
        %v4420 = vsub.f32 %v4292, %v4393
        %v4421 = vsub.f32 %v4293, %v4395
        %v4422 = vsub.f32 %v4294, %v4397
        %v4423 = vsub.f32 %v4295, %v4399
        %v4424 = vsub.f32 %v4296, %v4401
        %v4425 = vsub.f32 %v4297, %v4403
        %v4426 = vsub.f32 %v4298, %v4405
        %v4427 = vsub.f32 %v4299, %v4407
        %v4428 = vsub.f32 %v4300, %v4409
        %v4429 = vsub.f32 %v4301, %v4411
        %v4430 = vsub.f32 %v4302, %v4413
        %v4431 = vsub.f32 %v4303, %v4415
        %v4432 = vmul.f32 %v3056, %v4098
        %v4433 = vmul.f32 %v3061, %v4103
        %v4434 = vmul.f32 %v3066, %v4108
        %v4435 = vmul.f32 %v3071, %v4113
        %v4436 = vmul.f32 %v3076, %v4118
        %v4437 = vmul.f32 %v3081, %v4123
        %v4438 = vmul.f32 %v3086, %v4128
        %v4439 = vmul.f32 %v3091, %v4133
        %v4440 = vmul.f32 %v3096, %v4138
        %v4441 = vmul.f32 %v3101, %v4143
        %v4442 = vmul.f32 %v3106, %v4148
        %v4443 = vmul.f32 %v3111, %v4153
        %v4444 = vmul.f32 %v3116, %v4158
        %v4445 = vmul.f32 %v3121, %v4163
        %v4446 = vmul.f32 %v3126, %v4168
        %v4447 = vmul.f32 %v3131, %v4173
        %v4448 = vmul.f32 %v3136, %v4098
        %v4449 = vmul.f32 %v3141, %v4103
        %v4450 = vmul.f32 %v3146, %v4108
        %v4451 = vmul.f32 %v3151, %v4113
        %v4452 = vmul.f32 %v3156, %v4118
        %v4453 = vmul.f32 %v3161, %v4123
        %v4454 = vmul.f32 %v3166, %v4128
        %v4455 = vmul.f32 %v3171, %v4133
        %v4456 = vmul.f32 %v3176, %v4138
        %v4457 = vmul.f32 %v3181, %v4143
        %v4458 = vmul.f32 %v3186, %v4148
        %v4459 = vmul.f32 %v3191, %v4153
        %v4460 = vmul.f32 %v3196, %v4158
        %v4461 = vmul.f32 %v3201, %v4163
        %v4462 = vmul.f32 %v3206, %v4168
        %v4463 = vmul.f32 %v3211, %v4173
        %v4464 = vmul.f32 %v3216, %v4098
        %v4465 = vmul.f32 %v3221, %v4103
        %v4466 = vmul.f32 %v3226, %v4108
        %v4467 = vmul.f32 %v3231, %v4113
        %v4468 = vmul.f32 %v3236, %v4118
        %v4469 = vmul.f32 %v3241, %v4123
        %v4470 = vmul.f32 %v3246, %v4128
        %v4471 = vmul.f32 %v3251, %v4133
        %v4472 = vmul.f32 %v3256, %v4138
        %v4473 = vmul.f32 %v3261, %v4143
        %v4474 = vmul.f32 %v3266, %v4148
        %v4475 = vmul.f32 %v3271, %v4153
        %v4476 = vmul.f32 %v3276, %v4158
        %v4477 = vmul.f32 %v3281, %v4163
        %v4478 = vmul.f32 %v3286, %v4168
        %v4479 = vmul.f32 %v3291, %v4173
        %v4480 = vmul.f32 %v3296, %v4098
        %v4481 = vmul.f32 %v3301, %v4103
        %v4482 = vmul.f32 %v3306, %v4108
        %v4483 = vmul.f32 %v3311, %v4113
        %v4484 = vmul.f32 %v3316, %v4118
        %v4485 = vmul.f32 %v3321, %v4123
        %v4486 = vmul.f32 %v3326, %v4128
        %v4487 = vmul.f32 %v3331, %v4133
        %v4488 = vmul.f32 %v3336, %v4138
        %v4489 = vmul.f32 %v3341, %v4143
        %v4490 = vmul.f32 %v3346, %v4148
        %v4491 = vmul.f32 %v3351, %v4153
        %v4492 = vmul.f32 %v3356, %v4158
        %v4493 = vmul.f32 %v3361, %v4163
        %v4494 = vmul.f32 %v3366, %v4168
        %v4495 = vmul.f32 %v3371, %v4173
        %4496 = vadd.xlane.f32.xlu0 %v4432
        %v4497 = vpop.xlane.xlu0 %4496
        %4498 = vadd.xlane.f32.xlu0 %v4433
        %v4499 = vpop.xlane.xlu0 %4498
        %4500 = vadd.xlane.f32.xlu0 %v4434
        %v4501 = vpop.xlane.xlu0 %4500
        %4502 = vadd.xlane.f32.xlu0 %v4435
        %v4503 = vpop.xlane.xlu0 %4502
        %4504 = vadd.xlane.f32.xlu0 %v4436
        %v4505 = vpop.xlane.xlu0 %4504
        %4506 = vadd.xlane.f32.xlu0 %v4437
        %v4507 = vpop.xlane.xlu0 %4506
        %4508 = vadd.xlane.f32.xlu0 %v4438
        %v4509 = vpop.xlane.xlu0 %4508
        %4510 = vadd.xlane.f32.xlu0 %v4439
        %v4511 = vpop.xlane.xlu0 %4510
        %4512 = vadd.xlane.f32.xlu0 %v4440
        %v4513 = vpop.xlane.xlu0 %4512
        %4514 = vadd.xlane.f32.xlu0 %v4441
        %v4515 = vpop.xlane.xlu0 %4514
        %4516 = vadd.xlane.f32.xlu0 %v4442
        %v4517 = vpop.xlane.xlu0 %4516
        %4518 = vadd.xlane.f32.xlu0 %v4443
        %v4519 = vpop.xlane.xlu0 %4518
        %4520 = vadd.xlane.f32.xlu0 %v4444
        %v4521 = vpop.xlane.xlu0 %4520
        %4522 = vadd.xlane.f32.xlu0 %v4445
        %v4523 = vpop.xlane.xlu0 %4522
        %4524 = vadd.xlane.f32.xlu0 %v4446
        %v4525 = vpop.xlane.xlu0 %4524
        %4526 = vadd.xlane.f32.xlu0 %v4447
        %v4527 = vpop.xlane.xlu0 %4526
        %4528 = vadd.xlane.f32.xlu0 %v4448
        %v4529 = vpop.xlane.xlu0 %4528
        %4530 = vadd.xlane.f32.xlu0 %v4449
        %v4531 = vpop.xlane.xlu0 %4530
        %4532 = vadd.xlane.f32.xlu0 %v4450
        %v4533 = vpop.xlane.xlu0 %4532
        %4534 = vadd.xlane.f32.xlu0 %v4451
        %v4535 = vpop.xlane.xlu0 %4534
        %4536 = vadd.xlane.f32.xlu0 %v4452
        %v4537 = vpop.xlane.xlu0 %4536
        %4538 = vadd.xlane.f32.xlu0 %v4453
        %v4539 = vpop.xlane.xlu0 %4538
        %4540 = vadd.xlane.f32.xlu0 %v4454
        %v4541 = vpop.xlane.xlu0 %4540
        %4542 = vadd.xlane.f32.xlu0 %v4455
        %v4543 = vpop.xlane.xlu0 %4542
        %4544 = vadd.xlane.f32.xlu0 %v4456
        %v4545 = vpop.xlane.xlu0 %4544
        %4546 = vadd.xlane.f32.xlu0 %v4457
        %v4547 = vpop.xlane.xlu0 %4546
        %4548 = vadd.xlane.f32.xlu0 %v4458
        %v4549 = vpop.xlane.xlu0 %4548
        %4550 = vadd.xlane.f32.xlu0 %v4459
        %v4551 = vpop.xlane.xlu0 %4550
        %4552 = vadd.xlane.f32.xlu0 %v4460
        %v4553 = vpop.xlane.xlu0 %4552
        %4554 = vadd.xlane.f32.xlu0 %v4461
        %v4555 = vpop.xlane.xlu0 %4554
        %4556 = vadd.xlane.f32.xlu0 %v4462
        %v4557 = vpop.xlane.xlu0 %4556
        %4558 = vadd.xlane.f32.xlu0 %v4463
        %v4559 = vpop.xlane.xlu0 %4558
        %4560 = vadd.xlane.f32.xlu0 %v4464
        %v4561 = vpop.xlane.xlu0 %4560
        %4562 = vadd.xlane.f32.xlu0 %v4465
        %v4563 = vpop.xlane.xlu0 %4562
        %4564 = vadd.xlane.f32.xlu0 %v4466
        %v4565 = vpop.xlane.xlu0 %4564
        %4566 = vadd.xlane.f32.xlu0 %v4467
        %v4567 = vpop.xlane.xlu0 %4566
        %4568 = vadd.xlane.f32.xlu0 %v4468
        %v4569 = vpop.xlane.xlu0 %4568
        %4570 = vadd.xlane.f32.xlu0 %v4469
        %v4571 = vpop.xlane.xlu0 %4570
        %4572 = vadd.xlane.f32.xlu0 %v4470
        %v4573 = vpop.xlane.xlu0 %4572
        %4574 = vadd.xlane.f32.xlu0 %v4471
        %v4575 = vpop.xlane.xlu0 %4574
        %4576 = vadd.xlane.f32.xlu0 %v4472
        %v4577 = vpop.xlane.xlu0 %4576
        %4578 = vadd.xlane.f32.xlu0 %v4473
        %v4579 = vpop.xlane.xlu0 %4578
        %4580 = vadd.xlane.f32.xlu0 %v4474
        %v4581 = vpop.xlane.xlu0 %4580
        %4582 = vadd.xlane.f32.xlu0 %v4475
        %v4583 = vpop.xlane.xlu0 %4582
        %4584 = vadd.xlane.f32.xlu0 %v4476
        %v4585 = vpop.xlane.xlu0 %4584
        %4586 = vadd.xlane.f32.xlu0 %v4477
        %v4587 = vpop.xlane.xlu0 %4586
        %4588 = vadd.xlane.f32.xlu0 %v4478
        %v4589 = vpop.xlane.xlu0 %4588
        %4590 = vadd.xlane.f32.xlu0 %v4479
        %v4591 = vpop.xlane.xlu0 %4590
        %4592 = vadd.xlane.f32.xlu0 %v4480
        %v4593 = vpop.xlane.xlu0 %4592
        %4594 = vadd.xlane.f32.xlu0 %v4481
        %v4595 = vpop.xlane.xlu0 %4594
        %4596 = vadd.xlane.f32.xlu0 %v4482
        %v4597 = vpop.xlane.xlu0 %4596
        %4598 = vadd.xlane.f32.xlu0 %v4483
        %v4599 = vpop.xlane.xlu0 %4598
        %4600 = vadd.xlane.f32.xlu0 %v4484
        %v4601 = vpop.xlane.xlu0 %4600
        %4602 = vadd.xlane.f32.xlu0 %v4485
        %v4603 = vpop.xlane.xlu0 %4602
        %4604 = vadd.xlane.f32.xlu0 %v4486
        %v4605 = vpop.xlane.xlu0 %4604
        %4606 = vadd.xlane.f32.xlu0 %v4487
        %v4607 = vpop.xlane.xlu0 %4606
        %4608 = vadd.xlane.f32.xlu0 %v4488
        %v4609 = vpop.xlane.xlu0 %4608
        %4610 = vadd.xlane.f32.xlu0 %v4489
        %v4611 = vpop.xlane.xlu0 %4610
        %4612 = vadd.xlane.f32.xlu0 %v4490
        %v4613 = vpop.xlane.xlu0 %4612
        %4614 = vadd.xlane.f32.xlu0 %v4491
        %v4615 = vpop.xlane.xlu0 %4614
        %4616 = vadd.xlane.f32.xlu0 %v4492
        %v4617 = vpop.xlane.xlu0 %4616
        %4618 = vadd.xlane.f32.xlu0 %v4493
        %v4619 = vpop.xlane.xlu0 %4618
        %4620 = vadd.xlane.f32.xlu0 %v4494
        %v4621 = vpop.xlane.xlu0 %4620
        %4622 = vadd.xlane.f32.xlu0 %v4495
        %v4623 = vpop.xlane.xlu0 %4622
        %v4624 = vmul.f32 %v3376, %v4098
        %v4625 = vmul.f32 %v3381, %v4103
        %v4626 = vmul.f32 %v3386, %v4108
        %v4627 = vmul.f32 %v3391, %v4113
        %v4628 = vmul.f32 %v3396, %v4118
        %v4629 = vmul.f32 %v3401, %v4123
        %v4630 = vmul.f32 %v3406, %v4128
        %v4631 = vmul.f32 %v3411, %v4133
        %v4632 = vmul.f32 %v3416, %v4138
        %v4633 = vmul.f32 %v3421, %v4143
        %v4634 = vmul.f32 %v3426, %v4148
        %v4635 = vmul.f32 %v3431, %v4153
        %v4636 = vmul.f32 %v3436, %v4158
        %v4637 = vmul.f32 %v3441, %v4163
        %v4638 = vmul.f32 %v3446, %v4168
        %v4639 = vmul.f32 %v3451, %v4173
        %v4640 = vmul.f32 %v3456, %v4098
        %v4641 = vmul.f32 %v3461, %v4103
        %v4642 = vmul.f32 %v3466, %v4108
        %v4643 = vmul.f32 %v3471, %v4113
        %v4644 = vmul.f32 %v3476, %v4118
        %v4645 = vmul.f32 %v3481, %v4123
        %v4646 = vmul.f32 %v3486, %v4128
        %v4647 = vmul.f32 %v3491, %v4133
        %v4648 = vmul.f32 %v3496, %v4138
        %v4649 = vmul.f32 %v3501, %v4143
        %v4650 = vmul.f32 %v3506, %v4148
        %v4651 = vmul.f32 %v3511, %v4153
        %v4652 = vmul.f32 %v3516, %v4158
        %v4653 = vmul.f32 %v3521, %v4163
        %v4654 = vmul.f32 %v3526, %v4168
        %v4655 = vmul.f32 %v3531, %v4173
        %v4656 = vmul.f32 %v3536, %v4098
        %v4657 = vmul.f32 %v3541, %v4103
        %v4658 = vmul.f32 %v3546, %v4108
        %v4659 = vmul.f32 %v3551, %v4113
        %v4660 = vmul.f32 %v3556, %v4118
        %v4661 = vmul.f32 %v3561, %v4123
        %v4662 = vmul.f32 %v3566, %v4128
        %v4663 = vmul.f32 %v3571, %v4133
        %v4664 = vmul.f32 %v3576, %v4138
        %v4665 = vmul.f32 %v3581, %v4143
        %v4666 = vmul.f32 %v3586, %v4148
        %v4667 = vmul.f32 %v3591, %v4153
        %v4668 = vmul.f32 %v3596, %v4158
        %v4669 = vmul.f32 %v3601, %v4163
        %v4670 = vmul.f32 %v3606, %v4168
        %v4671 = vmul.f32 %v3611, %v4173
        %v4672 = vmul.f32 %v3616, %v4098
        %v4673 = vmul.f32 %v3621, %v4103
        %v4674 = vmul.f32 %v3626, %v4108
        %v4675 = vmul.f32 %v3631, %v4113
        %v4676 = vmul.f32 %v3636, %v4118
        %v4677 = vmul.f32 %v3641, %v4123
        %v4678 = vmul.f32 %v3646, %v4128
        %v4679 = vmul.f32 %v3651, %v4133
        %v4680 = vmul.f32 %v3656, %v4138
        %v4681 = vmul.f32 %v3661, %v4143
        %v4682 = vmul.f32 %v3666, %v4148
        %v4683 = vmul.f32 %v3671, %v4153
        %v4684 = vmul.f32 %v3676, %v4158
        %v4685 = vmul.f32 %v3681, %v4163
        %v4686 = vmul.f32 %v3686, %v4168
        %v4687 = vmul.f32 %v3691, %v4173
        %4688 = vadd.xlane.f32.xlu0 %v4624
        %v4689 = vpop.xlane.xlu0 %4688
        %4690 = vadd.xlane.f32.xlu0 %v4625
        %v4691 = vpop.xlane.xlu0 %4690
        %4692 = vadd.xlane.f32.xlu0 %v4626
        %v4693 = vpop.xlane.xlu0 %4692
        %4694 = vadd.xlane.f32.xlu0 %v4627
        %v4695 = vpop.xlane.xlu0 %4694
        %4696 = vadd.xlane.f32.xlu0 %v4628
        %v4697 = vpop.xlane.xlu0 %4696
        %4698 = vadd.xlane.f32.xlu0 %v4629
        %v4699 = vpop.xlane.xlu0 %4698
        %4700 = vadd.xlane.f32.xlu0 %v4630
        %v4701 = vpop.xlane.xlu0 %4700
        %4702 = vadd.xlane.f32.xlu0 %v4631
        %v4703 = vpop.xlane.xlu0 %4702
        %4704 = vadd.xlane.f32.xlu0 %v4632
        %v4705 = vpop.xlane.xlu0 %4704
        %4706 = vadd.xlane.f32.xlu0 %v4633
        %v4707 = vpop.xlane.xlu0 %4706
        %4708 = vadd.xlane.f32.xlu0 %v4634
        %v4709 = vpop.xlane.xlu0 %4708
        %4710 = vadd.xlane.f32.xlu0 %v4635
        %v4711 = vpop.xlane.xlu0 %4710
        %4712 = vadd.xlane.f32.xlu0 %v4636
        %v4713 = vpop.xlane.xlu0 %4712
        %4714 = vadd.xlane.f32.xlu0 %v4637
        %v4715 = vpop.xlane.xlu0 %4714
        %4716 = vadd.xlane.f32.xlu0 %v4638
        %v4717 = vpop.xlane.xlu0 %4716
        %4718 = vadd.xlane.f32.xlu0 %v4639
        %v4719 = vpop.xlane.xlu0 %4718
        %4720 = vadd.xlane.f32.xlu0 %v4640
        %v4721 = vpop.xlane.xlu0 %4720
        %4722 = vadd.xlane.f32.xlu0 %v4641
        %v4723 = vpop.xlane.xlu0 %4722
        %4724 = vadd.xlane.f32.xlu0 %v4642
        %v4725 = vpop.xlane.xlu0 %4724
        %4726 = vadd.xlane.f32.xlu0 %v4643
        %v4727 = vpop.xlane.xlu0 %4726
        %4728 = vadd.xlane.f32.xlu0 %v4644
        %v4729 = vpop.xlane.xlu0 %4728
        %4730 = vadd.xlane.f32.xlu0 %v4645
        %v4731 = vpop.xlane.xlu0 %4730
        %4732 = vadd.xlane.f32.xlu0 %v4646
        %v4733 = vpop.xlane.xlu0 %4732
        %4734 = vadd.xlane.f32.xlu0 %v4647
        %v4735 = vpop.xlane.xlu0 %4734
        %4736 = vadd.xlane.f32.xlu0 %v4648
        %v4737 = vpop.xlane.xlu0 %4736
        %4738 = vadd.xlane.f32.xlu0 %v4649
        %v4739 = vpop.xlane.xlu0 %4738
        %4740 = vadd.xlane.f32.xlu0 %v4650
        %v4741 = vpop.xlane.xlu0 %4740
        %4742 = vadd.xlane.f32.xlu0 %v4651
        %v4743 = vpop.xlane.xlu0 %4742
        %4744 = vadd.xlane.f32.xlu0 %v4652
        %v4745 = vpop.xlane.xlu0 %4744
        %4746 = vadd.xlane.f32.xlu0 %v4653
        %v4747 = vpop.xlane.xlu0 %4746
        %4748 = vadd.xlane.f32.xlu0 %v4654
        %v4749 = vpop.xlane.xlu0 %4748
        %4750 = vadd.xlane.f32.xlu0 %v4655
        %v4751 = vpop.xlane.xlu0 %4750
        %4752 = vadd.xlane.f32.xlu0 %v4656
        %v4753 = vpop.xlane.xlu0 %4752
        %4754 = vadd.xlane.f32.xlu0 %v4657
        %v4755 = vpop.xlane.xlu0 %4754
        %4756 = vadd.xlane.f32.xlu0 %v4658
        %v4757 = vpop.xlane.xlu0 %4756
        %4758 = vadd.xlane.f32.xlu0 %v4659
        %v4759 = vpop.xlane.xlu0 %4758
        %4760 = vadd.xlane.f32.xlu0 %v4660
        %v4761 = vpop.xlane.xlu0 %4760
        %4762 = vadd.xlane.f32.xlu0 %v4661
        %v4763 = vpop.xlane.xlu0 %4762
        %4764 = vadd.xlane.f32.xlu0 %v4662
        %v4765 = vpop.xlane.xlu0 %4764
        %4766 = vadd.xlane.f32.xlu0 %v4663
        %v4767 = vpop.xlane.xlu0 %4766
        %4768 = vadd.xlane.f32.xlu0 %v4664
        %v4769 = vpop.xlane.xlu0 %4768
        %4770 = vadd.xlane.f32.xlu0 %v4665
        %v4771 = vpop.xlane.xlu0 %4770
        %4772 = vadd.xlane.f32.xlu0 %v4666
        %v4773 = vpop.xlane.xlu0 %4772
        %4774 = vadd.xlane.f32.xlu0 %v4667
        %v4775 = vpop.xlane.xlu0 %4774
        %4776 = vadd.xlane.f32.xlu0 %v4668
        %v4777 = vpop.xlane.xlu0 %4776
        %4778 = vadd.xlane.f32.xlu0 %v4669
        %v4779 = vpop.xlane.xlu0 %4778
        %4780 = vadd.xlane.f32.xlu0 %v4670
        %v4781 = vpop.xlane.xlu0 %4780
        %4782 = vadd.xlane.f32.xlu0 %v4671
        %v4783 = vpop.xlane.xlu0 %4782
        %4784 = vadd.xlane.f32.xlu0 %v4672
        %v4785 = vpop.xlane.xlu0 %4784
        %4786 = vadd.xlane.f32.xlu0 %v4673
        %v4787 = vpop.xlane.xlu0 %4786
        %4788 = vadd.xlane.f32.xlu0 %v4674
        %v4789 = vpop.xlane.xlu0 %4788
        %4790 = vadd.xlane.f32.xlu0 %v4675
        %v4791 = vpop.xlane.xlu0 %4790
        %4792 = vadd.xlane.f32.xlu0 %v4676
        %v4793 = vpop.xlane.xlu0 %4792
        %4794 = vadd.xlane.f32.xlu0 %v4677
        %v4795 = vpop.xlane.xlu0 %4794
        %4796 = vadd.xlane.f32.xlu0 %v4678
        %v4797 = vpop.xlane.xlu0 %4796
        %4798 = vadd.xlane.f32.xlu0 %v4679
        %v4799 = vpop.xlane.xlu0 %4798
        %4800 = vadd.xlane.f32.xlu0 %v4680
        %v4801 = vpop.xlane.xlu0 %4800
        %4802 = vadd.xlane.f32.xlu0 %v4681
        %v4803 = vpop.xlane.xlu0 %4802
        %4804 = vadd.xlane.f32.xlu0 %v4682
        %v4805 = vpop.xlane.xlu0 %4804
        %4806 = vadd.xlane.f32.xlu0 %v4683
        %v4807 = vpop.xlane.xlu0 %4806
        %4808 = vadd.xlane.f32.xlu0 %v4684
        %v4809 = vpop.xlane.xlu0 %4808
        %4810 = vadd.xlane.f32.xlu0 %v4685
        %v4811 = vpop.xlane.xlu0 %4810
        %4812 = vadd.xlane.f32.xlu0 %v4686
        %v4813 = vpop.xlane.xlu0 %4812
        %4814 = vadd.xlane.f32.xlu0 %v4687
        %v4815 = vpop.xlane.xlu0 %4814
        %v4816 = vmul.f32 %v4176, %v4689
        %v4817 = vmul.f32 %v4177, %v4691
        %v4818 = vmul.f32 %v4178, %v4693
        %v4819 = vmul.f32 %v4179, %v4695
        %v4820 = vmul.f32 %v4180, %v4697
        %v4821 = vmul.f32 %v4181, %v4699
        %v4822 = vmul.f32 %v4182, %v4701
        %v4823 = vmul.f32 %v4183, %v4703
        %v4824 = vmul.f32 %v4184, %v4705
        %v4825 = vmul.f32 %v4185, %v4707
        %v4826 = vmul.f32 %v4186, %v4709
        %v4827 = vmul.f32 %v4187, %v4711
        %v4828 = vmul.f32 %v4188, %v4713
        %v4829 = vmul.f32 %v4189, %v4715
        %v4830 = vmul.f32 %v4190, %v4717
        %v4831 = vmul.f32 %v4191, %v4719
        %v4832 = vmul.f32 %v4192, %v4721
        %v4833 = vmul.f32 %v4193, %v4723
        %v4834 = vmul.f32 %v4194, %v4725
        %v4835 = vmul.f32 %v4195, %v4727
        %v4836 = vmul.f32 %v4196, %v4729
        %v4837 = vmul.f32 %v4197, %v4731
        %v4838 = vmul.f32 %v4198, %v4733
        %v4839 = vmul.f32 %v4199, %v4735
        %v4840 = vmul.f32 %v4200, %v4737
        %v4841 = vmul.f32 %v4201, %v4739
        %v4842 = vmul.f32 %v4202, %v4741
        %v4843 = vmul.f32 %v4203, %v4743
        %v4844 = vmul.f32 %v4204, %v4745
        %v4845 = vmul.f32 %v4205, %v4747
        %v4846 = vmul.f32 %v4206, %v4749
        %v4847 = vmul.f32 %v4207, %v4751
        %v4848 = vmul.f32 %v4208, %v4753
        %v4849 = vmul.f32 %v4209, %v4755
        %v4850 = vmul.f32 %v4210, %v4757
        %v4851 = vmul.f32 %v4211, %v4759
        %v4852 = vmul.f32 %v4212, %v4761
        %v4853 = vmul.f32 %v4213, %v4763
        %v4854 = vmul.f32 %v4214, %v4765
        %v4855 = vmul.f32 %v4215, %v4767
        %v4856 = vmul.f32 %v4216, %v4769
        %v4857 = vmul.f32 %v4217, %v4771
        %v4858 = vmul.f32 %v4218, %v4773
        %v4859 = vmul.f32 %v4219, %v4775
        %v4860 = vmul.f32 %v4220, %v4777
        %v4861 = vmul.f32 %v4221, %v4779
        %v4862 = vmul.f32 %v4222, %v4781
        %v4863 = vmul.f32 %v4223, %v4783
        %v4864 = vmul.f32 %v4224, %v4785
        %v4865 = vmul.f32 %v4225, %v4787
        %v4866 = vmul.f32 %v4226, %v4789
        %v4867 = vmul.f32 %v4227, %v4791
        %v4868 = vmul.f32 %v4228, %v4793
        %v4869 = vmul.f32 %v4229, %v4795
        %v4870 = vmul.f32 %v4230, %v4797
        %v4871 = vmul.f32 %v4231, %v4799
        %v4872 = vmul.f32 %v4232, %v4801
        %v4873 = vmul.f32 %v4233, %v4803
        %v4874 = vmul.f32 %v4234, %v4805
        %v4875 = vmul.f32 %v4235, %v4807
        %v4876 = vmul.f32 %v4236, %v4809
        %v4877 = vmul.f32 %v4237, %v4811
        %v4878 = vmul.f32 %v4238, %v4813
        %v4879 = vmul.f32 %v4239, %v4815
        %v4880 = vsub.f32 0.0, %v4816
        %v4881 = vsub.f32 0.0, %v4817
        %v4882 = vsub.f32 0.0, %v4818
        %v4883 = vsub.f32 0.0, %v4819
        %v4884 = vsub.f32 0.0, %v4820
        %v4885 = vsub.f32 0.0, %v4821
        %v4886 = vsub.f32 0.0, %v4822
        %v4887 = vsub.f32 0.0, %v4823
        %v4888 = vsub.f32 0.0, %v4824
        %v4889 = vsub.f32 0.0, %v4825
        %v4890 = vsub.f32 0.0, %v4826
        %v4891 = vsub.f32 0.0, %v4827
        %v4892 = vsub.f32 0.0, %v4828
        %v4893 = vsub.f32 0.0, %v4829
        %v4894 = vsub.f32 0.0, %v4830
        %v4895 = vsub.f32 0.0, %v4831
        %v4896 = vsub.f32 0.0, %v4832
        %v4897 = vsub.f32 0.0, %v4833
        %v4898 = vsub.f32 0.0, %v4834
        %v4899 = vsub.f32 0.0, %v4835
        %v4900 = vsub.f32 0.0, %v4836
        %v4901 = vsub.f32 0.0, %v4837
        %v4902 = vsub.f32 0.0, %v4838
        %v4903 = vsub.f32 0.0, %v4839
        %v4904 = vsub.f32 0.0, %v4840
        %v4905 = vsub.f32 0.0, %v4841
        %v4906 = vsub.f32 0.0, %v4842
        %v4907 = vsub.f32 0.0, %v4843
        %v4908 = vsub.f32 0.0, %v4844
        %v4909 = vsub.f32 0.0, %v4845
        %v4910 = vsub.f32 0.0, %v4846
        %v4911 = vsub.f32 0.0, %v4847
        %v4912 = vsub.f32 0.0, %v4848
        %v4913 = vsub.f32 0.0, %v4849
        %v4914 = vsub.f32 0.0, %v4850
        %v4915 = vsub.f32 0.0, %v4851
        %v4916 = vsub.f32 0.0, %v4852
        %v4917 = vsub.f32 0.0, %v4853
        %v4918 = vsub.f32 0.0, %v4854
        %v4919 = vsub.f32 0.0, %v4855
        %v4920 = vsub.f32 0.0, %v4856
        %v4921 = vsub.f32 0.0, %v4857
        %v4922 = vsub.f32 0.0, %v4858
        %v4923 = vsub.f32 0.0, %v4859
        %v4924 = vsub.f32 0.0, %v4860
        %v4925 = vsub.f32 0.0, %v4861
        %v4926 = vsub.f32 0.0, %v4862
        %v4927 = vsub.f32 0.0, %v4863
        %v4928 = vsub.f32 0.0, %v4864
        %v4929 = vsub.f32 0.0, %v4865
        %v4930 = vsub.f32 0.0, %v4866
        %v4931 = vsub.f32 0.0, %v4867
        %v4932 = vsub.f32 0.0, %v4868
        %v4933 = vsub.f32 0.0, %v4869
        %v4934 = vsub.f32 0.0, %v4870
        %v4935 = vsub.f32 0.0, %v4871
        %v4936 = vsub.f32 0.0, %v4872
        %v4937 = vsub.f32 0.0, %v4873
        %v4938 = vsub.f32 0.0, %v4874
        %v4939 = vsub.f32 0.0, %v4875
        %v4940 = vsub.f32 0.0, %v4876
        %v4941 = vsub.f32 0.0, %v4877
        %v4942 = vsub.f32 0.0, %v4878
        %v4943 = vsub.f32 0.0, %v4879
        %v4944 = vmin.f32 %v4880, 0.0
        %v4945 = vmin.f32 %v4881, 0.0
        %v4946 = vmin.f32 %v4882, 0.0
        %v4947 = vmin.f32 %v4883, 0.0
        %v4948 = vmin.f32 %v4884, 0.0
        %v4949 = vmin.f32 %v4885, 0.0
        %v4950 = vmin.f32 %v4886, 0.0
        %v4951 = vmin.f32 %v4887, 0.0
        %v4952 = vmin.f32 %v4888, 0.0
        %v4953 = vmin.f32 %v4889, 0.0
        %v4954 = vmin.f32 %v4890, 0.0
        %v4955 = vmin.f32 %v4891, 0.0
        %v4956 = vmin.f32 %v4892, 0.0
        %v4957 = vmin.f32 %v4893, 0.0
        %v4958 = vmin.f32 %v4894, 0.0
        %v4959 = vmin.f32 %v4895, 0.0
        %v4960 = vmin.f32 %v4896, 0.0
        %v4961 = vmin.f32 %v4897, 0.0
        %v4962 = vmin.f32 %v4898, 0.0
        %v4963 = vmin.f32 %v4899, 0.0
        %v4964 = vmin.f32 %v4900, 0.0
        %v4965 = vmin.f32 %v4901, 0.0
        %v4966 = vmin.f32 %v4902, 0.0
        %v4967 = vmin.f32 %v4903, 0.0
        %v4968 = vmin.f32 %v4904, 0.0
        %v4969 = vmin.f32 %v4905, 0.0
        %v4970 = vmin.f32 %v4906, 0.0
        %v4971 = vmin.f32 %v4907, 0.0
        %v4972 = vmin.f32 %v4908, 0.0
        %v4973 = vmin.f32 %v4909, 0.0
        %v4974 = vmin.f32 %v4910, 0.0
        %v4975 = vmin.f32 %v4911, 0.0
        %v4976 = vmin.f32 %v4912, 0.0
        %v4977 = vmin.f32 %v4913, 0.0
        %v4978 = vmin.f32 %v4914, 0.0
        %v4979 = vmin.f32 %v4915, 0.0
        %v4980 = vmin.f32 %v4916, 0.0
        %v4981 = vmin.f32 %v4917, 0.0
        %v4982 = vmin.f32 %v4918, 0.0
        %v4983 = vmin.f32 %v4919, 0.0
        %v4984 = vmin.f32 %v4920, 0.0
        %v4985 = vmin.f32 %v4921, 0.0
        %v4986 = vmin.f32 %v4922, 0.0
        %v4987 = vmin.f32 %v4923, 0.0
        %v4988 = vmin.f32 %v4924, 0.0
        %v4989 = vmin.f32 %v4925, 0.0
        %v4990 = vmin.f32 %v4926, 0.0
        %v4991 = vmin.f32 %v4927, 0.0
        %v4992 = vmin.f32 %v4928, 0.0
        %v4993 = vmin.f32 %v4929, 0.0
        %v4994 = vmin.f32 %v4930, 0.0
        %v4995 = vmin.f32 %v4931, 0.0
        %v4996 = vmin.f32 %v4932, 0.0
        %v4997 = vmin.f32 %v4933, 0.0
        %v4998 = vmin.f32 %v4934, 0.0
        %v4999 = vmin.f32 %v4935, 0.0
        %v5000 = vmin.f32 %v4936, 0.0
        %v5001 = vmin.f32 %v4937, 0.0
        %v5002 = vmin.f32 %v4938, 0.0
        %v5003 = vmin.f32 %v4939, 0.0
        %v5004 = vmin.f32 %v4940, 0.0
        %v5005 = vmin.f32 %v4941, 0.0
        %v5006 = vmin.f32 %v4942, 0.0
        %v5007 = vmin.f32 %v4943, 0.0
        %v5008 = vand.u32 2147483647, %v4880
        %v5009 = vand.u32 2147483647, %v4881
        %v5010 = vand.u32 2147483647, %v4882
        %v5011 = vand.u32 2147483647, %v4883
        %v5012 = vand.u32 2147483647, %v4884
        %v5013 = vand.u32 2147483647, %v4885
        %v5014 = vand.u32 2147483647, %v4886
        %v5015 = vand.u32 2147483647, %v4887
        %v5016 = vand.u32 2147483647, %v4888
        %v5017 = vand.u32 2147483647, %v4889
        %v5018 = vand.u32 2147483647, %v4890
        %v5019 = vand.u32 2147483647, %v4891
        %v5020 = vand.u32 2147483647, %v4892
        %v5021 = vand.u32 2147483647, %v4893
        %v5022 = vand.u32 2147483647, %v4894
        %v5023 = vand.u32 2147483647, %v4895
        %v5024 = vand.u32 2147483647, %v4896
        %v5025 = vand.u32 2147483647, %v4897
        %v5026 = vand.u32 2147483647, %v4898
        %v5027 = vand.u32 2147483647, %v4899
        %v5028 = vand.u32 2147483647, %v4900
        %v5029 = vand.u32 2147483647, %v4901
        %v5030 = vand.u32 2147483647, %v4902
        %v5031 = vand.u32 2147483647, %v4903
        %v5032 = vand.u32 2147483647, %v4904
        %v5033 = vand.u32 2147483647, %v4905
        %v5034 = vand.u32 2147483647, %v4906
        %v5035 = vand.u32 2147483647, %v4907
        %v5036 = vand.u32 2147483647, %v4908
        %v5037 = vand.u32 2147483647, %v4909
        %v5038 = vand.u32 2147483647, %v4910
        %v5039 = vand.u32 2147483647, %v4911
        %v5040 = vand.u32 2147483647, %v4912
        %v5041 = vand.u32 2147483647, %v4913
        %v5042 = vand.u32 2147483647, %v4914
        %v5043 = vand.u32 2147483647, %v4915
        %v5044 = vand.u32 2147483647, %v4916
        %v5045 = vand.u32 2147483647, %v4917
        %v5046 = vand.u32 2147483647, %v4918
        %v5047 = vand.u32 2147483647, %v4919
        %v5048 = vand.u32 2147483647, %v4920
        %v5049 = vand.u32 2147483647, %v4921
        %v5050 = vand.u32 2147483647, %v4922
        %v5051 = vand.u32 2147483647, %v4923
        %v5052 = vand.u32 2147483647, %v4924
        %v5053 = vand.u32 2147483647, %v4925
        %v5054 = vand.u32 2147483647, %v4926
        %v5055 = vand.u32 2147483647, %v4927
        %v5056 = vand.u32 2147483647, %v4928
        %v5057 = vand.u32 2147483647, %v4929
        %v5058 = vand.u32 2147483647, %v4930
        %v5059 = vand.u32 2147483647, %v4931
        %v5060 = vand.u32 2147483647, %v4932
        %v5061 = vand.u32 2147483647, %v4933
        %v5062 = vand.u32 2147483647, %v4934
        %v5063 = vand.u32 2147483647, %v4935
        %v5064 = vand.u32 2147483647, %v4936
        %v5065 = vand.u32 2147483647, %v4937
        %v5066 = vand.u32 2147483647, %v4938
        %v5067 = vand.u32 2147483647, %v4939
        %v5068 = vand.u32 2147483647, %v4940
        %v5069 = vand.u32 2147483647, %v4941
        %v5070 = vand.u32 2147483647, %v4942
        %v5071 = vand.u32 2147483647, %v4943
        %v5072 = vsub.f32 0.0, %v5008
        %v5073 = vsub.f32 0.0, %v5009
        %v5074 = vsub.f32 0.0, %v5010
        %v5075 = vsub.f32 0.0, %v5011
        %v5076 = vsub.f32 0.0, %v5012
        %v5077 = vsub.f32 0.0, %v5013
        %v5078 = vsub.f32 0.0, %v5014
        %v5079 = vsub.f32 0.0, %v5015
        %v5080 = vsub.f32 0.0, %v5016
        %v5081 = vsub.f32 0.0, %v5017
        %v5082 = vsub.f32 0.0, %v5018
        %v5083 = vsub.f32 0.0, %v5019
        %v5084 = vsub.f32 0.0, %v5020
        %v5085 = vsub.f32 0.0, %v5021
        %v5086 = vsub.f32 0.0, %v5022
        %v5087 = vsub.f32 0.0, %v5023
        %v5088 = vsub.f32 0.0, %v5024
        %v5089 = vsub.f32 0.0, %v5025
        %v5090 = vsub.f32 0.0, %v5026
        %v5091 = vsub.f32 0.0, %v5027
        %v5092 = vsub.f32 0.0, %v5028
        %v5093 = vsub.f32 0.0, %v5029
        %v5094 = vsub.f32 0.0, %v5030
        %v5095 = vsub.f32 0.0, %v5031
        %v5096 = vsub.f32 0.0, %v5032
        %v5097 = vsub.f32 0.0, %v5033
        %v5098 = vsub.f32 0.0, %v5034
        %v5099 = vsub.f32 0.0, %v5035
        %v5100 = vsub.f32 0.0, %v5036
        %v5101 = vsub.f32 0.0, %v5037
        %v5102 = vsub.f32 0.0, %v5038
        %v5103 = vsub.f32 0.0, %v5039
        %v5104 = vsub.f32 0.0, %v5040
        %v5105 = vsub.f32 0.0, %v5041
        %v5106 = vsub.f32 0.0, %v5042
        %v5107 = vsub.f32 0.0, %v5043
        %v5108 = vsub.f32 0.0, %v5044
        %v5109 = vsub.f32 0.0, %v5045
        %v5110 = vsub.f32 0.0, %v5046
        %v5111 = vsub.f32 0.0, %v5047
        %v5112 = vsub.f32 0.0, %v5048
        %v5113 = vsub.f32 0.0, %v5049
        %v5114 = vsub.f32 0.0, %v5050
        %v5115 = vsub.f32 0.0, %v5051
        %v5116 = vsub.f32 0.0, %v5052
        %v5117 = vsub.f32 0.0, %v5053
        %v5118 = vsub.f32 0.0, %v5054
        %v5119 = vsub.f32 0.0, %v5055
        %v5120 = vsub.f32 0.0, %v5056
        %v5121 = vsub.f32 0.0, %v5057
        %v5122 = vsub.f32 0.0, %v5058
        %v5123 = vsub.f32 0.0, %v5059
        %v5124 = vsub.f32 0.0, %v5060
        %v5125 = vsub.f32 0.0, %v5061
        %v5126 = vsub.f32 0.0, %v5062
        %v5127 = vsub.f32 0.0, %v5063
        %v5128 = vsub.f32 0.0, %v5064
        %v5129 = vsub.f32 0.0, %v5065
        %v5130 = vsub.f32 0.0, %v5066
        %v5131 = vsub.f32 0.0, %v5067
        %v5132 = vsub.f32 0.0, %v5068
        %v5133 = vsub.f32 0.0, %v5069
        %v5134 = vsub.f32 0.0, %v5070
        %v5135 = vsub.f32 0.0, %v5071
        %v5136 = vmul.f32 %v5072, 1.442695
        %v5137 = vpow.pop %v5136
        %v5138 = vmul.f32 %v5073, 1.442695
        %v5139 = vpow.pop %v5138
        %v5140 = vmul.f32 %v5074, 1.442695
        %v5141 = vpow.pop %v5140
        %v5142 = vmul.f32 %v5075, 1.442695
        %v5143 = vpow.pop %v5142
        %v5144 = vmul.f32 %v5076, 1.442695
        %v5145 = vpow.pop %v5144
        %v5146 = vmul.f32 %v5077, 1.442695
        %v5147 = vpow.pop %v5146
        %v5148 = vmul.f32 %v5078, 1.442695
        %v5149 = vpow.pop %v5148
        %v5150 = vmul.f32 %v5079, 1.442695
        %v5151 = vpow.pop %v5150
        %v5152 = vmul.f32 %v5080, 1.442695
        %v5153 = vpow.pop %v5152
        %v5154 = vmul.f32 %v5081, 1.442695
        %v5155 = vpow.pop %v5154
        %v5156 = vmul.f32 %v5082, 1.442695
        %v5157 = vpow.pop %v5156
        %v5158 = vmul.f32 %v5083, 1.442695
        %v5159 = vpow.pop %v5158
        %v5160 = vmul.f32 %v5084, 1.442695
        %v5161 = vpow.pop %v5160
        %v5162 = vmul.f32 %v5085, 1.442695
        %v5163 = vpow.pop %v5162
        %v5164 = vmul.f32 %v5086, 1.442695
        %v5165 = vpow.pop %v5164
        %v5166 = vmul.f32 %v5087, 1.442695
        %v5167 = vpow.pop %v5166
        %v5168 = vmul.f32 %v5088, 1.442695
        %v5169 = vpow.pop %v5168
        %v5170 = vmul.f32 %v5089, 1.442695
        %v5171 = vpow.pop %v5170
        %v5172 = vmul.f32 %v5090, 1.442695
        %v5173 = vpow.pop %v5172
        %v5174 = vmul.f32 %v5091, 1.442695
        %v5175 = vpow.pop %v5174
        %v5176 = vmul.f32 %v5092, 1.442695
        %v5177 = vpow.pop %v5176
        %v5178 = vmul.f32 %v5093, 1.442695
        %v5179 = vpow.pop %v5178
        %v5180 = vmul.f32 %v5094, 1.442695
        %v5181 = vpow.pop %v5180
        %v5182 = vmul.f32 %v5095, 1.442695
        %v5183 = vpow.pop %v5182
        %v5184 = vmul.f32 %v5096, 1.442695
        %v5185 = vpow.pop %v5184
        %v5186 = vmul.f32 %v5097, 1.442695
        %v5187 = vpow.pop %v5186
        %v5188 = vmul.f32 %v5098, 1.442695
        %v5189 = vpow.pop %v5188
        %v5190 = vmul.f32 %v5099, 1.442695
        %v5191 = vpow.pop %v5190
        %v5192 = vmul.f32 %v5100, 1.442695
        %v5193 = vpow.pop %v5192
        %v5194 = vmul.f32 %v5101, 1.442695
        %v5195 = vpow.pop %v5194
        %v5196 = vmul.f32 %v5102, 1.442695
        %v5197 = vpow.pop %v5196
        %v5198 = vmul.f32 %v5103, 1.442695
        %v5199 = vpow.pop %v5198
        %v5200 = vmul.f32 %v5104, 1.442695
        %v5201 = vpow.pop %v5200
        %v5202 = vmul.f32 %v5105, 1.442695
        %v5203 = vpow.pop %v5202
        %v5204 = vmul.f32 %v5106, 1.442695
        %v5205 = vpow.pop %v5204
        %v5206 = vmul.f32 %v5107, 1.442695
        %v5207 = vpow.pop %v5206
        %v5208 = vmul.f32 %v5108, 1.442695
        %v5209 = vpow.pop %v5208
        %v5210 = vmul.f32 %v5109, 1.442695
        %v5211 = vpow.pop %v5210
        %v5212 = vmul.f32 %v5110, 1.442695
        %v5213 = vpow.pop %v5212
        %v5214 = vmul.f32 %v5111, 1.442695
        %v5215 = vpow.pop %v5214
        %v5216 = vmul.f32 %v5112, 1.442695
        %v5217 = vpow.pop %v5216
        %v5218 = vmul.f32 %v5113, 1.442695
        %v5219 = vpow.pop %v5218
        %v5220 = vmul.f32 %v5114, 1.442695
        %v5221 = vpow.pop %v5220
        %v5222 = vmul.f32 %v5115, 1.442695
        %v5223 = vpow.pop %v5222
        %v5224 = vmul.f32 %v5116, 1.442695
        %v5225 = vpow.pop %v5224
        %v5226 = vmul.f32 %v5117, 1.442695
        %v5227 = vpow.pop %v5226
        %v5228 = vmul.f32 %v5118, 1.442695
        %v5229 = vpow.pop %v5228
        %v5230 = vmul.f32 %v5119, 1.442695
        %v5231 = vpow.pop %v5230
        %v5232 = vmul.f32 %v5120, 1.442695
        %v5233 = vpow.pop %v5232
        %v5234 = vmul.f32 %v5121, 1.442695
        %v5235 = vpow.pop %v5234
        %v5236 = vmul.f32 %v5122, 1.442695
        %v5237 = vpow.pop %v5236
        %v5238 = vmul.f32 %v5123, 1.442695
        %v5239 = vpow.pop %v5238
        %v5240 = vmul.f32 %v5124, 1.442695
        %v5241 = vpow.pop %v5240
        %v5242 = vmul.f32 %v5125, 1.442695
        %v5243 = vpow.pop %v5242
        %v5244 = vmul.f32 %v5126, 1.442695
        %v5245 = vpow.pop %v5244
        %v5246 = vmul.f32 %v5127, 1.442695
        %v5247 = vpow.pop %v5246
        %v5248 = vmul.f32 %v5128, 1.442695
        %v5249 = vpow.pop %v5248
        %v5250 = vmul.f32 %v5129, 1.442695
        %v5251 = vpow.pop %v5250
        %v5252 = vmul.f32 %v5130, 1.442695
        %v5253 = vpow.pop %v5252
        %v5254 = vmul.f32 %v5131, 1.442695
        %v5255 = vpow.pop %v5254
        %v5256 = vmul.f32 %v5132, 1.442695
        %v5257 = vpow.pop %v5256
        %v5258 = vmul.f32 %v5133, 1.442695
        %v5259 = vpow.pop %v5258
        %v5260 = vmul.f32 %v5134, 1.442695
        %v5261 = vpow.pop %v5260
        %v5262 = vmul.f32 %v5135, 1.442695
        %v5263 = vpow.pop %v5262
        %v5264 = vadd.f32 %v5137, 1.0
        %v5265 = vadd.f32 %v5139, 1.0
        %v5266 = vadd.f32 %v5141, 1.0
        %v5267 = vadd.f32 %v5143, 1.0
        %v5268 = vadd.f32 %v5145, 1.0
        %v5269 = vadd.f32 %v5147, 1.0
        %v5270 = vadd.f32 %v5149, 1.0
        %v5271 = vadd.f32 %v5151, 1.0
        %v5272 = vadd.f32 %v5153, 1.0
        %v5273 = vadd.f32 %v5155, 1.0
        %v5274 = vadd.f32 %v5157, 1.0
        %v5275 = vadd.f32 %v5159, 1.0
        %v5276 = vadd.f32 %v5161, 1.0
        %v5277 = vadd.f32 %v5163, 1.0
        %v5278 = vadd.f32 %v5165, 1.0
        %v5279 = vadd.f32 %v5167, 1.0
        %v5280 = vadd.f32 %v5169, 1.0
        %v5281 = vadd.f32 %v5171, 1.0
        %v5282 = vadd.f32 %v5173, 1.0
        %v5283 = vadd.f32 %v5175, 1.0
        %v5284 = vadd.f32 %v5177, 1.0
        %v5285 = vadd.f32 %v5179, 1.0
        %v5286 = vadd.f32 %v5181, 1.0
        %v5287 = vadd.f32 %v5183, 1.0
        %v5288 = vadd.f32 %v5185, 1.0
        %v5289 = vadd.f32 %v5187, 1.0
        %v5290 = vadd.f32 %v5189, 1.0
        %v5291 = vadd.f32 %v5191, 1.0
        %v5292 = vadd.f32 %v5193, 1.0
        %v5293 = vadd.f32 %v5195, 1.0
        %v5294 = vadd.f32 %v5197, 1.0
        %v5295 = vadd.f32 %v5199, 1.0
        %v5296 = vadd.f32 %v5201, 1.0
        %v5297 = vadd.f32 %v5203, 1.0
        %v5298 = vadd.f32 %v5205, 1.0
        %v5299 = vadd.f32 %v5207, 1.0
        %v5300 = vadd.f32 %v5209, 1.0
        %v5301 = vadd.f32 %v5211, 1.0
        %v5302 = vadd.f32 %v5213, 1.0
        %v5303 = vadd.f32 %v5215, 1.0
        %v5304 = vadd.f32 %v5217, 1.0
        %v5305 = vadd.f32 %v5219, 1.0
        %v5306 = vadd.f32 %v5221, 1.0
        %v5307 = vadd.f32 %v5223, 1.0
        %v5308 = vadd.f32 %v5225, 1.0
        %v5309 = vadd.f32 %v5227, 1.0
        %v5310 = vadd.f32 %v5229, 1.0
        %v5311 = vadd.f32 %v5231, 1.0
        %v5312 = vadd.f32 %v5233, 1.0
        %v5313 = vadd.f32 %v5235, 1.0
        %v5314 = vadd.f32 %v5237, 1.0
        %v5315 = vadd.f32 %v5239, 1.0
        %v5316 = vadd.f32 %v5241, 1.0
        %v5317 = vadd.f32 %v5243, 1.0
        %v5318 = vadd.f32 %v5245, 1.0
        %v5319 = vadd.f32 %v5247, 1.0
        %v5320 = vadd.f32 %v5249, 1.0
        %v5321 = vadd.f32 %v5251, 1.0
        %v5322 = vadd.f32 %v5253, 1.0
        %v5323 = vadd.f32 %v5255, 1.0
        %v5324 = vadd.f32 %v5257, 1.0
        %v5325 = vadd.f32 %v5259, 1.0
        %v5326 = vadd.f32 %v5261, 1.0
        %v5327 = vadd.f32 %v5263, 1.0
        %v5328 = vlog2.pop %v5264
        %v5329 = vmul.f32 %v5328, 0.6931472
        %v5330 = vlog2.pop %v5265
        %v5331 = vmul.f32 %v5330, 0.6931472
        %v5332 = vlog2.pop %v5266
        %v5333 = vmul.f32 %v5332, 0.6931472
        %v5334 = vlog2.pop %v5267
        %v5335 = vmul.f32 %v5334, 0.6931472
        %v5336 = vlog2.pop %v5268
        %v5337 = vmul.f32 %v5336, 0.6931472
        %v5338 = vlog2.pop %v5269
        %v5339 = vmul.f32 %v5338, 0.6931472
        %v5340 = vlog2.pop %v5270
        %v5341 = vmul.f32 %v5340, 0.6931472
        %v5342 = vlog2.pop %v5271
        %v5343 = vmul.f32 %v5342, 0.6931472
        %v5344 = vlog2.pop %v5272
        %v5345 = vmul.f32 %v5344, 0.6931472
        %v5346 = vlog2.pop %v5273
        %v5347 = vmul.f32 %v5346, 0.6931472
        %v5348 = vlog2.pop %v5274
        %v5349 = vmul.f32 %v5348, 0.6931472
        %v5350 = vlog2.pop %v5275
        %v5351 = vmul.f32 %v5350, 0.6931472
        %v5352 = vlog2.pop %v5276
        %v5353 = vmul.f32 %v5352, 0.6931472
        %v5354 = vlog2.pop %v5277
        %v5355 = vmul.f32 %v5354, 0.6931472
        %v5356 = vlog2.pop %v5278
        %v5357 = vmul.f32 %v5356, 0.6931472
        %v5358 = vlog2.pop %v5279
        %v5359 = vmul.f32 %v5358, 0.6931472
        %v5360 = vlog2.pop %v5280
        %v5361 = vmul.f32 %v5360, 0.6931472
        %v5362 = vlog2.pop %v5281
        %v5363 = vmul.f32 %v5362, 0.6931472
        %v5364 = vlog2.pop %v5282
        %v5365 = vmul.f32 %v5364, 0.6931472
        %v5366 = vlog2.pop %v5283
        %v5367 = vmul.f32 %v5366, 0.6931472
        %v5368 = vlog2.pop %v5284
        %v5369 = vmul.f32 %v5368, 0.6931472
        %v5370 = vlog2.pop %v5285
        %v5371 = vmul.f32 %v5370, 0.6931472
        %v5372 = vlog2.pop %v5286
        %v5373 = vmul.f32 %v5372, 0.6931472
        %v5374 = vlog2.pop %v5287
        %v5375 = vmul.f32 %v5374, 0.6931472
        %v5376 = vlog2.pop %v5288
        %v5377 = vmul.f32 %v5376, 0.6931472
        %v5378 = vlog2.pop %v5289
        %v5379 = vmul.f32 %v5378, 0.6931472
        %v5380 = vlog2.pop %v5290
        %v5381 = vmul.f32 %v5380, 0.6931472
        %v5382 = vlog2.pop %v5291
        %v5383 = vmul.f32 %v5382, 0.6931472
        %v5384 = vlog2.pop %v5292
        %v5385 = vmul.f32 %v5384, 0.6931472
        %v5386 = vlog2.pop %v5293
        %v5387 = vmul.f32 %v5386, 0.6931472
        %v5388 = vlog2.pop %v5294
        %v5389 = vmul.f32 %v5388, 0.6931472
        %v5390 = vlog2.pop %v5295
        %v5391 = vmul.f32 %v5390, 0.6931472
        %v5392 = vlog2.pop %v5296
        %v5393 = vmul.f32 %v5392, 0.6931472
        %v5394 = vlog2.pop %v5297
        %v5395 = vmul.f32 %v5394, 0.6931472
        %v5396 = vlog2.pop %v5298
        %v5397 = vmul.f32 %v5396, 0.6931472
        %v5398 = vlog2.pop %v5299
        %v5399 = vmul.f32 %v5398, 0.6931472
        %v5400 = vlog2.pop %v5300
        %v5401 = vmul.f32 %v5400, 0.6931472
        %v5402 = vlog2.pop %v5301
        %v5403 = vmul.f32 %v5402, 0.6931472
        %v5404 = vlog2.pop %v5302
        %v5405 = vmul.f32 %v5404, 0.6931472
        %v5406 = vlog2.pop %v5303
        %v5407 = vmul.f32 %v5406, 0.6931472
        %v5408 = vlog2.pop %v5304
        %v5409 = vmul.f32 %v5408, 0.6931472
        %v5410 = vlog2.pop %v5305
        %v5411 = vmul.f32 %v5410, 0.6931472
        %v5412 = vlog2.pop %v5306
        %v5413 = vmul.f32 %v5412, 0.6931472
        %v5414 = vlog2.pop %v5307
        %v5415 = vmul.f32 %v5414, 0.6931472
        %v5416 = vlog2.pop %v5308
        %v5417 = vmul.f32 %v5416, 0.6931472
        %v5418 = vlog2.pop %v5309
        %v5419 = vmul.f32 %v5418, 0.6931472
        %v5420 = vlog2.pop %v5310
        %v5421 = vmul.f32 %v5420, 0.6931472
        %v5422 = vlog2.pop %v5311
        %v5423 = vmul.f32 %v5422, 0.6931472
        %v5424 = vlog2.pop %v5312
        %v5425 = vmul.f32 %v5424, 0.6931472
        %v5426 = vlog2.pop %v5313
        %v5427 = vmul.f32 %v5426, 0.6931472
        %v5428 = vlog2.pop %v5314
        %v5429 = vmul.f32 %v5428, 0.6931472
        %v5430 = vlog2.pop %v5315
        %v5431 = vmul.f32 %v5430, 0.6931472
        %v5432 = vlog2.pop %v5316
        %v5433 = vmul.f32 %v5432, 0.6931472
        %v5434 = vlog2.pop %v5317
        %v5435 = vmul.f32 %v5434, 0.6931472
        %v5436 = vlog2.pop %v5318
        %v5437 = vmul.f32 %v5436, 0.6931472
        %v5438 = vlog2.pop %v5319
        %v5439 = vmul.f32 %v5438, 0.6931472
        %v5440 = vlog2.pop %v5320
        %v5441 = vmul.f32 %v5440, 0.6931472
        %v5442 = vlog2.pop %v5321
        %v5443 = vmul.f32 %v5442, 0.6931472
        %v5444 = vlog2.pop %v5322
        %v5445 = vmul.f32 %v5444, 0.6931472
        %v5446 = vlog2.pop %v5323
        %v5447 = vmul.f32 %v5446, 0.6931472
        %v5448 = vlog2.pop %v5324
        %v5449 = vmul.f32 %v5448, 0.6931472
        %v5450 = vlog2.pop %v5325
        %v5451 = vmul.f32 %v5450, 0.6931472
        %v5452 = vlog2.pop %v5326
        %v5453 = vmul.f32 %v5452, 0.6931472
        %v5454 = vlog2.pop %v5327
        %v5455 = vmul.f32 %v5454, 0.6931472
        %v5456 = vsub.f32 %v4944, %v5329
        %v5457 = vsub.f32 %v4945, %v5331
        %v5458 = vsub.f32 %v4946, %v5333
        %v5459 = vsub.f32 %v4947, %v5335
        %v5460 = vsub.f32 %v4948, %v5337
        %v5461 = vsub.f32 %v4949, %v5339
        %v5462 = vsub.f32 %v4950, %v5341
        %v5463 = vsub.f32 %v4951, %v5343
        %v5464 = vsub.f32 %v4952, %v5345
        %v5465 = vsub.f32 %v4953, %v5347
        %v5466 = vsub.f32 %v4954, %v5349
        %v5467 = vsub.f32 %v4955, %v5351
        %v5468 = vsub.f32 %v4956, %v5353
        %v5469 = vsub.f32 %v4957, %v5355
        %v5470 = vsub.f32 %v4958, %v5357
        %v5471 = vsub.f32 %v4959, %v5359
        %v5472 = vsub.f32 %v4960, %v5361
        %v5473 = vsub.f32 %v4961, %v5363
        %v5474 = vsub.f32 %v4962, %v5365
        %v5475 = vsub.f32 %v4963, %v5367
        %v5476 = vsub.f32 %v4964, %v5369
        %v5477 = vsub.f32 %v4965, %v5371
        %v5478 = vsub.f32 %v4966, %v5373
        %v5479 = vsub.f32 %v4967, %v5375
        %v5480 = vsub.f32 %v4968, %v5377
        %v5481 = vsub.f32 %v4969, %v5379
        %v5482 = vsub.f32 %v4970, %v5381
        %v5483 = vsub.f32 %v4971, %v5383
        %v5484 = vsub.f32 %v4972, %v5385
        %v5485 = vsub.f32 %v4973, %v5387
        %v5486 = vsub.f32 %v4974, %v5389
        %v5487 = vsub.f32 %v4975, %v5391
        %v5488 = vsub.f32 %v4976, %v5393
        %v5489 = vsub.f32 %v4977, %v5395
        %v5490 = vsub.f32 %v4978, %v5397
        %v5491 = vsub.f32 %v4979, %v5399
        %v5492 = vsub.f32 %v4980, %v5401
        %v5493 = vsub.f32 %v4981, %v5403
        %v5494 = vsub.f32 %v4982, %v5405
        %v5495 = vsub.f32 %v4983, %v5407
        %v5496 = vsub.f32 %v4984, %v5409
        %v5497 = vsub.f32 %v4985, %v5411
        %v5498 = vsub.f32 %v4986, %v5413
        %v5499 = vsub.f32 %v4987, %v5415
        %v5500 = vsub.f32 %v4988, %v5417
        %v5501 = vsub.f32 %v4989, %v5419
        %v5502 = vsub.f32 %v4990, %v5421
        %v5503 = vsub.f32 %v4991, %v5423
        %v5504 = vsub.f32 %v4992, %v5425
        %v5505 = vsub.f32 %v4993, %v5427
        %v5506 = vsub.f32 %v4994, %v5429
        %v5507 = vsub.f32 %v4995, %v5431
        %v5508 = vsub.f32 %v4996, %v5433
        %v5509 = vsub.f32 %v4997, %v5435
        %v5510 = vsub.f32 %v4998, %v5437
        %v5511 = vsub.f32 %v4999, %v5439
        %v5512 = vsub.f32 %v5000, %v5441
        %v5513 = vsub.f32 %v5001, %v5443
        %v5514 = vsub.f32 %v5002, %v5445
        %v5515 = vsub.f32 %v5003, %v5447
        %v5516 = vsub.f32 %v5004, %v5449
        %v5517 = vsub.f32 %v5005, %v5451
        %v5518 = vsub.f32 %v5006, %v5453
        %v5519 = vsub.f32 %v5007, %v5455
        %v5520 = vmul.f32 %v4176, %v4497
        %v5521 = vmul.f32 %v4177, %v4499
        %v5522 = vmul.f32 %v4178, %v4501
        %v5523 = vmul.f32 %v4179, %v4503
        %v5524 = vmul.f32 %v4180, %v4505
        %v5525 = vmul.f32 %v4181, %v4507
        %v5526 = vmul.f32 %v4182, %v4509
        %v5527 = vmul.f32 %v4183, %v4511
        %v5528 = vmul.f32 %v4184, %v4513
        %v5529 = vmul.f32 %v4185, %v4515
        %v5530 = vmul.f32 %v4186, %v4517
        %v5531 = vmul.f32 %v4187, %v4519
        %v5532 = vmul.f32 %v4188, %v4521
        %v5533 = vmul.f32 %v4189, %v4523
        %v5534 = vmul.f32 %v4190, %v4525
        %v5535 = vmul.f32 %v4191, %v4527
        %v5536 = vmul.f32 %v4192, %v4529
        %v5537 = vmul.f32 %v4193, %v4531
        %v5538 = vmul.f32 %v4194, %v4533
        %v5539 = vmul.f32 %v4195, %v4535
        %v5540 = vmul.f32 %v4196, %v4537
        %v5541 = vmul.f32 %v4197, %v4539
        %v5542 = vmul.f32 %v4198, %v4541
        %v5543 = vmul.f32 %v4199, %v4543
        %v5544 = vmul.f32 %v4200, %v4545
        %v5545 = vmul.f32 %v4201, %v4547
        %v5546 = vmul.f32 %v4202, %v4549
        %v5547 = vmul.f32 %v4203, %v4551
        %v5548 = vmul.f32 %v4204, %v4553
        %v5549 = vmul.f32 %v4205, %v4555
        %v5550 = vmul.f32 %v4206, %v4557
        %v5551 = vmul.f32 %v4207, %v4559
        %v5552 = vmul.f32 %v4208, %v4561
        %v5553 = vmul.f32 %v4209, %v4563
        %v5554 = vmul.f32 %v4210, %v4565
        %v5555 = vmul.f32 %v4211, %v4567
        %v5556 = vmul.f32 %v4212, %v4569
        %v5557 = vmul.f32 %v4213, %v4571
        %v5558 = vmul.f32 %v4214, %v4573
        %v5559 = vmul.f32 %v4215, %v4575
        %v5560 = vmul.f32 %v4216, %v4577
        %v5561 = vmul.f32 %v4217, %v4579
        %v5562 = vmul.f32 %v4218, %v4581
        %v5563 = vmul.f32 %v4219, %v4583
        %v5564 = vmul.f32 %v4220, %v4585
        %v5565 = vmul.f32 %v4221, %v4587
        %v5566 = vmul.f32 %v4222, %v4589
        %v5567 = vmul.f32 %v4223, %v4591
        %v5568 = vmul.f32 %v4224, %v4593
        %v5569 = vmul.f32 %v4225, %v4595
        %v5570 = vmul.f32 %v4226, %v4597
        %v5571 = vmul.f32 %v4227, %v4599
        %v5572 = vmul.f32 %v4228, %v4601
        %v5573 = vmul.f32 %v4229, %v4603
        %v5574 = vmul.f32 %v4230, %v4605
        %v5575 = vmul.f32 %v4231, %v4607
        %v5576 = vmul.f32 %v4232, %v4609
        %v5577 = vmul.f32 %v4233, %v4611
        %v5578 = vmul.f32 %v4234, %v4613
        %v5579 = vmul.f32 %v4235, %v4615
        %v5580 = vmul.f32 %v4236, %v4617
        %v5581 = vmul.f32 %v4237, %v4619
        %v5582 = vmul.f32 %v4238, %v4621
        %v5583 = vmul.f32 %v4239, %v4623
        %v5584 = vmin.f32 %v5520, 0.0
        %v5585 = vmin.f32 %v5521, 0.0
        %v5586 = vmin.f32 %v5522, 0.0
        %v5587 = vmin.f32 %v5523, 0.0
        %v5588 = vmin.f32 %v5524, 0.0
        %v5589 = vmin.f32 %v5525, 0.0
        %v5590 = vmin.f32 %v5526, 0.0
        %v5591 = vmin.f32 %v5527, 0.0
        %v5592 = vmin.f32 %v5528, 0.0
        %v5593 = vmin.f32 %v5529, 0.0
        %v5594 = vmin.f32 %v5530, 0.0
        %v5595 = vmin.f32 %v5531, 0.0
        %v5596 = vmin.f32 %v5532, 0.0
        %v5597 = vmin.f32 %v5533, 0.0
        %v5598 = vmin.f32 %v5534, 0.0
        %v5599 = vmin.f32 %v5535, 0.0
        %v5600 = vmin.f32 %v5536, 0.0
        %v5601 = vmin.f32 %v5537, 0.0
        %v5602 = vmin.f32 %v5538, 0.0
        %v5603 = vmin.f32 %v5539, 0.0
        %v5604 = vmin.f32 %v5540, 0.0
        %v5605 = vmin.f32 %v5541, 0.0
        %v5606 = vmin.f32 %v5542, 0.0
        %v5607 = vmin.f32 %v5543, 0.0
        %v5608 = vmin.f32 %v5544, 0.0
        %v5609 = vmin.f32 %v5545, 0.0
        %v5610 = vmin.f32 %v5546, 0.0
        %v5611 = vmin.f32 %v5547, 0.0
        %v5612 = vmin.f32 %v5548, 0.0
        %v5613 = vmin.f32 %v5549, 0.0
        %v5614 = vmin.f32 %v5550, 0.0
        %v5615 = vmin.f32 %v5551, 0.0
        %v5616 = vmin.f32 %v5552, 0.0
        %v5617 = vmin.f32 %v5553, 0.0
        %v5618 = vmin.f32 %v5554, 0.0
        %v5619 = vmin.f32 %v5555, 0.0
        %v5620 = vmin.f32 %v5556, 0.0
        %v5621 = vmin.f32 %v5557, 0.0
        %v5622 = vmin.f32 %v5558, 0.0
        %v5623 = vmin.f32 %v5559, 0.0
        %v5624 = vmin.f32 %v5560, 0.0
        %v5625 = vmin.f32 %v5561, 0.0
        %v5626 = vmin.f32 %v5562, 0.0
        %v5627 = vmin.f32 %v5563, 0.0
        %v5628 = vmin.f32 %v5564, 0.0
        %v5629 = vmin.f32 %v5565, 0.0
        %v5630 = vmin.f32 %v5566, 0.0
        %v5631 = vmin.f32 %v5567, 0.0
        %v5632 = vmin.f32 %v5568, 0.0
        %v5633 = vmin.f32 %v5569, 0.0
        %v5634 = vmin.f32 %v5570, 0.0
        %v5635 = vmin.f32 %v5571, 0.0
        %v5636 = vmin.f32 %v5572, 0.0
        %v5637 = vmin.f32 %v5573, 0.0
        %v5638 = vmin.f32 %v5574, 0.0
        %v5639 = vmin.f32 %v5575, 0.0
        %v5640 = vmin.f32 %v5576, 0.0
        %v5641 = vmin.f32 %v5577, 0.0
        %v5642 = vmin.f32 %v5578, 0.0
        %v5643 = vmin.f32 %v5579, 0.0
        %v5644 = vmin.f32 %v5580, 0.0
        %v5645 = vmin.f32 %v5581, 0.0
        %v5646 = vmin.f32 %v5582, 0.0
        %v5647 = vmin.f32 %v5583, 0.0
        %v5648 = vand.u32 2147483647, %v5520
        %v5649 = vand.u32 2147483647, %v5521
        %v5650 = vand.u32 2147483647, %v5522
        %v5651 = vand.u32 2147483647, %v5523
        %v5652 = vand.u32 2147483647, %v5524
        %v5653 = vand.u32 2147483647, %v5525
        %v5654 = vand.u32 2147483647, %v5526
        %v5655 = vand.u32 2147483647, %v5527
        %v5656 = vand.u32 2147483647, %v5528
        %v5657 = vand.u32 2147483647, %v5529
        %v5658 = vand.u32 2147483647, %v5530
        %v5659 = vand.u32 2147483647, %v5531
        %v5660 = vand.u32 2147483647, %v5532
        %v5661 = vand.u32 2147483647, %v5533
        %v5662 = vand.u32 2147483647, %v5534
        %v5663 = vand.u32 2147483647, %v5535
        %v5664 = vand.u32 2147483647, %v5536
        %v5665 = vand.u32 2147483647, %v5537
        %v5666 = vand.u32 2147483647, %v5538
        %v5667 = vand.u32 2147483647, %v5539
        %v5668 = vand.u32 2147483647, %v5540
        %v5669 = vand.u32 2147483647, %v5541
        %v5670 = vand.u32 2147483647, %v5542
        %v5671 = vand.u32 2147483647, %v5543
        %v5672 = vand.u32 2147483647, %v5544
        %v5673 = vand.u32 2147483647, %v5545
        %v5674 = vand.u32 2147483647, %v5546
        %v5675 = vand.u32 2147483647, %v5547
        %v5676 = vand.u32 2147483647, %v5548
        %v5677 = vand.u32 2147483647, %v5549
        %v5678 = vand.u32 2147483647, %v5550
        %v5679 = vand.u32 2147483647, %v5551
        %v5680 = vand.u32 2147483647, %v5552
        %v5681 = vand.u32 2147483647, %v5553
        %v5682 = vand.u32 2147483647, %v5554
        %v5683 = vand.u32 2147483647, %v5555
        %v5684 = vand.u32 2147483647, %v5556
        %v5685 = vand.u32 2147483647, %v5557
        %v5686 = vand.u32 2147483647, %v5558
        %v5687 = vand.u32 2147483647, %v5559
        %v5688 = vand.u32 2147483647, %v5560
        %v5689 = vand.u32 2147483647, %v5561
        %v5690 = vand.u32 2147483647, %v5562
        %v5691 = vand.u32 2147483647, %v5563
        %v5692 = vand.u32 2147483647, %v5564
        %v5693 = vand.u32 2147483647, %v5565
        %v5694 = vand.u32 2147483647, %v5566
        %v5695 = vand.u32 2147483647, %v5567
        %v5696 = vand.u32 2147483647, %v5568
        %v5697 = vand.u32 2147483647, %v5569
        %v5698 = vand.u32 2147483647, %v5570
        %v5699 = vand.u32 2147483647, %v5571
        %v5700 = vand.u32 2147483647, %v5572
        %v5701 = vand.u32 2147483647, %v5573
        %v5702 = vand.u32 2147483647, %v5574
        %v5703 = vand.u32 2147483647, %v5575
        %v5704 = vand.u32 2147483647, %v5576
        %v5705 = vand.u32 2147483647, %v5577
        %v5706 = vand.u32 2147483647, %v5578
        %v5707 = vand.u32 2147483647, %v5579
        %v5708 = vand.u32 2147483647, %v5580
        %v5709 = vand.u32 2147483647, %v5581
        %v5710 = vand.u32 2147483647, %v5582
        %v5711 = vand.u32 2147483647, %v5583
        %v5712 = vsub.f32 0.0, %v5648
        %v5713 = vsub.f32 0.0, %v5649
        %v5714 = vsub.f32 0.0, %v5650
        %v5715 = vsub.f32 0.0, %v5651
        %v5716 = vsub.f32 0.0, %v5652
        %v5717 = vsub.f32 0.0, %v5653
        %v5718 = vsub.f32 0.0, %v5654
        %v5719 = vsub.f32 0.0, %v5655
        %v5720 = vsub.f32 0.0, %v5656
        %v5721 = vsub.f32 0.0, %v5657
        %v5722 = vsub.f32 0.0, %v5658
        %v5723 = vsub.f32 0.0, %v5659
        %v5724 = vsub.f32 0.0, %v5660
        %v5725 = vsub.f32 0.0, %v5661
        %v5726 = vsub.f32 0.0, %v5662
        %v5727 = vsub.f32 0.0, %v5663
        %v5728 = vsub.f32 0.0, %v5664
        %v5729 = vsub.f32 0.0, %v5665
        %v5730 = vsub.f32 0.0, %v5666
        %v5731 = vsub.f32 0.0, %v5667
        %v5732 = vsub.f32 0.0, %v5668
        %v5733 = vsub.f32 0.0, %v5669
        %v5734 = vsub.f32 0.0, %v5670
        %v5735 = vsub.f32 0.0, %v5671
        %v5736 = vsub.f32 0.0, %v5672
        %v5737 = vsub.f32 0.0, %v5673
        %v5738 = vsub.f32 0.0, %v5674
        %v5739 = vsub.f32 0.0, %v5675
        %v5740 = vsub.f32 0.0, %v5676
        %v5741 = vsub.f32 0.0, %v5677
        %v5742 = vsub.f32 0.0, %v5678
        %v5743 = vsub.f32 0.0, %v5679
        %v5744 = vsub.f32 0.0, %v5680
        %v5745 = vsub.f32 0.0, %v5681
        %v5746 = vsub.f32 0.0, %v5682
        %v5747 = vsub.f32 0.0, %v5683
        %v5748 = vsub.f32 0.0, %v5684
        %v5749 = vsub.f32 0.0, %v5685
        %v5750 = vsub.f32 0.0, %v5686
        %v5751 = vsub.f32 0.0, %v5687
        %v5752 = vsub.f32 0.0, %v5688
        %v5753 = vsub.f32 0.0, %v5689
        %v5754 = vsub.f32 0.0, %v5690
        %v5755 = vsub.f32 0.0, %v5691
        %v5756 = vsub.f32 0.0, %v5692
        %v5757 = vsub.f32 0.0, %v5693
        %v5758 = vsub.f32 0.0, %v5694
        %v5759 = vsub.f32 0.0, %v5695
        %v5760 = vsub.f32 0.0, %v5696
        %v5761 = vsub.f32 0.0, %v5697
        %v5762 = vsub.f32 0.0, %v5698
        %v5763 = vsub.f32 0.0, %v5699
        %v5764 = vsub.f32 0.0, %v5700
        %v5765 = vsub.f32 0.0, %v5701
        %v5766 = vsub.f32 0.0, %v5702
        %v5767 = vsub.f32 0.0, %v5703
        %v5768 = vsub.f32 0.0, %v5704
        %v5769 = vsub.f32 0.0, %v5705
        %v5770 = vsub.f32 0.0, %v5706
        %v5771 = vsub.f32 0.0, %v5707
        %v5772 = vsub.f32 0.0, %v5708
        %v5773 = vsub.f32 0.0, %v5709
        %v5774 = vsub.f32 0.0, %v5710
        %v5775 = vsub.f32 0.0, %v5711
        %v5776 = vmul.f32 %v5712, 1.442695
        %v5777 = vpow.pop %v5776
        %v5778 = vmul.f32 %v5713, 1.442695
        %v5779 = vpow.pop %v5778
        %v5780 = vmul.f32 %v5714, 1.442695
        %v5781 = vpow.pop %v5780
        %v5782 = vmul.f32 %v5715, 1.442695
        %v5783 = vpow.pop %v5782
        %v5784 = vmul.f32 %v5716, 1.442695
        %v5785 = vpow.pop %v5784
        %v5786 = vmul.f32 %v5717, 1.442695
        %v5787 = vpow.pop %v5786
        %v5788 = vmul.f32 %v5718, 1.442695
        %v5789 = vpow.pop %v5788
        %v5790 = vmul.f32 %v5719, 1.442695
        %v5791 = vpow.pop %v5790
        %v5792 = vmul.f32 %v5720, 1.442695
        %v5793 = vpow.pop %v5792
        %v5794 = vmul.f32 %v5721, 1.442695
        %v5795 = vpow.pop %v5794
        %v5796 = vmul.f32 %v5722, 1.442695
        %v5797 = vpow.pop %v5796
        %v5798 = vmul.f32 %v5723, 1.442695
        %v5799 = vpow.pop %v5798
        %v5800 = vmul.f32 %v5724, 1.442695
        %v5801 = vpow.pop %v5800
        %v5802 = vmul.f32 %v5725, 1.442695
        %v5803 = vpow.pop %v5802
        %v5804 = vmul.f32 %v5726, 1.442695
        %v5805 = vpow.pop %v5804
        %v5806 = vmul.f32 %v5727, 1.442695
        %v5807 = vpow.pop %v5806
        %v5808 = vmul.f32 %v5728, 1.442695
        %v5809 = vpow.pop %v5808
        %v5810 = vmul.f32 %v5729, 1.442695
        %v5811 = vpow.pop %v5810
        %v5812 = vmul.f32 %v5730, 1.442695
        %v5813 = vpow.pop %v5812
        %v5814 = vmul.f32 %v5731, 1.442695
        %v5815 = vpow.pop %v5814
        %v5816 = vmul.f32 %v5732, 1.442695
        %v5817 = vpow.pop %v5816
        %v5818 = vmul.f32 %v5733, 1.442695
        %v5819 = vpow.pop %v5818
        %v5820 = vmul.f32 %v5734, 1.442695
        %v5821 = vpow.pop %v5820
        %v5822 = vmul.f32 %v5735, 1.442695
        %v5823 = vpow.pop %v5822
        %v5824 = vmul.f32 %v5736, 1.442695
        %v5825 = vpow.pop %v5824
        %v5826 = vmul.f32 %v5737, 1.442695
        %v5827 = vpow.pop %v5826
        %v5828 = vmul.f32 %v5738, 1.442695
        %v5829 = vpow.pop %v5828
        %v5830 = vmul.f32 %v5739, 1.442695
        %v5831 = vpow.pop %v5830
        %v5832 = vmul.f32 %v5740, 1.442695
        %v5833 = vpow.pop %v5832
        %v5834 = vmul.f32 %v5741, 1.442695
        %v5835 = vpow.pop %v5834
        %v5836 = vmul.f32 %v5742, 1.442695
        %v5837 = vpow.pop %v5836
        %v5838 = vmul.f32 %v5743, 1.442695
        %v5839 = vpow.pop %v5838
        %v5840 = vmul.f32 %v5744, 1.442695
        %v5841 = vpow.pop %v5840
        %v5842 = vmul.f32 %v5745, 1.442695
        %v5843 = vpow.pop %v5842
        %v5844 = vmul.f32 %v5746, 1.442695
        %v5845 = vpow.pop %v5844
        %v5846 = vmul.f32 %v5747, 1.442695
        %v5847 = vpow.pop %v5846
        %v5848 = vmul.f32 %v5748, 1.442695
        %v5849 = vpow.pop %v5848
        %v5850 = vmul.f32 %v5749, 1.442695
        %v5851 = vpow.pop %v5850
        %v5852 = vmul.f32 %v5750, 1.442695
        %v5853 = vpow.pop %v5852
        %v5854 = vmul.f32 %v5751, 1.442695
        %v5855 = vpow.pop %v5854
        %v5856 = vmul.f32 %v5752, 1.442695
        %v5857 = vpow.pop %v5856
        %v5858 = vmul.f32 %v5753, 1.442695
        %v5859 = vpow.pop %v5858
        %v5860 = vmul.f32 %v5754, 1.442695
        %v5861 = vpow.pop %v5860
        %v5862 = vmul.f32 %v5755, 1.442695
        %v5863 = vpow.pop %v5862
        %v5864 = vmul.f32 %v5756, 1.442695
        %v5865 = vpow.pop %v5864
        %v5866 = vmul.f32 %v5757, 1.442695
        %v5867 = vpow.pop %v5866
        %v5868 = vmul.f32 %v5758, 1.442695
        %v5869 = vpow.pop %v5868
        %v5870 = vmul.f32 %v5759, 1.442695
        %v5871 = vpow.pop %v5870
        %v5872 = vmul.f32 %v5760, 1.442695
        %v5873 = vpow.pop %v5872
        %v5874 = vmul.f32 %v5761, 1.442695
        %v5875 = vpow.pop %v5874
        %v5876 = vmul.f32 %v5762, 1.442695
        %v5877 = vpow.pop %v5876
        %v5878 = vmul.f32 %v5763, 1.442695
        %v5879 = vpow.pop %v5878
        %v5880 = vmul.f32 %v5764, 1.442695
        %v5881 = vpow.pop %v5880
        %v5882 = vmul.f32 %v5765, 1.442695
        %v5883 = vpow.pop %v5882
        %v5884 = vmul.f32 %v5766, 1.442695
        %v5885 = vpow.pop %v5884
        %v5886 = vmul.f32 %v5767, 1.442695
        %v5887 = vpow.pop %v5886
        %v5888 = vmul.f32 %v5768, 1.442695
        %v5889 = vpow.pop %v5888
        %v5890 = vmul.f32 %v5769, 1.442695
        %v5891 = vpow.pop %v5890
        %v5892 = vmul.f32 %v5770, 1.442695
        %v5893 = vpow.pop %v5892
        %v5894 = vmul.f32 %v5771, 1.442695
        %v5895 = vpow.pop %v5894
        %v5896 = vmul.f32 %v5772, 1.442695
        %v5897 = vpow.pop %v5896
        %v5898 = vmul.f32 %v5773, 1.442695
        %v5899 = vpow.pop %v5898
        %v5900 = vmul.f32 %v5774, 1.442695
        %v5901 = vpow.pop %v5900
        %v5902 = vmul.f32 %v5775, 1.442695
        %v5903 = vpow.pop %v5902
        %v5904 = vadd.f32 %v5777, 1.0
        %v5905 = vadd.f32 %v5779, 1.0
        %v5906 = vadd.f32 %v5781, 1.0
        %v5907 = vadd.f32 %v5783, 1.0
        %v5908 = vadd.f32 %v5785, 1.0
        %v5909 = vadd.f32 %v5787, 1.0
        %v5910 = vadd.f32 %v5789, 1.0
        %v5911 = vadd.f32 %v5791, 1.0
        %v5912 = vadd.f32 %v5793, 1.0
        %v5913 = vadd.f32 %v5795, 1.0
        %v5914 = vadd.f32 %v5797, 1.0
        %v5915 = vadd.f32 %v5799, 1.0
        %v5916 = vadd.f32 %v5801, 1.0
        %v5917 = vadd.f32 %v5803, 1.0
        %v5918 = vadd.f32 %v5805, 1.0
        %v5919 = vadd.f32 %v5807, 1.0
        %v5920 = vadd.f32 %v5809, 1.0
        %v5921 = vadd.f32 %v5811, 1.0
        %v5922 = vadd.f32 %v5813, 1.0
        %v5923 = vadd.f32 %v5815, 1.0
        %v5924 = vadd.f32 %v5817, 1.0
        %v5925 = vadd.f32 %v5819, 1.0
        %v5926 = vadd.f32 %v5821, 1.0
        %v5927 = vadd.f32 %v5823, 1.0
        %v5928 = vadd.f32 %v5825, 1.0
        %v5929 = vadd.f32 %v5827, 1.0
        %v5930 = vadd.f32 %v5829, 1.0
        %v5931 = vadd.f32 %v5831, 1.0
        %v5932 = vadd.f32 %v5833, 1.0
        %v5933 = vadd.f32 %v5835, 1.0
        %v5934 = vadd.f32 %v5837, 1.0
        %v5935 = vadd.f32 %v5839, 1.0
        %v5936 = vadd.f32 %v5841, 1.0
        %v5937 = vadd.f32 %v5843, 1.0
        %v5938 = vadd.f32 %v5845, 1.0
        %v5939 = vadd.f32 %v5847, 1.0
        %v5940 = vadd.f32 %v5849, 1.0
        %v5941 = vadd.f32 %v5851, 1.0
        %v5942 = vadd.f32 %v5853, 1.0
        %v5943 = vadd.f32 %v5855, 1.0
        %v5944 = vadd.f32 %v5857, 1.0
        %v5945 = vadd.f32 %v5859, 1.0
        %v5946 = vadd.f32 %v5861, 1.0
        %v5947 = vadd.f32 %v5863, 1.0
        %v5948 = vadd.f32 %v5865, 1.0
        %v5949 = vadd.f32 %v5867, 1.0
        %v5950 = vadd.f32 %v5869, 1.0
        %v5951 = vadd.f32 %v5871, 1.0
        %v5952 = vadd.f32 %v5873, 1.0
        %v5953 = vadd.f32 %v5875, 1.0
        %v5954 = vadd.f32 %v5877, 1.0
        %v5955 = vadd.f32 %v5879, 1.0
        %v5956 = vadd.f32 %v5881, 1.0
        %v5957 = vadd.f32 %v5883, 1.0
        %v5958 = vadd.f32 %v5885, 1.0
        %v5959 = vadd.f32 %v5887, 1.0
        %v5960 = vadd.f32 %v5889, 1.0
        %v5961 = vadd.f32 %v5891, 1.0
        %v5962 = vadd.f32 %v5893, 1.0
        %v5963 = vadd.f32 %v5895, 1.0
        %v5964 = vadd.f32 %v5897, 1.0
        %v5965 = vadd.f32 %v5899, 1.0
        %v5966 = vadd.f32 %v5901, 1.0
        %v5967 = vadd.f32 %v5903, 1.0
        %v5968 = vlog2.pop %v5904
        %v5969 = vmul.f32 %v5968, 0.6931472
        %v5970 = vlog2.pop %v5905
        %v5971 = vmul.f32 %v5970, 0.6931472
        %v5972 = vlog2.pop %v5906
        %v5973 = vmul.f32 %v5972, 0.6931472
        %v5974 = vlog2.pop %v5907
        %v5975 = vmul.f32 %v5974, 0.6931472
        %v5976 = vlog2.pop %v5908
        %v5977 = vmul.f32 %v5976, 0.6931472
        %v5978 = vlog2.pop %v5909
        %v5979 = vmul.f32 %v5978, 0.6931472
        %v5980 = vlog2.pop %v5910
        %v5981 = vmul.f32 %v5980, 0.6931472
        %v5982 = vlog2.pop %v5911
        %v5983 = vmul.f32 %v5982, 0.6931472
        %v5984 = vlog2.pop %v5912
        %v5985 = vmul.f32 %v5984, 0.6931472
        %v5986 = vlog2.pop %v5913
        %v5987 = vmul.f32 %v5986, 0.6931472
        %v5988 = vlog2.pop %v5914
        %v5989 = vmul.f32 %v5988, 0.6931472
        %v5990 = vlog2.pop %v5915
        %v5991 = vmul.f32 %v5990, 0.6931472
        %v5992 = vlog2.pop %v5916
        %v5993 = vmul.f32 %v5992, 0.6931472
        %v5994 = vlog2.pop %v5917
        %v5995 = vmul.f32 %v5994, 0.6931472
        %v5996 = vlog2.pop %v5918
        %v5997 = vmul.f32 %v5996, 0.6931472
        %v5998 = vlog2.pop %v5919
        %v5999 = vmul.f32 %v5998, 0.6931472
        %v6000 = vlog2.pop %v5920
        %v6001 = vmul.f32 %v6000, 0.6931472
        %v6002 = vlog2.pop %v5921
        %v6003 = vmul.f32 %v6002, 0.6931472
        %v6004 = vlog2.pop %v5922
        %v6005 = vmul.f32 %v6004, 0.6931472
        %v6006 = vlog2.pop %v5923
        %v6007 = vmul.f32 %v6006, 0.6931472
        %v6008 = vlog2.pop %v5924
        %v6009 = vmul.f32 %v6008, 0.6931472
        %v6010 = vlog2.pop %v5925
        %v6011 = vmul.f32 %v6010, 0.6931472
        %v6012 = vlog2.pop %v5926
        %v6013 = vmul.f32 %v6012, 0.6931472
        %v6014 = vlog2.pop %v5927
        %v6015 = vmul.f32 %v6014, 0.6931472
        %v6016 = vlog2.pop %v5928
        %v6017 = vmul.f32 %v6016, 0.6931472
        %v6018 = vlog2.pop %v5929
        %v6019 = vmul.f32 %v6018, 0.6931472
        %v6020 = vlog2.pop %v5930
        %v6021 = vmul.f32 %v6020, 0.6931472
        %v6022 = vlog2.pop %v5931
        %v6023 = vmul.f32 %v6022, 0.6931472
        %v6024 = vlog2.pop %v5932
        %v6025 = vmul.f32 %v6024, 0.6931472
        %v6026 = vlog2.pop %v5933
        %v6027 = vmul.f32 %v6026, 0.6931472
        %v6028 = vlog2.pop %v5934
        %v6029 = vmul.f32 %v6028, 0.6931472
        %v6030 = vlog2.pop %v5935
        %v6031 = vmul.f32 %v6030, 0.6931472
        %v6032 = vlog2.pop %v5936
        %v6033 = vmul.f32 %v6032, 0.6931472
        %v6034 = vlog2.pop %v5937
        %v6035 = vmul.f32 %v6034, 0.6931472
        %v6036 = vlog2.pop %v5938
        %v6037 = vmul.f32 %v6036, 0.6931472
        %v6038 = vlog2.pop %v5939
        %v6039 = vmul.f32 %v6038, 0.6931472
        %v6040 = vlog2.pop %v5940
        %v6041 = vmul.f32 %v6040, 0.6931472
        %v6042 = vlog2.pop %v5941
        %v6043 = vmul.f32 %v6042, 0.6931472
        %v6044 = vlog2.pop %v5942
        %v6045 = vmul.f32 %v6044, 0.6931472
        %v6046 = vlog2.pop %v5943
        %v6047 = vmul.f32 %v6046, 0.6931472
        %v6048 = vlog2.pop %v5944
        %v6049 = vmul.f32 %v6048, 0.6931472
        %v6050 = vlog2.pop %v5945
        %v6051 = vmul.f32 %v6050, 0.6931472
        %v6052 = vlog2.pop %v5946
        %v6053 = vmul.f32 %v6052, 0.6931472
        %v6054 = vlog2.pop %v5947
        %v6055 = vmul.f32 %v6054, 0.6931472
        %v6056 = vlog2.pop %v5948
        %v6057 = vmul.f32 %v6056, 0.6931472
        %v6058 = vlog2.pop %v5949
        %v6059 = vmul.f32 %v6058, 0.6931472
        %v6060 = vlog2.pop %v5950
        %v6061 = vmul.f32 %v6060, 0.6931472
        %v6062 = vlog2.pop %v5951
        %v6063 = vmul.f32 %v6062, 0.6931472
        %v6064 = vlog2.pop %v5952
        %v6065 = vmul.f32 %v6064, 0.6931472
        %v6066 = vlog2.pop %v5953
        %v6067 = vmul.f32 %v6066, 0.6931472
        %v6068 = vlog2.pop %v5954
        %v6069 = vmul.f32 %v6068, 0.6931472
        %v6070 = vlog2.pop %v5955
        %v6071 = vmul.f32 %v6070, 0.6931472
        %v6072 = vlog2.pop %v5956
        %v6073 = vmul.f32 %v6072, 0.6931472
        %v6074 = vlog2.pop %v5957
        %v6075 = vmul.f32 %v6074, 0.6931472
        %v6076 = vlog2.pop %v5958
        %v6077 = vmul.f32 %v6076, 0.6931472
        %v6078 = vlog2.pop %v5959
        %v6079 = vmul.f32 %v6078, 0.6931472
        %v6080 = vlog2.pop %v5960
        %v6081 = vmul.f32 %v6080, 0.6931472
        %v6082 = vlog2.pop %v5961
        %v6083 = vmul.f32 %v6082, 0.6931472
        %v6084 = vlog2.pop %v5962
        %v6085 = vmul.f32 %v6084, 0.6931472
        %v6086 = vlog2.pop %v5963
        %v6087 = vmul.f32 %v6086, 0.6931472
        %v6088 = vlog2.pop %v5964
        %v6089 = vmul.f32 %v6088, 0.6931472
        %v6090 = vlog2.pop %v5965
        %v6091 = vmul.f32 %v6090, 0.6931472
        %v6092 = vlog2.pop %v5966
        %v6093 = vmul.f32 %v6092, 0.6931472
        %v6094 = vlog2.pop %v5967
        %v6095 = vmul.f32 %v6094, 0.6931472
        %v6096 = vsub.f32 %v5584, %v5969
        %v6097 = vsub.f32 %v5585, %v5971
        %v6098 = vsub.f32 %v5586, %v5973
        %v6099 = vsub.f32 %v5587, %v5975
        %v6100 = vsub.f32 %v5588, %v5977
        %v6101 = vsub.f32 %v5589, %v5979
        %v6102 = vsub.f32 %v5590, %v5981
        %v6103 = vsub.f32 %v5591, %v5983
        %v6104 = vsub.f32 %v5592, %v5985
        %v6105 = vsub.f32 %v5593, %v5987
        %v6106 = vsub.f32 %v5594, %v5989
        %v6107 = vsub.f32 %v5595, %v5991
        %v6108 = vsub.f32 %v5596, %v5993
        %v6109 = vsub.f32 %v5597, %v5995
        %v6110 = vsub.f32 %v5598, %v5997
        %v6111 = vsub.f32 %v5599, %v5999
        %v6112 = vsub.f32 %v5600, %v6001
        %v6113 = vsub.f32 %v5601, %v6003
        %v6114 = vsub.f32 %v5602, %v6005
        %v6115 = vsub.f32 %v5603, %v6007
        %v6116 = vsub.f32 %v5604, %v6009
        %v6117 = vsub.f32 %v5605, %v6011
        %v6118 = vsub.f32 %v5606, %v6013
        %v6119 = vsub.f32 %v5607, %v6015
        %v6120 = vsub.f32 %v5608, %v6017
        %v6121 = vsub.f32 %v5609, %v6019
        %v6122 = vsub.f32 %v5610, %v6021
        %v6123 = vsub.f32 %v5611, %v6023
        %v6124 = vsub.f32 %v5612, %v6025
        %v6125 = vsub.f32 %v5613, %v6027
        %v6126 = vsub.f32 %v5614, %v6029
        %v6127 = vsub.f32 %v5615, %v6031
        %v6128 = vsub.f32 %v5616, %v6033
        %v6129 = vsub.f32 %v5617, %v6035
        %v6130 = vsub.f32 %v5618, %v6037
        %v6131 = vsub.f32 %v5619, %v6039
        %v6132 = vsub.f32 %v5620, %v6041
        %v6133 = vsub.f32 %v5621, %v6043
        %v6134 = vsub.f32 %v5622, %v6045
        %v6135 = vsub.f32 %v5623, %v6047
        %v6136 = vsub.f32 %v5624, %v6049
        %v6137 = vsub.f32 %v5625, %v6051
        %v6138 = vsub.f32 %v5626, %v6053
        %v6139 = vsub.f32 %v5627, %v6055
        %v6140 = vsub.f32 %v5628, %v6057
        %v6141 = vsub.f32 %v5629, %v6059
        %v6142 = vsub.f32 %v5630, %v6061
        %v6143 = vsub.f32 %v5631, %v6063
        %v6144 = vsub.f32 %v5632, %v6065
        %v6145 = vsub.f32 %v5633, %v6067
        %v6146 = vsub.f32 %v5634, %v6069
        %v6147 = vsub.f32 %v5635, %v6071
        %v6148 = vsub.f32 %v5636, %v6073
        %v6149 = vsub.f32 %v5637, %v6075
        %v6150 = vsub.f32 %v5638, %v6077
        %v6151 = vsub.f32 %v5639, %v6079
        %v6152 = vsub.f32 %v5640, %v6081
        %v6153 = vsub.f32 %v5641, %v6083
        %v6154 = vsub.f32 %v5642, %v6085
        %v6155 = vsub.f32 %v5643, %v6087
        %v6156 = vsub.f32 %v5644, %v6089
        %v6157 = vsub.f32 %v5645, %v6091
        %v6158 = vsub.f32 %v5646, %v6093
        %v6159 = vsub.f32 %v5647, %v6095
        %v6160 = vmul.f32 %v4416, %v4176
        %v6161 = vmul.f32 %v4417, %v4177
        %v6162 = vmul.f32 %v4418, %v4178
        %v6163 = vmul.f32 %v4419, %v4179
        %v6164 = vmul.f32 %v4420, %v4180
        %v6165 = vmul.f32 %v4421, %v4181
        %v6166 = vmul.f32 %v4422, %v4182
        %v6167 = vmul.f32 %v4423, %v4183
        %v6168 = vmul.f32 %v4424, %v4184
        %v6169 = vmul.f32 %v4425, %v4185
        %v6170 = vmul.f32 %v4426, %v4186
        %v6171 = vmul.f32 %v4427, %v4187
        %v6172 = vmul.f32 %v4428, %v4188
        %v6173 = vmul.f32 %v4429, %v4189
        %v6174 = vmul.f32 %v4430, %v4190
        %v6175 = vmul.f32 %v4431, %v4191
        %6192 = vrot.lane.b32.xlu0 %v6160, 126
        %v6193 = vpop.permute.xlu0 %6192
        %6194 = vrot.lane.b32.xlu0 %v6161, 126
        %v6195 = vpop.permute.xlu0 %6194
        %6196 = vrot.lane.b32.xlu0 %v6162, 126
        %v6197 = vpop.permute.xlu0 %6196
        %6198 = vrot.lane.b32.xlu0 %v6163, 126
        %v6199 = vpop.permute.xlu0 %6198
        %6200 = vrot.lane.b32.xlu0 %v6164, 126
        %v6201 = vpop.permute.xlu0 %6200
        %6202 = vrot.lane.b32.xlu0 %v6165, 126
        %v6203 = vpop.permute.xlu0 %6202
        %6204 = vrot.lane.b32.xlu0 %v6166, 126
        %v6205 = vpop.permute.xlu0 %6204
        %6206 = vrot.lane.b32.xlu0 %v6167, 126
        %v6207 = vpop.permute.xlu0 %6206
        %6208 = vrot.lane.b32.xlu0 %v6168, 126
        %v6209 = vpop.permute.xlu0 %6208
        %6210 = vrot.lane.b32.xlu0 %v6169, 126
        %v6211 = vpop.permute.xlu0 %6210
        %6212 = vrot.lane.b32.xlu0 %v6170, 126
        %v6213 = vpop.permute.xlu0 %6212
        %6214 = vrot.lane.b32.xlu0 %v6171, 126
        %v6215 = vpop.permute.xlu0 %6214
        %6216 = vrot.lane.b32.xlu0 %v6172, 126
        %v6217 = vpop.permute.xlu0 %6216
        %6218 = vrot.lane.b32.xlu0 %v6173, 126
        %v6219 = vpop.permute.xlu0 %6218
        %6220 = vrot.lane.b32.xlu0 %v6174, 126
        %v6221 = vpop.permute.xlu0 %6220
        %6222 = vrot.lane.b32.xlu0 %v6175, 126
        %v6223 = vpop.permute.xlu0 %6222
        %vm6240 = vcmask 7168
        %v6241 = vsel %vm6240, %v6193, 0.0
        %v6242 = vsel %vm6240, %v6195, 0.0
        %v6243 = vadd.f32 %v6241, %v6242
        %v6244 = vsel %vm6240, %v6197, 0.0
        %v6245 = vadd.f32 %v6243, %v6244
        %v6246 = vsel %vm6240, %v6199, 0.0
        %v6247 = vadd.f32 %v6245, %v6246
        %v6248 = vsel %vm6240, %v6201, 0.0
        %v6249 = vadd.f32 %v6247, %v6248
        %v6250 = vsel %vm6240, %v6203, 0.0
        %v6251 = vadd.f32 %v6249, %v6250
        %v6252 = vsel %vm6240, %v6205, 0.0
        %v6253 = vadd.f32 %v6251, %v6252
        %v6254 = vsel %vm6240, %v6207, 0.0
        %v6255 = vadd.f32 %v6253, %v6254
        %v6256 = vsel %vm6240, %v6209, 0.0
        %v6257 = vadd.f32 %v6255, %v6256
        %v6258 = vsel %vm6240, %v6211, 0.0
        %v6259 = vadd.f32 %v6257, %v6258
        %v6260 = vsel %vm6240, %v6213, 0.0
        %v6261 = vadd.f32 %v6259, %v6260
        %v6262 = vsel %vm6240, %v6215, 0.0
        %v6263 = vadd.f32 %v6261, %v6262
        %v6264 = vsel %vm6240, %v6217, 0.0
        %v6265 = vadd.f32 %v6263, %v6264
        %v6266 = vsel %vm6240, %v6219, 0.0
        %v6267 = vadd.f32 %v6265, %v6266
        %v6268 = vsel %vm6240, %v6221, 0.0
        %v6269 = vadd.f32 %v6267, %v6268
        %v6270 = vsel %vm6240, %v6223, 0.0
        %v6271 = vadd.f32 %v6269, %v6270
        %6272 = vadd.xlane.f32.xlu0 %v6271
        %v6273 = vpop.xlane.xlu0 %6272
        %v6274 = vrot.slane %v6273, 4
        %v6275 = vadd.f32 %v6273, %v6274
        %v6276 = vrot.slane %v6275, 2
        %v6277 = vadd.f32 %v6275, %v6276
        %v6278 = vrot.slane %v6277, 1
        %v6279 = vadd.f32 %v6277, %v6278
        %s6280 = vtos %v6279
        %s6281 = smul.f32 %s6280, 5.0
        %6346 = vrot.lane.b32.xlu0 %v4176, 127
        %v6347 = vpop.permute.xlu0 %6346
        %6348 = vrot.lane.b32.xlu0 %v4177, 127
        %v6349 = vpop.permute.xlu0 %6348
        %6350 = vrot.lane.b32.xlu0 %v4178, 127
        %v6351 = vpop.permute.xlu0 %6350
        %6352 = vrot.lane.b32.xlu0 %v4179, 127
        %v6353 = vpop.permute.xlu0 %6352
        %6354 = vrot.lane.b32.xlu0 %v4180, 127
        %v6355 = vpop.permute.xlu0 %6354
        %6356 = vrot.lane.b32.xlu0 %v4181, 127
        %v6357 = vpop.permute.xlu0 %6356
        %6358 = vrot.lane.b32.xlu0 %v4182, 127
        %v6359 = vpop.permute.xlu0 %6358
        %6360 = vrot.lane.b32.xlu0 %v4183, 127
        %v6361 = vpop.permute.xlu0 %6360
        %6362 = vrot.lane.b32.xlu0 %v4184, 127
        %v6363 = vpop.permute.xlu0 %6362
        %6364 = vrot.lane.b32.xlu0 %v4185, 127
        %v6365 = vpop.permute.xlu0 %6364
        %6366 = vrot.lane.b32.xlu0 %v4186, 127
        %v6367 = vpop.permute.xlu0 %6366
        %6368 = vrot.lane.b32.xlu0 %v4187, 127
        %v6369 = vpop.permute.xlu0 %6368
        %6370 = vrot.lane.b32.xlu0 %v4188, 127
        %v6371 = vpop.permute.xlu0 %6370
        %6372 = vrot.lane.b32.xlu0 %v4189, 127
        %v6373 = vpop.permute.xlu0 %6372
        %6374 = vrot.lane.b32.xlu0 %v4190, 127
        %v6375 = vpop.permute.xlu0 %6374
        %6376 = vrot.lane.b32.xlu0 %v4191, 127
        %v6377 = vpop.permute.xlu0 %6376
        %6378 = vrot.lane.b32.xlu0 %v4192, 127
        %v6379 = vpop.permute.xlu0 %6378
        %6380 = vrot.lane.b32.xlu0 %v4193, 127
        %v6381 = vpop.permute.xlu0 %6380
        %6382 = vrot.lane.b32.xlu0 %v4194, 127
        %v6383 = vpop.permute.xlu0 %6382
        %6384 = vrot.lane.b32.xlu0 %v4195, 127
        %v6385 = vpop.permute.xlu0 %6384
        %6386 = vrot.lane.b32.xlu0 %v4196, 127
        %v6387 = vpop.permute.xlu0 %6386
        %6388 = vrot.lane.b32.xlu0 %v4197, 127
        %v6389 = vpop.permute.xlu0 %6388
        %6390 = vrot.lane.b32.xlu0 %v4198, 127
        %v6391 = vpop.permute.xlu0 %6390
        %6392 = vrot.lane.b32.xlu0 %v4199, 127
        %v6393 = vpop.permute.xlu0 %6392
        %6394 = vrot.lane.b32.xlu0 %v4200, 127
        %v6395 = vpop.permute.xlu0 %6394
        %6396 = vrot.lane.b32.xlu0 %v4201, 127
        %v6397 = vpop.permute.xlu0 %6396
        %6398 = vrot.lane.b32.xlu0 %v4202, 127
        %v6399 = vpop.permute.xlu0 %6398
        %6400 = vrot.lane.b32.xlu0 %v4203, 127
        %v6401 = vpop.permute.xlu0 %6400
        %6402 = vrot.lane.b32.xlu0 %v4204, 127
        %v6403 = vpop.permute.xlu0 %6402
        %6404 = vrot.lane.b32.xlu0 %v4205, 127
        %v6405 = vpop.permute.xlu0 %6404
        %6406 = vrot.lane.b32.xlu0 %v4206, 127
        %v6407 = vpop.permute.xlu0 %6406
        %6408 = vrot.lane.b32.xlu0 %v4207, 127
        %v6409 = vpop.permute.xlu0 %6408
        %6410 = vrot.lane.b32.xlu0 %v4208, 127
        %v6411 = vpop.permute.xlu0 %6410
        %6412 = vrot.lane.b32.xlu0 %v4209, 127
        %v6413 = vpop.permute.xlu0 %6412
        %6414 = vrot.lane.b32.xlu0 %v4210, 127
        %v6415 = vpop.permute.xlu0 %6414
        %6416 = vrot.lane.b32.xlu0 %v4211, 127
        %v6417 = vpop.permute.xlu0 %6416
        %6418 = vrot.lane.b32.xlu0 %v4212, 127
        %v6419 = vpop.permute.xlu0 %6418
        %6420 = vrot.lane.b32.xlu0 %v4213, 127
        %v6421 = vpop.permute.xlu0 %6420
        %6422 = vrot.lane.b32.xlu0 %v4214, 127
        %v6423 = vpop.permute.xlu0 %6422
        %6424 = vrot.lane.b32.xlu0 %v4215, 127
        %v6425 = vpop.permute.xlu0 %6424
        %6426 = vrot.lane.b32.xlu0 %v4216, 127
        %v6427 = vpop.permute.xlu0 %6426
        %6428 = vrot.lane.b32.xlu0 %v4217, 127
        %v6429 = vpop.permute.xlu0 %6428
        %6430 = vrot.lane.b32.xlu0 %v4218, 127
        %v6431 = vpop.permute.xlu0 %6430
        %6432 = vrot.lane.b32.xlu0 %v4219, 127
        %v6433 = vpop.permute.xlu0 %6432
        %6434 = vrot.lane.b32.xlu0 %v4220, 127
        %v6435 = vpop.permute.xlu0 %6434
        %6436 = vrot.lane.b32.xlu0 %v4221, 127
        %v6437 = vpop.permute.xlu0 %6436
        %6438 = vrot.lane.b32.xlu0 %v4222, 127
        %v6439 = vpop.permute.xlu0 %6438
        %6440 = vrot.lane.b32.xlu0 %v4223, 127
        %v6441 = vpop.permute.xlu0 %6440
        %6442 = vrot.lane.b32.xlu0 %v4224, 127
        %v6443 = vpop.permute.xlu0 %6442
        %6444 = vrot.lane.b32.xlu0 %v4225, 127
        %v6445 = vpop.permute.xlu0 %6444
        %6446 = vrot.lane.b32.xlu0 %v4226, 127
        %v6447 = vpop.permute.xlu0 %6446
        %6448 = vrot.lane.b32.xlu0 %v4227, 127
        %v6449 = vpop.permute.xlu0 %6448
        %6450 = vrot.lane.b32.xlu0 %v4228, 127
        %v6451 = vpop.permute.xlu0 %6450
        %6452 = vrot.lane.b32.xlu0 %v4229, 127
        %v6453 = vpop.permute.xlu0 %6452
        %6454 = vrot.lane.b32.xlu0 %v4230, 127
        %v6455 = vpop.permute.xlu0 %6454
        %6456 = vrot.lane.b32.xlu0 %v4231, 127
        %v6457 = vpop.permute.xlu0 %6456
        %6458 = vrot.lane.b32.xlu0 %v4232, 127
        %v6459 = vpop.permute.xlu0 %6458
        %6460 = vrot.lane.b32.xlu0 %v4233, 127
        %v6461 = vpop.permute.xlu0 %6460
        %6462 = vrot.lane.b32.xlu0 %v4234, 127
        %v6463 = vpop.permute.xlu0 %6462
        %6464 = vrot.lane.b32.xlu0 %v4235, 127
        %v6465 = vpop.permute.xlu0 %6464
        %6466 = vrot.lane.b32.xlu0 %v4236, 127
        %v6467 = vpop.permute.xlu0 %6466
        %6468 = vrot.lane.b32.xlu0 %v4237, 127
        %v6469 = vpop.permute.xlu0 %6468
        %6470 = vrot.lane.b32.xlu0 %v4238, 127
        %v6471 = vpop.permute.xlu0 %6470
        %6472 = vrot.lane.b32.xlu0 %v4239, 127
        %v6473 = vpop.permute.xlu0 %6472
        %v6538 = vmul.f32 %v5456, %v6347
        %v6539 = vmul.f32 %v5457, %v6349
        %v6540 = vmul.f32 %v5458, %v6351
        %v6541 = vmul.f32 %v5459, %v6353
        %v6542 = vmul.f32 %v5460, %v6355
        %v6543 = vmul.f32 %v5461, %v6357
        %v6544 = vmul.f32 %v5462, %v6359
        %v6545 = vmul.f32 %v5463, %v6361
        %v6546 = vmul.f32 %v5464, %v6363
        %v6547 = vmul.f32 %v5465, %v6365
        %v6548 = vmul.f32 %v5466, %v6367
        %v6549 = vmul.f32 %v5467, %v6369
        %v6550 = vmul.f32 %v5468, %v6371
        %v6551 = vmul.f32 %v5469, %v6373
        %v6552 = vmul.f32 %v5470, %v6375
        %v6553 = vmul.f32 %v5471, %v6377
        %v6554 = vmul.f32 %v5472, %v6379
        %v6555 = vmul.f32 %v5473, %v6381
        %v6556 = vmul.f32 %v5474, %v6383
        %v6557 = vmul.f32 %v5475, %v6385
        %v6558 = vmul.f32 %v5476, %v6387
        %v6559 = vmul.f32 %v5477, %v6389
        %v6560 = vmul.f32 %v5478, %v6391
        %v6561 = vmul.f32 %v5479, %v6393
        %v6562 = vmul.f32 %v5480, %v6395
        %v6563 = vmul.f32 %v5481, %v6397
        %v6564 = vmul.f32 %v5482, %v6399
        %v6565 = vmul.f32 %v5483, %v6401
        %v6566 = vmul.f32 %v5484, %v6403
        %v6567 = vmul.f32 %v5485, %v6405
        %v6568 = vmul.f32 %v5486, %v6407
        %v6569 = vmul.f32 %v5487, %v6409
        %v6570 = vmul.f32 %v5488, %v6411
        %v6571 = vmul.f32 %v5489, %v6413
        %v6572 = vmul.f32 %v5490, %v6415
        %v6573 = vmul.f32 %v5491, %v6417
        %v6574 = vmul.f32 %v5492, %v6419
        %v6575 = vmul.f32 %v5493, %v6421
        %v6576 = vmul.f32 %v5494, %v6423
        %v6577 = vmul.f32 %v5495, %v6425
        %v6578 = vmul.f32 %v5496, %v6427
        %v6579 = vmul.f32 %v5497, %v6429
        %v6580 = vmul.f32 %v5498, %v6431
        %v6581 = vmul.f32 %v5499, %v6433
        %v6582 = vmul.f32 %v5500, %v6435
        %v6583 = vmul.f32 %v5501, %v6437
        %v6584 = vmul.f32 %v5502, %v6439
        %v6585 = vmul.f32 %v5503, %v6441
        %v6586 = vmul.f32 %v5504, %v6443
        %v6587 = vmul.f32 %v5505, %v6445
        %v6588 = vmul.f32 %v5506, %v6447
        %v6589 = vmul.f32 %v5507, %v6449
        %v6590 = vmul.f32 %v5508, %v6451
        %v6591 = vmul.f32 %v5509, %v6453
        %v6592 = vmul.f32 %v5510, %v6455
        %v6593 = vmul.f32 %v5511, %v6457
        %v6594 = vmul.f32 %v5512, %v6459
        %v6595 = vmul.f32 %v5513, %v6461
        %v6596 = vmul.f32 %v5514, %v6463
        %v6597 = vmul.f32 %v5515, %v6465
        %v6598 = vmul.f32 %v5516, %v6467
        %v6599 = vmul.f32 %v5517, %v6469
        %v6600 = vmul.f32 %v5518, %v6471
        %v6601 = vmul.f32 %v5519, %v6473
        %6666 = vrot.lane.b32.xlu0 %v6538, 127
        %v6667 = vpop.permute.xlu0 %6666
        %6668 = vrot.lane.b32.xlu0 %v6539, 127
        %v6669 = vpop.permute.xlu0 %6668
        %6670 = vrot.lane.b32.xlu0 %v6540, 127
        %v6671 = vpop.permute.xlu0 %6670
        %6672 = vrot.lane.b32.xlu0 %v6541, 127
        %v6673 = vpop.permute.xlu0 %6672
        %6674 = vrot.lane.b32.xlu0 %v6542, 127
        %v6675 = vpop.permute.xlu0 %6674
        %6676 = vrot.lane.b32.xlu0 %v6543, 127
        %v6677 = vpop.permute.xlu0 %6676
        %6678 = vrot.lane.b32.xlu0 %v6544, 127
        %v6679 = vpop.permute.xlu0 %6678
        %6680 = vrot.lane.b32.xlu0 %v6545, 127
        %v6681 = vpop.permute.xlu0 %6680
        %6682 = vrot.lane.b32.xlu0 %v6546, 127
        %v6683 = vpop.permute.xlu0 %6682
        %6684 = vrot.lane.b32.xlu0 %v6547, 127
        %v6685 = vpop.permute.xlu0 %6684
        %6686 = vrot.lane.b32.xlu0 %v6548, 127
        %v6687 = vpop.permute.xlu0 %6686
        %6688 = vrot.lane.b32.xlu0 %v6549, 127
        %v6689 = vpop.permute.xlu0 %6688
        %6690 = vrot.lane.b32.xlu0 %v6550, 127
        %v6691 = vpop.permute.xlu0 %6690
        %6692 = vrot.lane.b32.xlu0 %v6551, 127
        %v6693 = vpop.permute.xlu0 %6692
        %6694 = vrot.lane.b32.xlu0 %v6552, 127
        %v6695 = vpop.permute.xlu0 %6694
        %6696 = vrot.lane.b32.xlu0 %v6553, 127
        %v6697 = vpop.permute.xlu0 %6696
        %6698 = vrot.lane.b32.xlu0 %v6554, 127
        %v6699 = vpop.permute.xlu0 %6698
        %6700 = vrot.lane.b32.xlu0 %v6555, 127
        %v6701 = vpop.permute.xlu0 %6700
        %6702 = vrot.lane.b32.xlu0 %v6556, 127
        %v6703 = vpop.permute.xlu0 %6702
        %6704 = vrot.lane.b32.xlu0 %v6557, 127
        %v6705 = vpop.permute.xlu0 %6704
        %6706 = vrot.lane.b32.xlu0 %v6558, 127
        %v6707 = vpop.permute.xlu0 %6706
        %6708 = vrot.lane.b32.xlu0 %v6559, 127
        %v6709 = vpop.permute.xlu0 %6708
        %6710 = vrot.lane.b32.xlu0 %v6560, 127
        %v6711 = vpop.permute.xlu0 %6710
        %6712 = vrot.lane.b32.xlu0 %v6561, 127
        %v6713 = vpop.permute.xlu0 %6712
        %6714 = vrot.lane.b32.xlu0 %v6562, 127
        %v6715 = vpop.permute.xlu0 %6714
        %6716 = vrot.lane.b32.xlu0 %v6563, 127
        %v6717 = vpop.permute.xlu0 %6716
        %6718 = vrot.lane.b32.xlu0 %v6564, 127
        %v6719 = vpop.permute.xlu0 %6718
        %6720 = vrot.lane.b32.xlu0 %v6565, 127
        %v6721 = vpop.permute.xlu0 %6720
        %6722 = vrot.lane.b32.xlu0 %v6566, 127
        %v6723 = vpop.permute.xlu0 %6722
        %6724 = vrot.lane.b32.xlu0 %v6567, 127
        %v6725 = vpop.permute.xlu0 %6724
        %6726 = vrot.lane.b32.xlu0 %v6568, 127
        %v6727 = vpop.permute.xlu0 %6726
        %6728 = vrot.lane.b32.xlu0 %v6569, 127
        %v6729 = vpop.permute.xlu0 %6728
        %6730 = vrot.lane.b32.xlu0 %v6570, 127
        %v6731 = vpop.permute.xlu0 %6730
        %6732 = vrot.lane.b32.xlu0 %v6571, 127
        %v6733 = vpop.permute.xlu0 %6732
        %6734 = vrot.lane.b32.xlu0 %v6572, 127
        %v6735 = vpop.permute.xlu0 %6734
        %6736 = vrot.lane.b32.xlu0 %v6573, 127
        %v6737 = vpop.permute.xlu0 %6736
        %6738 = vrot.lane.b32.xlu0 %v6574, 127
        %v6739 = vpop.permute.xlu0 %6738
        %6740 = vrot.lane.b32.xlu0 %v6575, 127
        %v6741 = vpop.permute.xlu0 %6740
        %6742 = vrot.lane.b32.xlu0 %v6576, 127
        %v6743 = vpop.permute.xlu0 %6742
        %6744 = vrot.lane.b32.xlu0 %v6577, 127
        %v6745 = vpop.permute.xlu0 %6744
        %6746 = vrot.lane.b32.xlu0 %v6578, 127
        %v6747 = vpop.permute.xlu0 %6746
        %6748 = vrot.lane.b32.xlu0 %v6579, 127
        %v6749 = vpop.permute.xlu0 %6748
        %6750 = vrot.lane.b32.xlu0 %v6580, 127
        %v6751 = vpop.permute.xlu0 %6750
        %6752 = vrot.lane.b32.xlu0 %v6581, 127
        %v6753 = vpop.permute.xlu0 %6752
        %6754 = vrot.lane.b32.xlu0 %v6582, 127
        %v6755 = vpop.permute.xlu0 %6754
        %6756 = vrot.lane.b32.xlu0 %v6583, 127
        %v6757 = vpop.permute.xlu0 %6756
        %6758 = vrot.lane.b32.xlu0 %v6584, 127
        %v6759 = vpop.permute.xlu0 %6758
        %6760 = vrot.lane.b32.xlu0 %v6585, 127
        %v6761 = vpop.permute.xlu0 %6760
        %6762 = vrot.lane.b32.xlu0 %v6586, 127
        %v6763 = vpop.permute.xlu0 %6762
        %6764 = vrot.lane.b32.xlu0 %v6587, 127
        %v6765 = vpop.permute.xlu0 %6764
        %6766 = vrot.lane.b32.xlu0 %v6588, 127
        %v6767 = vpop.permute.xlu0 %6766
        %6768 = vrot.lane.b32.xlu0 %v6589, 127
        %v6769 = vpop.permute.xlu0 %6768
        %6770 = vrot.lane.b32.xlu0 %v6590, 127
        %v6771 = vpop.permute.xlu0 %6770
        %6772 = vrot.lane.b32.xlu0 %v6591, 127
        %v6773 = vpop.permute.xlu0 %6772
        %6774 = vrot.lane.b32.xlu0 %v6592, 127
        %v6775 = vpop.permute.xlu0 %6774
        %6776 = vrot.lane.b32.xlu0 %v6593, 127
        %v6777 = vpop.permute.xlu0 %6776
        %6778 = vrot.lane.b32.xlu0 %v6594, 127
        %v6779 = vpop.permute.xlu0 %6778
        %6780 = vrot.lane.b32.xlu0 %v6595, 127
        %v6781 = vpop.permute.xlu0 %6780
        %6782 = vrot.lane.b32.xlu0 %v6596, 127
        %v6783 = vpop.permute.xlu0 %6782
        %6784 = vrot.lane.b32.xlu0 %v6597, 127
        %v6785 = vpop.permute.xlu0 %6784
        %6786 = vrot.lane.b32.xlu0 %v6598, 127
        %v6787 = vpop.permute.xlu0 %6786
        %6788 = vrot.lane.b32.xlu0 %v6599, 127
        %v6789 = vpop.permute.xlu0 %6788
        %6790 = vrot.lane.b32.xlu0 %v6600, 127
        %v6791 = vpop.permute.xlu0 %6790
        %6792 = vrot.lane.b32.xlu0 %v6601, 127
        %v6793 = vpop.permute.xlu0 %6792
        %v6858 = vsel %vm6240, %v6667, 0.0
        %v6859 = vsel %vm6240, %v6669, 0.0
        %v6860 = vadd.f32 %v6858, %v6859
        %v6861 = vsel %vm6240, %v6671, 0.0
        %v6862 = vadd.f32 %v6860, %v6861
        %v6863 = vsel %vm6240, %v6673, 0.0
        %v6864 = vadd.f32 %v6862, %v6863
        %v6865 = vsel %vm6240, %v6675, 0.0
        %v6866 = vadd.f32 %v6864, %v6865
        %v6867 = vsel %vm6240, %v6677, 0.0
        %v6868 = vadd.f32 %v6866, %v6867
        %v6869 = vsel %vm6240, %v6679, 0.0
        %v6870 = vadd.f32 %v6868, %v6869
        %v6871 = vsel %vm6240, %v6681, 0.0
        %v6872 = vadd.f32 %v6870, %v6871
        %v6873 = vsel %vm6240, %v6683, 0.0
        %v6874 = vadd.f32 %v6872, %v6873
        %v6875 = vsel %vm6240, %v6685, 0.0
        %v6876 = vadd.f32 %v6874, %v6875
        %v6877 = vsel %vm6240, %v6687, 0.0
        %v6878 = vadd.f32 %v6876, %v6877
        %v6879 = vsel %vm6240, %v6689, 0.0
        %v6880 = vadd.f32 %v6878, %v6879
        %v6881 = vsel %vm6240, %v6691, 0.0
        %v6882 = vadd.f32 %v6880, %v6881
        %v6883 = vsel %vm6240, %v6693, 0.0
        %v6884 = vadd.f32 %v6882, %v6883
        %v6885 = vsel %vm6240, %v6695, 0.0
        %v6886 = vadd.f32 %v6884, %v6885
        %v6887 = vsel %vm6240, %v6697, 0.0
        %v6888 = vadd.f32 %v6886, %v6887
        %v6889 = vsel %vm6240, %v6699, 0.0
        %v6890 = vadd.f32 %v6888, %v6889
        %v6891 = vsel %vm6240, %v6701, 0.0
        %v6892 = vadd.f32 %v6890, %v6891
        %v6893 = vsel %vm6240, %v6703, 0.0
        %v6894 = vadd.f32 %v6892, %v6893
        %v6895 = vsel %vm6240, %v6705, 0.0
        %v6896 = vadd.f32 %v6894, %v6895
        %v6897 = vsel %vm6240, %v6707, 0.0
        %v6898 = vadd.f32 %v6896, %v6897
        %v6899 = vsel %vm6240, %v6709, 0.0
        %v6900 = vadd.f32 %v6898, %v6899
        %v6901 = vsel %vm6240, %v6711, 0.0
        %v6902 = vadd.f32 %v6900, %v6901
        %v6903 = vsel %vm6240, %v6713, 0.0
        %v6904 = vadd.f32 %v6902, %v6903
        %v6905 = vsel %vm6240, %v6715, 0.0
        %v6906 = vadd.f32 %v6904, %v6905
        %v6907 = vsel %vm6240, %v6717, 0.0
        %v6908 = vadd.f32 %v6906, %v6907
        %v6909 = vsel %vm6240, %v6719, 0.0
        %v6910 = vadd.f32 %v6908, %v6909
        %v6911 = vsel %vm6240, %v6721, 0.0
        %v6912 = vadd.f32 %v6910, %v6911
        %v6913 = vsel %vm6240, %v6723, 0.0
        %v6914 = vadd.f32 %v6912, %v6913
        %v6915 = vsel %vm6240, %v6725, 0.0
        %v6916 = vadd.f32 %v6914, %v6915
        %v6917 = vsel %vm6240, %v6727, 0.0
        %v6918 = vadd.f32 %v6916, %v6917
        %v6919 = vsel %vm6240, %v6729, 0.0
        %v6920 = vadd.f32 %v6918, %v6919
        %v6921 = vsel %vm6240, %v6731, 0.0
        %v6922 = vadd.f32 %v6920, %v6921
        %v6923 = vsel %vm6240, %v6733, 0.0
        %v6924 = vadd.f32 %v6922, %v6923
        %v6925 = vsel %vm6240, %v6735, 0.0
        %v6926 = vadd.f32 %v6924, %v6925
        %v6927 = vsel %vm6240, %v6737, 0.0
        %v6928 = vadd.f32 %v6926, %v6927
        %v6929 = vsel %vm6240, %v6739, 0.0
        %v6930 = vadd.f32 %v6928, %v6929
        %v6931 = vsel %vm6240, %v6741, 0.0
        %v6932 = vadd.f32 %v6930, %v6931
        %v6933 = vsel %vm6240, %v6743, 0.0
        %v6934 = vadd.f32 %v6932, %v6933
        %v6935 = vsel %vm6240, %v6745, 0.0
        %v6936 = vadd.f32 %v6934, %v6935
        %v6937 = vsel %vm6240, %v6747, 0.0
        %v6938 = vadd.f32 %v6936, %v6937
        %v6939 = vsel %vm6240, %v6749, 0.0
        %v6940 = vadd.f32 %v6938, %v6939
        %v6941 = vsel %vm6240, %v6751, 0.0
        %v6942 = vadd.f32 %v6940, %v6941
        %v6943 = vsel %vm6240, %v6753, 0.0
        %v6944 = vadd.f32 %v6942, %v6943
        %v6945 = vsel %vm6240, %v6755, 0.0
        %v6946 = vadd.f32 %v6944, %v6945
        %v6947 = vsel %vm6240, %v6757, 0.0
        %v6948 = vadd.f32 %v6946, %v6947
        %v6949 = vsel %vm6240, %v6759, 0.0
        %v6950 = vadd.f32 %v6948, %v6949
        %v6951 = vsel %vm6240, %v6761, 0.0
        %v6952 = vadd.f32 %v6950, %v6951
        %v6953 = vsel %vm6240, %v6763, 0.0
        %v6954 = vadd.f32 %v6952, %v6953
        %v6955 = vsel %vm6240, %v6765, 0.0
        %v6956 = vadd.f32 %v6954, %v6955
        %v6957 = vsel %vm6240, %v6767, 0.0
        %v6958 = vadd.f32 %v6956, %v6957
        %v6959 = vsel %vm6240, %v6769, 0.0
        %v6960 = vadd.f32 %v6958, %v6959
        %v6961 = vsel %vm6240, %v6771, 0.0
        %v6962 = vadd.f32 %v6960, %v6961
        %v6963 = vsel %vm6240, %v6773, 0.0
        %v6964 = vadd.f32 %v6962, %v6963
        %v6965 = vsel %vm6240, %v6775, 0.0
        %v6966 = vadd.f32 %v6964, %v6965
        %v6967 = vsel %vm6240, %v6777, 0.0
        %v6968 = vadd.f32 %v6966, %v6967
        %v6969 = vsel %vm6240, %v6779, 0.0
        %v6970 = vadd.f32 %v6968, %v6969
        %v6971 = vsel %vm6240, %v6781, 0.0
        %v6972 = vadd.f32 %v6970, %v6971
        %v6973 = vsel %vm6240, %v6783, 0.0
        %v6974 = vadd.f32 %v6972, %v6973
        %v6975 = vsel %vm6240, %v6785, 0.0
        %v6976 = vadd.f32 %v6974, %v6975
        %v6977 = vsel %vm6240, %v6787, 0.0
        %v6978 = vadd.f32 %v6976, %v6977
        %v6979 = vsel %vm6240, %v6789, 0.0
        %v6980 = vadd.f32 %v6978, %v6979
        %v6981 = vsel %vm6240, %v6791, 0.0
        %v6982 = vadd.f32 %v6980, %v6981
        %v6983 = vsel %vm6240, %v6793, 0.0
        %v6984 = vadd.f32 %v6982, %v6983
        %6985 = vadd.xlane.f32.xlu0 %v6984
        %v6986 = vpop.xlane.xlu0 %6985
        %v6987 = vrot.slane %v6986, 4
        %v6988 = vadd.f32 %v6986, %v6987
        %v6989 = vrot.slane %v6988, 2
        %v6990 = vadd.f32 %v6988, %v6989
        %v6991 = vrot.slane %v6990, 1
        %v6992 = vadd.f32 %v6990, %v6991
        %s6993 = vtos %v6992
        %s6994 = sadd.f32 %s6281, %s6993
        %6995 = vrot.lane.b32.xlu0 %v4176, 126
        %v6996 = vpop.permute.xlu0 %6995
        %6997 = vrot.lane.b32.xlu0 %v4177, 126
        %v6998 = vpop.permute.xlu0 %6997
        %6999 = vrot.lane.b32.xlu0 %v4178, 126
        %v7000 = vpop.permute.xlu0 %6999
        %7001 = vrot.lane.b32.xlu0 %v4179, 126
        %v7002 = vpop.permute.xlu0 %7001
        %7003 = vrot.lane.b32.xlu0 %v4180, 126
        %v7004 = vpop.permute.xlu0 %7003
        %7005 = vrot.lane.b32.xlu0 %v4181, 126
        %v7006 = vpop.permute.xlu0 %7005
        %7007 = vrot.lane.b32.xlu0 %v4182, 126
        %v7008 = vpop.permute.xlu0 %7007
        %7009 = vrot.lane.b32.xlu0 %v4183, 126
        %v7010 = vpop.permute.xlu0 %7009
        %7011 = vrot.lane.b32.xlu0 %v4184, 126
        %v7012 = vpop.permute.xlu0 %7011
        %7013 = vrot.lane.b32.xlu0 %v4185, 126
        %v7014 = vpop.permute.xlu0 %7013
        %7015 = vrot.lane.b32.xlu0 %v4186, 126
        %v7016 = vpop.permute.xlu0 %7015
        %7017 = vrot.lane.b32.xlu0 %v4187, 126
        %v7018 = vpop.permute.xlu0 %7017
        %7019 = vrot.lane.b32.xlu0 %v4188, 126
        %v7020 = vpop.permute.xlu0 %7019
        %7021 = vrot.lane.b32.xlu0 %v4189, 126
        %v7022 = vpop.permute.xlu0 %7021
        %7023 = vrot.lane.b32.xlu0 %v4190, 126
        %v7024 = vpop.permute.xlu0 %7023
        %7025 = vrot.lane.b32.xlu0 %v4191, 126
        %v7026 = vpop.permute.xlu0 %7025
        %7027 = vrot.lane.b32.xlu0 %v4192, 126
        %v7028 = vpop.permute.xlu0 %7027
        %7029 = vrot.lane.b32.xlu0 %v4193, 126
        %v7030 = vpop.permute.xlu0 %7029
        %7031 = vrot.lane.b32.xlu0 %v4194, 126
        %v7032 = vpop.permute.xlu0 %7031
        %7033 = vrot.lane.b32.xlu0 %v4195, 126
        %v7034 = vpop.permute.xlu0 %7033
        %7035 = vrot.lane.b32.xlu0 %v4196, 126
        %v7036 = vpop.permute.xlu0 %7035
        %7037 = vrot.lane.b32.xlu0 %v4197, 126
        %v7038 = vpop.permute.xlu0 %7037
        %7039 = vrot.lane.b32.xlu0 %v4198, 126
        %v7040 = vpop.permute.xlu0 %7039
        %7041 = vrot.lane.b32.xlu0 %v4199, 126
        %v7042 = vpop.permute.xlu0 %7041
        %7043 = vrot.lane.b32.xlu0 %v4200, 126
        %v7044 = vpop.permute.xlu0 %7043
        %7045 = vrot.lane.b32.xlu0 %v4201, 126
        %v7046 = vpop.permute.xlu0 %7045
        %7047 = vrot.lane.b32.xlu0 %v4202, 126
        %v7048 = vpop.permute.xlu0 %7047
        %7049 = vrot.lane.b32.xlu0 %v4203, 126
        %v7050 = vpop.permute.xlu0 %7049
        %7051 = vrot.lane.b32.xlu0 %v4204, 126
        %v7052 = vpop.permute.xlu0 %7051
        %7053 = vrot.lane.b32.xlu0 %v4205, 126
        %v7054 = vpop.permute.xlu0 %7053
        %7055 = vrot.lane.b32.xlu0 %v4206, 126
        %v7056 = vpop.permute.xlu0 %7055
        %7057 = vrot.lane.b32.xlu0 %v4207, 126
        %v7058 = vpop.permute.xlu0 %7057
        %7059 = vrot.lane.b32.xlu0 %v4208, 126
        %v7060 = vpop.permute.xlu0 %7059
        %7061 = vrot.lane.b32.xlu0 %v4209, 126
        %v7062 = vpop.permute.xlu0 %7061
        %7063 = vrot.lane.b32.xlu0 %v4210, 126
        %v7064 = vpop.permute.xlu0 %7063
        %7065 = vrot.lane.b32.xlu0 %v4211, 126
        %v7066 = vpop.permute.xlu0 %7065
        %7067 = vrot.lane.b32.xlu0 %v4212, 126
        %v7068 = vpop.permute.xlu0 %7067
        %7069 = vrot.lane.b32.xlu0 %v4213, 126
        %v7070 = vpop.permute.xlu0 %7069
        %7071 = vrot.lane.b32.xlu0 %v4214, 126
        %v7072 = vpop.permute.xlu0 %7071
        %7073 = vrot.lane.b32.xlu0 %v4215, 126
        %v7074 = vpop.permute.xlu0 %7073
        %7075 = vrot.lane.b32.xlu0 %v4216, 126
        %v7076 = vpop.permute.xlu0 %7075
        %7077 = vrot.lane.b32.xlu0 %v4217, 126
        %v7078 = vpop.permute.xlu0 %7077
        %7079 = vrot.lane.b32.xlu0 %v4218, 126
        %v7080 = vpop.permute.xlu0 %7079
        %7081 = vrot.lane.b32.xlu0 %v4219, 126
        %v7082 = vpop.permute.xlu0 %7081
        %7083 = vrot.lane.b32.xlu0 %v4220, 126
        %v7084 = vpop.permute.xlu0 %7083
        %7085 = vrot.lane.b32.xlu0 %v4221, 126
        %v7086 = vpop.permute.xlu0 %7085
        %7087 = vrot.lane.b32.xlu0 %v4222, 126
        %v7088 = vpop.permute.xlu0 %7087
        %7089 = vrot.lane.b32.xlu0 %v4223, 126
        %v7090 = vpop.permute.xlu0 %7089
        %7091 = vrot.lane.b32.xlu0 %v4224, 126
        %v7092 = vpop.permute.xlu0 %7091
        %7093 = vrot.lane.b32.xlu0 %v4225, 126
        %v7094 = vpop.permute.xlu0 %7093
        %7095 = vrot.lane.b32.xlu0 %v4226, 126
        %v7096 = vpop.permute.xlu0 %7095
        %7097 = vrot.lane.b32.xlu0 %v4227, 126
        %v7098 = vpop.permute.xlu0 %7097
        %7099 = vrot.lane.b32.xlu0 %v4228, 126
        %v7100 = vpop.permute.xlu0 %7099
        %7101 = vrot.lane.b32.xlu0 %v4229, 126
        %v7102 = vpop.permute.xlu0 %7101
        %7103 = vrot.lane.b32.xlu0 %v4230, 126
        %v7104 = vpop.permute.xlu0 %7103
        %7105 = vrot.lane.b32.xlu0 %v4231, 126
        %v7106 = vpop.permute.xlu0 %7105
        %7107 = vrot.lane.b32.xlu0 %v4232, 126
        %v7108 = vpop.permute.xlu0 %7107
        %7109 = vrot.lane.b32.xlu0 %v4233, 126
        %v7110 = vpop.permute.xlu0 %7109
        %7111 = vrot.lane.b32.xlu0 %v4234, 126
        %v7112 = vpop.permute.xlu0 %7111
        %7113 = vrot.lane.b32.xlu0 %v4235, 126
        %v7114 = vpop.permute.xlu0 %7113
        %7115 = vrot.lane.b32.xlu0 %v4236, 126
        %v7116 = vpop.permute.xlu0 %7115
        %7117 = vrot.lane.b32.xlu0 %v4237, 126
        %v7118 = vpop.permute.xlu0 %7117
        %7119 = vrot.lane.b32.xlu0 %v4238, 126
        %v7120 = vpop.permute.xlu0 %7119
        %7121 = vrot.lane.b32.xlu0 %v4239, 126
        %v7122 = vpop.permute.xlu0 %7121
        %v7187 = vmul.f32 %v6096, %v6996
        %v7188 = vmul.f32 %v6097, %v6998
        %v7189 = vmul.f32 %v6098, %v7000
        %v7190 = vmul.f32 %v6099, %v7002
        %v7191 = vmul.f32 %v6100, %v7004
        %v7192 = vmul.f32 %v6101, %v7006
        %v7193 = vmul.f32 %v6102, %v7008
        %v7194 = vmul.f32 %v6103, %v7010
        %v7195 = vmul.f32 %v6104, %v7012
        %v7196 = vmul.f32 %v6105, %v7014
        %v7197 = vmul.f32 %v6106, %v7016
        %v7198 = vmul.f32 %v6107, %v7018
        %v7199 = vmul.f32 %v6108, %v7020
        %v7200 = vmul.f32 %v6109, %v7022
        %v7201 = vmul.f32 %v6110, %v7024
        %v7202 = vmul.f32 %v6111, %v7026
        %v7203 = vmul.f32 %v6112, %v7028
        %v7204 = vmul.f32 %v6113, %v7030
        %v7205 = vmul.f32 %v6114, %v7032
        %v7206 = vmul.f32 %v6115, %v7034
        %v7207 = vmul.f32 %v6116, %v7036
        %v7208 = vmul.f32 %v6117, %v7038
        %v7209 = vmul.f32 %v6118, %v7040
        %v7210 = vmul.f32 %v6119, %v7042
        %v7211 = vmul.f32 %v6120, %v7044
        %v7212 = vmul.f32 %v6121, %v7046
        %v7213 = vmul.f32 %v6122, %v7048
        %v7214 = vmul.f32 %v6123, %v7050
        %v7215 = vmul.f32 %v6124, %v7052
        %v7216 = vmul.f32 %v6125, %v7054
        %v7217 = vmul.f32 %v6126, %v7056
        %v7218 = vmul.f32 %v6127, %v7058
        %v7219 = vmul.f32 %v6128, %v7060
        %v7220 = vmul.f32 %v6129, %v7062
        %v7221 = vmul.f32 %v6130, %v7064
        %v7222 = vmul.f32 %v6131, %v7066
        %v7223 = vmul.f32 %v6132, %v7068
        %v7224 = vmul.f32 %v6133, %v7070
        %v7225 = vmul.f32 %v6134, %v7072
        %v7226 = vmul.f32 %v6135, %v7074
        %v7227 = vmul.f32 %v6136, %v7076
        %v7228 = vmul.f32 %v6137, %v7078
        %v7229 = vmul.f32 %v6138, %v7080
        %v7230 = vmul.f32 %v6139, %v7082
        %v7231 = vmul.f32 %v6140, %v7084
        %v7232 = vmul.f32 %v6141, %v7086
        %v7233 = vmul.f32 %v6142, %v7088
        %v7234 = vmul.f32 %v6143, %v7090
        %v7235 = vmul.f32 %v6144, %v7092
        %v7236 = vmul.f32 %v6145, %v7094
        %v7237 = vmul.f32 %v6146, %v7096
        %v7238 = vmul.f32 %v6147, %v7098
        %v7239 = vmul.f32 %v6148, %v7100
        %v7240 = vmul.f32 %v6149, %v7102
        %v7241 = vmul.f32 %v6150, %v7104
        %v7242 = vmul.f32 %v6151, %v7106
        %v7243 = vmul.f32 %v6152, %v7108
        %v7244 = vmul.f32 %v6153, %v7110
        %v7245 = vmul.f32 %v6154, %v7112
        %v7246 = vmul.f32 %v6155, %v7114
        %v7247 = vmul.f32 %v6156, %v7116
        %v7248 = vmul.f32 %v6157, %v7118
        %v7249 = vmul.f32 %v6158, %v7120
        %v7250 = vmul.f32 %v6159, %v7122
        %v7251 = vsel %vm6240, %v7187, 0.0
        %v7252 = vsel %vm6240, %v7188, 0.0
        %v7253 = vadd.f32 %v7251, %v7252
        %v7254 = vsel %vm6240, %v7189, 0.0
        %v7255 = vadd.f32 %v7253, %v7254
        %v7256 = vsel %vm6240, %v7190, 0.0
        %v7257 = vadd.f32 %v7255, %v7256
        %v7258 = vsel %vm6240, %v7191, 0.0
        %v7259 = vadd.f32 %v7257, %v7258
        %v7260 = vsel %vm6240, %v7192, 0.0
        %v7261 = vadd.f32 %v7259, %v7260
        %v7262 = vsel %vm6240, %v7193, 0.0
        %v7263 = vadd.f32 %v7261, %v7262
        %v7264 = vsel %vm6240, %v7194, 0.0
        %v7265 = vadd.f32 %v7263, %v7264
        %v7266 = vsel %vm6240, %v7195, 0.0
        %v7267 = vadd.f32 %v7265, %v7266
        %v7268 = vsel %vm6240, %v7196, 0.0
        %v7269 = vadd.f32 %v7267, %v7268
        %v7270 = vsel %vm6240, %v7197, 0.0
        %v7271 = vadd.f32 %v7269, %v7270
        %v7272 = vsel %vm6240, %v7198, 0.0
        %v7273 = vadd.f32 %v7271, %v7272
        %v7274 = vsel %vm6240, %v7199, 0.0
        %v7275 = vadd.f32 %v7273, %v7274
        %v7276 = vsel %vm6240, %v7200, 0.0
        %v7277 = vadd.f32 %v7275, %v7276
        %v7278 = vsel %vm6240, %v7201, 0.0
        %v7279 = vadd.f32 %v7277, %v7278
        %v7280 = vsel %vm6240, %v7202, 0.0
        %v7281 = vadd.f32 %v7279, %v7280
        %v7282 = vsel %vm6240, %v7203, 0.0
        %v7283 = vadd.f32 %v7281, %v7282
        %v7284 = vsel %vm6240, %v7204, 0.0
        %v7285 = vadd.f32 %v7283, %v7284
        %v7286 = vsel %vm6240, %v7205, 0.0
        %v7287 = vadd.f32 %v7285, %v7286
        %v7288 = vsel %vm6240, %v7206, 0.0
        %v7289 = vadd.f32 %v7287, %v7288
        %v7290 = vsel %vm6240, %v7207, 0.0
        %v7291 = vadd.f32 %v7289, %v7290
        %v7292 = vsel %vm6240, %v7208, 0.0
        %v7293 = vadd.f32 %v7291, %v7292
        %v7294 = vsel %vm6240, %v7209, 0.0
        %v7295 = vadd.f32 %v7293, %v7294
        %v7296 = vsel %vm6240, %v7210, 0.0
        %v7297 = vadd.f32 %v7295, %v7296
        %v7298 = vsel %vm6240, %v7211, 0.0
        %v7299 = vadd.f32 %v7297, %v7298
        %v7300 = vsel %vm6240, %v7212, 0.0
        %v7301 = vadd.f32 %v7299, %v7300
        %v7302 = vsel %vm6240, %v7213, 0.0
        %v7303 = vadd.f32 %v7301, %v7302
        %v7304 = vsel %vm6240, %v7214, 0.0
        %v7305 = vadd.f32 %v7303, %v7304
        %v7306 = vsel %vm6240, %v7215, 0.0
        %v7307 = vadd.f32 %v7305, %v7306
        %v7308 = vsel %vm6240, %v7216, 0.0
        %v7309 = vadd.f32 %v7307, %v7308
        %v7310 = vsel %vm6240, %v7217, 0.0
        %v7311 = vadd.f32 %v7309, %v7310
        %v7312 = vsel %vm6240, %v7218, 0.0
        %v7313 = vadd.f32 %v7311, %v7312
        %v7314 = vsel %vm6240, %v7219, 0.0
        %v7315 = vadd.f32 %v7313, %v7314
        %v7316 = vsel %vm6240, %v7220, 0.0
        %v7317 = vadd.f32 %v7315, %v7316
        %v7318 = vsel %vm6240, %v7221, 0.0
        %v7319 = vadd.f32 %v7317, %v7318
        %v7320 = vsel %vm6240, %v7222, 0.0
        %v7321 = vadd.f32 %v7319, %v7320
        %v7322 = vsel %vm6240, %v7223, 0.0
        %v7323 = vadd.f32 %v7321, %v7322
        %v7324 = vsel %vm6240, %v7224, 0.0
        %v7325 = vadd.f32 %v7323, %v7324
        %v7326 = vsel %vm6240, %v7225, 0.0
        %v7327 = vadd.f32 %v7325, %v7326
        %v7328 = vsel %vm6240, %v7226, 0.0
        %v7329 = vadd.f32 %v7327, %v7328
        %v7330 = vsel %vm6240, %v7227, 0.0
        %v7331 = vadd.f32 %v7329, %v7330
        %v7332 = vsel %vm6240, %v7228, 0.0
        %v7333 = vadd.f32 %v7331, %v7332
        %v7334 = vsel %vm6240, %v7229, 0.0
        %v7335 = vadd.f32 %v7333, %v7334
        %v7336 = vsel %vm6240, %v7230, 0.0
        %v7337 = vadd.f32 %v7335, %v7336
        %v7338 = vsel %vm6240, %v7231, 0.0
        %v7339 = vadd.f32 %v7337, %v7338
        %v7340 = vsel %vm6240, %v7232, 0.0
        %v7341 = vadd.f32 %v7339, %v7340
        %v7342 = vsel %vm6240, %v7233, 0.0
        %v7343 = vadd.f32 %v7341, %v7342
        %v7344 = vsel %vm6240, %v7234, 0.0
        %v7345 = vadd.f32 %v7343, %v7344
        %v7346 = vsel %vm6240, %v7235, 0.0
        %v7347 = vadd.f32 %v7345, %v7346
        %v7348 = vsel %vm6240, %v7236, 0.0
        %v7349 = vadd.f32 %v7347, %v7348
        %v7350 = vsel %vm6240, %v7237, 0.0
        %v7351 = vadd.f32 %v7349, %v7350
        %v7352 = vsel %vm6240, %v7238, 0.0
        %v7353 = vadd.f32 %v7351, %v7352
        %v7354 = vsel %vm6240, %v7239, 0.0
        %v7355 = vadd.f32 %v7353, %v7354
        %v7356 = vsel %vm6240, %v7240, 0.0
        %v7357 = vadd.f32 %v7355, %v7356
        %v7358 = vsel %vm6240, %v7241, 0.0
        %v7359 = vadd.f32 %v7357, %v7358
        %v7360 = vsel %vm6240, %v7242, 0.0
        %v7361 = vadd.f32 %v7359, %v7360
        %v7362 = vsel %vm6240, %v7243, 0.0
        %v7363 = vadd.f32 %v7361, %v7362
        %v7364 = vsel %vm6240, %v7244, 0.0
        %v7365 = vadd.f32 %v7363, %v7364
        %v7366 = vsel %vm6240, %v7245, 0.0
        %v7367 = vadd.f32 %v7365, %v7366
        %v7368 = vsel %vm6240, %v7246, 0.0
        %v7369 = vadd.f32 %v7367, %v7368
        %v7370 = vsel %vm6240, %v7247, 0.0
        %v7371 = vadd.f32 %v7369, %v7370
        %v7372 = vsel %vm6240, %v7248, 0.0
        %v7373 = vadd.f32 %v7371, %v7372
        %v7374 = vsel %vm6240, %v7249, 0.0
        %v7375 = vadd.f32 %v7373, %v7374
        %v7376 = vsel %vm6240, %v7250, 0.0
        %v7377 = vadd.f32 %v7375, %v7376
        %7378 = vadd.xlane.f32.xlu0 %v7377
        %v7379 = vpop.xlane.xlu0 %7378
        %v7380 = vrot.slane %v7379, 4
        %v7381 = vadd.f32 %v7379, %v7380
        %v7382 = vrot.slane %v7381, 2
        %v7383 = vadd.f32 %v7381, %v7382
        %v7384 = vrot.slane %v7383, 1
        %v7385 = vadd.f32 %v7383, %v7384
        %s7386 = vtos %v7385
        %s7387 = ssub.f32 %s6994, %s7386
        %v7388 = vld [vmem:[#allocation2] sm:$0x1]
        %v7389 = vstv %s7387
        %v7390 = vadd.f32 %v7388, %v7389
        %vm7391 = vcmask 0
        %7392 = vst.msk [vmem:[#allocation2] sm:$0x1] %vm7391, %v7390
        %p7393 = scmp.eq.s32.totalorder %s17, 1
        // Predicated region
        $region45: #{tpu_custom_call.1} parent=39 // pred_check
          %p7394 = pneg %p7393
        $region46: #{tpu_custom_call.1} parent=39 // pred_check_branch
          %7396 = sbr.rel (%p7394) target = $region48
        $region47: #{tpu_custom_call.1} parent=39 // pred_region
          %v7397 = vld [vmem:[#allocation2] sm:$0x1]
          %v7398 = vsub.f32 0.0, %v7397
          %7399 = vst.msk [vmem:[#allocation2] sm:$0x1] %vm7391, %v7398
        $region48: #{tpu_custom_call.1} parent=39 // pred_fallthru
          _
        // Predicated region
        $region49: #{tpu_custom_call.1} parent=39 // pred_check
          %p7400 = pneg %p150
        $region50: #{tpu_custom_call.1} parent=39 // pred_check_branch
          %7402 = sbr.rel (%p7400) target = $region52
        $region51: #{tpu_custom_call.1} parent=39 // pred_region
          %s7404 = ssub.s32 16, 16
          %7405 = vsyncadd [#allocation3], %s7404
          %s7407 = sshll.u32 [#allocation2], 4
          %s7408 = int_to_ptr.vmem [resolvable:$true] %s7407
          %7410 = dma.vmem_to_hbm [thread:$0]  %s7408, 16, %s5, [#allocation3]
        $region52: #{tpu_custom_call.1} parent=39 // pred_fallthru
          _
        // Predicated region
        $region53: #{tpu_custom_call.1} parent=39 // pred_check
          %p7411 = pneg %p150
        $region54: #{tpu_custom_call.1} parent=39 // pred_check_branch
          %7413 = sbr.rel (%p7411) target = $region56
        $region55: #{tpu_custom_call.1} parent=39 // pred_region
          %7414 = dma.done [#allocation3], 16
        $region56: #{tpu_custom_call.1} parent=39 // pred_fallthru
          _
      $region40: #{tpu_custom_call.1} parent=5 // pred_fallthru
        _
      %p7415 = scmp.le.s32.totalorder 2, %s12
      // Predicated region
      $region57: #{tpu_custom_call.1} parent=5 // pred_check
        %p7416 = pneg %p7415
      $region58: #{tpu_custom_call.1} parent=5 // pred_check_branch
        %7418 = sbr.rel (%p7416) target = $region60
      $region59: #{tpu_custom_call.1} parent=5 // pred_region
        %s7419 = ssub.s32 %s12, 2
      $region60: #{tpu_custom_call.1} parent=5 // pred_fallthru
        _
    $region6: #{tpu_custom_call.1} parent=1 // loop_footer
      %s16 = sadd.s32 1, %s12
    $region7: #{tpu_custom_call.1} parent=1 // loop_footer_branch
      %11 = sbr.rel target = $region3
    $region8: #{tpu_custom_call.1} parent=1 // loop_exit
      _
    %7420 = vsyncpa [#allocation3], 1
    %s7421 = scalar_lea.sflag [#allocation3], 1
    %7422 = vsyncpa %s7421, 1

</llo_original>
